<compile_context>
chip_gen: v7x
topology: tpu7x:2x2x1
jax: 0.10.0
libtpu: 0.0.40
codegen_flags: <defaults>
</compile_context>

<pallas_src>
import numpy as np
import jax
import jax.numpy as jnp
from jax import lax
from jax.experimental import pallas as pl
from jax.experimental.pallas import tpu as pltpu

BN_EPS = 1e-5

# Fixed Decoder3Lxs architecture constants.
L0, C0 = 32, 64                       # decoder_linear output reshaped to (B, 64, 32) = NCL
CONV_SPECS = [                        # (Cin, Cout_or_None, K, pad); None -> channels_out
    (64, 32, 15, 7),
    (32, 16, 31, 15),
    (16, None, 63, 31),
]


def _decoder_kernel(x_ref, w0_ref, b0_ref,
                    w1_ref, b1_ref, g1_ref, t1_ref,
                    w2_ref, b2_ref, g2_ref, t2_ref,
                    w3_ref, b3_ref, g3_ref, t3_ref,
                    o_ref, z_ref):
    f32 = jnp.float32
    bf16 = jnp.bfloat16
    B = x_ref.shape[0]

    def conv_block(wb_list, cin, w_ref, b_ref, gamma_ref, beta_ref):
        """One ConvBlock on phase-packed input tiles.

        wb_list[b]: (16, 128) f32, lanes = (phase s, channel c); row m holds input positions
        g*m + s (g = 128 // cin phases, 16*g positions total).  Returns the x2-upsampled output
        in the same packed form: (16, 2*g*cout) per batch, lanes = (output phase, channel)."""
        g = 128 // cin
        nbr = B * g
        cout = w_ref.shape[1]

        # ---- phase-packed, zero-padded conv input tiles (padding = 4g - 1 on both sides) ----
        # Z[b*g+r, q, t*cin + c] = x_pad[g*q + r + t, c]; filled with two aligned-width stores
        # per (b, r) sourced from lane-slices of wb (the rest stays zero = conv padding).
        z_ref[0:nbr] = jnp.zeros((nbr, 32, 128), f32)
        for b in range(B):
            wb = wb_list[b]
            for r in range(g):
                br = b * g + r
                split = (g - 1 - r) * cin
                if split > 0:
                    z_ref[br, 4:20, 0:split] = wb[:, 128 - split:]
                z_ref[br, 3:19, split:128] = wb[:, 0:128 - split]

        # ---- im2col slab from 8 lane-aligned 128-wide tap groups (row-shifted tile copies) ----
        slab = jnp.concatenate(
            [z_ref[0:nbr, j:j + 16, :].astype(bf16) for j in range(8)], axis=2)
        slab = slab.reshape(nbr * 16, 8 * 128)                   # rows = (b, phase r, m)

        # ---- Conv1d as ONE wide-contraction matmul (+bias, ReLU) ----
        y = jnp.dot(slab, w_ref[...], preferred_element_type=f32) + b_ref[...]
        y = jnp.maximum(y, 0.0)

        # ---- BatchNorm1d, training-mode batch stats, one-pass mean/var ----
        n = float(nbr * 16)
        s1 = jnp.sum(y, axis=0, keepdims=True)
        s2 = jnp.sum(y * y, axis=0, keepdims=True)
        mean = s1 * (1.0 / n)
        var = s2 * (1.0 / n) - mean * mean
        y = (y - mean) * lax.rsqrt(var + BN_EPS) * gamma_ref[...] + beta_ref[...]

        # ---- Upsample x2 (linear, align_corners=False) as a lerp over phase tiles ----
        out_wb = []
        for b in range(B):
            yb = [y[(b * g + rho) * 16:(b * g + rho + 1) * 16, :] for rho in range(g)]
            phases = []
            for rho in range(g):
                cur = yb[rho]
                if rho >= 1:
                    prev = yb[rho - 1]
                else:   # position p-1 wraps to the previous row of the last phase; clamp at p=0
                    prev = jnp.concatenate([cur[0:1], yb[g - 1][0:15]], axis=0)
                if rho + 1 < g:
                    nxt = yb[rho + 1]
                else:   # position p+1 wraps to the next row of phase 0; clamp at p=L-1
                    nxt = jnp.concatenate([yb[0][1:16], cur[15:16]], axis=0)
                phases.append(0.25 * prev + 0.75 * cur)          # even output positions
                phases.append(0.75 * cur + 0.25 * nxt)           # odd output positions
            out_wb.append(jnp.concatenate(phases, axis=1))       # (16, 2*g*cout)
        return out_wb

    # decoder_linear (Linear + ReLU); weight is pre-permuted so lanes are (m, phase, channel),
    # i.e. hl[b, m*128 + s*64 + c] = position 2m+s, channel c of the (B, 64, 32) activation.
    hl = jnp.maximum(
        jnp.dot(x_ref[...], w0_ref[...], preferred_element_type=f32) + b0_ref[...], 0.0)
    wb = [jnp.concatenate([hl[b:b + 1, m * 128:(m + 1) * 128] for m in range(16)], axis=0)
          for b in range(B)]                                     # B x (16, 128)

    wb = conv_block(wb, 64, w1_ref, b1_ref, g1_ref, t1_ref)      # Conv(64->32, k=15) + up x2
    wb = conv_block(wb, 32, w2_ref, b2_ref, g2_ref, t2_ref)      # Conv(32->16, k=31) + up x2
    wb = conv_block(wb, 16, w3_ref, b3_ref, g3_ref, t3_ref)      # Conv(16->Cout, k=63) + up x2

    # Final packed form (16, 16*Cout) per batch is already (position, channel)-major -> store.
    for b in range(B):
        o_ref[b * 16:(b + 1) * 16, :] = wb[b]


def pack_params(params):
    """Rearrange torch-convention parameters into the forms the fused kernel consumes.
    Batch-independent (no O(B^2) interpolation matrices)."""
    w_lin, b_lin = params["linear_w"], params["linear_b"]        # (2048, din), (2048,)
    # Linear output columns reordered to (m, phase, channel): col m*128 + s*64 + c holds torch
    # output feature c*32 + (2m + s)  (channel-major, position-minor in torch's reshape).
    m_idx = np.arange(16)[:, None, None]
    s_idx = np.arange(2)[None, :, None]
    c_idx = np.arange(64)[None, None, :]
    perm = (c_idx * 32 + 2 * m_idx + s_idx).reshape(-1)
    w0 = w_lin.T[:, perm].astype(jnp.float32)
    b0 = b_lin[perm].reshape(1, -1).astype(jnp.float32)

    packed = [w0, b0]
    for blk in params["blocks"]:
        w = blk["w"]                                             # (Cout, Cin, K) torch layout
        cout, cin, k = w.shape
        g = 128 // cin
        wt = jnp.transpose(w, (2, 1, 0))                         # (K, Cin, Cout)
        wt = jnp.concatenate([wt, jnp.zeros((8 * g - k, cin, cout), w.dtype)], axis=0)
        # rows ordered (tap-group j, within-group position t, cin) = j*128 + t*cin + cin_idx
        wc = wt.reshape(8 * g * cin, cout).astype(jnp.bfloat16)
        packed += [
            wc,
            blk["b"].reshape(1, -1).astype(jnp.float32),
            blk["gamma"].reshape(1, -1).astype(jnp.float32),
            blk["beta"].reshape(1, -1).astype(jnp.float32),
        ]
    return packed


def decoder3lxs_forward(x, packed):
    batch = x.shape[0]
    cout = packed[10].shape[1]                                   # last conv weight (1024, Cout)
    args = [x] + list(packed)
    out2d = pl.pallas_call(
        _decoder_kernel,
        out_shape=jax.ShapeDtypeStruct((batch * 16, 16 * cout), jnp.float32),
        grid_spec=pltpu.PrefetchScalarGridSpec(
            num_scalar_prefetch=0,
            grid=(1,),
            in_specs=[pl.BlockSpec(a.shape, lambda i: (0, 0)) for a in args],
            out_specs=pl.BlockSpec((batch * 16, 16 * cout), lambda i: (0, 0)),
            scratch_shapes=[pltpu.VMEM((batch * 8, 32, 128), jnp.float32)],
        ),
        compiler_params=pltpu.CompilerParams(
            dimension_semantics=("arbitrary",),
            vmem_limit_bytes=16 * 1024 * 1024,
        ),
    )(*args)
    # Rows are (batch, position-block), lanes are (position-phase, channel) -> free reshape.
    return out2d.reshape(batch, 8 * L0, cout)


def init_params(key, dims_in, channels_out):
    keys = jax.random.split(key, 8)
    bound0 = 1.0 / float(dims_in) ** 0.5
    params = dict(
        linear_w=jax.random.uniform(keys[0], (C0 * L0, dims_in), jnp.float32, -bound0, bound0),
        linear_b=jax.random.uniform(keys[1], (C0 * L0,), jnp.float32, -bound0, bound0),
        blocks=[],
    )
    for i, (cin, cout, k, pad) in enumerate(CONV_SPECS):
        cout = channels_out if cout is None else cout
        bound = 1.0 / float(cin * k) ** 0.5
        params["blocks"].append(dict(
            w=jax.random.uniform(keys[2 + 2 * i], (cout, cin, k), jnp.float32, -bound, bound),
            b=jax.random.uniform(keys[3 + 2 * i], (cout,), jnp.float32, -bound, bound),
            gamma=jnp.ones((cout,), jnp.float32),
            beta=jnp.zeros((cout,), jnp.float32),
            pad=pad,
        ))
    return params


# ---------------- pure-JAX reference (for correctness check) ----------------
def _ref_upsample_linear_x2(y):
    # y: (B, L, C) channels-last; nn.Upsample(2, 'linear', align_corners=False) semantics.
    length = y.shape[1]
    i = jnp.arange(2 * length)
    src = jnp.maximum(0.5 * (i + 0.5) - 0.5, 0.0)
    j0 = jnp.floor(src).astype(jnp.int32)
    lam = (src - j0)[None, :, None]
    j1 = jnp.minimum(j0 + 1, length - 1)
    return (1.0 - lam) * y[:, j0, :] + lam * y[:, j1, :]


def _ref_forward(x, params):
    h = jnp.maximum(x @ params["linear_w"].T + params["linear_b"], 0.0)
    h = jnp.transpose(h.reshape(-1, C0, L0), (0, 2, 1))          # (B, 32, 64) channels-last
    for blk in params["blocks"]:
        w = jnp.transpose(blk["w"], (2, 1, 0))                   # (K, Cin, Cout)
        pad = blk["pad"]
        y = lax.conv_general_dilated(h, w, (1,), [(pad, pad)],
                                     dimension_numbers=("NWC", "WIO", "NWC"),
                                     precision=lax.Precision.HIGHEST)
        y = jnp.maximum(y + blk["b"][None, None, :], 0.0)
        mean = jnp.mean(y, axis=(0, 1), keepdims=True)
        var = jnp.mean((y - mean) ** 2, axis=(0, 1), keepdims=True)
        y = (y - mean) * lax.rsqrt(var + BN_EPS) * blk["gamma"][None, None, :] \
            + blk["beta"][None, None, :]
        h = _ref_upsample_linear_x2(y)
    return h                                                     # (B, 256, channels_out)


if __name__ == "__main__":
    key = jax.random.PRNGKey(0)
    kx, kp = jax.random.split(key)

    B, dims_in, channels_out = 2, 32, 4
    x = jax.random.normal(kx, (B, dims_in), jnp.float32)
    params = init_params(kp, dims_in, channels_out)
    packed = pack_params(params)

    out = jax.block_until_ready(decoder3lxs_forward(x, packed))
    ref = jax.block_until_ready(_ref_forward(x, params))

    # (B, dims_in) -> Linear 2048 -> (B, 64, 32) NCL -> 3x (length-preserving conv + x2
    # upsample) -> (B, channels_out, 256) -> permute -> (B, 256, channels_out)
    assert out.shape == (B, 8 * L0, channels_out), out.shape
    assert bool(jnp.all(jnp.isfinite(out)))
    err = float(jnp.max(jnp.abs(out - ref)))
    # Tolerance is slightly looser than the f32 version (2e-2) because the conv matmul operands
    # are bf16 (f32 accumulation); the reference runs in full f32.
    assert bool(jnp.allclose(out, ref, atol=2e-2, rtol=2e-2)), err
    print("KERNEL_OK")
</pallas_src>

<mosaic_0001>
module attributes {stable_mosaic.version = 11 : i64} {
  func.func @_decoder_kernel(%arg0: i32, %arg1: memref<2x32xf32, #tpu.memory_space<vmem>>, %arg2: memref<32x2048xf32, #tpu.memory_space<vmem>>, %arg3: memref<1x2048xf32, #tpu.memory_space<vmem>>, %arg4: memref<1024x32xbf16, #tpu.memory_space<vmem>>, %arg5: memref<1x32xf32, #tpu.memory_space<vmem>>, %arg6: memref<1x32xf32, #tpu.memory_space<vmem>>, %arg7: memref<1x32xf32, #tpu.memory_space<vmem>>, %arg8: memref<1024x16xbf16, #tpu.memory_space<vmem>>, %arg9: memref<1x16xf32, #tpu.memory_space<vmem>>, %arg10: memref<1x16xf32, #tpu.memory_space<vmem>>, %arg11: memref<1x16xf32, #tpu.memory_space<vmem>>, %arg12: memref<1024x4xbf16, #tpu.memory_space<vmem>>, %arg13: memref<1x4xf32, #tpu.memory_space<vmem>>, %arg14: memref<1x4xf32, #tpu.memory_space<vmem>>, %arg15: memref<1x4xf32, #tpu.memory_space<vmem>>, %arg16: memref<32x64xf32, #tpu.memory_space<vmem>>, %arg17: memref<16x32x128xf32, #tpu.memory_space<vmem>>) attributes {dimension_semantics = [#tpu.dimension_semantics<arbitrary>], iteration_bounds = array<i64: 1>, scalar_prefetch = 0 : i64, scratch_operands = 1 : i64, tpu.core_type = #tpu.core_type<tc>, window_params = [{pipeline_mode = #tpu.pipeline_mode<synchronous>, transform_indices = @transform_0, window_bounds = array<i64: 2, 32>}, {pipeline_mode = #tpu.pipeline_mode<synchronous>, transform_indices = @transform_1, window_bounds = array<i64: 32, 2048>}, {pipeline_mode = #tpu.pipeline_mode<synchronous>, transform_indices = @transform_2, window_bounds = array<i64: 1, 2048>}, {pipeline_mode = #tpu.pipeline_mode<synchronous>, transform_indices = @transform_3, window_bounds = array<i64: 1024, 32>}, {pipeline_mode = #tpu.pipeline_mode<synchronous>, transform_indices = @transform_4, window_bounds = array<i64: 1, 32>}, {pipeline_mode = #tpu.pipeline_mode<synchronous>, transform_indices = @transform_5, window_bounds = array<i64: 1, 32>}, {pipeline_mode = #tpu.pipeline_mode<synchronous>, transform_indices = @transform_6, window_bounds = array<i64: 1, 32>}, {pipeline_mode = #tpu.pipeline_mode<synchronous>, transform_indices = @transform_7, window_bounds = array<i64: 1024, 16>}, {pipeline_mode = #tpu.pipeline_mode<synchronous>, transform_indices = @transform_8, window_bounds = array<i64: 1, 16>}, {pipeline_mode = #tpu.pipeline_mode<synchronous>, transform_indices = @transform_9, window_bounds = array<i64: 1, 16>}, {pipeline_mode = #tpu.pipeline_mode<synchronous>, transform_indices = @transform_10, window_bounds = array<i64: 1, 16>}, {pipeline_mode = #tpu.pipeline_mode<synchronous>, transform_indices = @transform_11, window_bounds = array<i64: 1024, 4>}, {pipeline_mode = #tpu.pipeline_mode<synchronous>, transform_indices = @transform_12, window_bounds = array<i64: 1, 4>}, {pipeline_mode = #tpu.pipeline_mode<synchronous>, transform_indices = @transform_13, window_bounds = array<i64: 1, 4>}, {pipeline_mode = #tpu.pipeline_mode<synchronous>, transform_indices = @transform_14, window_bounds = array<i64: 1, 4>}, {pipeline_mode = #tpu.pipeline_mode<synchronous>, transform_indices = @transform_15, window_bounds = array<i64: 32, 64>}]} {
    %c0 = arith.constant 0 : index
    %c0_0 = arith.constant 0 : index
    %0 = vector.load %arg1[%c0, %c0_0] : memref<2x32xf32, #tpu.memory_space<vmem>>, vector<2x32xf32>
    %c0_1 = arith.constant 0 : index
    %c0_2 = arith.constant 0 : index
    %1 = vector.load %arg2[%c0_1, %c0_2] : memref<32x2048xf32, #tpu.memory_space<vmem>>, vector<32x2048xf32>
    %cst = arith.constant dense<0.000000e+00> : vector<2x2048xf32>
    %2 = tpu.matmul %0, %1, %cst {dimension_numbers = #tpu.dot_dimension_numbers<[1], [0], [0], [1], [0, 0, 1, 1], [], []>} : vector<2x32xf32>, vector<32x2048xf32>, vector<2x2048xf32> -> vector<2x2048xf32>
    %c0_3 = arith.constant 0 : index
    %c0_4 = arith.constant 0 : index
    %3 = vector.load %arg3[%c0_3, %c0_4] : memref<1x2048xf32, #tpu.memory_space<vmem>>, vector<1x2048xf32>
    %4 = vector.broadcast %3 : vector<1x2048xf32> to vector<2x2048xf32>
    %5 = arith.addf %2, %4 : vector<2x2048xf32>
    %cst_5 = arith.constant 0.000000e+00 : f32
    %6 = vector.broadcast %cst_5 : f32 to vector<2x2048xf32>
    %7 = arith.maximumf %5, %6 : vector<2x2048xf32>
    %8 = vector.extract_strided_slice %7 {offsets = [0, 0], sizes = [1, 128], strides = [1, 1]} : vector<2x2048xf32> to vector<1x128xf32>
    %9 = vector.extract_strided_slice %7 {offsets = [0, 128], sizes = [1, 128], strides = [1, 1]} : vector<2x2048xf32> to vector<1x128xf32>
    %10 = vector.extract_strided_slice %7 {offsets = [0, 256], sizes = [1, 128], strides = [1, 1]} : vector<2x2048xf32> to vector<1x128xf32>
    %11 = vector.extract_strided_slice %7 {offsets = [0, 384], sizes = [1, 128], strides = [1, 1]} : vector<2x2048xf32> to vector<1x128xf32>
    %12 = vector.extract_strided_slice %7 {offsets = [0, 512], sizes = [1, 128], strides = [1, 1]} : vector<2x2048xf32> to vector<1x128xf32>
    %13 = vector.extract_strided_slice %7 {offsets = [0, 640], sizes = [1, 128], strides = [1, 1]} : vector<2x2048xf32> to vector<1x128xf32>
    %14 = vector.extract_strided_slice %7 {offsets = [0, 768], sizes = [1, 128], strides = [1, 1]} : vector<2x2048xf32> to vector<1x128xf32>
    %15 = vector.extract_strided_slice %7 {offsets = [0, 896], sizes = [1, 128], strides = [1, 1]} : vector<2x2048xf32> to vector<1x128xf32>
    %16 = vector.extract_strided_slice %7 {offsets = [0, 1024], sizes = [1, 128], strides = [1, 1]} : vector<2x2048xf32> to vector<1x128xf32>
    %17 = vector.extract_strided_slice %7 {offsets = [0, 1152], sizes = [1, 128], strides = [1, 1]} : vector<2x2048xf32> to vector<1x128xf32>
    %18 = vector.extract_strided_slice %7 {offsets = [0, 1280], sizes = [1, 128], strides = [1, 1]} : vector<2x2048xf32> to vector<1x128xf32>
    %19 = vector.extract_strided_slice %7 {offsets = [0, 1408], sizes = [1, 128], strides = [1, 1]} : vector<2x2048xf32> to vector<1x128xf32>
    %20 = vector.extract_strided_slice %7 {offsets = [0, 1536], sizes = [1, 128], strides = [1, 1]} : vector<2x2048xf32> to vector<1x128xf32>
    %21 = vector.extract_strided_slice %7 {offsets = [0, 1664], sizes = [1, 128], strides = [1, 1]} : vector<2x2048xf32> to vector<1x128xf32>
    %22 = vector.extract_strided_slice %7 {offsets = [0, 1792], sizes = [1, 128], strides = [1, 1]} : vector<2x2048xf32> to vector<1x128xf32>
    %23 = vector.extract_strided_slice %7 {offsets = [0, 1920], sizes = [1, 128], strides = [1, 1]} : vector<2x2048xf32> to vector<1x128xf32>
    %24 = tpu.concatenate %8, %9, %10, %11, %12, %13, %14, %15, %16, %17, %18, %19, %20, %21, %22, %23 in 0 : vector<1x128xf32>, vector<1x128xf32>, vector<1x128xf32>, vector<1x128xf32>, vector<1x128xf32>, vector<1x128xf32>, vector<1x128xf32>, vector<1x128xf32>, vector<1x128xf32>, vector<1x128xf32>, vector<1x128xf32>, vector<1x128xf32>, vector<1x128xf32>, vector<1x128xf32>, vector<1x128xf32>, vector<1x128xf32> -> vector<16x128xf32>
    %25 = vector.extract_strided_slice %7 {offsets = [1, 0], sizes = [1, 128], strides = [1, 1]} : vector<2x2048xf32> to vector<1x128xf32>
    %26 = vector.extract_strided_slice %7 {offsets = [1, 128], sizes = [1, 128], strides = [1, 1]} : vector<2x2048xf32> to vector<1x128xf32>
    %27 = vector.extract_strided_slice %7 {offsets = [1, 256], sizes = [1, 128], strides = [1, 1]} : vector<2x2048xf32> to vector<1x128xf32>
    %28 = vector.extract_strided_slice %7 {offsets = [1, 384], sizes = [1, 128], strides = [1, 1]} : vector<2x2048xf32> to vector<1x128xf32>
    %29 = vector.extract_strided_slice %7 {offsets = [1, 512], sizes = [1, 128], strides = [1, 1]} : vector<2x2048xf32> to vector<1x128xf32>
    %30 = vector.extract_strided_slice %7 {offsets = [1, 640], sizes = [1, 128], strides = [1, 1]} : vector<2x2048xf32> to vector<1x128xf32>
    %31 = vector.extract_strided_slice %7 {offsets = [1, 768], sizes = [1, 128], strides = [1, 1]} : vector<2x2048xf32> to vector<1x128xf32>
    %32 = vector.extract_strided_slice %7 {offsets = [1, 896], sizes = [1, 128], strides = [1, 1]} : vector<2x2048xf32> to vector<1x128xf32>
    %33 = vector.extract_strided_slice %7 {offsets = [1, 1024], sizes = [1, 128], strides = [1, 1]} : vector<2x2048xf32> to vector<1x128xf32>
    %34 = vector.extract_strided_slice %7 {offsets = [1, 1152], sizes = [1, 128], strides = [1, 1]} : vector<2x2048xf32> to vector<1x128xf32>
    %35 = vector.extract_strided_slice %7 {offsets = [1, 1280], sizes = [1, 128], strides = [1, 1]} : vector<2x2048xf32> to vector<1x128xf32>
    %36 = vector.extract_strided_slice %7 {offsets = [1, 1408], sizes = [1, 128], strides = [1, 1]} : vector<2x2048xf32> to vector<1x128xf32>
    %37 = vector.extract_strided_slice %7 {offsets = [1, 1536], sizes = [1, 128], strides = [1, 1]} : vector<2x2048xf32> to vector<1x128xf32>
    %38 = vector.extract_strided_slice %7 {offsets = [1, 1664], sizes = [1, 128], strides = [1, 1]} : vector<2x2048xf32> to vector<1x128xf32>
    %39 = vector.extract_strided_slice %7 {offsets = [1, 1792], sizes = [1, 128], strides = [1, 1]} : vector<2x2048xf32> to vector<1x128xf32>
    %40 = vector.extract_strided_slice %7 {offsets = [1, 1920], sizes = [1, 128], strides = [1, 1]} : vector<2x2048xf32> to vector<1x128xf32>
    %41 = tpu.concatenate %25, %26, %27, %28, %29, %30, %31, %32, %33, %34, %35, %36, %37, %38, %39, %40 in 0 : vector<1x128xf32>, vector<1x128xf32>, vector<1x128xf32>, vector<1x128xf32>, vector<1x128xf32>, vector<1x128xf32>, vector<1x128xf32>, vector<1x128xf32>, vector<1x128xf32>, vector<1x128xf32>, vector<1x128xf32>, vector<1x128xf32>, vector<1x128xf32>, vector<1x128xf32>, vector<1x128xf32>, vector<1x128xf32> -> vector<16x128xf32>
    %cst_6 = arith.constant 0.000000e+00 : f32
    %42 = vector.broadcast %cst_6 : f32 to vector<4x32x128xf32>
    %c0_7 = arith.constant 0 : index
    %c0_8 = arith.constant 0 : index
    %c0_9 = arith.constant 0 : index
    %43 = vector.load %arg17[%c0_7, %c0_8, %c0_9] : memref<16x32x128xf32, #tpu.memory_space<vmem>>, vector<4x32x128xf32>
    tpu.vector_store %arg17[%c0_7, %c0_8, %c0_9], %42 {strides = array<i32>} : memref<16x32x128xf32, #tpu.memory_space<vmem>>, vector<4x32x128xf32>,
    %44 = vector.extract_strided_slice %24 {offsets = [0, 64], sizes = [16, 64], strides = [1, 1]} : vector<16x128xf32> to vector<16x64xf32>
    %c0_10 = arith.constant 0 : index
    %c4 = arith.constant 4 : index
    %c0_11 = arith.constant 0 : index
    %45 = vector.load %arg17[%c0_10, %c4, %c0_11] : memref<16x32x128xf32, #tpu.memory_space<vmem>>, vector<1x16x64xf32>
    %46 = vector.shape_cast %45 : vector<1x16x64xf32> to vector<16x64xf32>
    %47 = vector.shape_cast %44 : vector<16x64xf32> to vector<1x16x64xf32>
    tpu.vector_store %arg17[%c0_10, %c4, %c0_11], %47 {strides = array<i32>} : memref<16x32x128xf32, #tpu.memory_space<vmem>>, vector<1x16x64xf32>,
    %48 = vector.extract_strided_slice %24 {offsets = [0, 0], sizes = [16, 64], strides = [1, 1]} : vector<16x128xf32> to vector<16x64xf32>
    %c0_12 = arith.constant 0 : index
    %c3 = arith.constant 3 : index
    %c64 = arith.constant 64 : index
    %49 = vector.load %arg17[%c0_12, %c3, %c64] : memref<16x32x128xf32, #tpu.memory_space<vmem>>, vector<1x16x64xf32>
    %50 = vector.shape_cast %49 : vector<1x16x64xf32> to vector<16x64xf32>
    %51 = vector.shape_cast %48 : vector<16x64xf32> to vector<1x16x64xf32>
    tpu.vector_store %arg17[%c0_12, %c3, %c64], %51 {strides = array<i32>} : memref<16x32x128xf32, #tpu.memory_space<vmem>>, vector<1x16x64xf32>,
    %c1 = arith.constant 1 : index
    %c3_13 = arith.constant 3 : index
    %c0_14 = arith.constant 0 : index
    %52 = vector.load %arg17[%c1, %c3_13, %c0_14] : memref<16x32x128xf32, #tpu.memory_space<vmem>>, vector<1x16x128xf32>
    %53 = vector.shape_cast %52 : vector<1x16x128xf32> to vector<16x128xf32>
    %54 = vector.shape_cast %24 : vector<16x128xf32> to vector<1x16x128xf32>
    tpu.vector_store %arg17[%c1, %c3_13, %c0_14], %54 {strides = array<i32>} : memref<16x32x128xf32, #tpu.memory_space<vmem>>, vector<1x16x128xf32>,
    %55 = vector.extract_strided_slice %41 {offsets = [0, 64], sizes = [16, 64], strides = [1, 1]} : vector<16x128xf32> to vector<16x64xf32>
    %c2 = arith.constant 2 : index
    %c4_15 = arith.constant 4 : index
    %c0_16 = arith.constant 0 : index
    %56 = vector.load %arg17[%c2, %c4_15, %c0_16] : memref<16x32x128xf32, #tpu.memory_space<vmem>>, vector<1x16x64xf32>
    %57 = vector.shape_cast %56 : vector<1x16x64xf32> to vector<16x64xf32>
    %58 = vector.shape_cast %55 : vector<16x64xf32> to vector<1x16x64xf32>
    tpu.vector_store %arg17[%c2, %c4_15, %c0_16], %58 {strides = array<i32>} : memref<16x32x128xf32, #tpu.memory_space<vmem>>, vector<1x16x64xf32>,
    %59 = vector.extract_strided_slice %41 {offsets = [0, 0], sizes = [16, 64], strides = [1, 1]} : vector<16x128xf32> to vector<16x64xf32>
    %c2_17 = arith.constant 2 : index
    %c3_18 = arith.constant 3 : index
    %c64_19 = arith.constant 64 : index
    %60 = vector.load %arg17[%c2_17, %c3_18, %c64_19] : memref<16x32x128xf32, #tpu.memory_space<vmem>>, vector<1x16x64xf32>
    %61 = vector.shape_cast %60 : vector<1x16x64xf32> to vector<16x64xf32>
    %62 = vector.shape_cast %59 : vector<16x64xf32> to vector<1x16x64xf32>
    tpu.vector_store %arg17[%c2_17, %c3_18, %c64_19], %62 {strides = array<i32>} : memref<16x32x128xf32, #tpu.memory_space<vmem>>, vector<1x16x64xf32>,
    %c3_20 = arith.constant 3 : index
    %c3_21 = arith.constant 3 : index
    %c0_22 = arith.constant 0 : index
    %63 = vector.load %arg17[%c3_20, %c3_21, %c0_22] : memref<16x32x128xf32, #tpu.memory_space<vmem>>, vector<1x16x128xf32>
    %64 = vector.shape_cast %63 : vector<1x16x128xf32> to vector<16x128xf32>
    %65 = vector.shape_cast %41 : vector<16x128xf32> to vector<1x16x128xf32>
    tpu.vector_store %arg17[%c3_20, %c3_21, %c0_22], %65 {strides = array<i32>} : memref<16x32x128xf32, #tpu.memory_space<vmem>>, vector<1x16x128xf32>,
    %c0_23 = arith.constant 0 : index
    %c0_24 = arith.constant 0 : index
    %c0_25 = arith.constant 0 : index
    %66 = vector.load %arg17[%c0_23, %c0_24, %c0_25] : memref<16x32x128xf32, #tpu.memory_space<vmem>>, vector<4x16x128xf32>
    %67 = arith.truncf %66 : vector<4x16x128xf32> to vector<4x16x128xbf16>
    %c0_26 = arith.constant 0 : index
    %c1_27 = arith.constant 1 : index
    %c0_28 = arith.constant 0 : index
    %68 = vector.load %arg17[%c0_26, %c1_27, %c0_28] : memref<16x32x128xf32, #tpu.memory_space<vmem>>, vector<4x16x128xf32>
    %69 = arith.truncf %68 : vector<4x16x128xf32> to vector<4x16x128xbf16>
    %c0_29 = arith.constant 0 : index
    %c2_30 = arith.constant 2 : index
    %c0_31 = arith.constant 0 : index
    %70 = vector.load %arg17[%c0_29, %c2_30, %c0_31] : memref<16x32x128xf32, #tpu.memory_space<vmem>>, vector<4x16x128xf32>
    %71 = arith.truncf %70 : vector<4x16x128xf32> to vector<4x16x128xbf16>
    %c0_32 = arith.constant 0 : index
    %c3_33 = arith.constant 3 : index
    %c0_34 = arith.constant 0 : index
    %72 = vector.load %arg17[%c0_32, %c3_33, %c0_34] : memref<16x32x128xf32, #tpu.memory_space<vmem>>, vector<4x16x128xf32>
    %73 = arith.truncf %72 : vector<4x16x128xf32> to vector<4x16x128xbf16>
    %c0_35 = arith.constant 0 : index
    %c4_36 = arith.constant 4 : index
    %c0_37 = arith.constant 0 : index
    %74 = vector.load %arg17[%c0_35, %c4_36, %c0_37] : memref<16x32x128xf32, #tpu.memory_space<vmem>>, vector<4x16x128xf32>
    %75 = arith.truncf %74 : vector<4x16x128xf32> to vector<4x16x128xbf16>
    %c0_38 = arith.constant 0 : index
    %c5 = arith.constant 5 : index
    %c0_39 = arith.constant 0 : index
    %76 = vector.load %arg17[%c0_38, %c5, %c0_39] : memref<16x32x128xf32, #tpu.memory_space<vmem>>, vector<4x16x128xf32>
    %77 = arith.truncf %76 : vector<4x16x128xf32> to vector<4x16x128xbf16>
    %c0_40 = arith.constant 0 : index
    %c6 = arith.constant 6 : index
    %c0_41 = arith.constant 0 : index
    %78 = vector.load %arg17[%c0_40, %c6, %c0_41] : memref<16x32x128xf32, #tpu.memory_space<vmem>>, vector<4x16x128xf32>
    %79 = arith.truncf %78 : vector<4x16x128xf32> to vector<4x16x128xbf16>
    %c0_42 = arith.constant 0 : index
    %c7 = arith.constant 7 : index
    %c0_43 = arith.constant 0 : index
    %80 = vector.load %arg17[%c0_42, %c7, %c0_43] : memref<16x32x128xf32, #tpu.memory_space<vmem>>, vector<4x16x128xf32>
    %81 = arith.truncf %80 : vector<4x16x128xf32> to vector<4x16x128xbf16>
    %82 = tpu.concatenate %67, %69, %71, %73, %75, %77, %79, %81 in 2 : vector<4x16x128xbf16>, vector<4x16x128xbf16>, vector<4x16x128xbf16>, vector<4x16x128xbf16>, vector<4x16x128xbf16>, vector<4x16x128xbf16>, vector<4x16x128xbf16>, vector<4x16x128xbf16> -> vector<4x16x1024xbf16>
    %83 = vector.shape_cast %82 : vector<4x16x1024xbf16> to vector<64x1024xbf16>
    %c0_44 = arith.constant 0 : index
    %c0_45 = arith.constant 0 : index
    %84 = vector.load %arg4[%c0_44, %c0_45] : memref<1024x32xbf16, #tpu.memory_space<vmem>>, vector<1024x32xbf16>
    %cst_46 = arith.constant dense<0.000000e+00> : vector<64x32xf32>
    %85 = tpu.matmul %83, %84, %cst_46 {dimension_numbers = #tpu.dot_dimension_numbers<[1], [0], [0], [1], [0, 0, 1, 1], [], []>} : vector<64x1024xbf16>, vector<1024x32xbf16>, vector<64x32xf32> -> vector<64x32xf32>
    %c0_47 = arith.constant 0 : index
    %c0_48 = arith.constant 0 : index
    %86 = vector.load %arg5[%c0_47, %c0_48] : memref<1x32xf32, #tpu.memory_space<vmem>>, vector<1x32xf32>
    %87 = vector.broadcast %86 : vector<1x32xf32> to vector<64x32xf32>
    %88 = arith.addf %85, %87 : vector<64x32xf32>
    %cst_49 = arith.constant 0.000000e+00 : f32
    %89 = vector.broadcast %cst_49 : f32 to vector<64x32xf32>
    %90 = arith.maximumf %88, %89 : vector<64x32xf32>
    %cst_50 = arith.constant dense<0.000000e+00> : vector<32xf32>
    %91 = vector.multi_reduction <add>, %90, %cst_50 [0] : vector<64x32xf32> to vector<32xf32>
    %92 = vector.shape_cast %91 : vector<32xf32> to vector<1x32xf32>
    %93 = arith.mulf %90, %90 : vector<64x32xf32>
    %cst_51 = arith.constant dense<0.000000e+00> : vector<32xf32>
    %94 = vector.multi_reduction <add>, %93, %cst_51 [0] : vector<64x32xf32> to vector<32xf32>
    %95 = vector.shape_cast %94 : vector<32xf32> to vector<1x32xf32>
    %cst_52 = arith.constant 1.562500e-02 : f32
    %96 = vector.broadcast %cst_52 : f32 to vector<1x32xf32>
    %97 = arith.mulf %92, %96 : vector<1x32xf32>
    %cst_53 = arith.constant 1.562500e-02 : f32
    %98 = vector.broadcast %cst_53 : f32 to vector<1x32xf32>
    %99 = arith.mulf %95, %98 : vector<1x32xf32>
    %100 = arith.mulf %97, %97 : vector<1x32xf32>
    %101 = arith.subf %99, %100 : vector<1x32xf32>
    %102 = vector.broadcast %97 : vector<1x32xf32> to vector<64x32xf32>
    %103 = arith.subf %90, %102 : vector<64x32xf32>
    %cst_54 = arith.constant 9.99999974E-6 : f32
    %104 = vector.broadcast %cst_54 : f32 to vector<1x32xf32>
    %105 = arith.addf %101, %104 : vector<1x32xf32>
    %106 = math.rsqrt %105 : vector<1x32xf32>
    %107 = vector.broadcast %106 : vector<1x32xf32> to vector<64x32xf32>
    %108 = arith.mulf %103, %107 : vector<64x32xf32>
    %c0_55 = arith.constant 0 : index
    %c0_56 = arith.constant 0 : index
    %109 = vector.load %arg6[%c0_55, %c0_56] : memref<1x32xf32, #tpu.memory_space<vmem>>, vector<1x32xf32>
    %110 = vector.broadcast %109 : vector<1x32xf32> to vector<64x32xf32>
    %111 = arith.mulf %108, %110 : vector<64x32xf32>
    %c0_57 = arith.constant 0 : index
    %c0_58 = arith.constant 0 : index
    %112 = vector.load %arg7[%c0_57, %c0_58] : memref<1x32xf32, #tpu.memory_space<vmem>>, vector<1x32xf32>
    %113 = vector.broadcast %112 : vector<1x32xf32> to vector<64x32xf32>
    %114 = arith.addf %111, %113 : vector<64x32xf32>
    %115 = vector.extract_strided_slice %114 {offsets = [0, 0], sizes = [16, 32], strides = [1, 1]} : vector<64x32xf32> to vector<16x32xf32>
    %116 = vector.extract_strided_slice %114 {offsets = [16, 0], sizes = [16, 32], strides = [1, 1]} : vector<64x32xf32> to vector<16x32xf32>
    %117 = vector.extract_strided_slice %115 {offsets = [0, 0], sizes = [1, 32], strides = [1, 1]} : vector<16x32xf32> to vector<1x32xf32>
    %118 = vector.extract_strided_slice %116 {offsets = [0, 0], sizes = [15, 32], strides = [1, 1]} : vector<16x32xf32> to vector<15x32xf32>
    %119 = tpu.concatenate %117, %118 in 0 : vector<1x32xf32>, vector<15x32xf32> -> vector<16x32xf32>
    %cst_59 = arith.constant 2.500000e-01 : f32
    %120 = vector.broadcast %cst_59 : f32 to vector<16x32xf32>
    %121 = arith.mulf %120, %119 : vector<16x32xf32>
    %cst_60 = arith.constant 7.500000e-01 : f32
    %122 = vector.broadcast %cst_60 : f32 to vector<16x32xf32>
    %123 = arith.mulf %122, %115 : vector<16x32xf32>
    %124 = arith.addf %121, %123 : vector<16x32xf32>
    %cst_61 = arith.constant 7.500000e-01 : f32
    %125 = vector.broadcast %cst_61 : f32 to vector<16x32xf32>
    %126 = arith.mulf %125, %115 : vector<16x32xf32>
    %cst_62 = arith.constant 2.500000e-01 : f32
    %127 = vector.broadcast %cst_62 : f32 to vector<16x32xf32>
    %128 = arith.mulf %127, %116 : vector<16x32xf32>
    %129 = arith.addf %126, %128 : vector<16x32xf32>
    %130 = vector.extract_strided_slice %115 {offsets = [1, 0], sizes = [15, 32], strides = [1, 1]} : vector<16x32xf32> to vector<15x32xf32>
    %131 = vector.extract_strided_slice %116 {offsets = [15, 0], sizes = [1, 32], strides = [1, 1]} : vector<16x32xf32> to vector<1x32xf32>
    %132 = tpu.concatenate %130, %131 in 0 : vector<15x32xf32>, vector<1x32xf32> -> vector<16x32xf32>
    %cst_63 = arith.constant 2.500000e-01 : f32
    %133 = vector.broadcast %cst_63 : f32 to vector<16x32xf32>
    %134 = arith.mulf %133, %115 : vector<16x32xf32>
    %cst_64 = arith.constant 7.500000e-01 : f32
    %135 = vector.broadcast %cst_64 : f32 to vector<16x32xf32>
    %136 = arith.mulf %135, %116 : vector<16x32xf32>
    %137 = arith.addf %134, %136 : vector<16x32xf32>
    %cst_65 = arith.constant 7.500000e-01 : f32
    %138 = vector.broadcast %cst_65 : f32 to vector<16x32xf32>
    %139 = arith.mulf %138, %116 : vector<16x32xf32>
    %cst_66 = arith.constant 2.500000e-01 : f32
    %140 = vector.broadcast %cst_66 : f32 to vector<16x32xf32>
    %141 = arith.mulf %140, %132 : vector<16x32xf32>
    %142 = arith.addf %139, %141 : vector<16x32xf32>
    %143 = tpu.concatenate %124, %129, %137, %142 in 1 : vector<16x32xf32>, vector<16x32xf32>, vector<16x32xf32>, vector<16x32xf32> -> vector<16x128xf32>
    %144 = vector.extract_strided_slice %114 {offsets = [32, 0], sizes = [16, 32], strides = [1, 1]} : vector<64x32xf32> to vector<16x32xf32>
    %145 = vector.extract_strided_slice %114 {offsets = [48, 0], sizes = [16, 32], strides = [1, 1]} : vector<64x32xf32> to vector<16x32xf32>
    %146 = vector.extract_strided_slice %144 {offsets = [0, 0], sizes = [1, 32], strides = [1, 1]} : vector<16x32xf32> to vector<1x32xf32>
    %147 = vector.extract_strided_slice %145 {offsets = [0, 0], sizes = [15, 32], strides = [1, 1]} : vector<16x32xf32> to vector<15x32xf32>
    %148 = tpu.concatenate %146, %147 in 0 : vector<1x32xf32>, vector<15x32xf32> -> vector<16x32xf32>
    %cst_67 = arith.constant 2.500000e-01 : f32
    %149 = vector.broadcast %cst_67 : f32 to vector<16x32xf32>
    %150 = arith.mulf %149, %148 : vector<16x32xf32>
    %cst_68 = arith.constant 7.500000e-01 : f32
    %151 = vector.broadcast %cst_68 : f32 to vector<16x32xf32>
    %152 = arith.mulf %151, %144 : vector<16x32xf32>
    %153 = arith.addf %150, %152 : vector<16x32xf32>
    %cst_69 = arith.constant 7.500000e-01 : f32
    %154 = vector.broadcast %cst_69 : f32 to vector<16x32xf32>
    %155 = arith.mulf %154, %144 : vector<16x32xf32>
    %cst_70 = arith.constant 2.500000e-01 : f32
    %156 = vector.broadcast %cst_70 : f32 to vector<16x32xf32>
    %157 = arith.mulf %156, %145 : vector<16x32xf32>
    %158 = arith.addf %155, %157 : vector<16x32xf32>
    %159 = vector.extract_strided_slice %144 {offsets = [1, 0], sizes = [15, 32], strides = [1, 1]} : vector<16x32xf32> to vector<15x32xf32>
    %160 = vector.extract_strided_slice %145 {offsets = [15, 0], sizes = [1, 32], strides = [1, 1]} : vector<16x32xf32> to vector<1x32xf32>
    %161 = tpu.concatenate %159, %160 in 0 : vector<15x32xf32>, vector<1x32xf32> -> vector<16x32xf32>
    %cst_71 = arith.constant 2.500000e-01 : f32
    %162 = vector.broadcast %cst_71 : f32 to vector<16x32xf32>
    %163 = arith.mulf %162, %144 : vector<16x32xf32>
    %cst_72 = arith.constant 7.500000e-01 : f32
    %164 = vector.broadcast %cst_72 : f32 to vector<16x32xf32>
    %165 = arith.mulf %164, %145 : vector<16x32xf32>
    %166 = arith.addf %163, %165 : vector<16x32xf32>
    %cst_73 = arith.constant 7.500000e-01 : f32
    %167 = vector.broadcast %cst_73 : f32 to vector<16x32xf32>
    %168 = arith.mulf %167, %145 : vector<16x32xf32>
    %cst_74 = arith.constant 2.500000e-01 : f32
    %169 = vector.broadcast %cst_74 : f32 to vector<16x32xf32>
    %170 = arith.mulf %169, %161 : vector<16x32xf32>
    %171 = arith.addf %168, %170 : vector<16x32xf32>
    %172 = tpu.concatenate %153, %158, %166, %171 in 1 : vector<16x32xf32>, vector<16x32xf32>, vector<16x32xf32>, vector<16x32xf32> -> vector<16x128xf32>
    %cst_75 = arith.constant 0.000000e+00 : f32
    %173 = vector.broadcast %cst_75 : f32 to vector<8x32x128xf32>
    %c0_76 = arith.constant 0 : index
    %c0_77 = arith.constant 0 : index
    %c0_78 = arith.constant 0 : index
    %174 = vector.load %arg17[%c0_76, %c0_77, %c0_78] : memref<16x32x128xf32, #tpu.memory_space<vmem>>, vector<8x32x128xf32>
    tpu.vector_store %arg17[%c0_76, %c0_77, %c0_78], %173 {strides = array<i32>} : memref<16x32x128xf32, #tpu.memory_space<vmem>>, vector<8x32x128xf32>,
    %175 = vector.extract_strided_slice %143 {offsets = [0, 32], sizes = [16, 96], strides = [1, 1]} : vector<16x128xf32> to vector<16x96xf32>
    %c0_79 = arith.constant 0 : index
    %c4_80 = arith.constant 4 : index
    %c0_81 = arith.constant 0 : index
    %176 = vector.load %arg17[%c0_79, %c4_80, %c0_81] : memref<16x32x128xf32, #tpu.memory_space<vmem>>, vector<1x16x96xf32>
    %177 = vector.shape_cast %176 : vector<1x16x96xf32> to vector<16x96xf32>
    %178 = vector.shape_cast %175 : vector<16x96xf32> to vector<1x16x96xf32>
    tpu.vector_store %arg17[%c0_79, %c4_80, %c0_81], %178 {strides = array<i32>} : memref<16x32x128xf32, #tpu.memory_space<vmem>>, vector<1x16x96xf32>,
    %179 = vector.extract_strided_slice %143 {offsets = [0, 0], sizes = [16, 32], strides = [1, 1]} : vector<16x128xf32> to vector<16x32xf32>
    %c0_82 = arith.constant 0 : index
    %c3_83 = arith.constant 3 : index
    %c96 = arith.constant 96 : index
    %180 = vector.load %arg17[%c0_82, %c3_83, %c96] : memref<16x32x128xf32, #tpu.memory_space<vmem>>, vector<1x16x32xf32>
    %181 = vector.shape_cast %180 : vector<1x16x32xf32> to vector<16x32xf32>
    %182 = vector.shape_cast %179 : vector<16x32xf32> to vector<1x16x32xf32>
    tpu.vector_store %arg17[%c0_82, %c3_83, %c96], %182 {strides = array<i32>} : memref<16x32x128xf32, #tpu.memory_space<vmem>>, vector<1x16x32xf32>,
    %183 = vector.extract_strided_slice %143 {offsets = [0, 64], sizes = [16, 64], strides = [1, 1]} : vector<16x128xf32> to vector<16x64xf32>
    %c1_84 = arith.constant 1 : index
    %c4_85 = arith.constant 4 : index
    %c0_86 = arith.constant 0 : index
    %184 = vector.load %arg17[%c1_84, %c4_85, %c0_86] : memref<16x32x128xf32, #tpu.memory_space<vmem>>, vector<1x16x64xf32>
    %185 = vector.shape_cast %184 : vector<1x16x64xf32> to vector<16x64xf32>
    %186 = vector.shape_cast %183 : vector<16x64xf32> to vector<1x16x64xf32>
    tpu.vector_store %arg17[%c1_84, %c4_85, %c0_86], %186 {strides = array<i32>} : memref<16x32x128xf32, #tpu.memory_space<vmem>>, vector<1x16x64xf32>,
    %187 = vector.extract_strided_slice %143 {offsets = [0, 0], sizes = [16, 64], strides = [1, 1]} : vector<16x128xf32> to vector<16x64xf32>
    %c1_87 = arith.constant 1 : index
    %c3_88 = arith.constant 3 : index
    %c64_89 = arith.constant 64 : index
    %188 = vector.load %arg17[%c1_87, %c3_88, %c64_89] : memref<16x32x128xf32, #tpu.memory_space<vmem>>, vector<1x16x64xf32>
    %189 = vector.shape_cast %188 : vector<1x16x64xf32> to vector<16x64xf32>
    %190 = vector.shape_cast %187 : vector<16x64xf32> to vector<1x16x64xf32>
    tpu.vector_store %arg17[%c1_87, %c3_88, %c64_89], %190 {strides = array<i32>} : memref<16x32x128xf32, #tpu.memory_space<vmem>>, vector<1x16x64xf32>,
    %191 = vector.extract_strided_slice %143 {offsets = [0, 96], sizes = [16, 32], strides = [1, 1]} : vector<16x128xf32> to vector<16x32xf32>
    %c2_90 = arith.constant 2 : index
    %c4_91 = arith.constant 4 : index
    %c0_92 = arith.constant 0 : index
    %192 = vector.load %arg17[%c2_90, %c4_91, %c0_92] : memref<16x32x128xf32, #tpu.memory_space<vmem>>, vector<1x16x32xf32>
    %193 = vector.shape_cast %192 : vector<1x16x32xf32> to vector<16x32xf32>
    %194 = vector.shape_cast %191 : vector<16x32xf32> to vector<1x16x32xf32>
    tpu.vector_store %arg17[%c2_90, %c4_91, %c0_92], %194 {strides = array<i32>} : memref<16x32x128xf32, #tpu.memory_space<vmem>>, vector<1x16x32xf32>,
    %195 = vector.extract_strided_slice %143 {offsets = [0, 0], sizes = [16, 96], strides = [1, 1]} : vector<16x128xf32> to vector<16x96xf32>
    %c2_93 = arith.constant 2 : index
    %c3_94 = arith.constant 3 : index
    %c32 = arith.constant 32 : index
    %196 = vector.load %arg17[%c2_93, %c3_94, %c32] : memref<16x32x128xf32, #tpu.memory_space<vmem>>, vector<1x16x96xf32>
    %197 = vector.shape_cast %196 : vector<1x16x96xf32> to vector<16x96xf32>
    %198 = vector.shape_cast %195 : vector<16x96xf32> to vector<1x16x96xf32>
    tpu.vector_store %arg17[%c2_93, %c3_94, %c32], %198 {strides = array<i32>} : memref<16x32x128xf32, #tpu.memory_space<vmem>>, vector<1x16x96xf32>,
    %c3_95 = arith.constant 3 : index
    %c3_96 = arith.constant 3 : index
    %c0_97 = arith.constant 0 : index
    %199 = vector.load %arg17[%c3_95, %c3_96, %c0_97] : memref<16x32x128xf32, #tpu.memory_space<vmem>>, vector<1x16x128xf32>
    %200 = vector.shape_cast %199 : vector<1x16x128xf32> to vector<16x128xf32>
    %201 = vector.shape_cast %143 : vector<16x128xf32> to vector<1x16x128xf32>
    tpu.vector_store %arg17[%c3_95, %c3_96, %c0_97], %201 {strides = array<i32>} : memref<16x32x128xf32, #tpu.memory_space<vmem>>, vector<1x16x128xf32>,
    %202 = vector.extract_strided_slice %172 {offsets = [0, 32], sizes = [16, 96], strides = [1, 1]} : vector<16x128xf32> to vector<16x96xf32>
    %c4_98 = arith.constant 4 : index
    %c4_99 = arith.constant 4 : index
    %c0_100 = arith.constant 0 : index
    %203 = vector.load %arg17[%c4_98, %c4_99, %c0_100] : memref<16x32x128xf32, #tpu.memory_space<vmem>>, vector<1x16x96xf32>
    %204 = vector.shape_cast %203 : vector<1x16x96xf32> to vector<16x96xf32>
    %205 = vector.shape_cast %202 : vector<16x96xf32> to vector<1x16x96xf32>
    tpu.vector_store %arg17[%c4_98, %c4_99, %c0_100], %205 {strides = array<i32>} : memref<16x32x128xf32, #tpu.memory_space<vmem>>, vector<1x16x96xf32>,
    %206 = vector.extract_strided_slice %172 {offsets = [0, 0], sizes = [16, 32], strides = [1, 1]} : vector<16x128xf32> to vector<16x32xf32>
    %c4_101 = arith.constant 4 : index
    %c3_102 = arith.constant 3 : index
    %c96_103 = arith.constant 96 : index
    %207 = vector.load %arg17[%c4_101, %c3_102, %c96_103] : memref<16x32x128xf32, #tpu.memory_space<vmem>>, vector<1x16x32xf32>
    %208 = vector.shape_cast %207 : vector<1x16x32xf32> to vector<16x32xf32>
    %209 = vector.shape_cast %206 : vector<16x32xf32> to vector<1x16x32xf32>
    tpu.vector_store %arg17[%c4_101, %c3_102, %c96_103], %209 {strides = array<i32>} : memref<16x32x128xf32, #tpu.memory_space<vmem>>, vector<1x16x32xf32>,
    %210 = vector.extract_strided_slice %172 {offsets = [0, 64], sizes = [16, 64], strides = [1, 1]} : vector<16x128xf32> to vector<16x64xf32>
    %c5_104 = arith.constant 5 : index
    %c4_105 = arith.constant 4 : index
    %c0_106 = arith.constant 0 : index
    %211 = vector.load %arg17[%c5_104, %c4_105, %c0_106] : memref<16x32x128xf32, #tpu.memory_space<vmem>>, vector<1x16x64xf32>
    %212 = vector.shape_cast %211 : vector<1x16x64xf32> to vector<16x64xf32>
    %213 = vector.shape_cast %210 : vector<16x64xf32> to vector<1x16x64xf32>
    tpu.vector_store %arg17[%c5_104, %c4_105, %c0_106], %213 {strides = array<i32>} : memref<16x32x128xf32, #tpu.memory_space<vmem>>, vector<1x16x64xf32>,
    %214 = vector.extract_strided_slice %172 {offsets = [0, 0], sizes = [16, 64], strides = [1, 1]} : vector<16x128xf32> to vector<16x64xf32>
    %c5_107 = arith.constant 5 : index
    %c3_108 = arith.constant 3 : index
    %c64_109 = arith.constant 64 : index
    %215 = vector.load %arg17[%c5_107, %c3_108, %c64_109] : memref<16x32x128xf32, #tpu.memory_space<vmem>>, vector<1x16x64xf32>
    %216 = vector.shape_cast %215 : vector<1x16x64xf32> to vector<16x64xf32>
    %217 = vector.shape_cast %214 : vector<16x64xf32> to vector<1x16x64xf32>
    tpu.vector_store %arg17[%c5_107, %c3_108, %c64_109], %217 {strides = array<i32>} : memref<16x32x128xf32, #tpu.memory_space<vmem>>, vector<1x16x64xf32>,
    %218 = vector.extract_strided_slice %172 {offsets = [0, 96], sizes = [16, 32], strides = [1, 1]} : vector<16x128xf32> to vector<16x32xf32>
    %c6_110 = arith.constant 6 : index
    %c4_111 = arith.constant 4 : index
    %c0_112 = arith.constant 0 : index
    %219 = vector.load %arg17[%c6_110, %c4_111, %c0_112] : memref<16x32x128xf32, #tpu.memory_space<vmem>>, vector<1x16x32xf32>
    %220 = vector.shape_cast %219 : vector<1x16x32xf32> to vector<16x32xf32>
    %221 = vector.shape_cast %218 : vector<16x32xf32> to vector<1x16x32xf32>
    tpu.vector_store %arg17[%c6_110, %c4_111, %c0_112], %221 {strides = array<i32>} : memref<16x32x128xf32, #tpu.memory_space<vmem>>, vector<1x16x32xf32>,
    %222 = vector.extract_strided_slice %172 {offsets = [0, 0], sizes = [16, 96], strides = [1, 1]} : vector<16x128xf32> to vector<16x96xf32>
    %c6_113 = arith.constant 6 : index
    %c3_114 = arith.constant 3 : index
    %c32_115 = arith.constant 32 : index
    %223 = vector.load %arg17[%c6_113, %c3_114, %c32_115] : memref<16x32x128xf32, #tpu.memory_space<vmem>>, vector<1x16x96xf32>
    %224 = vector.shape_cast %223 : vector<1x16x96xf32> to vector<16x96xf32>
    %225 = vector.shape_cast %222 : vector<16x96xf32> to vector<1x16x96xf32>
    tpu.vector_store %arg17[%c6_113, %c3_114, %c32_115], %225 {strides = array<i32>} : memref<16x32x128xf32, #tpu.memory_space<vmem>>, vector<1x16x96xf32>,
    %c7_116 = arith.constant 7 : index
    %c3_117 = arith.constant 3 : index
    %c0_118 = arith.constant 0 : index
    %226 = vector.load %arg17[%c7_116, %c3_117, %c0_118] : memref<16x32x128xf32, #tpu.memory_space<vmem>>, vector<1x16x128xf32>
    %227 = vector.shape_cast %226 : vector<1x16x128xf32> to vector<16x128xf32>
    %228 = vector.shape_cast %172 : vector<16x128xf32> to vector<1x16x128xf32>
    tpu.vector_store %arg17[%c7_116, %c3_117, %c0_118], %228 {strides = array<i32>} : memref<16x32x128xf32, #tpu.memory_space<vmem>>, vector<1x16x128xf32>,
    %c0_119 = arith.constant 0 : index
    %c0_120 = arith.constant 0 : index
    %c0_121 = arith.constant 0 : index
    %229 = vector.load %arg17[%c0_119, %c0_120, %c0_121] : memref<16x32x128xf32, #tpu.memory_space<vmem>>, vector<8x16x128xf32>
    %230 = arith.truncf %229 : vector<8x16x128xf32> to vector<8x16x128xbf16>
    %c0_122 = arith.constant 0 : index
    %c1_123 = arith.constant 1 : index
    %c0_124 = arith.constant 0 : index
    %231 = vector.load %arg17[%c0_122, %c1_123, %c0_124] : memref<16x32x128xf32, #tpu.memory_space<vmem>>, vector<8x16x128xf32>
    %232 = arith.truncf %231 : vector<8x16x128xf32> to vector<8x16x128xbf16>
    %c0_125 = arith.constant 0 : index
    %c2_126 = arith.constant 2 : index
    %c0_127 = arith.constant 0 : index
    %233 = vector.load %arg17[%c0_125, %c2_126, %c0_127] : memref<16x32x128xf32, #tpu.memory_space<vmem>>, vector<8x16x128xf32>
    %234 = arith.truncf %233 : vector<8x16x128xf32> to vector<8x16x128xbf16>
    %c0_128 = arith.constant 0 : index
    %c3_129 = arith.constant 3 : index
    %c0_130 = arith.constant 0 : index
    %235 = vector.load %arg17[%c0_128, %c3_129, %c0_130] : memref<16x32x128xf32, #tpu.memory_space<vmem>>, vector<8x16x128xf32>
    %236 = arith.truncf %235 : vector<8x16x128xf32> to vector<8x16x128xbf16>
    %c0_131 = arith.constant 0 : index
    %c4_132 = arith.constant 4 : index
    %c0_133 = arith.constant 0 : index
    %237 = vector.load %arg17[%c0_131, %c4_132, %c0_133] : memref<16x32x128xf32, #tpu.memory_space<vmem>>, vector<8x16x128xf32>
    %238 = arith.truncf %237 : vector<8x16x128xf32> to vector<8x16x128xbf16>
    %c0_134 = arith.constant 0 : index
    %c5_135 = arith.constant 5 : index
    %c0_136 = arith.constant 0 : index
    %239 = vector.load %arg17[%c0_134, %c5_135, %c0_136] : memref<16x32x128xf32, #tpu.memory_space<vmem>>, vector<8x16x128xf32>
    %240 = arith.truncf %239 : vector<8x16x128xf32> to vector<8x16x128xbf16>
    %c0_137 = arith.constant 0 : index
    %c6_138 = arith.constant 6 : index
    %c0_139 = arith.constant 0 : index
    %241 = vector.load %arg17[%c0_137, %c6_138, %c0_139] : memref<16x32x128xf32, #tpu.memory_space<vmem>>, vector<8x16x128xf32>
    %242 = arith.truncf %241 : vector<8x16x128xf32> to vector<8x16x128xbf16>
    %c0_140 = arith.constant 0 : index
    %c7_141 = arith.constant 7 : index
    %c0_142 = arith.constant 0 : index
    %243 = vector.load %arg17[%c0_140, %c7_141, %c0_142] : memref<16x32x128xf32, #tpu.memory_space<vmem>>, vector<8x16x128xf32>
    %244 = arith.truncf %243 : vector<8x16x128xf32> to vector<8x16x128xbf16>
    %245 = tpu.concatenate %230, %232, %234, %236, %238, %240, %242, %244 in 2 : vector<8x16x128xbf16>, vector<8x16x128xbf16>, vector<8x16x128xbf16>, vector<8x16x128xbf16>, vector<8x16x128xbf16>, vector<8x16x128xbf16>, vector<8x16x128xbf16>, vector<8x16x128xbf16> -> vector<8x16x1024xbf16>
    %246 = vector.shape_cast %245 : vector<8x16x1024xbf16> to vector<128x1024xbf16>
    %c0_143 = arith.constant 0 : index
    %c0_144 = arith.constant 0 : index
    %247 = vector.load %arg8[%c0_143, %c0_144] : memref<1024x16xbf16, #tpu.memory_space<vmem>>, vector<1024x16xbf16>
    %cst_145 = arith.constant dense<0.000000e+00> : vector<128x16xf32>
    %248 = tpu.matmul %246, %247, %cst_145 {dimension_numbers = #tpu.dot_dimension_numbers<[1], [0], [0], [1], [0, 0, 1, 1], [], []>} : vector<128x1024xbf16>, vector<1024x16xbf16>, vector<128x16xf32> -> vector<128x16xf32>
    %c0_146 = arith.constant 0 : index
    %c0_147 = arith.constant 0 : index
    %249 = vector.load %arg9[%c0_146, %c0_147] : memref<1x16xf32, #tpu.memory_space<vmem>>, vector<1x16xf32>
    %250 = vector.broadcast %249 : vector<1x16xf32> to vector<128x16xf32>
    %251 = arith.addf %248, %250 : vector<128x16xf32>
    %cst_148 = arith.constant 0.000000e+00 : f32
    %252 = vector.broadcast %cst_148 : f32 to vector<128x16xf32>
    %253 = arith.maximumf %251, %252 : vector<128x16xf32>
    %cst_149 = arith.constant dense<0.000000e+00> : vector<16xf32>
    %254 = vector.multi_reduction <add>, %253, %cst_149 [0] : vector<128x16xf32> to vector<16xf32>
    %255 = vector.shape_cast %254 : vector<16xf32> to vector<1x16xf32>
    %256 = arith.mulf %253, %253 : vector<128x16xf32>
    %cst_150 = arith.constant dense<0.000000e+00> : vector<16xf32>
    %257 = vector.multi_reduction <add>, %256, %cst_150 [0] : vector<128x16xf32> to vector<16xf32>
    %258 = vector.shape_cast %257 : vector<16xf32> to vector<1x16xf32>
    %cst_151 = arith.constant 7.812500e-03 : f32
    %259 = vector.broadcast %cst_151 : f32 to vector<1x16xf32>
    %260 = arith.mulf %255, %259 : vector<1x16xf32>
    %cst_152 = arith.constant 7.812500e-03 : f32
    %261 = vector.broadcast %cst_152 : f32 to vector<1x16xf32>
    %262 = arith.mulf %258, %261 : vector<1x16xf32>
    %263 = arith.mulf %260, %260 : vector<1x16xf32>
    %264 = arith.subf %262, %263 : vector<1x16xf32>
    %265 = vector.broadcast %260 : vector<1x16xf32> to vector<128x16xf32>
    %266 = arith.subf %253, %265 : vector<128x16xf32>
    %cst_153 = arith.constant 9.99999974E-6 : f32
    %267 = vector.broadcast %cst_153 : f32 to vector<1x16xf32>
    %268 = arith.addf %264, %267 : vector<1x16xf32>
    %269 = math.rsqrt %268 : vector<1x16xf32>
    %270 = vector.broadcast %269 : vector<1x16xf32> to vector<128x16xf32>
    %271 = arith.mulf %266, %270 : vector<128x16xf32>
    %c0_154 = arith.constant 0 : index
    %c0_155 = arith.constant 0 : index
    %272 = vector.load %arg10[%c0_154, %c0_155] : memref<1x16xf32, #tpu.memory_space<vmem>>, vector<1x16xf32>
    %273 = vector.broadcast %272 : vector<1x16xf32> to vector<128x16xf32>
    %274 = arith.mulf %271, %273 : vector<128x16xf32>
    %c0_156 = arith.constant 0 : index
    %c0_157 = arith.constant 0 : index
    %275 = vector.load %arg11[%c0_156, %c0_157] : memref<1x16xf32, #tpu.memory_space<vmem>>, vector<1x16xf32>
    %276 = vector.broadcast %275 : vector<1x16xf32> to vector<128x16xf32>
    %277 = arith.addf %274, %276 : vector<128x16xf32>
    %278 = vector.extract_strided_slice %277 {offsets = [0, 0], sizes = [16, 16], strides = [1, 1]} : vector<128x16xf32> to vector<16x16xf32>
    %279 = vector.extract_strided_slice %277 {offsets = [16, 0], sizes = [16, 16], strides = [1, 1]} : vector<128x16xf32> to vector<16x16xf32>
    %280 = vector.extract_strided_slice %277 {offsets = [32, 0], sizes = [16, 16], strides = [1, 1]} : vector<128x16xf32> to vector<16x16xf32>
    %281 = vector.extract_strided_slice %277 {offsets = [48, 0], sizes = [16, 16], strides = [1, 1]} : vector<128x16xf32> to vector<16x16xf32>
    %282 = vector.extract_strided_slice %278 {offsets = [0, 0], sizes = [1, 16], strides = [1, 1]} : vector<16x16xf32> to vector<1x16xf32>
    %283 = vector.extract_strided_slice %281 {offsets = [0, 0], sizes = [15, 16], strides = [1, 1]} : vector<16x16xf32> to vector<15x16xf32>
    %284 = tpu.concatenate %282, %283 in 0 : vector<1x16xf32>, vector<15x16xf32> -> vector<16x16xf32>
    %cst_158 = arith.constant 2.500000e-01 : f32
    %285 = vector.broadcast %cst_158 : f32 to vector<16x16xf32>
    %286 = arith.mulf %285, %284 : vector<16x16xf32>
    %cst_159 = arith.constant 7.500000e-01 : f32
    %287 = vector.broadcast %cst_159 : f32 to vector<16x16xf32>
    %288 = arith.mulf %287, %278 : vector<16x16xf32>
    %289 = arith.addf %286, %288 : vector<16x16xf32>
    %cst_160 = arith.constant 7.500000e-01 : f32
    %290 = vector.broadcast %cst_160 : f32 to vector<16x16xf32>
    %291 = arith.mulf %290, %278 : vector<16x16xf32>
    %cst_161 = arith.constant 2.500000e-01 : f32
    %292 = vector.broadcast %cst_161 : f32 to vector<16x16xf32>
    %293 = arith.mulf %292, %279 : vector<16x16xf32>
    %294 = arith.addf %291, %293 : vector<16x16xf32>
    %cst_162 = arith.constant 2.500000e-01 : f32
    %295 = vector.broadcast %cst_162 : f32 to vector<16x16xf32>
    %296 = arith.mulf %295, %278 : vector<16x16xf32>
    %cst_163 = arith.constant 7.500000e-01 : f32
    %297 = vector.broadcast %cst_163 : f32 to vector<16x16xf32>
    %298 = arith.mulf %297, %279 : vector<16x16xf32>
    %299 = arith.addf %296, %298 : vector<16x16xf32>
    %cst_164 = arith.constant 7.500000e-01 : f32
    %300 = vector.broadcast %cst_164 : f32 to vector<16x16xf32>
    %301 = arith.mulf %300, %279 : vector<16x16xf32>
    %cst_165 = arith.constant 2.500000e-01 : f32
    %302 = vector.broadcast %cst_165 : f32 to vector<16x16xf32>
    %303 = arith.mulf %302, %280 : vector<16x16xf32>
    %304 = arith.addf %301, %303 : vector<16x16xf32>
    %cst_166 = arith.constant 2.500000e-01 : f32
    %305 = vector.broadcast %cst_166 : f32 to vector<16x16xf32>
    %306 = arith.mulf %305, %279 : vector<16x16xf32>
    %cst_167 = arith.constant 7.500000e-01 : f32
    %307 = vector.broadcast %cst_167 : f32 to vector<16x16xf32>
    %308 = arith.mulf %307, %280 : vector<16x16xf32>
    %309 = arith.addf %306, %308 : vector<16x16xf32>
    %cst_168 = arith.constant 7.500000e-01 : f32
    %310 = vector.broadcast %cst_168 : f32 to vector<16x16xf32>
    %311 = arith.mulf %310, %280 : vector<16x16xf32>
    %cst_169 = arith.constant 2.500000e-01 : f32
    %312 = vector.broadcast %cst_169 : f32 to vector<16x16xf32>
    %313 = arith.mulf %312, %281 : vector<16x16xf32>
    %314 = arith.addf %311, %313 : vector<16x16xf32>
    %315 = vector.extract_strided_slice %278 {offsets = [1, 0], sizes = [15, 16], strides = [1, 1]} : vector<16x16xf32> to vector<15x16xf32>
    %316 = vector.extract_strided_slice %281 {offsets = [15, 0], sizes = [1, 16], strides = [1, 1]} : vector<16x16xf32> to vector<1x16xf32>
    %317 = tpu.concatenate %315, %316 in 0 : vector<15x16xf32>, vector<1x16xf32> -> vector<16x16xf32>
    %cst_170 = arith.constant 2.500000e-01 : f32
    %318 = vector.broadcast %cst_170 : f32 to vector<16x16xf32>
    %319 = arith.mulf %318, %280 : vector<16x16xf32>
    %cst_171 = arith.constant 7.500000e-01 : f32
    %320 = vector.broadcast %cst_171 : f32 to vector<16x16xf32>
    %321 = arith.mulf %320, %281 : vector<16x16xf32>
    %322 = arith.addf %319, %321 : vector<16x16xf32>
    %cst_172 = arith.constant 7.500000e-01 : f32
    %323 = vector.broadcast %cst_172 : f32 to vector<16x16xf32>
    %324 = arith.mulf %323, %281 : vector<16x16xf32>
    %cst_173 = arith.constant 2.500000e-01 : f32
    %325 = vector.broadcast %cst_173 : f32 to vector<16x16xf32>
    %326 = arith.mulf %325, %317 : vector<16x16xf32>
    %327 = arith.addf %324, %326 : vector<16x16xf32>
    %328 = tpu.concatenate %289, %294, %299, %304, %309, %314, %322, %327 in 1 : vector<16x16xf32>, vector<16x16xf32>, vector<16x16xf32>, vector<16x16xf32>, vector<16x16xf32>, vector<16x16xf32>, vector<16x16xf32>, vector<16x16xf32> -> vector<16x128xf32>
    %329 = vector.extract_strided_slice %277 {offsets = [64, 0], sizes = [16, 16], strides = [1, 1]} : vector<128x16xf32> to vector<16x16xf32>
    %330 = vector.extract_strided_slice %277 {offsets = [80, 0], sizes = [16, 16], strides = [1, 1]} : vector<128x16xf32> to vector<16x16xf32>
    %331 = vector.extract_strided_slice %277 {offsets = [96, 0], sizes = [16, 16], strides = [1, 1]} : vector<128x16xf32> to vector<16x16xf32>
    %332 = vector.extract_strided_slice %277 {offsets = [112, 0], sizes = [16, 16], strides = [1, 1]} : vector<128x16xf32> to vector<16x16xf32>
    %333 = vector.extract_strided_slice %329 {offsets = [0, 0], sizes = [1, 16], strides = [1, 1]} : vector<16x16xf32> to vector<1x16xf32>
    %334 = vector.extract_strided_slice %332 {offsets = [0, 0], sizes = [15, 16], strides = [1, 1]} : vector<16x16xf32> to vector<15x16xf32>
    %335 = tpu.concatenate %333, %334 in 0 : vector<1x16xf32>, vector<15x16xf32> -> vector<16x16xf32>
    %cst_174 = arith.constant 2.500000e-01 : f32
    %336 = vector.broadcast %cst_174 : f32 to vector<16x16xf32>
    %337 = arith.mulf %336, %335 : vector<16x16xf32>
    %cst_175 = arith.constant 7.500000e-01 : f32
    %338 = vector.broadcast %cst_175 : f32 to vector<16x16xf32>
    %339 = arith.mulf %338, %329 : vector<16x16xf32>
    %340 = arith.addf %337, %339 : vector<16x16xf32>
    %cst_176 = arith.constant 7.500000e-01 : f32
    %341 = vector.broadcast %cst_176 : f32 to vector<16x16xf32>
    %342 = arith.mulf %341, %329 : vector<16x16xf32>
    %cst_177 = arith.constant 2.500000e-01 : f32
    %343 = vector.broadcast %cst_177 : f32 to vector<16x16xf32>
    %344 = arith.mulf %343, %330 : vector<16x16xf32>
    %345 = arith.addf %342, %344 : vector<16x16xf32>
    %cst_178 = arith.constant 2.500000e-01 : f32
    %346 = vector.broadcast %cst_178 : f32 to vector<16x16xf32>
    %347 = arith.mulf %346, %329 : vector<16x16xf32>
    %cst_179 = arith.constant 7.500000e-01 : f32
    %348 = vector.broadcast %cst_179 : f32 to vector<16x16xf32>
    %349 = arith.mulf %348, %330 : vector<16x16xf32>
    %350 = arith.addf %347, %349 : vector<16x16xf32>
    %cst_180 = arith.constant 7.500000e-01 : f32
    %351 = vector.broadcast %cst_180 : f32 to vector<16x16xf32>
    %352 = arith.mulf %351, %330 : vector<16x16xf32>
    %cst_181 = arith.constant 2.500000e-01 : f32
    %353 = vector.broadcast %cst_181 : f32 to vector<16x16xf32>
    %354 = arith.mulf %353, %331 : vector<16x16xf32>
    %355 = arith.addf %352, %354 : vector<16x16xf32>
    %cst_182 = arith.constant 2.500000e-01 : f32
    %356 = vector.broadcast %cst_182 : f32 to vector<16x16xf32>
    %357 = arith.mulf %356, %330 : vector<16x16xf32>
    %cst_183 = arith.constant 7.500000e-01 : f32
    %358 = vector.broadcast %cst_183 : f32 to vector<16x16xf32>
    %359 = arith.mulf %358, %331 : vector<16x16xf32>
    %360 = arith.addf %357, %359 : vector<16x16xf32>
    %cst_184 = arith.constant 7.500000e-01 : f32
    %361 = vector.broadcast %cst_184 : f32 to vector<16x16xf32>
    %362 = arith.mulf %361, %331 : vector<16x16xf32>
    %cst_185 = arith.constant 2.500000e-01 : f32
    %363 = vector.broadcast %cst_185 : f32 to vector<16x16xf32>
    %364 = arith.mulf %363, %332 : vector<16x16xf32>
    %365 = arith.addf %362, %364 : vector<16x16xf32>
    %366 = vector.extract_strided_slice %329 {offsets = [1, 0], sizes = [15, 16], strides = [1, 1]} : vector<16x16xf32> to vector<15x16xf32>
    %367 = vector.extract_strided_slice %332 {offsets = [15, 0], sizes = [1, 16], strides = [1, 1]} : vector<16x16xf32> to vector<1x16xf32>
    %368 = tpu.concatenate %366, %367 in 0 : vector<15x16xf32>, vector<1x16xf32> -> vector<16x16xf32>
    %cst_186 = arith.constant 2.500000e-01 : f32
    %369 = vector.broadcast %cst_186 : f32 to vector<16x16xf32>
    %370 = arith.mulf %369, %331 : vector<16x16xf32>
    %cst_187 = arith.constant 7.500000e-01 : f32
    %371 = vector.broadcast %cst_187 : f32 to vector<16x16xf32>
    %372 = arith.mulf %371, %332 : vector<16x16xf32>
    %373 = arith.addf %370, %372 : vector<16x16xf32>
    %cst_188 = arith.constant 7.500000e-01 : f32
    %374 = vector.broadcast %cst_188 : f32 to vector<16x16xf32>
    %375 = arith.mulf %374, %332 : vector<16x16xf32>
    %cst_189 = arith.constant 2.500000e-01 : f32
    %376 = vector.broadcast %cst_189 : f32 to vector<16x16xf32>
    %377 = arith.mulf %376, %368 : vector<16x16xf32>
    %378 = arith.addf %375, %377 : vector<16x16xf32>
    %379 = tpu.concatenate %340, %345, %350, %355, %360, %365, %373, %378 in 1 : vector<16x16xf32>, vector<16x16xf32>, vector<16x16xf32>, vector<16x16xf32>, vector<16x16xf32>, vector<16x16xf32>, vector<16x16xf32>, vector<16x16xf32> -> vector<16x128xf32>
    %cst_190 = arith.constant 0.000000e+00 : f32
    %380 = vector.broadcast %cst_190 : f32 to vector<16x32x128xf32>
    %c0_191 = arith.constant 0 : index
    %c0_192 = arith.constant 0 : index
    %c0_193 = arith.constant 0 : index
    %381 = vector.load %arg17[%c0_191, %c0_192, %c0_193] : memref<16x32x128xf32, #tpu.memory_space<vmem>>, vector<16x32x128xf32>
    tpu.vector_store %arg17[%c0_191, %c0_192, %c0_193], %380 {strides = array<i32>} : memref<16x32x128xf32, #tpu.memory_space<vmem>>, vector<16x32x128xf32>,
    %382 = vector.extract_strided_slice %328 {offsets = [0, 16], sizes = [16, 112], strides = [1, 1]} : vector<16x128xf32> to vector<16x112xf32>
    %c0_194 = arith.constant 0 : index
    %c4_195 = arith.constant 4 : index
    %c0_196 = arith.constant 0 : index
    %383 = vector.load %arg17[%c0_194, %c4_195, %c0_196] : memref<16x32x128xf32, #tpu.memory_space<vmem>>, vector<1x16x112xf32>
    %384 = vector.shape_cast %383 : vector<1x16x112xf32> to vector<16x112xf32>
    %385 = vector.shape_cast %382 : vector<16x112xf32> to vector<1x16x112xf32>
    tpu.vector_store %arg17[%c0_194, %c4_195, %c0_196], %385 {strides = array<i32>} : memref<16x32x128xf32, #tpu.memory_space<vmem>>, vector<1x16x112xf32>,
    %386 = vector.extract_strided_slice %328 {offsets = [0, 0], sizes = [16, 16], strides = [1, 1]} : vector<16x128xf32> to vector<16x16xf32>
    %c0_197 = arith.constant 0 : index
    %c3_198 = arith.constant 3 : index
    %c112 = arith.constant 112 : index
    %387 = vector.load %arg17[%c0_197, %c3_198, %c112] : memref<16x32x128xf32, #tpu.memory_space<vmem>>, vector<1x16x16xf32>
    %388 = vector.shape_cast %387 : vector<1x16x16xf32> to vector<16x16xf32>
    %389 = vector.shape_cast %386 : vector<16x16xf32> to vector<1x16x16xf32>
    tpu.vector_store %arg17[%c0_197, %c3_198, %c112], %389 {strides = array<i32>} : memref<16x32x128xf32, #tpu.memory_space<vmem>>, vector<1x16x16xf32>,
    %390 = vector.extract_strided_slice %328 {offsets = [0, 32], sizes = [16, 96], strides = [1, 1]} : vector<16x128xf32> to vector<16x96xf32>
    %c1_199 = arith.constant 1 : index
    %c4_200 = arith.constant 4 : index
    %c0_201 = arith.constant 0 : index
    %391 = vector.load %arg17[%c1_199, %c4_200, %c0_201] : memref<16x32x128xf32, #tpu.memory_space<vmem>>, vector<1x16x96xf32>
    %392 = vector.shape_cast %391 : vector<1x16x96xf32> to vector<16x96xf32>
    %393 = vector.shape_cast %390 : vector<16x96xf32> to vector<1x16x96xf32>
    tpu.vector_store %arg17[%c1_199, %c4_200, %c0_201], %393 {strides = array<i32>} : memref<16x32x128xf32, #tpu.memory_space<vmem>>, vector<1x16x96xf32>,
    %394 = vector.extract_strided_slice %328 {offsets = [0, 0], sizes = [16, 32], strides = [1, 1]} : vector<16x128xf32> to vector<16x32xf32>
    %c1_202 = arith.constant 1 : index
    %c3_203 = arith.constant 3 : index
    %c96_204 = arith.constant 96 : index
    %395 = vector.load %arg17[%c1_202, %c3_203, %c96_204] : memref<16x32x128xf32, #tpu.memory_space<vmem>>, vector<1x16x32xf32>
    %396 = vector.shape_cast %395 : vector<1x16x32xf32> to vector<16x32xf32>
    %397 = vector.shape_cast %394 : vector<16x32xf32> to vector<1x16x32xf32>
    tpu.vector_store %arg17[%c1_202, %c3_203, %c96_204], %397 {strides = array<i32>} : memref<16x32x128xf32, #tpu.memory_space<vmem>>, vector<1x16x32xf32>,
    %398 = vector.extract_strided_slice %328 {offsets = [0, 48], sizes = [16, 80], strides = [1, 1]} : vector<16x128xf32> to vector<16x80xf32>
    %c2_205 = arith.constant 2 : index
    %c4_206 = arith.constant 4 : index
    %c0_207 = arith.constant 0 : index
    %399 = vector.load %arg17[%c2_205, %c4_206, %c0_207] : memref<16x32x128xf32, #tpu.memory_space<vmem>>, vector<1x16x80xf32>
    %400 = vector.shape_cast %399 : vector<1x16x80xf32> to vector<16x80xf32>
    %401 = vector.shape_cast %398 : vector<16x80xf32> to vector<1x16x80xf32>
    tpu.vector_store %arg17[%c2_205, %c4_206, %c0_207], %401 {strides = array<i32>} : memref<16x32x128xf32, #tpu.memory_space<vmem>>, vector<1x16x80xf32>,
    %402 = vector.extract_strided_slice %328 {offsets = [0, 0], sizes = [16, 48], strides = [1, 1]} : vector<16x128xf32> to vector<16x48xf32>
    %c2_208 = arith.constant 2 : index
    %c3_209 = arith.constant 3 : index
    %c80 = arith.constant 80 : index
    %403 = vector.load %arg17[%c2_208, %c3_209, %c80] : memref<16x32x128xf32, #tpu.memory_space<vmem>>, vector<1x16x48xf32>
    %404 = vector.shape_cast %403 : vector<1x16x48xf32> to vector<16x48xf32>
    %405 = vector.shape_cast %402 : vector<16x48xf32> to vector<1x16x48xf32>
    tpu.vector_store %arg17[%c2_208, %c3_209, %c80], %405 {strides = array<i32>} : memref<16x32x128xf32, #tpu.memory_space<vmem>>, vector<1x16x48xf32>,
    %406 = vector.extract_strided_slice %328 {offsets = [0, 64], sizes = [16, 64], strides = [1, 1]} : vector<16x128xf32> to vector<16x64xf32>
    %c3_210 = arith.constant 3 : index
    %c4_211 = arith.constant 4 : index
    %c0_212 = arith.constant 0 : index
    %407 = vector.load %arg17[%c3_210, %c4_211, %c0_212] : memref<16x32x128xf32, #tpu.memory_space<vmem>>, vector<1x16x64xf32>
    %408 = vector.shape_cast %407 : vector<1x16x64xf32> to vector<16x64xf32>
    %409 = vector.shape_cast %406 : vector<16x64xf32> to vector<1x16x64xf32>
    tpu.vector_store %arg17[%c3_210, %c4_211, %c0_212], %409 {strides = array<i32>} : memref<16x32x128xf32, #tpu.memory_space<vmem>>, vector<1x16x64xf32>,
    %410 = vector.extract_strided_slice %328 {offsets = [0, 0], sizes = [16, 64], strides = [1, 1]} : vector<16x128xf32> to vector<16x64xf32>
    %c3_213 = arith.constant 3 : index
    %c3_214 = arith.constant 3 : index
    %c64_215 = arith.constant 64 : index
    %411 = vector.load %arg17[%c3_213, %c3_214, %c64_215] : memref<16x32x128xf32, #tpu.memory_space<vmem>>, vector<1x16x64xf32>
    %412 = vector.shape_cast %411 : vector<1x16x64xf32> to vector<16x64xf32>
    %413 = vector.shape_cast %410 : vector<16x64xf32> to vector<1x16x64xf32>
    tpu.vector_store %arg17[%c3_213, %c3_214, %c64_215], %413 {strides = array<i32>} : memref<16x32x128xf32, #tpu.memory_space<vmem>>, vector<1x16x64xf32>,
    %414 = vector.extract_strided_slice %328 {offsets = [0, 80], sizes = [16, 48], strides = [1, 1]} : vector<16x128xf32> to vector<16x48xf32>
    %c4_216 = arith.constant 4 : index
    %c4_217 = arith.constant 4 : index
    %c0_218 = arith.constant 0 : index
    %415 = vector.load %arg17[%c4_216, %c4_217, %c0_218] : memref<16x32x128xf32, #tpu.memory_space<vmem>>, vector<1x16x48xf32>
    %416 = vector.shape_cast %415 : vector<1x16x48xf32> to vector<16x48xf32>
    %417 = vector.shape_cast %414 : vector<16x48xf32> to vector<1x16x48xf32>
    tpu.vector_store %arg17[%c4_216, %c4_217, %c0_218], %417 {strides = array<i32>} : memref<16x32x128xf32, #tpu.memory_space<vmem>>, vector<1x16x48xf32>,
    %418 = vector.extract_strided_slice %328 {offsets = [0, 0], sizes = [16, 80], strides = [1, 1]} : vector<16x128xf32> to vector<16x80xf32>
    %c4_219 = arith.constant 4 : index
    %c3_220 = arith.constant 3 : index
    %c48 = arith.constant 48 : index
    %419 = vector.load %arg17[%c4_219, %c3_220, %c48] : memref<16x32x128xf32, #tpu.memory_space<vmem>>, vector<1x16x80xf32>
    %420 = vector.shape_cast %419 : vector<1x16x80xf32> to vector<16x80xf32>
    %421 = vector.shape_cast %418 : vector<16x80xf32> to vector<1x16x80xf32>
    tpu.vector_store %arg17[%c4_219, %c3_220, %c48], %421 {strides = array<i32>} : memref<16x32x128xf32, #tpu.memory_space<vmem>>, vector<1x16x80xf32>,
    %422 = vector.extract_strided_slice %328 {offsets = [0, 96], sizes = [16, 32], strides = [1, 1]} : vector<16x128xf32> to vector<16x32xf32>
    %c5_221 = arith.constant 5 : index
    %c4_222 = arith.constant 4 : index
    %c0_223 = arith.constant 0 : index
    %423 = vector.load %arg17[%c5_221, %c4_222, %c0_223] : memref<16x32x128xf32, #tpu.memory_space<vmem>>, vector<1x16x32xf32>
    %424 = vector.shape_cast %423 : vector<1x16x32xf32> to vector<16x32xf32>
    %425 = vector.shape_cast %422 : vector<16x32xf32> to vector<1x16x32xf32>
    tpu.vector_store %arg17[%c5_221, %c4_222, %c0_223], %425 {strides = array<i32>} : memref<16x32x128xf32, #tpu.memory_space<vmem>>, vector<1x16x32xf32>,
    %426 = vector.extract_strided_slice %328 {offsets = [0, 0], sizes = [16, 96], strides = [1, 1]} : vector<16x128xf32> to vector<16x96xf32>
    %c5_224 = arith.constant 5 : index
    %c3_225 = arith.constant 3 : index
    %c32_226 = arith.constant 32 : index
    %427 = vector.load %arg17[%c5_224, %c3_225, %c32_226] : memref<16x32x128xf32, #tpu.memory_space<vmem>>, vector<1x16x96xf32>
    %428 = vector.shape_cast %427 : vector<1x16x96xf32> to vector<16x96xf32>
    %429 = vector.shape_cast %426 : vector<16x96xf32> to vector<1x16x96xf32>
    tpu.vector_store %arg17[%c5_224, %c3_225, %c32_226], %429 {strides = array<i32>} : memref<16x32x128xf32, #tpu.memory_space<vmem>>, vector<1x16x96xf32>,
    %430 = vector.extract_strided_slice %328 {offsets = [0, 112], sizes = [16, 16], strides = [1, 1]} : vector<16x128xf32> to vector<16x16xf32>
    %c6_227 = arith.constant 6 : index
    %c4_228 = arith.constant 4 : index
    %c0_229 = arith.constant 0 : index
    %431 = vector.load %arg17[%c6_227, %c4_228, %c0_229] : memref<16x32x128xf32, #tpu.memory_space<vmem>>, vector<1x16x16xf32>
    %432 = vector.shape_cast %431 : vector<1x16x16xf32> to vector<16x16xf32>
    %433 = vector.shape_cast %430 : vector<16x16xf32> to vector<1x16x16xf32>
    tpu.vector_store %arg17[%c6_227, %c4_228, %c0_229], %433 {strides = array<i32>} : memref<16x32x128xf32, #tpu.memory_space<vmem>>, vector<1x16x16xf32>,
    %434 = vector.extract_strided_slice %328 {offsets = [0, 0], sizes = [16, 112], strides = [1, 1]} : vector<16x128xf32> to vector<16x112xf32>
    %c6_230 = arith.constant 6 : index
    %c3_231 = arith.constant 3 : index
    %c16 = arith.constant 16 : index
    %435 = vector.load %arg17[%c6_230, %c3_231, %c16] : memref<16x32x128xf32, #tpu.memory_space<vmem>>, vector<1x16x112xf32>
    %436 = vector.shape_cast %435 : vector<1x16x112xf32> to vector<16x112xf32>
    %437 = vector.shape_cast %434 : vector<16x112xf32> to vector<1x16x112xf32>
    tpu.vector_store %arg17[%c6_230, %c3_231, %c16], %437 {strides = array<i32>} : memref<16x32x128xf32, #tpu.memory_space<vmem>>, vector<1x16x112xf32>,
    %c7_232 = arith.constant 7 : index
    %c3_233 = arith.constant 3 : index
    %c0_234 = arith.constant 0 : index
    %438 = vector.load %arg17[%c7_232, %c3_233, %c0_234] : memref<16x32x128xf32, #tpu.memory_space<vmem>>, vector<1x16x128xf32>
    %439 = vector.shape_cast %438 : vector<1x16x128xf32> to vector<16x128xf32>
    %440 = vector.shape_cast %328 : vector<16x128xf32> to vector<1x16x128xf32>
    tpu.vector_store %arg17[%c7_232, %c3_233, %c0_234], %440 {strides = array<i32>} : memref<16x32x128xf32, #tpu.memory_space<vmem>>, vector<1x16x128xf32>,
    %441 = vector.extract_strided_slice %379 {offsets = [0, 16], sizes = [16, 112], strides = [1, 1]} : vector<16x128xf32> to vector<16x112xf32>
    %c8 = arith.constant 8 : index
    %c4_235 = arith.constant 4 : index
    %c0_236 = arith.constant 0 : index
    %442 = vector.load %arg17[%c8, %c4_235, %c0_236] : memref<16x32x128xf32, #tpu.memory_space<vmem>>, vector<1x16x112xf32>
    %443 = vector.shape_cast %442 : vector<1x16x112xf32> to vector<16x112xf32>
    %444 = vector.shape_cast %441 : vector<16x112xf32> to vector<1x16x112xf32>
    tpu.vector_store %arg17[%c8, %c4_235, %c0_236], %444 {strides = array<i32>} : memref<16x32x128xf32, #tpu.memory_space<vmem>>, vector<1x16x112xf32>,
    %445 = vector.extract_strided_slice %379 {offsets = [0, 0], sizes = [16, 16], strides = [1, 1]} : vector<16x128xf32> to vector<16x16xf32>
    %c8_237 = arith.constant 8 : index
    %c3_238 = arith.constant 3 : index
    %c112_239 = arith.constant 112 : index
    %446 = vector.load %arg17[%c8_237, %c3_238, %c112_239] : memref<16x32x128xf32, #tpu.memory_space<vmem>>, vector<1x16x16xf32>
    %447 = vector.shape_cast %446 : vector<1x16x16xf32> to vector<16x16xf32>
    %448 = vector.shape_cast %445 : vector<16x16xf32> to vector<1x16x16xf32>
    tpu.vector_store %arg17[%c8_237, %c3_238, %c112_239], %448 {strides = array<i32>} : memref<16x32x128xf32, #tpu.memory_space<vmem>>, vector<1x16x16xf32>,
    %449 = vector.extract_strided_slice %379 {offsets = [0, 32], sizes = [16, 96], strides = [1, 1]} : vector<16x128xf32> to vector<16x96xf32>
    %c9 = arith.constant 9 : index
    %c4_240 = arith.constant 4 : index
    %c0_241 = arith.constant 0 : index
    %450 = vector.load %arg17[%c9, %c4_240, %c0_241] : memref<16x32x128xf32, #tpu.memory_space<vmem>>, vector<1x16x96xf32>
    %451 = vector.shape_cast %450 : vector<1x16x96xf32> to vector<16x96xf32>
    %452 = vector.shape_cast %449 : vector<16x96xf32> to vector<1x16x96xf32>
    tpu.vector_store %arg17[%c9, %c4_240, %c0_241], %452 {strides = array<i32>} : memref<16x32x128xf32, #tpu.memory_space<vmem>>, vector<1x16x96xf32>,
    %453 = vector.extract_strided_slice %379 {offsets = [0, 0], sizes = [16, 32], strides = [1, 1]} : vector<16x128xf32> to vector<16x32xf32>
    %c9_242 = arith.constant 9 : index
    %c3_243 = arith.constant 3 : index
    %c96_244 = arith.constant 96 : index
    %454 = vector.load %arg17[%c9_242, %c3_243, %c96_244] : memref<16x32x128xf32, #tpu.memory_space<vmem>>, vector<1x16x32xf32>
    %455 = vector.shape_cast %454 : vector<1x16x32xf32> to vector<16x32xf32>
    %456 = vector.shape_cast %453 : vector<16x32xf32> to vector<1x16x32xf32>
    tpu.vector_store %arg17[%c9_242, %c3_243, %c96_244], %456 {strides = array<i32>} : memref<16x32x128xf32, #tpu.memory_space<vmem>>, vector<1x16x32xf32>,
    %457 = vector.extract_strided_slice %379 {offsets = [0, 48], sizes = [16, 80], strides = [1, 1]} : vector<16x128xf32> to vector<16x80xf32>
    %c10 = arith.constant 10 : index
    %c4_245 = arith.constant 4 : index
    %c0_246 = arith.constant 0 : index
    %458 = vector.load %arg17[%c10, %c4_245, %c0_246] : memref<16x32x128xf32, #tpu.memory_space<vmem>>, vector<1x16x80xf32>
    %459 = vector.shape_cast %458 : vector<1x16x80xf32> to vector<16x80xf32>
    %460 = vector.shape_cast %457 : vector<16x80xf32> to vector<1x16x80xf32>
    tpu.vector_store %arg17[%c10, %c4_245, %c0_246], %460 {strides = array<i32>} : memref<16x32x128xf32, #tpu.memory_space<vmem>>, vector<1x16x80xf32>,
    %461 = vector.extract_strided_slice %379 {offsets = [0, 0], sizes = [16, 48], strides = [1, 1]} : vector<16x128xf32> to vector<16x48xf32>
    %c10_247 = arith.constant 10 : index
    %c3_248 = arith.constant 3 : index
    %c80_249 = arith.constant 80 : index
    %462 = vector.load %arg17[%c10_247, %c3_248, %c80_249] : memref<16x32x128xf32, #tpu.memory_space<vmem>>, vector<1x16x48xf32>
    %463 = vector.shape_cast %462 : vector<1x16x48xf32> to vector<16x48xf32>
    %464 = vector.shape_cast %461 : vector<16x48xf32> to vector<1x16x48xf32>
    tpu.vector_store %arg17[%c10_247, %c3_248, %c80_249], %464 {strides = array<i32>} : memref<16x32x128xf32, #tpu.memory_space<vmem>>, vector<1x16x48xf32>,
    %465 = vector.extract_strided_slice %379 {offsets = [0, 64], sizes = [16, 64], strides = [1, 1]} : vector<16x128xf32> to vector<16x64xf32>
    %c11 = arith.constant 11 : index
    %c4_250 = arith.constant 4 : index
    %c0_251 = arith.constant 0 : index
    %466 = vector.load %arg17[%c11, %c4_250, %c0_251] : memref<16x32x128xf32, #tpu.memory_space<vmem>>, vector<1x16x64xf32>
    %467 = vector.shape_cast %466 : vector<1x16x64xf32> to vector<16x64xf32>
    %468 = vector.shape_cast %465 : vector<16x64xf32> to vector<1x16x64xf32>
    tpu.vector_store %arg17[%c11, %c4_250, %c0_251], %468 {strides = array<i32>} : memref<16x32x128xf32, #tpu.memory_space<vmem>>, vector<1x16x64xf32>,
    %469 = vector.extract_strided_slice %379 {offsets = [0, 0], sizes = [16, 64], strides = [1, 1]} : vector<16x128xf32> to vector<16x64xf32>
    %c11_252 = arith.constant 11 : index
    %c3_253 = arith.constant 3 : index
    %c64_254 = arith.constant 64 : index
    %470 = vector.load %arg17[%c11_252, %c3_253, %c64_254] : memref<16x32x128xf32, #tpu.memory_space<vmem>>, vector<1x16x64xf32>
    %471 = vector.shape_cast %470 : vector<1x16x64xf32> to vector<16x64xf32>
    %472 = vector.shape_cast %469 : vector<16x64xf32> to vector<1x16x64xf32>
    tpu.vector_store %arg17[%c11_252, %c3_253, %c64_254], %472 {strides = array<i32>} : memref<16x32x128xf32, #tpu.memory_space<vmem>>, vector<1x16x64xf32>,
    %473 = vector.extract_strided_slice %379 {offsets = [0, 80], sizes = [16, 48], strides = [1, 1]} : vector<16x128xf32> to vector<16x48xf32>
    %c12 = arith.constant 12 : index
    %c4_255 = arith.constant 4 : index
    %c0_256 = arith.constant 0 : index
    %474 = vector.load %arg17[%c12, %c4_255, %c0_256] : memref<16x32x128xf32, #tpu.memory_space<vmem>>, vector<1x16x48xf32>
    %475 = vector.shape_cast %474 : vector<1x16x48xf32> to vector<16x48xf32>
    %476 = vector.shape_cast %473 : vector<16x48xf32> to vector<1x16x48xf32>
    tpu.vector_store %arg17[%c12, %c4_255, %c0_256], %476 {strides = array<i32>} : memref<16x32x128xf32, #tpu.memory_space<vmem>>, vector<1x16x48xf32>,
    %477 = vector.extract_strided_slice %379 {offsets = [0, 0], sizes = [16, 80], strides = [1, 1]} : vector<16x128xf32> to vector<16x80xf32>
    %c12_257 = arith.constant 12 : index
    %c3_258 = arith.constant 3 : index
    %c48_259 = arith.constant 48 : index
    %478 = vector.load %arg17[%c12_257, %c3_258, %c48_259] : memref<16x32x128xf32, #tpu.memory_space<vmem>>, vector<1x16x80xf32>
    %479 = vector.shape_cast %478 : vector<1x16x80xf32> to vector<16x80xf32>
    %480 = vector.shape_cast %477 : vector<16x80xf32> to vector<1x16x80xf32>
    tpu.vector_store %arg17[%c12_257, %c3_258, %c48_259], %480 {strides = array<i32>} : memref<16x32x128xf32, #tpu.memory_space<vmem>>, vector<1x16x80xf32>,
    %481 = vector.extract_strided_slice %379 {offsets = [0, 96], sizes = [16, 32], strides = [1, 1]} : vector<16x128xf32> to vector<16x32xf32>
    %c13 = arith.constant 13 : index
    %c4_260 = arith.constant 4 : index
    %c0_261 = arith.constant 0 : index
    %482 = vector.load %arg17[%c13, %c4_260, %c0_261] : memref<16x32x128xf32, #tpu.memory_space<vmem>>, vector<1x16x32xf32>
    %483 = vector.shape_cast %482 : vector<1x16x32xf32> to vector<16x32xf32>
    %484 = vector.shape_cast %481 : vector<16x32xf32> to vector<1x16x32xf32>
    tpu.vector_store %arg17[%c13, %c4_260, %c0_261], %484 {strides = array<i32>} : memref<16x32x128xf32, #tpu.memory_space<vmem>>, vector<1x16x32xf32>,
    %485 = vector.extract_strided_slice %379 {offsets = [0, 0], sizes = [16, 96], strides = [1, 1]} : vector<16x128xf32> to vector<16x96xf32>
    %c13_262 = arith.constant 13 : index
    %c3_263 = arith.constant 3 : index
    %c32_264 = arith.constant 32 : index
    %486 = vector.load %arg17[%c13_262, %c3_263, %c32_264] : memref<16x32x128xf32, #tpu.memory_space<vmem>>, vector<1x16x96xf32>
    %487 = vector.shape_cast %486 : vector<1x16x96xf32> to vector<16x96xf32>
    %488 = vector.shape_cast %485 : vector<16x96xf32> to vector<1x16x96xf32>
    tpu.vector_store %arg17[%c13_262, %c3_263, %c32_264], %488 {strides = array<i32>} : memref<16x32x128xf32, #tpu.memory_space<vmem>>, vector<1x16x96xf32>,
    %489 = vector.extract_strided_slice %379 {offsets = [0, 112], sizes = [16, 16], strides = [1, 1]} : vector<16x128xf32> to vector<16x16xf32>
    %c14 = arith.constant 14 : index
    %c4_265 = arith.constant 4 : index
    %c0_266 = arith.constant 0 : index
    %490 = vector.load %arg17[%c14, %c4_265, %c0_266] : memref<16x32x128xf32, #tpu.memory_space<vmem>>, vector<1x16x16xf32>
    %491 = vector.shape_cast %490 : vector<1x16x16xf32> to vector<16x16xf32>
    %492 = vector.shape_cast %489 : vector<16x16xf32> to vector<1x16x16xf32>
    tpu.vector_store %arg17[%c14, %c4_265, %c0_266], %492 {strides = array<i32>} : memref<16x32x128xf32, #tpu.memory_space<vmem>>, vector<1x16x16xf32>,
    %493 = vector.extract_strided_slice %379 {offsets = [0, 0], sizes = [16, 112], strides = [1, 1]} : vector<16x128xf32> to vector<16x112xf32>
    %c14_267 = arith.constant 14 : index
    %c3_268 = arith.constant 3 : index
    %c16_269 = arith.constant 16 : index
    %494 = vector.load %arg17[%c14_267, %c3_268, %c16_269] : memref<16x32x128xf32, #tpu.memory_space<vmem>>, vector<1x16x112xf32>
    %495 = vector.shape_cast %494 : vector<1x16x112xf32> to vector<16x112xf32>
    %496 = vector.shape_cast %493 : vector<16x112xf32> to vector<1x16x112xf32>
    tpu.vector_store %arg17[%c14_267, %c3_268, %c16_269], %496 {strides = array<i32>} : memref<16x32x128xf32, #tpu.memory_space<vmem>>, vector<1x16x112xf32>,
    %c15 = arith.constant 15 : index
    %c3_270 = arith.constant 3 : index
    %c0_271 = arith.constant 0 : index
    %497 = vector.load %arg17[%c15, %c3_270, %c0_271] : memref<16x32x128xf32, #tpu.memory_space<vmem>>, vector<1x16x128xf32>
    %498 = vector.shape_cast %497 : vector<1x16x128xf32> to vector<16x128xf32>
    %499 = vector.shape_cast %379 : vector<16x128xf32> to vector<1x16x128xf32>
    tpu.vector_store %arg17[%c15, %c3_270, %c0_271], %499 {strides = array<i32>} : memref<16x32x128xf32, #tpu.memory_space<vmem>>, vector<1x16x128xf32>,
    %c0_272 = arith.constant 0 : index
    %c0_273 = arith.constant 0 : index
    %c0_274 = arith.constant 0 : index
    %500 = vector.load %arg17[%c0_272, %c0_273, %c0_274] : memref<16x32x128xf32, #tpu.memory_space<vmem>>, vector<16x16x128xf32>
    %501 = arith.truncf %500 : vector<16x16x128xf32> to vector<16x16x128xbf16>
    %c0_275 = arith.constant 0 : index
    %c1_276 = arith.constant 1 : index
    %c0_277 = arith.constant 0 : index
    %502 = vector.load %arg17[%c0_275, %c1_276, %c0_277] : memref<16x32x128xf32, #tpu.memory_space<vmem>>, vector<16x16x128xf32>
    %503 = arith.truncf %502 : vector<16x16x128xf32> to vector<16x16x128xbf16>
    %c0_278 = arith.constant 0 : index
    %c2_279 = arith.constant 2 : index
    %c0_280 = arith.constant 0 : index
    %504 = vector.load %arg17[%c0_278, %c2_279, %c0_280] : memref<16x32x128xf32, #tpu.memory_space<vmem>>, vector<16x16x128xf32>
    %505 = arith.truncf %504 : vector<16x16x128xf32> to vector<16x16x128xbf16>
    %c0_281 = arith.constant 0 : index
    %c3_282 = arith.constant 3 : index
    %c0_283 = arith.constant 0 : index
    %506 = vector.load %arg17[%c0_281, %c3_282, %c0_283] : memref<16x32x128xf32, #tpu.memory_space<vmem>>, vector<16x16x128xf32>
    %507 = arith.truncf %506 : vector<16x16x128xf32> to vector<16x16x128xbf16>
    %c0_284 = arith.constant 0 : index
    %c4_285 = arith.constant 4 : index
    %c0_286 = arith.constant 0 : index
    %508 = vector.load %arg17[%c0_284, %c4_285, %c0_286] : memref<16x32x128xf32, #tpu.memory_space<vmem>>, vector<16x16x128xf32>
    %509 = arith.truncf %508 : vector<16x16x128xf32> to vector<16x16x128xbf16>
    %c0_287 = arith.constant 0 : index
    %c5_288 = arith.constant 5 : index
    %c0_289 = arith.constant 0 : index
    %510 = vector.load %arg17[%c0_287, %c5_288, %c0_289] : memref<16x32x128xf32, #tpu.memory_space<vmem>>, vector<16x16x128xf32>
    %511 = arith.truncf %510 : vector<16x16x128xf32> to vector<16x16x128xbf16>
    %c0_290 = arith.constant 0 : index
    %c6_291 = arith.constant 6 : index
    %c0_292 = arith.constant 0 : index
    %512 = vector.load %arg17[%c0_290, %c6_291, %c0_292] : memref<16x32x128xf32, #tpu.memory_space<vmem>>, vector<16x16x128xf32>
    %513 = arith.truncf %512 : vector<16x16x128xf32> to vector<16x16x128xbf16>
    %c0_293 = arith.constant 0 : index
    %c7_294 = arith.constant 7 : index
    %c0_295 = arith.constant 0 : index
    %514 = vector.load %arg17[%c0_293, %c7_294, %c0_295] : memref<16x32x128xf32, #tpu.memory_space<vmem>>, vector<16x16x128xf32>
    %515 = arith.truncf %514 : vector<16x16x128xf32> to vector<16x16x128xbf16>
    %516 = tpu.concatenate %501, %503, %505, %507, %509, %511, %513, %515 in 2 : vector<16x16x128xbf16>, vector<16x16x128xbf16>, vector<16x16x128xbf16>, vector<16x16x128xbf16>, vector<16x16x128xbf16>, vector<16x16x128xbf16>, vector<16x16x128xbf16>, vector<16x16x128xbf16> -> vector<16x16x1024xbf16>
    %517 = vector.shape_cast %516 : vector<16x16x1024xbf16> to vector<256x1024xbf16>
    %c0_296 = arith.constant 0 : index
    %c0_297 = arith.constant 0 : index
    %518 = vector.load %arg12[%c0_296, %c0_297] : memref<1024x4xbf16, #tpu.memory_space<vmem>>, vector<1024x4xbf16>
    %cst_298 = arith.constant dense<0.000000e+00> : vector<256x4xf32>
    %519 = tpu.matmul %517, %518, %cst_298 {dimension_numbers = #tpu.dot_dimension_numbers<[1], [0], [0], [1], [0, 0, 1, 1], [], []>} : vector<256x1024xbf16>, vector<1024x4xbf16>, vector<256x4xf32> -> vector<256x4xf32>
    %c0_299 = arith.constant 0 : index
    %c0_300 = arith.constant 0 : index
    %520 = vector.load %arg13[%c0_299, %c0_300] : memref<1x4xf32, #tpu.memory_space<vmem>>, vector<1x4xf32>
    %521 = vector.broadcast %520 : vector<1x4xf32> to vector<256x4xf32>
    %522 = arith.addf %519, %521 : vector<256x4xf32>
    %cst_301 = arith.constant 0.000000e+00 : f32
    %523 = vector.broadcast %cst_301 : f32 to vector<256x4xf32>
    %524 = arith.maximumf %522, %523 : vector<256x4xf32>
    %cst_302 = arith.constant dense<0.000000e+00> : vector<4xf32>
    %525 = vector.multi_reduction <add>, %524, %cst_302 [0] : vector<256x4xf32> to vector<4xf32>
    %526 = vector.shape_cast %525 : vector<4xf32> to vector<1x4xf32>
    %527 = arith.mulf %524, %524 : vector<256x4xf32>
    %cst_303 = arith.constant dense<0.000000e+00> : vector<4xf32>
    %528 = vector.multi_reduction <add>, %527, %cst_303 [0] : vector<256x4xf32> to vector<4xf32>
    %529 = vector.shape_cast %528 : vector<4xf32> to vector<1x4xf32>
    %cst_304 = arith.constant 3.906250e-03 : f32
    %530 = vector.broadcast %cst_304 : f32 to vector<1x4xf32>
    %531 = arith.mulf %526, %530 : vector<1x4xf32>
    %cst_305 = arith.constant 3.906250e-03 : f32
    %532 = vector.broadcast %cst_305 : f32 to vector<1x4xf32>
    %533 = arith.mulf %529, %532 : vector<1x4xf32>
    %534 = arith.mulf %531, %531 : vector<1x4xf32>
    %535 = arith.subf %533, %534 : vector<1x4xf32>
    %536 = vector.broadcast %531 : vector<1x4xf32> to vector<256x4xf32>
    %537 = arith.subf %524, %536 : vector<256x4xf32>
    %cst_306 = arith.constant 9.99999974E-6 : f32
    %538 = vector.broadcast %cst_306 : f32 to vector<1x4xf32>
    %539 = arith.addf %535, %538 : vector<1x4xf32>
    %540 = math.rsqrt %539 : vector<1x4xf32>
    %541 = vector.broadcast %540 : vector<1x4xf32> to vector<256x4xf32>
    %542 = arith.mulf %537, %541 : vector<256x4xf32>
    %c0_307 = arith.constant 0 : index
    %c0_308 = arith.constant 0 : index
    %543 = vector.load %arg14[%c0_307, %c0_308] : memref<1x4xf32, #tpu.memory_space<vmem>>, vector<1x4xf32>
    %544 = vector.broadcast %543 : vector<1x4xf32> to vector<256x4xf32>
    %545 = arith.mulf %542, %544 : vector<256x4xf32>
    %c0_309 = arith.constant 0 : index
    %c0_310 = arith.constant 0 : index
    %546 = vector.load %arg15[%c0_309, %c0_310] : memref<1x4xf32, #tpu.memory_space<vmem>>, vector<1x4xf32>
    %547 = vector.broadcast %546 : vector<1x4xf32> to vector<256x4xf32>
    %548 = arith.addf %545, %547 : vector<256x4xf32>
    %549 = vector.extract_strided_slice %548 {offsets = [0, 0], sizes = [16, 4], strides = [1, 1]} : vector<256x4xf32> to vector<16x4xf32>
    %550 = vector.extract_strided_slice %548 {offsets = [16, 0], sizes = [16, 4], strides = [1, 1]} : vector<256x4xf32> to vector<16x4xf32>
    %551 = vector.extract_strided_slice %548 {offsets = [32, 0], sizes = [16, 4], strides = [1, 1]} : vector<256x4xf32> to vector<16x4xf32>
    %552 = vector.extract_strided_slice %548 {offsets = [48, 0], sizes = [16, 4], strides = [1, 1]} : vector<256x4xf32> to vector<16x4xf32>
    %553 = vector.extract_strided_slice %548 {offsets = [64, 0], sizes = [16, 4], strides = [1, 1]} : vector<256x4xf32> to vector<16x4xf32>
    %554 = vector.extract_strided_slice %548 {offsets = [80, 0], sizes = [16, 4], strides = [1, 1]} : vector<256x4xf32> to vector<16x4xf32>
    %555 = vector.extract_strided_slice %548 {offsets = [96, 0], sizes = [16, 4], strides = [1, 1]} : vector<256x4xf32> to vector<16x4xf32>
    %556 = vector.extract_strided_slice %548 {offsets = [112, 0], sizes = [16, 4], strides = [1, 1]} : vector<256x4xf32> to vector<16x4xf32>
    %557 = vector.extract_strided_slice %549 {offsets = [0, 0], sizes = [1, 4], strides = [1, 1]} : vector<16x4xf32> to vector<1x4xf32>
    %558 = vector.extract_strided_slice %556 {offsets = [0, 0], sizes = [15, 4], strides = [1, 1]} : vector<16x4xf32> to vector<15x4xf32>
    %559 = tpu.concatenate %557, %558 in 0 : vector<1x4xf32>, vector<15x4xf32> -> vector<16x4xf32>
    %cst_311 = arith.constant 2.500000e-01 : f32
    %560 = vector.broadcast %cst_311 : f32 to vector<16x4xf32>
    %561 = arith.mulf %560, %559 : vector<16x4xf32>
    %cst_312 = arith.constant 7.500000e-01 : f32
    %562 = vector.broadcast %cst_312 : f32 to vector<16x4xf32>
    %563 = arith.mulf %562, %549 : vector<16x4xf32>
    %564 = arith.addf %561, %563 : vector<16x4xf32>
    %cst_313 = arith.constant 7.500000e-01 : f32
    %565 = vector.broadcast %cst_313 : f32 to vector<16x4xf32>
    %566 = arith.mulf %565, %549 : vector<16x4xf32>
    %cst_314 = arith.constant 2.500000e-01 : f32
    %567 = vector.broadcast %cst_314 : f32 to vector<16x4xf32>
    %568 = arith.mulf %567, %550 : vector<16x4xf32>
    %569 = arith.addf %566, %568 : vector<16x4xf32>
    %cst_315 = arith.constant 2.500000e-01 : f32
    %570 = vector.broadcast %cst_315 : f32 to vector<16x4xf32>
    %571 = arith.mulf %570, %549 : vector<16x4xf32>
    %cst_316 = arith.constant 7.500000e-01 : f32
    %572 = vector.broadcast %cst_316 : f32 to vector<16x4xf32>
    %573 = arith.mulf %572, %550 : vector<16x4xf32>
    %574 = arith.addf %571, %573 : vector<16x4xf32>
    %cst_317 = arith.constant 7.500000e-01 : f32
    %575 = vector.broadcast %cst_317 : f32 to vector<16x4xf32>
    %576 = arith.mulf %575, %550 : vector<16x4xf32>
    %cst_318 = arith.constant 2.500000e-01 : f32
    %577 = vector.broadcast %cst_318 : f32 to vector<16x4xf32>
    %578 = arith.mulf %577, %551 : vector<16x4xf32>
    %579 = arith.addf %576, %578 : vector<16x4xf32>
    %cst_319 = arith.constant 2.500000e-01 : f32
    %580 = vector.broadcast %cst_319 : f32 to vector<16x4xf32>
    %581 = arith.mulf %580, %550 : vector<16x4xf32>
    %cst_320 = arith.constant 7.500000e-01 : f32
    %582 = vector.broadcast %cst_320 : f32 to vector<16x4xf32>
    %583 = arith.mulf %582, %551 : vector<16x4xf32>
    %584 = arith.addf %581, %583 : vector<16x4xf32>
    %cst_321 = arith.constant 7.500000e-01 : f32
    %585 = vector.broadcast %cst_321 : f32 to vector<16x4xf32>
    %586 = arith.mulf %585, %551 : vector<16x4xf32>
    %cst_322 = arith.constant 2.500000e-01 : f32
    %587 = vector.broadcast %cst_322 : f32 to vector<16x4xf32>
    %588 = arith.mulf %587, %552 : vector<16x4xf32>
    %589 = arith.addf %586, %588 : vector<16x4xf32>
    %cst_323 = arith.constant 2.500000e-01 : f32
    %590 = vector.broadcast %cst_323 : f32 to vector<16x4xf32>
    %591 = arith.mulf %590, %551 : vector<16x4xf32>
    %cst_324 = arith.constant 7.500000e-01 : f32
    %592 = vector.broadcast %cst_324 : f32 to vector<16x4xf32>
    %593 = arith.mulf %592, %552 : vector<16x4xf32>
    %594 = arith.addf %591, %593 : vector<16x4xf32>
    %cst_325 = arith.constant 7.500000e-01 : f32
    %595 = vector.broadcast %cst_325 : f32 to vector<16x4xf32>
    %596 = arith.mulf %595, %552 : vector<16x4xf32>
    %cst_326 = arith.constant 2.500000e-01 : f32
    %597 = vector.broadcast %cst_326 : f32 to vector<16x4xf32>
    %598 = arith.mulf %597, %553 : vector<16x4xf32>
    %599 = arith.addf %596, %598 : vector<16x4xf32>
    %cst_327 = arith.constant 2.500000e-01 : f32
    %600 = vector.broadcast %cst_327 : f32 to vector<16x4xf32>
    %601 = arith.mulf %600, %552 : vector<16x4xf32>
    %cst_328 = arith.constant 7.500000e-01 : f32
    %602 = vector.broadcast %cst_328 : f32 to vector<16x4xf32>
    %603 = arith.mulf %602, %553 : vector<16x4xf32>
    %604 = arith.addf %601, %603 : vector<16x4xf32>
    %cst_329 = arith.constant 7.500000e-01 : f32
    %605 = vector.broadcast %cst_329 : f32 to vector<16x4xf32>
    %606 = arith.mulf %605, %553 : vector<16x4xf32>
    %cst_330 = arith.constant 2.500000e-01 : f32
    %607 = vector.broadcast %cst_330 : f32 to vector<16x4xf32>
    %608 = arith.mulf %607, %554 : vector<16x4xf32>
    %609 = arith.addf %606, %608 : vector<16x4xf32>
    %cst_331 = arith.constant 2.500000e-01 : f32
    %610 = vector.broadcast %cst_331 : f32 to vector<16x4xf32>
    %611 = arith.mulf %610, %553 : vector<16x4xf32>
    %cst_332 = arith.constant 7.500000e-01 : f32
    %612 = vector.broadcast %cst_332 : f32 to vector<16x4xf32>
    %613 = arith.mulf %612, %554 : vector<16x4xf32>
    %614 = arith.addf %611, %613 : vector<16x4xf32>
    %cst_333 = arith.constant 7.500000e-01 : f32
    %615 = vector.broadcast %cst_333 : f32 to vector<16x4xf32>
    %616 = arith.mulf %615, %554 : vector<16x4xf32>
    %cst_334 = arith.constant 2.500000e-01 : f32
    %617 = vector.broadcast %cst_334 : f32 to vector<16x4xf32>
    %618 = arith.mulf %617, %555 : vector<16x4xf32>
    %619 = arith.addf %616, %618 : vector<16x4xf32>
    %cst_335 = arith.constant 2.500000e-01 : f32
    %620 = vector.broadcast %cst_335 : f32 to vector<16x4xf32>
    %621 = arith.mulf %620, %554 : vector<16x4xf32>
    %cst_336 = arith.constant 7.500000e-01 : f32
    %622 = vector.broadcast %cst_336 : f32 to vector<16x4xf32>
    %623 = arith.mulf %622, %555 : vector<16x4xf32>
    %624 = arith.addf %621, %623 : vector<16x4xf32>
    %cst_337 = arith.constant 7.500000e-01 : f32
    %625 = vector.broadcast %cst_337 : f32 to vector<16x4xf32>
    %626 = arith.mulf %625, %555 : vector<16x4xf32>
    %cst_338 = arith.constant 2.500000e-01 : f32
    %627 = vector.broadcast %cst_338 : f32 to vector<16x4xf32>
    %628 = arith.mulf %627, %556 : vector<16x4xf32>
    %629 = arith.addf %626, %628 : vector<16x4xf32>
    %630 = vector.extract_strided_slice %549 {offsets = [1, 0], sizes = [15, 4], strides = [1, 1]} : vector<16x4xf32> to vector<15x4xf32>
    %631 = vector.extract_strided_slice %556 {offsets = [15, 0], sizes = [1, 4], strides = [1, 1]} : vector<16x4xf32> to vector<1x4xf32>
    %632 = tpu.concatenate %630, %631 in 0 : vector<15x4xf32>, vector<1x4xf32> -> vector<16x4xf32>
    %cst_339 = arith.constant 2.500000e-01 : f32
    %633 = vector.broadcast %cst_339 : f32 to vector<16x4xf32>
    %634 = arith.mulf %633, %555 : vector<16x4xf32>
    %cst_340 = arith.constant 7.500000e-01 : f32
    %635 = vector.broadcast %cst_340 : f32 to vector<16x4xf32>
    %636 = arith.mulf %635, %556 : vector<16x4xf32>
    %637 = arith.addf %634, %636 : vector<16x4xf32>
    %cst_341 = arith.constant 7.500000e-01 : f32
    %638 = vector.broadcast %cst_341 : f32 to vector<16x4xf32>
    %639 = arith.mulf %638, %556 : vector<16x4xf32>
    %cst_342 = arith.constant 2.500000e-01 : f32
    %640 = vector.broadcast %cst_342 : f32 to vector<16x4xf32>
    %641 = arith.mulf %640, %632 : vector<16x4xf32>
    %642 = arith.addf %639, %641 : vector<16x4xf32>
    %643 = tpu.concatenate %564, %569, %574, %579, %584, %589, %594, %599, %604, %609, %614, %619, %624, %629, %637, %642 in 1 : vector<16x4xf32>, vector<16x4xf32>, vector<16x4xf32>, vector<16x4xf32>, vector<16x4xf32>, vector<16x4xf32>, vector<16x4xf32>, vector<16x4xf32>, vector<16x4xf32>, vector<16x4xf32>, vector<16x4xf32>, vector<16x4xf32>, vector<16x4xf32>, vector<16x4xf32>, vector<16x4xf32>, vector<16x4xf32> -> vector<16x64xf32>
    %644 = vector.extract_strided_slice %548 {offsets = [128, 0], sizes = [16, 4], strides = [1, 1]} : vector<256x4xf32> to vector<16x4xf32>
    %645 = vector.extract_strided_slice %548 {offsets = [144, 0], sizes = [16, 4], strides = [1, 1]} : vector<256x4xf32> to vector<16x4xf32>
    %646 = vector.extract_strided_slice %548 {offsets = [160, 0], sizes = [16, 4], strides = [1, 1]} : vector<256x4xf32> to vector<16x4xf32>
    %647 = vector.extract_strided_slice %548 {offsets = [176, 0], sizes = [16, 4], strides = [1, 1]} : vector<256x4xf32> to vector<16x4xf32>
    %648 = vector.extract_strided_slice %548 {offsets = [192, 0], sizes = [16, 4], strides = [1, 1]} : vector<256x4xf32> to vector<16x4xf32>
    %649 = vector.extract_strided_slice %548 {offsets = [208, 0], sizes = [16, 4], strides = [1, 1]} : vector<256x4xf32> to vector<16x4xf32>
    %650 = vector.extract_strided_slice %548 {offsets = [224, 0], sizes = [16, 4], strides = [1, 1]} : vector<256x4xf32> to vector<16x4xf32>
    %651 = vector.extract_strided_slice %548 {offsets = [240, 0], sizes = [16, 4], strides = [1, 1]} : vector<256x4xf32> to vector<16x4xf32>
    %652 = vector.extract_strided_slice %644 {offsets = [0, 0], sizes = [1, 4], strides = [1, 1]} : vector<16x4xf32> to vector<1x4xf32>
    %653 = vector.extract_strided_slice %651 {offsets = [0, 0], sizes = [15, 4], strides = [1, 1]} : vector<16x4xf32> to vector<15x4xf32>
    %654 = tpu.concatenate %652, %653 in 0 : vector<1x4xf32>, vector<15x4xf32> -> vector<16x4xf32>
    %cst_343 = arith.constant 2.500000e-01 : f32
    %655 = vector.broadcast %cst_343 : f32 to vector<16x4xf32>
    %656 = arith.mulf %655, %654 : vector<16x4xf32>
    %cst_344 = arith.constant 7.500000e-01 : f32
    %657 = vector.broadcast %cst_344 : f32 to vector<16x4xf32>
    %658 = arith.mulf %657, %644 : vector<16x4xf32>
    %659 = arith.addf %656, %658 : vector<16x4xf32>
    %cst_345 = arith.constant 7.500000e-01 : f32
    %660 = vector.broadcast %cst_345 : f32 to vector<16x4xf32>
    %661 = arith.mulf %660, %644 : vector<16x4xf32>
    %cst_346 = arith.constant 2.500000e-01 : f32
    %662 = vector.broadcast %cst_346 : f32 to vector<16x4xf32>
    %663 = arith.mulf %662, %645 : vector<16x4xf32>
    %664 = arith.addf %661, %663 : vector<16x4xf32>
    %cst_347 = arith.constant 2.500000e-01 : f32
    %665 = vector.broadcast %cst_347 : f32 to vector<16x4xf32>
    %666 = arith.mulf %665, %644 : vector<16x4xf32>
    %cst_348 = arith.constant 7.500000e-01 : f32
    %667 = vector.broadcast %cst_348 : f32 to vector<16x4xf32>
    %668 = arith.mulf %667, %645 : vector<16x4xf32>
    %669 = arith.addf %666, %668 : vector<16x4xf32>
    %cst_349 = arith.constant 7.500000e-01 : f32
    %670 = vector.broadcast %cst_349 : f32 to vector<16x4xf32>
    %671 = arith.mulf %670, %645 : vector<16x4xf32>
    %cst_350 = arith.constant 2.500000e-01 : f32
    %672 = vector.broadcast %cst_350 : f32 to vector<16x4xf32>
    %673 = arith.mulf %672, %646 : vector<16x4xf32>
    %674 = arith.addf %671, %673 : vector<16x4xf32>
    %cst_351 = arith.constant 2.500000e-01 : f32
    %675 = vector.broadcast %cst_351 : f32 to vector<16x4xf32>
    %676 = arith.mulf %675, %645 : vector<16x4xf32>
    %cst_352 = arith.constant 7.500000e-01 : f32
    %677 = vector.broadcast %cst_352 : f32 to vector<16x4xf32>
    %678 = arith.mulf %677, %646 : vector<16x4xf32>
    %679 = arith.addf %676, %678 : vector<16x4xf32>
    %cst_353 = arith.constant 7.500000e-01 : f32
    %680 = vector.broadcast %cst_353 : f32 to vector<16x4xf32>
    %681 = arith.mulf %680, %646 : vector<16x4xf32>
    %cst_354 = arith.constant 2.500000e-01 : f32
    %682 = vector.broadcast %cst_354 : f32 to vector<16x4xf32>
    %683 = arith.mulf %682, %647 : vector<16x4xf32>
    %684 = arith.addf %681, %683 : vector<16x4xf32>
    %cst_355 = arith.constant 2.500000e-01 : f32
    %685 = vector.broadcast %cst_355 : f32 to vector<16x4xf32>
    %686 = arith.mulf %685, %646 : vector<16x4xf32>
    %cst_356 = arith.constant 7.500000e-01 : f32
    %687 = vector.broadcast %cst_356 : f32 to vector<16x4xf32>
    %688 = arith.mulf %687, %647 : vector<16x4xf32>
    %689 = arith.addf %686, %688 : vector<16x4xf32>
    %cst_357 = arith.constant 7.500000e-01 : f32
    %690 = vector.broadcast %cst_357 : f32 to vector<16x4xf32>
    %691 = arith.mulf %690, %647 : vector<16x4xf32>
    %cst_358 = arith.constant 2.500000e-01 : f32
    %692 = vector.broadcast %cst_358 : f32 to vector<16x4xf32>
    %693 = arith.mulf %692, %648 : vector<16x4xf32>
    %694 = arith.addf %691, %693 : vector<16x4xf32>
    %cst_359 = arith.constant 2.500000e-01 : f32
    %695 = vector.broadcast %cst_359 : f32 to vector<16x4xf32>
    %696 = arith.mulf %695, %647 : vector<16x4xf32>
    %cst_360 = arith.constant 7.500000e-01 : f32
    %697 = vector.broadcast %cst_360 : f32 to vector<16x4xf32>
    %698 = arith.mulf %697, %648 : vector<16x4xf32>
    %699 = arith.addf %696, %698 : vector<16x4xf32>
    %cst_361 = arith.constant 7.500000e-01 : f32
    %700 = vector.broadcast %cst_361 : f32 to vector<16x4xf32>
    %701 = arith.mulf %700, %648 : vector<16x4xf32>
    %cst_362 = arith.constant 2.500000e-01 : f32
    %702 = vector.broadcast %cst_362 : f32 to vector<16x4xf32>
    %703 = arith.mulf %702, %649 : vector<16x4xf32>
    %704 = arith.addf %701, %703 : vector<16x4xf32>
    %cst_363 = arith.constant 2.500000e-01 : f32
    %705 = vector.broadcast %cst_363 : f32 to vector<16x4xf32>
    %706 = arith.mulf %705, %648 : vector<16x4xf32>
    %cst_364 = arith.constant 7.500000e-01 : f32
    %707 = vector.broadcast %cst_364 : f32 to vector<16x4xf32>
    %708 = arith.mulf %707, %649 : vector<16x4xf32>
    %709 = arith.addf %706, %708 : vector<16x4xf32>
    %cst_365 = arith.constant 7.500000e-01 : f32
    %710 = vector.broadcast %cst_365 : f32 to vector<16x4xf32>
    %711 = arith.mulf %710, %649 : vector<16x4xf32>
    %cst_366 = arith.constant 2.500000e-01 : f32
    %712 = vector.broadcast %cst_366 : f32 to vector<16x4xf32>
    %713 = arith.mulf %712, %650 : vector<16x4xf32>
    %714 = arith.addf %711, %713 : vector<16x4xf32>
    %cst_367 = arith.constant 2.500000e-01 : f32
    %715 = vector.broadcast %cst_367 : f32 to vector<16x4xf32>
    %716 = arith.mulf %715, %649 : vector<16x4xf32>
    %cst_368 = arith.constant 7.500000e-01 : f32
    %717 = vector.broadcast %cst_368 : f32 to vector<16x4xf32>
    %718 = arith.mulf %717, %650 : vector<16x4xf32>
    %719 = arith.addf %716, %718 : vector<16x4xf32>
    %cst_369 = arith.constant 7.500000e-01 : f32
    %720 = vector.broadcast %cst_369 : f32 to vector<16x4xf32>
    %721 = arith.mulf %720, %650 : vector<16x4xf32>
    %cst_370 = arith.constant 2.500000e-01 : f32
    %722 = vector.broadcast %cst_370 : f32 to vector<16x4xf32>
    %723 = arith.mulf %722, %651 : vector<16x4xf32>
    %724 = arith.addf %721, %723 : vector<16x4xf32>
    %725 = vector.extract_strided_slice %644 {offsets = [1, 0], sizes = [15, 4], strides = [1, 1]} : vector<16x4xf32> to vector<15x4xf32>
    %726 = vector.extract_strided_slice %651 {offsets = [15, 0], sizes = [1, 4], strides = [1, 1]} : vector<16x4xf32> to vector<1x4xf32>
    %727 = tpu.concatenate %725, %726 in 0 : vector<15x4xf32>, vector<1x4xf32> -> vector<16x4xf32>
    %cst_371 = arith.constant 2.500000e-01 : f32
    %728 = vector.broadcast %cst_371 : f32 to vector<16x4xf32>
    %729 = arith.mulf %728, %650 : vector<16x4xf32>
    %cst_372 = arith.constant 7.500000e-01 : f32
    %730 = vector.broadcast %cst_372 : f32 to vector<16x4xf32>
    %731 = arith.mulf %730, %651 : vector<16x4xf32>
    %732 = arith.addf %729, %731 : vector<16x4xf32>
    %cst_373 = arith.constant 7.500000e-01 : f32
    %733 = vector.broadcast %cst_373 : f32 to vector<16x4xf32>
    %734 = arith.mulf %733, %651 : vector<16x4xf32>
    %cst_374 = arith.constant 2.500000e-01 : f32
    %735 = vector.broadcast %cst_374 : f32 to vector<16x4xf32>
    %736 = arith.mulf %735, %727 : vector<16x4xf32>
    %737 = arith.addf %734, %736 : vector<16x4xf32>
    %738 = tpu.concatenate %659, %664, %669, %674, %679, %684, %689, %694, %699, %704, %709, %714, %719, %724, %732, %737 in 1 : vector<16x4xf32>, vector<16x4xf32>, vector<16x4xf32>, vector<16x4xf32>, vector<16x4xf32>, vector<16x4xf32>, vector<16x4xf32>, vector<16x4xf32>, vector<16x4xf32>, vector<16x4xf32>, vector<16x4xf32>, vector<16x4xf32>, vector<16x4xf32>, vector<16x4xf32>, vector<16x4xf32>, vector<16x4xf32> -> vector<16x64xf32>
    %c0_375 = arith.constant 0 : index
    %c0_376 = arith.constant 0 : index
    %739 = vector.load %arg16[%c0_375, %c0_376] : memref<32x64xf32, #tpu.memory_space<vmem>>, vector<16x64xf32>
    tpu.vector_store %arg16[%c0_375, %c0_376], %643 {strides = array<i32>} : memref<32x64xf32, #tpu.memory_space<vmem>>, vector<16x64xf32>,
    %c16_377 = arith.constant 16 : index
    %c0_378 = arith.constant 0 : index
    %740 = vector.load %arg16[%c16_377, %c0_378] : memref<32x64xf32, #tpu.memory_space<vmem>>, vector<16x64xf32>
    tpu.vector_store %arg16[%c16_377, %c0_378], %738 {strides = array<i32>} : memref<32x64xf32, #tpu.memory_space<vmem>>, vector<16x64xf32>,
    return
  }
  func.func @transform_0(%arg0: i32) -> (i32, i32) {
    %c0_i32 = arith.constant 0 : i32
    %c0_i32_0 = arith.constant 0 : i32
    %c0_i32_1 = arith.constant 0 : i32
    return %c0_i32, %c0_i32_0 : i32, i32
  }
  func.func @transform_1(%arg0: i32) -> (i32, i32) {
    %c0_i32 = arith.constant 0 : i32
    %c0_i32_0 = arith.constant 0 : i32
    %c0_i32_1 = arith.constant 0 : i32
    return %c0_i32, %c0_i32_0 : i32, i32
  }
  func.func @transform_2(%arg0: i32) -> (i32, i32) {
    %c0_i32 = arith.constant 0 : i32
    %c0_i32_0 = arith.constant 0 : i32
    %c0_i32_1 = arith.constant 0 : i32
    return %c0_i32, %c0_i32_0 : i32, i32
  }
  func.func @transform_3(%arg0: i32) -> (i32, i32) {
    %c0_i32 = arith.constant 0 : i32
    %c0_i32_0 = arith.constant 0 : i32
    %c0_i32_1 = arith.constant 0 : i32
    return %c0_i32, %c0_i32_0 : i32, i32
  }
  func.func @transform_4(%arg0: i32) -> (i32, i32) {
    %c0_i32 = arith.constant 0 : i32
    %c0_i32_0 = arith.constant 0 : i32
    %c0_i32_1 = arith.constant 0 : i32
    return %c0_i32, %c0_i32_0 : i32, i32
  }
  func.func @transform_5(%arg0: i32) -> (i32, i32) {
    %c0_i32 = arith.constant 0 : i32
    %c0_i32_0 = arith.constant 0 : i32
    %c0_i32_1 = arith.constant 0 : i32
    return %c0_i32, %c0_i32_0 : i32, i32
  }
  func.func @transform_6(%arg0: i32) -> (i32, i32) {
    %c0_i32 = arith.constant 0 : i32
    %c0_i32_0 = arith.constant 0 : i32
    %c0_i32_1 = arith.constant 0 : i32
    return %c0_i32, %c0_i32_0 : i32, i32
  }
  func.func @transform_7(%arg0: i32) -> (i32, i32) {
    %c0_i32 = arith.constant 0 : i32
    %c0_i32_0 = arith.constant 0 : i32
    %c0_i32_1 = arith.constant 0 : i32
    return %c0_i32, %c0_i32_0 : i32, i32
  }
  func.func @transform_8(%arg0: i32) -> (i32, i32) {
    %c0_i32 = arith.constant 0 : i32
    %c0_i32_0 = arith.constant 0 : i32
    %c0_i32_1 = arith.constant 0 : i32
    return %c0_i32, %c0_i32_0 : i32, i32
  }
  func.func @transform_9(%arg0: i32) -> (i32, i32) {
    %c0_i32 = arith.constant 0 : i32
    %c0_i32_0 = arith.constant 0 : i32
    %c0_i32_1 = arith.constant 0 : i32
    return %c0_i32, %c0_i32_0 : i32, i32
  }
  func.func @transform_10(%arg0: i32) -> (i32, i32) {
    %c0_i32 = arith.constant 0 : i32
    %c0_i32_0 = arith.constant 0 : i32
    %c0_i32_1 = arith.constant 0 : i32
    return %c0_i32, %c0_i32_0 : i32, i32
  }
  func.func @transform_11(%arg0: i32) -> (i32, i32) {
    %c0_i32 = arith.constant 0 : i32
    %c0_i32_0 = arith.constant 0 : i32
    %c0_i32_1 = arith.constant 0 : i32
    return %c0_i32, %c0_i32_0 : i32, i32
  }
  func.func @transform_12(%arg0: i32) -> (i32, i32) {
    %c0_i32 = arith.constant 0 : i32
    %c0_i32_0 = arith.constant 0 : i32
    %c0_i32_1 = arith.constant 0 : i32
    return %c0_i32, %c0_i32_0 : i32, i32
  }
  func.func @transform_13(%arg0: i32) -> (i32, i32) {
    %c0_i32 = arith.constant 0 : i32
    %c0_i32_0 = arith.constant 0 : i32
    %c0_i32_1 = arith.constant 0 : i32
    return %c0_i32, %c0_i32_0 : i32, i32
  }
  func.func @transform_14(%arg0: i32) -> (i32, i32) {
    %c0_i32 = arith.constant 0 : i32
    %c0_i32_0 = arith.constant 0 : i32
    %c0_i32_1 = arith.constant 0 : i32
    return %c0_i32, %c0_i32_0 : i32, i32
  }
  func.func @transform_15(%arg0: i32) -> (i32, i32) {
    %c0_i32 = arith.constant 0 : i32
    %c0_i32_0 = arith.constant 0 : i32
    %c0_i32_1 = arith.constant 0 : i32
    return %c0_i32, %c0_i32_0 : i32, i32
  }
}

</mosaic_0001>

<llo_original>
// kernel: tpu_custom_call.1
$region0: #{tpu_custom_call.1}
  #allocation0 [shape = 'u32[]', space=smem, size = 0x4, offset = 0x4, fixed_abs, tag = 'smem constant byte address 0x4 - core index']
  #allocation1 [shape = 'u32[144,128]{1,0:T(1,128)}', space=vmem, size = 0x12000, scoped, tag = 'internal scratch']
  #allocation2 [shape = 'f32[16,32,128]{2,1,0:T(8,128)}', space=vmem, size = 0x40000, scoped, tag = 'scratch operand']
  %s0 = inlined_call_operand.vmem [shape: f32[2,32], index: 0, kind: input, shape index: {}]
  %s1 = inlined_call_operand.vmem [shape: f32[32,2048], index: 1, kind: input, shape index: {}]
  %s2 = inlined_call_operand.vmem [shape: f32[1,2048], index: 2, kind: input, shape index: {}]
  %s3 = inlined_call_operand.vmem [shape: bf16[1024,32], index: 3, kind: input, shape index: {}]
  %s4 = inlined_call_operand.vmem [shape: f32[1,32], index: 4, kind: input, shape index: {}]
  %s5 = inlined_call_operand.vmem [shape: f32[1,32], index: 5, kind: input, shape index: {}]
  %s6 = inlined_call_operand.vmem [shape: f32[1,32], index: 6, kind: input, shape index: {}]
  %s7 = inlined_call_operand.vmem [shape: bf16[1024,16], index: 7, kind: input, shape index: {}]
  %s8 = inlined_call_operand.vmem [shape: f32[1,16], index: 8, kind: input, shape index: {}]
  %s9 = inlined_call_operand.vmem [shape: f32[1,16], index: 9, kind: input, shape index: {}]
  %s10 = inlined_call_operand.vmem [shape: f32[1,16], index: 10, kind: input, shape index: {}]
  %s11 = inlined_call_operand.vmem [shape: bf16[1024,4], index: 11, kind: input, shape index: {}]
  %s12 = inlined_call_operand.vmem [shape: f32[1,4], index: 12, kind: input, shape index: {}]
  %s13 = inlined_call_operand.vmem [shape: f32[1,4], index: 13, kind: input, shape index: {}]
  %s14 = inlined_call_operand.vmem [shape: f32[1,4], index: 14, kind: input, shape index: {}]
  %s15 = inlined_call_operand.hbm [shape: f32[32,64], index: 15, kind: output, shape index: {}]
  %s16 = sld [smem:[#allocation0]]
  $region70: #{tpu_custom_call.1} parent=0
    _
  %s18 = ssub.s32 1, %s16
  %s19 = scalar_select 0, %s18, %s16
  $region1: #{tpu_custom_call.1} parent=0
    #allocation3 [shape = 'u8[16384]{0}', space=vmem, size = 0x4000, scoped, tag = 'output window, operand 0, single buffered']
    #allocation4 [shape = 's32[1]{0}', space=sflag, size = 0x4, scoped, tag = 'scoped memory for tpu_custom_call.1']
    %20 = vsyncpa [#allocation4], 0
    // Predicated region
    $region2: #{tpu_custom_call.1} parent=1 // pred_check
      _
    $region3: #{tpu_custom_call.1} parent=1 // pred_check_branch
      %22 = sbr.rel (0) target = $region5
    $region4: #{tpu_custom_call.1} parent=1 // pred_region
      _
    $region5: #{tpu_custom_call.1} parent=1 // pred_fallthru
      _
    // Predicated region
    $region6: #{tpu_custom_call.1} parent=1 // pred_check
      _
    $region7: #{tpu_custom_call.1} parent=1 // pred_check_branch
      %24 = sbr.rel (0) target = $region9
    $region8: #{tpu_custom_call.1} parent=1 // pred_region
      _
    $region9: #{tpu_custom_call.1} parent=1 // pred_fallthru
      _
    // Predicated region
    $region10: #{tpu_custom_call.1} parent=1 // pred_check
      _
    $region11: #{tpu_custom_call.1} parent=1 // pred_check_branch
      %26 = sbr.rel (0) target = $region13
    $region12: #{tpu_custom_call.1} parent=1 // pred_region
      _
    $region13: #{tpu_custom_call.1} parent=1 // pred_fallthru
      _
    // Predicated region
    $region14: #{tpu_custom_call.1} parent=1 // pred_check
      _
    $region15: #{tpu_custom_call.1} parent=1 // pred_check_branch
      %28 = sbr.rel (0) target = $region17
    $region16: #{tpu_custom_call.1} parent=1 // pred_region
      _
    $region17: #{tpu_custom_call.1} parent=1 // pred_fallthru
      _
    // Predicated region
    $region18: #{tpu_custom_call.1} parent=1 // pred_check
      _
    $region19: #{tpu_custom_call.1} parent=1 // pred_check_branch
      %30 = sbr.rel (0) target = $region21
    $region20: #{tpu_custom_call.1} parent=1 // pred_region
      _
    $region21: #{tpu_custom_call.1} parent=1 // pred_fallthru
      _
    // Predicated region
    $region22: #{tpu_custom_call.1} parent=1 // pred_check
      _
    $region23: #{tpu_custom_call.1} parent=1 // pred_check_branch
      %32 = sbr.rel (0) target = $region25
    $region24: #{tpu_custom_call.1} parent=1 // pred_region
      _
    $region25: #{tpu_custom_call.1} parent=1 // pred_fallthru
      _
    // Predicated region
    $region26: #{tpu_custom_call.1} parent=1 // pred_check
      _
    $region27: #{tpu_custom_call.1} parent=1 // pred_check_branch
      %34 = sbr.rel (0) target = $region29
    $region28: #{tpu_custom_call.1} parent=1 // pred_region
      _
    $region29: #{tpu_custom_call.1} parent=1 // pred_fallthru
      _
    // Predicated region
    $region30: #{tpu_custom_call.1} parent=1 // pred_check
      _
    $region31: #{tpu_custom_call.1} parent=1 // pred_check_branch
      %36 = sbr.rel (0) target = $region33
    $region32: #{tpu_custom_call.1} parent=1 // pred_region
      _
    $region33: #{tpu_custom_call.1} parent=1 // pred_fallthru
      _
    // Predicated region
    $region34: #{tpu_custom_call.1} parent=1 // pred_check
      _
    $region35: #{tpu_custom_call.1} parent=1 // pred_check_branch
      %38 = sbr.rel (0) target = $region37
    $region36: #{tpu_custom_call.1} parent=1 // pred_region
      _
    $region37: #{tpu_custom_call.1} parent=1 // pred_fallthru
      _
    // Predicated region
    $region38: #{tpu_custom_call.1} parent=1 // pred_check
      _
    $region39: #{tpu_custom_call.1} parent=1 // pred_check_branch
      %40 = sbr.rel (0) target = $region41
    $region40: #{tpu_custom_call.1} parent=1 // pred_region
      _
    $region41: #{tpu_custom_call.1} parent=1 // pred_fallthru
      _
    // Predicated region
    $region42: #{tpu_custom_call.1} parent=1 // pred_check
      _
    $region43: #{tpu_custom_call.1} parent=1 // pred_check_branch
      %42 = sbr.rel (0) target = $region45
    $region44: #{tpu_custom_call.1} parent=1 // pred_region
      _
    $region45: #{tpu_custom_call.1} parent=1 // pred_fallthru
      _
    // Predicated region
    $region46: #{tpu_custom_call.1} parent=1 // pred_check
      _
    $region47: #{tpu_custom_call.1} parent=1 // pred_check_branch
      %44 = sbr.rel (0) target = $region49
    $region48: #{tpu_custom_call.1} parent=1 // pred_region
      _
    $region49: #{tpu_custom_call.1} parent=1 // pred_fallthru
      _
    // Predicated region
    $region50: #{tpu_custom_call.1} parent=1 // pred_check
      _
    $region51: #{tpu_custom_call.1} parent=1 // pred_check_branch
      %46 = sbr.rel (0) target = $region53
    $region52: #{tpu_custom_call.1} parent=1 // pred_region
      _
    $region53: #{tpu_custom_call.1} parent=1 // pred_fallthru
      _
    // Predicated region
    $region54: #{tpu_custom_call.1} parent=1 // pred_check
      _
    $region55: #{tpu_custom_call.1} parent=1 // pred_check_branch
      %48 = sbr.rel (0) target = $region57
    $region56: #{tpu_custom_call.1} parent=1 // pred_region
      _
    $region57: #{tpu_custom_call.1} parent=1 // pred_fallthru
      _
    // Predicated region
    $region58: #{tpu_custom_call.1} parent=1 // pred_check
      _
    $region59: #{tpu_custom_call.1} parent=1 // pred_check_branch
      %50 = sbr.rel (0) target = $region61
    $region60: #{tpu_custom_call.1} parent=1 // pred_region
      _
    $region61: #{tpu_custom_call.1} parent=1 // pred_fallthru
      _
    %v52 = vld [vmem:[%s0] sm:$0x3]
    %v53 = vld [vmem:[%s1] sm:$0xff]
    %v54 = vld [vmem:[%s1 + $0x8] sm:$0xff]
    %v55 = vld [vmem:[%s1 + $0x10] sm:$0xff]
    %v56 = vld [vmem:[%s1 + $0x18] sm:$0xff]
    %v57 = vld [vmem:[%s1 + $0x20] sm:$0xff]
    %v58 = vld [vmem:[%s1 + $0x28] sm:$0xff]
    %v59 = vld [vmem:[%s1 + $0x30] sm:$0xff]
    %v60 = vld [vmem:[%s1 + $0x38] sm:$0xff]
    %v61 = vld [vmem:[%s1 + $0x40] sm:$0xff]
    %v62 = vld [vmem:[%s1 + $0x48] sm:$0xff]
    %v63 = vld [vmem:[%s1 + $0x50] sm:$0xff]
    %v64 = vld [vmem:[%s1 + $0x58] sm:$0xff]
    %v65 = vld [vmem:[%s1 + $0x60] sm:$0xff]
    %v66 = vld [vmem:[%s1 + $0x68] sm:$0xff]
    %v67 = vld [vmem:[%s1 + $0x70] sm:$0xff]
    %v68 = vld [vmem:[%s1 + $0x78] sm:$0xff]
    %v69 = vld [vmem:[%s1 + $0x80] sm:$0xff]
    %v70 = vld [vmem:[%s1 + $0x88] sm:$0xff]
    %v71 = vld [vmem:[%s1 + $0x90] sm:$0xff]
    %v72 = vld [vmem:[%s1 + $0x98] sm:$0xff]
    %v73 = vld [vmem:[%s1 + $0xa0] sm:$0xff]
    %v74 = vld [vmem:[%s1 + $0xa8] sm:$0xff]
    %v75 = vld [vmem:[%s1 + $0xb0] sm:$0xff]
    %v76 = vld [vmem:[%s1 + $0xb8] sm:$0xff]
    %v77 = vld [vmem:[%s1 + $0xc0] sm:$0xff]
    %v78 = vld [vmem:[%s1 + $0xc8] sm:$0xff]
    %v79 = vld [vmem:[%s1 + $0xd0] sm:$0xff]
    %v80 = vld [vmem:[%s1 + $0xd8] sm:$0xff]
    %v81 = vld [vmem:[%s1 + $0xe0] sm:$0xff]
    %v82 = vld [vmem:[%s1 + $0xe8] sm:$0xff]
    %v83 = vld [vmem:[%s1 + $0xf0] sm:$0xff]
    %v84 = vld [vmem:[%s1 + $0xf8] sm:$0xff]
    %v85 = vld [vmem:[%s1 + $0x100] sm:$0xff]
    %v86 = vld [vmem:[%s1 + $0x108] sm:$0xff]
    %v87 = vld [vmem:[%s1 + $0x110] sm:$0xff]
    %v88 = vld [vmem:[%s1 + $0x118] sm:$0xff]
    %v89 = vld [vmem:[%s1 + $0x120] sm:$0xff]
    %v90 = vld [vmem:[%s1 + $0x128] sm:$0xff]
    %v91 = vld [vmem:[%s1 + $0x130] sm:$0xff]
    %v92 = vld [vmem:[%s1 + $0x138] sm:$0xff]
    %v93 = vld [vmem:[%s1 + $0x140] sm:$0xff]
    %v94 = vld [vmem:[%s1 + $0x148] sm:$0xff]
    %v95 = vld [vmem:[%s1 + $0x150] sm:$0xff]
    %v96 = vld [vmem:[%s1 + $0x158] sm:$0xff]
    %v97 = vld [vmem:[%s1 + $0x160] sm:$0xff]
    %v98 = vld [vmem:[%s1 + $0x168] sm:$0xff]
    %v99 = vld [vmem:[%s1 + $0x170] sm:$0xff]
    %v100 = vld [vmem:[%s1 + $0x178] sm:$0xff]
    %v101 = vld [vmem:[%s1 + $0x180] sm:$0xff]
    %v102 = vld [vmem:[%s1 + $0x188] sm:$0xff]
    %v103 = vld [vmem:[%s1 + $0x190] sm:$0xff]
    %v104 = vld [vmem:[%s1 + $0x198] sm:$0xff]
    %v105 = vld [vmem:[%s1 + $0x1a0] sm:$0xff]
    %v106 = vld [vmem:[%s1 + $0x1a8] sm:$0xff]
    %v107 = vld [vmem:[%s1 + $0x1b0] sm:$0xff]
    %v108 = vld [vmem:[%s1 + $0x1b8] sm:$0xff]
    %v109 = vld [vmem:[%s1 + $0x1c0] sm:$0xff]
    %v110 = vld [vmem:[%s1 + $0x1c8] sm:$0xff]
    %v111 = vld [vmem:[%s1 + $0x1d0] sm:$0xff]
    %v112 = vld [vmem:[%s1 + $0x1d8] sm:$0xff]
    %v113 = vld [vmem:[%s1 + $0x1e0] sm:$0xff]
    %v114 = vld [vmem:[%s1 + $0x1e8] sm:$0xff]
    %v115 = vld [vmem:[%s1 + $0x1f0] sm:$0xff]
    %v116 = vld [vmem:[%s1 + $0x1f8] sm:$0xff]
    %v117 = vld [vmem:[%s2] sm:$0xff]
    %v118 = vld [vmem:[%s2 + $0x8] sm:$0xff]
    %v121 = vlaneseq
    %v122 = vshrl.u32 %v121, 7
    %v123 = vsub.s32 0, %v122
    %v124 = vrot.slane %v117, %v123
    %v125 = vlaneseq
    %v126 = vshrl.u32 %v125, 7
    %v127 = vsub.s32 1, %v126
    %v128 = vrot.slane %v117, %v127
    %v129 = vlaneseq
    %v130 = vshrl.u32 %v129, 7
    %v131 = vsub.s32 2, %v130
    %v132 = vrot.slane %v117, %v131
    %v133 = vlaneseq
    %v134 = vshrl.u32 %v133, 7
    %v135 = vsub.s32 3, %v134
    %v136 = vrot.slane %v117, %v135
    %v137 = vlaneseq
    %v138 = vshrl.u32 %v137, 7
    %v139 = vsub.s32 4, %v138
    %v140 = vrot.slane %v117, %v139
    %v141 = vlaneseq
    %v142 = vshrl.u32 %v141, 7
    %v143 = vsub.s32 5, %v142
    %v144 = vrot.slane %v117, %v143
    %v145 = vlaneseq
    %v146 = vshrl.u32 %v145, 7
    %v147 = vsub.s32 6, %v146
    %v148 = vrot.slane %v117, %v147
    %v149 = vlaneseq
    %v150 = vshrl.u32 %v149, 7
    %v151 = vsub.s32 7, %v150
    %v152 = vrot.slane %v117, %v151
    %v153 = vlaneseq
    %v154 = vshrl.u32 %v153, 7
    %v155 = vsub.s32 0, %v154
    %v156 = vrot.slane %v118, %v155
    %v157 = vlaneseq
    %v158 = vshrl.u32 %v157, 7
    %v159 = vsub.s32 1, %v158
    %v160 = vrot.slane %v118, %v159
    %v161 = vlaneseq
    %v162 = vshrl.u32 %v161, 7
    %v163 = vsub.s32 2, %v162
    %v164 = vrot.slane %v118, %v163
    %v165 = vlaneseq
    %v166 = vshrl.u32 %v165, 7
    %v167 = vsub.s32 3, %v166
    %v168 = vrot.slane %v118, %v167
    %v169 = vlaneseq
    %v170 = vshrl.u32 %v169, 7
    %v171 = vsub.s32 4, %v170
    %v172 = vrot.slane %v118, %v171
    %v173 = vlaneseq
    %v174 = vshrl.u32 %v173, 7
    %v175 = vsub.s32 5, %v174
    %v176 = vrot.slane %v118, %v175
    %v177 = vlaneseq
    %v178 = vshrl.u32 %v177, 7
    %v179 = vsub.s32 6, %v178
    %v180 = vrot.slane %v118, %v179
    %v181 = vlaneseq
    %v182 = vshrl.u32 %v181, 7
    %v183 = vsub.s32 7, %v182
    %v184 = vrot.slane %v118, %v183
    %vm201 = vcmask 261120
    %v203 = vsel %vm201, %v52, 0
    %205 = vmatprep.subr.mxu0 %v54
    %206 = vmatpush1.msra.mxu0 %v53
    %207 = vmatprep.subr.mxu0 %v70
    %208 = vmatpush1.msra.mxu0 %v69
    %209 = vmatprep.subr.mxu0 %v86
    %210 = vmatpush1.msra.mxu0 %v85
    %211 = vmatprep.subr.mxu0 %v102
    %212 = vmatpush1.msra.mxu0 %v101
    %213 = vmatprep.subr.mxu0 0.0
    %214 = vmatpush1.msra.mxu0 0.0
    %215 = vmatprep.subr.mxu0 0.0
    %216 = vmatpush1.msra.mxu0 0.0
    %217 = vmatprep.subr.mxu0 0.0
    %218 = vmatpush1.msra.mxu0 0.0
    %219 = vmatprep.subr.mxu0 0.0
    %220 = vmatpush1.msra.mxu0 0.0
    %221 = vmatprep.subr.mxu0 0.0
    %222 = vmatpush1.msra.mxu0 0.0
    %223 = vmatprep.subr.mxu0 0.0
    %224 = vmatpush1.msra.mxu0 0.0
    %225 = vmatprep.subr.mxu0 0.0
    %226 = vmatpush1.msra.mxu0 0.0
    %227 = vmatprep.subr.mxu0 0.0
    %228 = vmatpush1.msra.mxu0 0.0
    %229 = vmatprep.subr.mxu0 0.0
    %230 = vmatpush1.msra.mxu0 0.0
    %231 = vmatprep.subr.mxu0 0.0
    %232 = vmatpush1.msra.mxu0 0.0
    %233 = vmatprep.subr.mxu0 0.0
    %234 = vmatpush1.msra.mxu0 0.0
    %235 = vmatprep.subr.mxu0 0.0
    %236 = vmatpush1.msra.mxu0 0.0
    %237 = vmatprep.subr.mxu0 0.0
    %238 = vmatpush1.msra.mxu0 0.0
    %239 = vmatprep.subr.mxu0 0.0
    %240 = vmatpush1.msra.mxu0 0.0
    %241 = vmatprep.subr.mxu0 0.0
    %242 = vmatpush1.msra.mxu0 0.0
    %243 = vmatprep.subr.mxu0 0.0
    %244 = vmatpush1.msra.mxu0 0.0
    %245 = vmatprep.subr.mxu0 0.0
    %246 = vmatpush1.msra.mxu0 0.0
    %247 = vmatprep.subr.mxu0 0.0
    %248 = vmatpush1.msra.mxu0 0.0
    %249 = vmatprep.subr.mxu0 0.0
    %250 = vmatpush1.msra.mxu0 0.0
    %251 = vmatprep.subr.mxu0 0.0
    %252 = vmatpush1.msra.mxu0 0.0
    %253 = vmatprep.subr.mxu0 0.0
    %254 = vmatpush1.msra.mxu0 0.0
    %255 = vmatprep.subr.mxu0 0.0
    %256 = vmatpush1.msra.mxu0 0.0
    %257 = vmatprep.subr.mxu0 0.0
    %258 = vmatpush1.msra.mxu0 0.0
    %259 = vmatprep.subr.mxu0 0.0
    %260 = vmatpush1.msra.mxu0 0.0
    %261 = vmatprep.subr.mxu0 0.0
    %262 = vmatpush1.msra.mxu0 0.0
    %263 = vmatprep.subr.mxu0 0.0
    %264 = vmatpush1.msra.mxu0 0.0
    %265 = vmatprep.subr.mxu0 0.0
    %266 = vmatpush1.msra.mxu0 0.0
    %267 = vmatprep.subr.mxu0 0.0
    %268 = vmatpush1.msra.mxu0 0.0
    %269 = vmatprep.mubr.f32.mxu0 0.0
    %270 = vmatmul.mubr.f32.gmra.mrb[0].mxu0 %v203
    %v271 = vpop.f32.mrb[0].mxu0
    %v272 = vadd.f32 %v124, %v271
    %v273 = vpop.f32.mrb[0].mxu0
    %v274 = vadd.f32 %v128, %v273
    %275 = vdwg.mxu0
    %276 = vmatprep.subr.mxu0 %v56
    %277 = vmatpush1.msra.mxu0 %v55
    %278 = vmatprep.subr.mxu0 %v72
    %279 = vmatpush1.msra.mxu0 %v71
    %280 = vmatprep.subr.mxu0 %v88
    %281 = vmatpush1.msra.mxu0 %v87
    %282 = vmatprep.subr.mxu0 %v104
    %283 = vmatpush1.msra.mxu0 %v103
    %284 = vmatprep.subr.mxu0 0.0
    %285 = vmatpush1.msra.mxu0 0.0
    %286 = vmatprep.subr.mxu0 0.0
    %287 = vmatpush1.msra.mxu0 0.0
    %288 = vmatprep.subr.mxu0 0.0
    %289 = vmatpush1.msra.mxu0 0.0
    %290 = vmatprep.subr.mxu0 0.0
    %291 = vmatpush1.msra.mxu0 0.0
    %292 = vmatprep.subr.mxu0 0.0
    %293 = vmatpush1.msra.mxu0 0.0
    %294 = vmatprep.subr.mxu0 0.0
    %295 = vmatpush1.msra.mxu0 0.0
    %296 = vmatprep.subr.mxu0 0.0
    %297 = vmatpush1.msra.mxu0 0.0
    %298 = vmatprep.subr.mxu0 0.0
    %299 = vmatpush1.msra.mxu0 0.0
    %300 = vmatprep.subr.mxu0 0.0
    %301 = vmatpush1.msra.mxu0 0.0
    %302 = vmatprep.subr.mxu0 0.0
    %303 = vmatpush1.msra.mxu0 0.0
    %304 = vmatprep.subr.mxu0 0.0
    %305 = vmatpush1.msra.mxu0 0.0
    %306 = vmatprep.subr.mxu0 0.0
    %307 = vmatpush1.msra.mxu0 0.0
    %308 = vmatprep.subr.mxu0 0.0
    %309 = vmatpush1.msra.mxu0 0.0
    %310 = vmatprep.subr.mxu0 0.0
    %311 = vmatpush1.msra.mxu0 0.0
    %312 = vmatprep.subr.mxu0 0.0
    %313 = vmatpush1.msra.mxu0 0.0
    %314 = vmatprep.subr.mxu0 0.0
    %315 = vmatpush1.msra.mxu0 0.0
    %316 = vmatprep.subr.mxu0 0.0
    %317 = vmatpush1.msra.mxu0 0.0
    %318 = vmatprep.subr.mxu0 0.0
    %319 = vmatpush1.msra.mxu0 0.0
    %320 = vmatprep.subr.mxu0 0.0
    %321 = vmatpush1.msra.mxu0 0.0
    %322 = vmatprep.subr.mxu0 0.0
    %323 = vmatpush1.msra.mxu0 0.0
    %324 = vmatprep.subr.mxu0 0.0
    %325 = vmatpush1.msra.mxu0 0.0
    %326 = vmatprep.subr.mxu0 0.0
    %327 = vmatpush1.msra.mxu0 0.0
    %328 = vmatprep.subr.mxu0 0.0
    %329 = vmatpush1.msra.mxu0 0.0
    %330 = vmatprep.subr.mxu0 0.0
    %331 = vmatpush1.msra.mxu0 0.0
    %332 = vmatprep.subr.mxu0 0.0
    %333 = vmatpush1.msra.mxu0 0.0
    %334 = vmatprep.subr.mxu0 0.0
    %335 = vmatpush1.msra.mxu0 0.0
    %336 = vmatprep.subr.mxu0 0.0
    %337 = vmatpush1.msra.mxu0 0.0
    %338 = vmatprep.subr.mxu0 0.0
    %339 = vmatpush1.msra.mxu0 0.0
    %340 = vmatprep.mubr.f32.mxu0 0.0
    %341 = vmatmul.mubr.f32.gmra.mrb[0].mxu0 %v203
    %v342 = vpop.f32.mrb[0].mxu0
    %v343 = vadd.f32 %v132, %v342
    %v344 = vpop.f32.mrb[0].mxu0
    %v345 = vadd.f32 %v136, %v344
    %346 = vdwg.mxu0
    %347 = vmatprep.subr.mxu0 %v58
    %348 = vmatpush1.msra.mxu0 %v57
    %349 = vmatprep.subr.mxu0 %v74
    %350 = vmatpush1.msra.mxu0 %v73
    %351 = vmatprep.subr.mxu0 %v90
    %352 = vmatpush1.msra.mxu0 %v89
    %353 = vmatprep.subr.mxu0 %v106
    %354 = vmatpush1.msra.mxu0 %v105
    %355 = vmatprep.subr.mxu0 0.0
    %356 = vmatpush1.msra.mxu0 0.0
    %357 = vmatprep.subr.mxu0 0.0
    %358 = vmatpush1.msra.mxu0 0.0
    %359 = vmatprep.subr.mxu0 0.0
    %360 = vmatpush1.msra.mxu0 0.0
    %361 = vmatprep.subr.mxu0 0.0
    %362 = vmatpush1.msra.mxu0 0.0
    %363 = vmatprep.subr.mxu0 0.0
    %364 = vmatpush1.msra.mxu0 0.0
    %365 = vmatprep.subr.mxu0 0.0
    %366 = vmatpush1.msra.mxu0 0.0
    %367 = vmatprep.subr.mxu0 0.0
    %368 = vmatpush1.msra.mxu0 0.0
    %369 = vmatprep.subr.mxu0 0.0
    %370 = vmatpush1.msra.mxu0 0.0
    %371 = vmatprep.subr.mxu0 0.0
    %372 = vmatpush1.msra.mxu0 0.0
    %373 = vmatprep.subr.mxu0 0.0
    %374 = vmatpush1.msra.mxu0 0.0
    %375 = vmatprep.subr.mxu0 0.0
    %376 = vmatpush1.msra.mxu0 0.0
    %377 = vmatprep.subr.mxu0 0.0
    %378 = vmatpush1.msra.mxu0 0.0
    %379 = vmatprep.subr.mxu0 0.0
    %380 = vmatpush1.msra.mxu0 0.0
    %381 = vmatprep.subr.mxu0 0.0
    %382 = vmatpush1.msra.mxu0 0.0
    %383 = vmatprep.subr.mxu0 0.0
    %384 = vmatpush1.msra.mxu0 0.0
    %385 = vmatprep.subr.mxu0 0.0
    %386 = vmatpush1.msra.mxu0 0.0
    %387 = vmatprep.subr.mxu0 0.0
    %388 = vmatpush1.msra.mxu0 0.0
    %389 = vmatprep.subr.mxu0 0.0
    %390 = vmatpush1.msra.mxu0 0.0
    %391 = vmatprep.subr.mxu0 0.0
    %392 = vmatpush1.msra.mxu0 0.0
    %393 = vmatprep.subr.mxu0 0.0
    %394 = vmatpush1.msra.mxu0 0.0
    %395 = vmatprep.subr.mxu0 0.0
    %396 = vmatpush1.msra.mxu0 0.0
    %397 = vmatprep.subr.mxu0 0.0
    %398 = vmatpush1.msra.mxu0 0.0
    %399 = vmatprep.subr.mxu0 0.0
    %400 = vmatpush1.msra.mxu0 0.0
    %401 = vmatprep.subr.mxu0 0.0
    %402 = vmatpush1.msra.mxu0 0.0
    %403 = vmatprep.subr.mxu0 0.0
    %404 = vmatpush1.msra.mxu0 0.0
    %405 = vmatprep.subr.mxu0 0.0
    %406 = vmatpush1.msra.mxu0 0.0
    %407 = vmatprep.subr.mxu0 0.0
    %408 = vmatpush1.msra.mxu0 0.0
    %409 = vmatprep.subr.mxu0 0.0
    %410 = vmatpush1.msra.mxu0 0.0
    %411 = vmatprep.mubr.f32.mxu0 0.0
    %412 = vmatmul.mubr.f32.gmra.mrb[0].mxu0 %v203
    %v413 = vpop.f32.mrb[0].mxu0
    %v414 = vadd.f32 %v140, %v413
    %v415 = vpop.f32.mrb[0].mxu0
    %v416 = vadd.f32 %v144, %v415
    %417 = vdwg.mxu0
    %418 = vmatprep.subr.mxu0 %v60
    %419 = vmatpush1.msra.mxu0 %v59
    %420 = vmatprep.subr.mxu0 %v76
    %421 = vmatpush1.msra.mxu0 %v75
    %422 = vmatprep.subr.mxu0 %v92
    %423 = vmatpush1.msra.mxu0 %v91
    %424 = vmatprep.subr.mxu0 %v108
    %425 = vmatpush1.msra.mxu0 %v107
    %426 = vmatprep.subr.mxu0 0.0
    %427 = vmatpush1.msra.mxu0 0.0
    %428 = vmatprep.subr.mxu0 0.0
    %429 = vmatpush1.msra.mxu0 0.0
    %430 = vmatprep.subr.mxu0 0.0
    %431 = vmatpush1.msra.mxu0 0.0
    %432 = vmatprep.subr.mxu0 0.0
    %433 = vmatpush1.msra.mxu0 0.0
    %434 = vmatprep.subr.mxu0 0.0
    %435 = vmatpush1.msra.mxu0 0.0
    %436 = vmatprep.subr.mxu0 0.0
    %437 = vmatpush1.msra.mxu0 0.0
    %438 = vmatprep.subr.mxu0 0.0
    %439 = vmatpush1.msra.mxu0 0.0
    %440 = vmatprep.subr.mxu0 0.0
    %441 = vmatpush1.msra.mxu0 0.0
    %442 = vmatprep.subr.mxu0 0.0
    %443 = vmatpush1.msra.mxu0 0.0
    %444 = vmatprep.subr.mxu0 0.0
    %445 = vmatpush1.msra.mxu0 0.0
    %446 = vmatprep.subr.mxu0 0.0
    %447 = vmatpush1.msra.mxu0 0.0
    %448 = vmatprep.subr.mxu0 0.0
    %449 = vmatpush1.msra.mxu0 0.0
    %450 = vmatprep.subr.mxu0 0.0
    %451 = vmatpush1.msra.mxu0 0.0
    %452 = vmatprep.subr.mxu0 0.0
    %453 = vmatpush1.msra.mxu0 0.0
    %454 = vmatprep.subr.mxu0 0.0
    %455 = vmatpush1.msra.mxu0 0.0
    %456 = vmatprep.subr.mxu0 0.0
    %457 = vmatpush1.msra.mxu0 0.0
    %458 = vmatprep.subr.mxu0 0.0
    %459 = vmatpush1.msra.mxu0 0.0
    %460 = vmatprep.subr.mxu0 0.0
    %461 = vmatpush1.msra.mxu0 0.0
    %462 = vmatprep.subr.mxu0 0.0
    %463 = vmatpush1.msra.mxu0 0.0
    %464 = vmatprep.subr.mxu0 0.0
    %465 = vmatpush1.msra.mxu0 0.0
    %466 = vmatprep.subr.mxu0 0.0
    %467 = vmatpush1.msra.mxu0 0.0
    %468 = vmatprep.subr.mxu0 0.0
    %469 = vmatpush1.msra.mxu0 0.0
    %470 = vmatprep.subr.mxu0 0.0
    %471 = vmatpush1.msra.mxu0 0.0
    %472 = vmatprep.subr.mxu0 0.0
    %473 = vmatpush1.msra.mxu0 0.0
    %474 = vmatprep.subr.mxu0 0.0
    %475 = vmatpush1.msra.mxu0 0.0
    %476 = vmatprep.subr.mxu0 0.0
    %477 = vmatpush1.msra.mxu0 0.0
    %478 = vmatprep.subr.mxu0 0.0
    %479 = vmatpush1.msra.mxu0 0.0
    %480 = vmatprep.subr.mxu0 0.0
    %481 = vmatpush1.msra.mxu0 0.0
    %482 = vmatprep.mubr.f32.mxu0 0.0
    %483 = vmatmul.mubr.f32.gmra.mrb[0].mxu0 %v203
    %v484 = vpop.f32.mrb[0].mxu0
    %v485 = vadd.f32 %v148, %v484
    %v486 = vpop.f32.mrb[0].mxu0
    %v487 = vadd.f32 %v152, %v486
    %488 = vdwg.mxu0
    %489 = vmatprep.subr.mxu0 %v62
    %490 = vmatpush1.msra.mxu0 %v61
    %491 = vmatprep.subr.mxu0 %v78
    %492 = vmatpush1.msra.mxu0 %v77
    %493 = vmatprep.subr.mxu0 %v94
    %494 = vmatpush1.msra.mxu0 %v93
    %495 = vmatprep.subr.mxu0 %v110
    %496 = vmatpush1.msra.mxu0 %v109
    %497 = vmatprep.subr.mxu0 0.0
    %498 = vmatpush1.msra.mxu0 0.0
    %499 = vmatprep.subr.mxu0 0.0
    %500 = vmatpush1.msra.mxu0 0.0
    %501 = vmatprep.subr.mxu0 0.0
    %502 = vmatpush1.msra.mxu0 0.0
    %503 = vmatprep.subr.mxu0 0.0
    %504 = vmatpush1.msra.mxu0 0.0
    %505 = vmatprep.subr.mxu0 0.0
    %506 = vmatpush1.msra.mxu0 0.0
    %507 = vmatprep.subr.mxu0 0.0
    %508 = vmatpush1.msra.mxu0 0.0
    %509 = vmatprep.subr.mxu0 0.0
    %510 = vmatpush1.msra.mxu0 0.0
    %511 = vmatprep.subr.mxu0 0.0
    %512 = vmatpush1.msra.mxu0 0.0
    %513 = vmatprep.subr.mxu0 0.0
    %514 = vmatpush1.msra.mxu0 0.0
    %515 = vmatprep.subr.mxu0 0.0
    %516 = vmatpush1.msra.mxu0 0.0
    %517 = vmatprep.subr.mxu0 0.0
    %518 = vmatpush1.msra.mxu0 0.0
    %519 = vmatprep.subr.mxu0 0.0
    %520 = vmatpush1.msra.mxu0 0.0
    %521 = vmatprep.subr.mxu0 0.0
    %522 = vmatpush1.msra.mxu0 0.0
    %523 = vmatprep.subr.mxu0 0.0
    %524 = vmatpush1.msra.mxu0 0.0
    %525 = vmatprep.subr.mxu0 0.0
    %526 = vmatpush1.msra.mxu0 0.0
    %527 = vmatprep.subr.mxu0 0.0
    %528 = vmatpush1.msra.mxu0 0.0
    %529 = vmatprep.subr.mxu0 0.0
    %530 = vmatpush1.msra.mxu0 0.0
    %531 = vmatprep.subr.mxu0 0.0
    %532 = vmatpush1.msra.mxu0 0.0
    %533 = vmatprep.subr.mxu0 0.0
    %534 = vmatpush1.msra.mxu0 0.0
    %535 = vmatprep.subr.mxu0 0.0
    %536 = vmatpush1.msra.mxu0 0.0
    %537 = vmatprep.subr.mxu0 0.0
    %538 = vmatpush1.msra.mxu0 0.0
    %539 = vmatprep.subr.mxu0 0.0
    %540 = vmatpush1.msra.mxu0 0.0
    %541 = vmatprep.subr.mxu0 0.0
    %542 = vmatpush1.msra.mxu0 0.0
    %543 = vmatprep.subr.mxu0 0.0
    %544 = vmatpush1.msra.mxu0 0.0
    %545 = vmatprep.subr.mxu0 0.0
    %546 = vmatpush1.msra.mxu0 0.0
    %547 = vmatprep.subr.mxu0 0.0
    %548 = vmatpush1.msra.mxu0 0.0
    %549 = vmatprep.subr.mxu0 0.0
    %550 = vmatpush1.msra.mxu0 0.0
    %551 = vmatprep.subr.mxu0 0.0
    %552 = vmatpush1.msra.mxu0 0.0
    %553 = vmatprep.mubr.f32.mxu0 0.0
    %554 = vmatmul.mubr.f32.gmra.mrb[0].mxu0 %v203
    %v555 = vpop.f32.mrb[0].mxu0
    %v556 = vadd.f32 %v156, %v555
    %v557 = vpop.f32.mrb[0].mxu0
    %v558 = vadd.f32 %v160, %v557
    %559 = vdwg.mxu0
    %560 = vmatprep.subr.mxu0 %v64
    %561 = vmatpush1.msra.mxu0 %v63
    %562 = vmatprep.subr.mxu0 %v80
    %563 = vmatpush1.msra.mxu0 %v79
    %564 = vmatprep.subr.mxu0 %v96
    %565 = vmatpush1.msra.mxu0 %v95
    %566 = vmatprep.subr.mxu0 %v112
    %567 = vmatpush1.msra.mxu0 %v111
    %568 = vmatprep.subr.mxu0 0.0
    %569 = vmatpush1.msra.mxu0 0.0
    %570 = vmatprep.subr.mxu0 0.0
    %571 = vmatpush1.msra.mxu0 0.0
    %572 = vmatprep.subr.mxu0 0.0
    %573 = vmatpush1.msra.mxu0 0.0
    %574 = vmatprep.subr.mxu0 0.0
    %575 = vmatpush1.msra.mxu0 0.0
    %576 = vmatprep.subr.mxu0 0.0
    %577 = vmatpush1.msra.mxu0 0.0
    %578 = vmatprep.subr.mxu0 0.0
    %579 = vmatpush1.msra.mxu0 0.0
    %580 = vmatprep.subr.mxu0 0.0
    %581 = vmatpush1.msra.mxu0 0.0
    %582 = vmatprep.subr.mxu0 0.0
    %583 = vmatpush1.msra.mxu0 0.0
    %584 = vmatprep.subr.mxu0 0.0
    %585 = vmatpush1.msra.mxu0 0.0
    %586 = vmatprep.subr.mxu0 0.0
    %587 = vmatpush1.msra.mxu0 0.0
    %588 = vmatprep.subr.mxu0 0.0
    %589 = vmatpush1.msra.mxu0 0.0
    %590 = vmatprep.subr.mxu0 0.0
    %591 = vmatpush1.msra.mxu0 0.0
    %592 = vmatprep.subr.mxu0 0.0
    %593 = vmatpush1.msra.mxu0 0.0
    %594 = vmatprep.subr.mxu0 0.0
    %595 = vmatpush1.msra.mxu0 0.0
    %596 = vmatprep.subr.mxu0 0.0
    %597 = vmatpush1.msra.mxu0 0.0
    %598 = vmatprep.subr.mxu0 0.0
    %599 = vmatpush1.msra.mxu0 0.0
    %600 = vmatprep.subr.mxu0 0.0
    %601 = vmatpush1.msra.mxu0 0.0
    %602 = vmatprep.subr.mxu0 0.0
    %603 = vmatpush1.msra.mxu0 0.0
    %604 = vmatprep.subr.mxu0 0.0
    %605 = vmatpush1.msra.mxu0 0.0
    %606 = vmatprep.subr.mxu0 0.0
    %607 = vmatpush1.msra.mxu0 0.0
    %608 = vmatprep.subr.mxu0 0.0
    %609 = vmatpush1.msra.mxu0 0.0
    %610 = vmatprep.subr.mxu0 0.0
    %611 = vmatpush1.msra.mxu0 0.0
    %612 = vmatprep.subr.mxu0 0.0
    %613 = vmatpush1.msra.mxu0 0.0
    %614 = vmatprep.subr.mxu0 0.0
    %615 = vmatpush1.msra.mxu0 0.0
    %616 = vmatprep.subr.mxu0 0.0
    %617 = vmatpush1.msra.mxu0 0.0
    %618 = vmatprep.subr.mxu0 0.0
    %619 = vmatpush1.msra.mxu0 0.0
    %620 = vmatprep.subr.mxu0 0.0
    %621 = vmatpush1.msra.mxu0 0.0
    %622 = vmatprep.subr.mxu0 0.0
    %623 = vmatpush1.msra.mxu0 0.0
    %624 = vmatprep.mubr.f32.mxu0 0.0
    %625 = vmatmul.mubr.f32.gmra.mrb[0].mxu0 %v203
    %v626 = vpop.f32.mrb[0].mxu0
    %v627 = vadd.f32 %v164, %v626
    %v628 = vpop.f32.mrb[0].mxu0
    %v629 = vadd.f32 %v168, %v628
    %630 = vdwg.mxu0
    %631 = vmatprep.subr.mxu0 %v66
    %632 = vmatpush1.msra.mxu0 %v65
    %633 = vmatprep.subr.mxu0 %v82
    %634 = vmatpush1.msra.mxu0 %v81
    %635 = vmatprep.subr.mxu0 %v98
    %636 = vmatpush1.msra.mxu0 %v97
    %637 = vmatprep.subr.mxu0 %v114
    %638 = vmatpush1.msra.mxu0 %v113
    %639 = vmatprep.subr.mxu0 0.0
    %640 = vmatpush1.msra.mxu0 0.0
    %641 = vmatprep.subr.mxu0 0.0
    %642 = vmatpush1.msra.mxu0 0.0
    %643 = vmatprep.subr.mxu0 0.0
    %644 = vmatpush1.msra.mxu0 0.0
    %645 = vmatprep.subr.mxu0 0.0
    %646 = vmatpush1.msra.mxu0 0.0
    %647 = vmatprep.subr.mxu0 0.0
    %648 = vmatpush1.msra.mxu0 0.0
    %649 = vmatprep.subr.mxu0 0.0
    %650 = vmatpush1.msra.mxu0 0.0
    %651 = vmatprep.subr.mxu0 0.0
    %652 = vmatpush1.msra.mxu0 0.0
    %653 = vmatprep.subr.mxu0 0.0
    %654 = vmatpush1.msra.mxu0 0.0
    %655 = vmatprep.subr.mxu0 0.0
    %656 = vmatpush1.msra.mxu0 0.0
    %657 = vmatprep.subr.mxu0 0.0
    %658 = vmatpush1.msra.mxu0 0.0
    %659 = vmatprep.subr.mxu0 0.0
    %660 = vmatpush1.msra.mxu0 0.0
    %661 = vmatprep.subr.mxu0 0.0
    %662 = vmatpush1.msra.mxu0 0.0
    %663 = vmatprep.subr.mxu0 0.0
    %664 = vmatpush1.msra.mxu0 0.0
    %665 = vmatprep.subr.mxu0 0.0
    %666 = vmatpush1.msra.mxu0 0.0
    %667 = vmatprep.subr.mxu0 0.0
    %668 = vmatpush1.msra.mxu0 0.0
    %669 = vmatprep.subr.mxu0 0.0
    %670 = vmatpush1.msra.mxu0 0.0
    %671 = vmatprep.subr.mxu0 0.0
    %672 = vmatpush1.msra.mxu0 0.0
    %673 = vmatprep.subr.mxu0 0.0
    %674 = vmatpush1.msra.mxu0 0.0
    %675 = vmatprep.subr.mxu0 0.0
    %676 = vmatpush1.msra.mxu0 0.0
    %677 = vmatprep.subr.mxu0 0.0
    %678 = vmatpush1.msra.mxu0 0.0
    %679 = vmatprep.subr.mxu0 0.0
    %680 = vmatpush1.msra.mxu0 0.0
    %681 = vmatprep.subr.mxu0 0.0
    %682 = vmatpush1.msra.mxu0 0.0
    %683 = vmatprep.subr.mxu0 0.0
    %684 = vmatpush1.msra.mxu0 0.0
    %685 = vmatprep.subr.mxu0 0.0
    %686 = vmatpush1.msra.mxu0 0.0
    %687 = vmatprep.subr.mxu0 0.0
    %688 = vmatpush1.msra.mxu0 0.0
    %689 = vmatprep.subr.mxu0 0.0
    %690 = vmatpush1.msra.mxu0 0.0
    %691 = vmatprep.subr.mxu0 0.0
    %692 = vmatpush1.msra.mxu0 0.0
    %693 = vmatprep.subr.mxu0 0.0
    %694 = vmatpush1.msra.mxu0 0.0
    %695 = vmatprep.mubr.f32.mxu0 0.0
    %696 = vmatmul.mubr.f32.gmra.mrb[0].mxu0 %v203
    %v697 = vpop.f32.mrb[0].mxu0
    %v698 = vadd.f32 %v172, %v697
    %v699 = vpop.f32.mrb[0].mxu0
    %v700 = vadd.f32 %v176, %v699
    %701 = vdwg.mxu0
    %702 = vmatprep.subr.mxu0 %v68
    %703 = vmatpush1.msra.mxu0 %v67
    %704 = vmatprep.subr.mxu0 %v84
    %705 = vmatpush1.msra.mxu0 %v83
    %706 = vmatprep.subr.mxu0 %v100
    %707 = vmatpush1.msra.mxu0 %v99
    %708 = vmatprep.subr.mxu0 %v116
    %709 = vmatpush1.msra.mxu0 %v115
    %710 = vmatprep.subr.mxu0 0.0
    %711 = vmatpush1.msra.mxu0 0.0
    %712 = vmatprep.subr.mxu0 0.0
    %713 = vmatpush1.msra.mxu0 0.0
    %714 = vmatprep.subr.mxu0 0.0
    %715 = vmatpush1.msra.mxu0 0.0
    %716 = vmatprep.subr.mxu0 0.0
    %717 = vmatpush1.msra.mxu0 0.0
    %718 = vmatprep.subr.mxu0 0.0
    %719 = vmatpush1.msra.mxu0 0.0
    %720 = vmatprep.subr.mxu0 0.0
    %721 = vmatpush1.msra.mxu0 0.0
    %722 = vmatprep.subr.mxu0 0.0
    %723 = vmatpush1.msra.mxu0 0.0
    %724 = vmatprep.subr.mxu0 0.0
    %725 = vmatpush1.msra.mxu0 0.0
    %726 = vmatprep.subr.mxu0 0.0
    %727 = vmatpush1.msra.mxu0 0.0
    %728 = vmatprep.subr.mxu0 0.0
    %729 = vmatpush1.msra.mxu0 0.0
    %730 = vmatprep.subr.mxu0 0.0
    %731 = vmatpush1.msra.mxu0 0.0
    %732 = vmatprep.subr.mxu0 0.0
    %733 = vmatpush1.msra.mxu0 0.0
    %734 = vmatprep.subr.mxu0 0.0
    %735 = vmatpush1.msra.mxu0 0.0
    %736 = vmatprep.subr.mxu0 0.0
    %737 = vmatpush1.msra.mxu0 0.0
    %738 = vmatprep.subr.mxu0 0.0
    %739 = vmatpush1.msra.mxu0 0.0
    %740 = vmatprep.subr.mxu0 0.0
    %741 = vmatpush1.msra.mxu0 0.0
    %742 = vmatprep.subr.mxu0 0.0
    %743 = vmatpush1.msra.mxu0 0.0
    %744 = vmatprep.subr.mxu0 0.0
    %745 = vmatpush1.msra.mxu0 0.0
    %746 = vmatprep.subr.mxu0 0.0
    %747 = vmatpush1.msra.mxu0 0.0
    %748 = vmatprep.subr.mxu0 0.0
    %749 = vmatpush1.msra.mxu0 0.0
    %750 = vmatprep.subr.mxu0 0.0
    %751 = vmatpush1.msra.mxu0 0.0
    %752 = vmatprep.subr.mxu0 0.0
    %753 = vmatpush1.msra.mxu0 0.0
    %754 = vmatprep.subr.mxu0 0.0
    %755 = vmatpush1.msra.mxu0 0.0
    %756 = vmatprep.subr.mxu0 0.0
    %757 = vmatpush1.msra.mxu0 0.0
    %758 = vmatprep.subr.mxu0 0.0
    %759 = vmatpush1.msra.mxu0 0.0
    %760 = vmatprep.subr.mxu0 0.0
    %761 = vmatpush1.msra.mxu0 0.0
    %762 = vmatprep.subr.mxu0 0.0
    %763 = vmatpush1.msra.mxu0 0.0
    %764 = vmatprep.subr.mxu0 0.0
    %765 = vmatpush1.msra.mxu0 0.0
    %766 = vmatprep.mubr.f32.mxu0 0.0
    %767 = vmatmul.mubr.f32.gmra.mrb[0].mxu0 %v203
    %v768 = vpop.f32.mrb[0].mxu0
    %v769 = vadd.f32 %v180, %v768
    %v770 = vpop.f32.mrb[0].mxu0
    %v771 = vadd.f32 %v184, %v770
    %772 = vdwg.mxu0
    %v773 = vmax.f32 %v272, 0.0
    %v774 = vmax.f32 %v274, 0.0
    %v775 = vmax.f32 %v343, 0.0
    %v776 = vmax.f32 %v345, 0.0
    %v777 = vmax.f32 %v414, 0.0
    %v778 = vmax.f32 %v416, 0.0
    %v779 = vmax.f32 %v485, 0.0
    %v780 = vmax.f32 %v487, 0.0
    %v781 = vmax.f32 %v556, 0.0
    %v782 = vmax.f32 %v558, 0.0
    %v783 = vmax.f32 %v627, 0.0
    %v784 = vmax.f32 %v629, 0.0
    %v785 = vmax.f32 %v698, 0.0
    %v786 = vmax.f32 %v700, 0.0
    %v787 = vmax.f32 %v769, 0.0
    %v788 = vmax.f32 %v771, 0.0
    %v790 = vrot.slane %v774, 7
    %v793 = vrot.slane %v775, 6
    %v796 = vrot.slane %v776, 5
    %v799 = vrot.slane %v777, 4
    %v802 = vrot.slane %v778, 3
    %v805 = vrot.slane %v779, 2
    %v808 = vrot.slane %v780, 1
    %v811 = vrot.slane %v782, 7
    %v814 = vrot.slane %v783, 6
    %v817 = vrot.slane %v784, 5
    %v820 = vrot.slane %v785, 4
    %v823 = vrot.slane %v786, 3
    %v826 = vrot.slane %v787, 2
    %v829 = vrot.slane %v788, 1
    %vm831 = vcmask 1040384
    %v832 = vsel %vm831, %v773, %v790
    %vm833 = vcmask 1041408
    %v834 = vsel %vm833, %v832, %v793
    %vm835 = vcmask 1042432
    %v836 = vsel %vm835, %v834, %v796
    %vm837 = vcmask 1043456
    %v838 = vsel %vm837, %v836, %v799
    %vm839 = vcmask 1044480
    %v840 = vsel %vm839, %v838, %v802
    %vm841 = vcmask 1045504
    %v842 = vsel %vm841, %v840, %v805
    %vm843 = vcmask 1046528
    %v844 = vsel %vm843, %v842, %v808
    %v845 = vsel %vm831, %v781, %v811
    %v846 = vsel %vm833, %v845, %v814
    %v847 = vsel %vm835, %v846, %v817
    %v848 = vsel %vm837, %v847, %v820
    %v849 = vsel %vm839, %v848, %v823
    %v850 = vsel %vm841, %v849, %v826
    %v851 = vsel %vm843, %v850, %v829
    %v853 = vrot.slane %v773, 1
    %v855 = vrot.slane %v775, 7
    %v857 = vrot.slane %v776, 6
    %v859 = vrot.slane %v777, 5
    %v861 = vrot.slane %v778, 4
    %v863 = vrot.slane %v779, 3
    %v865 = vrot.slane %v780, 2
    %v868 = vrot.slane %v781, 1
    %v870 = vrot.slane %v783, 7
    %v872 = vrot.slane %v784, 6
    %v874 = vrot.slane %v785, 5
    %v876 = vrot.slane %v786, 4
    %v878 = vrot.slane %v787, 3
    %v880 = vrot.slane %v788, 2
    %v882 = vsel %vm831, %v853, %v774
    %v883 = vsel %vm833, %v882, %v855
    %v884 = vsel %vm835, %v883, %v857
    %v885 = vsel %vm837, %v884, %v859
    %v886 = vsel %vm839, %v885, %v861
    %v887 = vsel %vm841, %v886, %v863
    %v888 = vsel %vm843, %v887, %v865
    %v889 = vsel %vm831, %v868, %v782
    %v890 = vsel %vm833, %v889, %v870
    %v891 = vsel %vm835, %v890, %v872
    %v892 = vsel %vm837, %v891, %v874
    %v893 = vsel %vm839, %v892, %v876
    %v894 = vsel %vm841, %v893, %v878
    %v895 = vsel %vm843, %v894, %v880
    %896 = vst [vmem:[#allocation2] sm:$0xff] 0.0
    %897 = vst [vmem:[#allocation2 + $0x8] sm:$0xff] 0.0
    %898 = vst [vmem:[#allocation2 + $0x10] sm:$0xff] 0.0
    %899 = vst [vmem:[#allocation2 + $0x18] sm:$0xff] 0.0
    %900 = vst [vmem:[#allocation2 + $0x20] sm:$0xff] 0.0
    %901 = vst [vmem:[#allocation2 + $0x28] sm:$0xff] 0.0
    %902 = vst [vmem:[#allocation2 + $0x30] sm:$0xff] 0.0
    %903 = vst [vmem:[#allocation2 + $0x38] sm:$0xff] 0.0
    %904 = vst [vmem:[#allocation2 + $0x40] sm:$0xff] 0.0
    %905 = vst [vmem:[#allocation2 + $0x48] sm:$0xff] 0.0
    %906 = vst [vmem:[#allocation2 + $0x50] sm:$0xff] 0.0
    %907 = vst [vmem:[#allocation2 + $0x58] sm:$0xff] 0.0
    %908 = vst [vmem:[#allocation2 + $0x60] sm:$0xff] 0.0
    %909 = vst [vmem:[#allocation2 + $0x68] sm:$0xff] 0.0
    %910 = vst [vmem:[#allocation2 + $0x70] sm:$0xff] 0.0
    %911 = vst [vmem:[#allocation2 + $0x78] sm:$0xff] 0.0
    %914 = vrot.lane.b32.xlu0 %v844, 64
    %v915 = vpop.permute.xlu0 %914
    %916 = vrot.lane.b32.xlu0 %v851, 64
    %v917 = vpop.permute.xlu0 %916
    %vm920 = vcmask 523264
    %921 = vst.msk [vmem:[#allocation2 + $0x4] sm:$0xff] %vm920, %v915
    %922 = vst.msk [vmem:[#allocation2 + $0xc] sm:$0xff] %vm920, %v917
    %vm923 = vcmask 1048064
    %924 = vst.msk [vmem:[#allocation2 + $0x3] sm:$0xff] %vm923, %v915
    %925 = vst.msk [vmem:[#allocation2 + $0xb] sm:$0xff] %vm923, %v917
    %s926 = scalar_lea.vmem [#allocation2], 32
    %927 = vst [vmem:[%s926 + $0x3] sm:$0xff] %v844
    %928 = vst [vmem:[%s926 + $0xb] sm:$0xff] %v851
    %931 = vrot.lane.b32.xlu0 %v888, 64
    %v932 = vpop.permute.xlu0 %931
    %933 = vrot.lane.b32.xlu0 %v895, 64
    %v934 = vpop.permute.xlu0 %933
    %s937 = scalar_lea.vmem [#allocation2], 64
    %938 = vst.msk [vmem:[%s937 + $0x4] sm:$0xff] %vm920, %v932
    %939 = vst.msk [vmem:[%s937 + $0xc] sm:$0xff] %vm920, %v934
    %940 = vst.msk [vmem:[%s937 + $0x3] sm:$0xff] %vm923, %v932
    %941 = vst.msk [vmem:[%s937 + $0xb] sm:$0xff] %vm923, %v934
    %s942 = scalar_lea.vmem [#allocation2], 96
    %943 = vst [vmem:[%s942 + $0x3] sm:$0xff] %v888
    %944 = vst [vmem:[%s942 + $0xb] sm:$0xff] %v895
    %v945 = vld [vmem:[#allocation2] sm:$0xff]
    %v946 = vld [vmem:[#allocation2 + $0x8] sm:$0xff]
    %v947 = vld [vmem:[#allocation2 + $0x20] sm:$0xff]
    %v948 = vld [vmem:[#allocation2 + $0x28] sm:$0xff]
    %v949 = vld [vmem:[#allocation2 + $0x40] sm:$0xff]
    %v950 = vld [vmem:[#allocation2 + $0x48] sm:$0xff]
    %v951 = vld [vmem:[#allocation2 + $0x60] sm:$0xff]
    %v952 = vld [vmem:[#allocation2 + $0x68] sm:$0xff]
    %v953 = vpack.c.bf16 %v946, %v945
    %v954 = vpack.c.bf16 %v948, %v947
    %v955 = vpack.c.bf16 %v950, %v949
    %v956 = vpack.c.bf16 %v952, %v951
    %v957 = vld [vmem:[#allocation2 + $0x1] sm:$0xff]
    %v958 = vld [vmem:[#allocation2 + $0x9] sm:$0xff]
    %v959 = vld [vmem:[#allocation2 + $0x21] sm:$0xff]
    %v960 = vld [vmem:[#allocation2 + $0x29] sm:$0xff]
    %v961 = vld [vmem:[#allocation2 + $0x41] sm:$0xff]
    %v962 = vld [vmem:[#allocation2 + $0x49] sm:$0xff]
    %v963 = vld [vmem:[#allocation2 + $0x61] sm:$0xff]
    %v964 = vld [vmem:[#allocation2 + $0x69] sm:$0xff]
    %v965 = vpack.c.bf16 %v958, %v957
    %v966 = vpack.c.bf16 %v960, %v959
    %v967 = vpack.c.bf16 %v962, %v961
    %v968 = vpack.c.bf16 %v964, %v963
    %v969 = vld [vmem:[#allocation2 + $0x2] sm:$0xff]
    %v970 = vld [vmem:[#allocation2 + $0xa] sm:$0xff]
    %v971 = vld [vmem:[#allocation2 + $0x22] sm:$0xff]
    %v972 = vld [vmem:[#allocation2 + $0x2a] sm:$0xff]
    %v973 = vld [vmem:[#allocation2 + $0x42] sm:$0xff]
    %v974 = vld [vmem:[#allocation2 + $0x4a] sm:$0xff]
    %v975 = vld [vmem:[#allocation2 + $0x62] sm:$0xff]
    %v976 = vld [vmem:[#allocation2 + $0x6a] sm:$0xff]
    %v977 = vpack.c.bf16 %v970, %v969
    %v978 = vpack.c.bf16 %v972, %v971
    %v979 = vpack.c.bf16 %v974, %v973
    %v980 = vpack.c.bf16 %v976, %v975
    %v981 = vld [vmem:[#allocation2 + $0x3] sm:$0xff]
    %v982 = vld [vmem:[#allocation2 + $0xb] sm:$0xff]
    %v983 = vld [vmem:[#allocation2 + $0x23] sm:$0xff]
    %v984 = vld [vmem:[#allocation2 + $0x2b] sm:$0xff]
    %v985 = vld [vmem:[#allocation2 + $0x43] sm:$0xff]
    %v986 = vld [vmem:[#allocation2 + $0x4b] sm:$0xff]
    %v987 = vld [vmem:[#allocation2 + $0x63] sm:$0xff]
    %v988 = vld [vmem:[#allocation2 + $0x6b] sm:$0xff]
    %v989 = vpack.c.bf16 %v982, %v981
    %v990 = vpack.c.bf16 %v984, %v983
    %v991 = vpack.c.bf16 %v986, %v985
    %v992 = vpack.c.bf16 %v988, %v987
    %v993 = vld [vmem:[#allocation2 + $0x4] sm:$0xff]
    %v994 = vld [vmem:[#allocation2 + $0xc] sm:$0xff]
    %v995 = vld [vmem:[#allocation2 + $0x24] sm:$0xff]
    %v996 = vld [vmem:[#allocation2 + $0x2c] sm:$0xff]
    %v997 = vld [vmem:[#allocation2 + $0x44] sm:$0xff]
    %v998 = vld [vmem:[#allocation2 + $0x4c] sm:$0xff]
    %v999 = vld [vmem:[#allocation2 + $0x64] sm:$0xff]
    %v1000 = vld [vmem:[#allocation2 + $0x6c] sm:$0xff]
    %v1001 = vpack.c.bf16 %v994, %v993
    %v1002 = vpack.c.bf16 %v996, %v995
    %v1003 = vpack.c.bf16 %v998, %v997
    %v1004 = vpack.c.bf16 %v1000, %v999
    %v1005 = vld [vmem:[#allocation2 + $0x5] sm:$0xff]
    %v1006 = vld [vmem:[#allocation2 + $0xd] sm:$0xff]
    %v1007 = vld [vmem:[#allocation2 + $0x25] sm:$0xff]
    %v1008 = vld [vmem:[#allocation2 + $0x2d] sm:$0xff]
    %v1009 = vld [vmem:[#allocation2 + $0x45] sm:$0xff]
    %v1010 = vld [vmem:[#allocation2 + $0x4d] sm:$0xff]
    %v1011 = vld [vmem:[#allocation2 + $0x65] sm:$0xff]
    %v1012 = vld [vmem:[#allocation2 + $0x6d] sm:$0xff]
    %v1013 = vpack.c.bf16 %v1006, %v1005
    %v1014 = vpack.c.bf16 %v1008, %v1007
    %v1015 = vpack.c.bf16 %v1010, %v1009
    %v1016 = vpack.c.bf16 %v1012, %v1011
    %v1017 = vld [vmem:[#allocation2 + $0x6] sm:$0xff]
    %v1018 = vld [vmem:[#allocation2 + $0xe] sm:$0xff]
    %v1019 = vld [vmem:[#allocation2 + $0x26] sm:$0xff]
    %v1020 = vld [vmem:[#allocation2 + $0x2e] sm:$0xff]
    %v1021 = vld [vmem:[#allocation2 + $0x46] sm:$0xff]
    %v1022 = vld [vmem:[#allocation2 + $0x4e] sm:$0xff]
    %v1023 = vld [vmem:[#allocation2 + $0x66] sm:$0xff]
    %v1024 = vld [vmem:[#allocation2 + $0x6e] sm:$0xff]
    %v1025 = vpack.c.bf16 %v1018, %v1017
    %v1026 = vpack.c.bf16 %v1020, %v1019
    %v1027 = vpack.c.bf16 %v1022, %v1021
    %v1028 = vpack.c.bf16 %v1024, %v1023
    %v1029 = vld [vmem:[#allocation2 + $0x7] sm:$0xff]
    %v1030 = vld [vmem:[#allocation2 + $0xf] sm:$0xff]
    %v1031 = vld [vmem:[#allocation2 + $0x27] sm:$0xff]
    %v1032 = vld [vmem:[#allocation2 + $0x2f] sm:$0xff]
    %v1033 = vld [vmem:[#allocation2 + $0x47] sm:$0xff]
    %v1034 = vld [vmem:[#allocation2 + $0x4f] sm:$0xff]
    %v1035 = vld [vmem:[#allocation2 + $0x67] sm:$0xff]
    %v1036 = vld [vmem:[#allocation2 + $0x6f] sm:$0xff]
    %v1037 = vpack.c.bf16 %v1030, %v1029
    %v1038 = vpack.c.bf16 %v1032, %v1031
    %v1039 = vpack.c.bf16 %v1034, %v1033
    %v1040 = vpack.c.bf16 %v1036, %v1035
    %v1041 = vld [vmem:[%s3] sm:$0xf]
    %v1042 = vld [vmem:[%s3 + $0x4] sm:$0xf]
    %v1043 = vld [vmem:[%s3 + $0x8] sm:$0xf]
    %v1044 = vld [vmem:[%s3 + $0xc] sm:$0xf]
    %v1045 = vld [vmem:[%s3 + $0x10] sm:$0xf]
    %v1046 = vld [vmem:[%s3 + $0x14] sm:$0xf]
    %v1047 = vld [vmem:[%s3 + $0x18] sm:$0xf]
    %v1048 = vld [vmem:[%s3 + $0x1c] sm:$0xf]
    %v1049 = vld [vmem:[%s3 + $0x20] sm:$0xf]
    %v1050 = vld [vmem:[%s3 + $0x24] sm:$0xf]
    %v1051 = vld [vmem:[%s3 + $0x28] sm:$0xf]
    %v1052 = vld [vmem:[%s3 + $0x2c] sm:$0xf]
    %v1053 = vld [vmem:[%s3 + $0x30] sm:$0xf]
    %v1054 = vld [vmem:[%s3 + $0x34] sm:$0xf]
    %v1055 = vld [vmem:[%s3 + $0x38] sm:$0xf]
    %v1056 = vld [vmem:[%s3 + $0x3c] sm:$0xf]
    %v1057 = vld [vmem:[%s3 + $0x40] sm:$0xf]
    %v1058 = vld [vmem:[%s3 + $0x44] sm:$0xf]
    %v1059 = vld [vmem:[%s3 + $0x48] sm:$0xf]
    %v1060 = vld [vmem:[%s3 + $0x4c] sm:$0xf]
    %v1061 = vld [vmem:[%s3 + $0x50] sm:$0xf]
    %v1062 = vld [vmem:[%s3 + $0x54] sm:$0xf]
    %v1063 = vld [vmem:[%s3 + $0x58] sm:$0xf]
    %v1064 = vld [vmem:[%s3 + $0x5c] sm:$0xf]
    %v1065 = vld [vmem:[%s3 + $0x60] sm:$0xf]
    %v1066 = vld [vmem:[%s3 + $0x64] sm:$0xf]
    %v1067 = vld [vmem:[%s3 + $0x68] sm:$0xf]
    %v1068 = vld [vmem:[%s3 + $0x6c] sm:$0xf]
    %v1069 = vld [vmem:[%s3 + $0x70] sm:$0xf]
    %v1070 = vld [vmem:[%s3 + $0x74] sm:$0xf]
    %v1071 = vld [vmem:[%s3 + $0x78] sm:$0xf]
    %v1072 = vld [vmem:[%s3 + $0x7c] sm:$0xf]
    %v1073 = vld [vmem:[%s3 + $0x80] sm:$0xf]
    %v1074 = vld [vmem:[%s3 + $0x84] sm:$0xf]
    %v1075 = vld [vmem:[%s3 + $0x88] sm:$0xf]
    %v1076 = vld [vmem:[%s3 + $0x8c] sm:$0xf]
    %v1077 = vld [vmem:[%s3 + $0x90] sm:$0xf]
    %v1078 = vld [vmem:[%s3 + $0x94] sm:$0xf]
    %v1079 = vld [vmem:[%s3 + $0x98] sm:$0xf]
    %v1080 = vld [vmem:[%s3 + $0x9c] sm:$0xf]
    %v1081 = vld [vmem:[%s3 + $0xa0] sm:$0xf]
    %v1082 = vld [vmem:[%s3 + $0xa4] sm:$0xf]
    %v1083 = vld [vmem:[%s3 + $0xa8] sm:$0xf]
    %v1084 = vld [vmem:[%s3 + $0xac] sm:$0xf]
    %v1085 = vld [vmem:[%s3 + $0xb0] sm:$0xf]
    %v1086 = vld [vmem:[%s3 + $0xb4] sm:$0xf]
    %v1087 = vld [vmem:[%s3 + $0xb8] sm:$0xf]
    %v1088 = vld [vmem:[%s3 + $0xbc] sm:$0xf]
    %v1089 = vld [vmem:[%s3 + $0xc0] sm:$0xf]
    %v1090 = vld [vmem:[%s3 + $0xc4] sm:$0xf]
    %v1091 = vld [vmem:[%s3 + $0xc8] sm:$0xf]
    %v1092 = vld [vmem:[%s3 + $0xcc] sm:$0xf]
    %v1093 = vld [vmem:[%s3 + $0xd0] sm:$0xf]
    %v1094 = vld [vmem:[%s3 + $0xd4] sm:$0xf]
    %v1095 = vld [vmem:[%s3 + $0xd8] sm:$0xf]
    %v1096 = vld [vmem:[%s3 + $0xdc] sm:$0xf]
    %v1097 = vld [vmem:[%s3 + $0xe0] sm:$0xf]
    %v1098 = vld [vmem:[%s3 + $0xe4] sm:$0xf]
    %v1099 = vld [vmem:[%s3 + $0xe8] sm:$0xf]
    %v1100 = vld [vmem:[%s3 + $0xec] sm:$0xf]
    %v1101 = vld [vmem:[%s3 + $0xf0] sm:$0xf]
    %v1102 = vld [vmem:[%s3 + $0xf4] sm:$0xf]
    %v1103 = vld [vmem:[%s3 + $0xf8] sm:$0xf]
    %v1104 = vld [vmem:[%s3 + $0xfc] sm:$0xf]
    %v1105 = vld [vmem:[%s3 + $0x100] sm:$0xf]
    %v1106 = vld [vmem:[%s3 + $0x104] sm:$0xf]
    %v1107 = vld [vmem:[%s3 + $0x108] sm:$0xf]
    %v1108 = vld [vmem:[%s3 + $0x10c] sm:$0xf]
    %v1109 = vld [vmem:[%s3 + $0x110] sm:$0xf]
    %v1110 = vld [vmem:[%s3 + $0x114] sm:$0xf]
    %v1111 = vld [vmem:[%s3 + $0x118] sm:$0xf]
    %v1112 = vld [vmem:[%s3 + $0x11c] sm:$0xf]
    %v1113 = vld [vmem:[%s3 + $0x120] sm:$0xf]
    %v1114 = vld [vmem:[%s3 + $0x124] sm:$0xf]
    %v1115 = vld [vmem:[%s3 + $0x128] sm:$0xf]
    %v1116 = vld [vmem:[%s3 + $0x12c] sm:$0xf]
    %v1117 = vld [vmem:[%s3 + $0x130] sm:$0xf]
    %v1118 = vld [vmem:[%s3 + $0x134] sm:$0xf]
    %v1119 = vld [vmem:[%s3 + $0x138] sm:$0xf]
    %v1120 = vld [vmem:[%s3 + $0x13c] sm:$0xf]
    %v1121 = vld [vmem:[%s3 + $0x140] sm:$0xf]
    %v1122 = vld [vmem:[%s3 + $0x144] sm:$0xf]
    %v1123 = vld [vmem:[%s3 + $0x148] sm:$0xf]
    %v1124 = vld [vmem:[%s3 + $0x14c] sm:$0xf]
    %v1125 = vld [vmem:[%s3 + $0x150] sm:$0xf]
    %v1126 = vld [vmem:[%s3 + $0x154] sm:$0xf]
    %v1127 = vld [vmem:[%s3 + $0x158] sm:$0xf]
    %v1128 = vld [vmem:[%s3 + $0x15c] sm:$0xf]
    %v1129 = vld [vmem:[%s3 + $0x160] sm:$0xf]
    %v1130 = vld [vmem:[%s3 + $0x164] sm:$0xf]
    %v1131 = vld [vmem:[%s3 + $0x168] sm:$0xf]
    %v1132 = vld [vmem:[%s3 + $0x16c] sm:$0xf]
    %v1133 = vld [vmem:[%s3 + $0x170] sm:$0xf]
    %v1134 = vld [vmem:[%s3 + $0x174] sm:$0xf]
    %v1135 = vld [vmem:[%s3 + $0x178] sm:$0xf]
    %v1136 = vld [vmem:[%s3 + $0x17c] sm:$0xf]
    %v1137 = vld [vmem:[%s3 + $0x180] sm:$0xf]
    %v1138 = vld [vmem:[%s3 + $0x184] sm:$0xf]
    %v1139 = vld [vmem:[%s3 + $0x188] sm:$0xf]
    %v1140 = vld [vmem:[%s3 + $0x18c] sm:$0xf]
    %v1141 = vld [vmem:[%s3 + $0x190] sm:$0xf]
    %v1142 = vld [vmem:[%s3 + $0x194] sm:$0xf]
    %v1143 = vld [vmem:[%s3 + $0x198] sm:$0xf]
    %v1144 = vld [vmem:[%s3 + $0x19c] sm:$0xf]
    %v1145 = vld [vmem:[%s3 + $0x1a0] sm:$0xf]
    %v1146 = vld [vmem:[%s3 + $0x1a4] sm:$0xf]
    %v1147 = vld [vmem:[%s3 + $0x1a8] sm:$0xf]
    %v1148 = vld [vmem:[%s3 + $0x1ac] sm:$0xf]
    %v1149 = vld [vmem:[%s3 + $0x1b0] sm:$0xf]
    %v1150 = vld [vmem:[%s3 + $0x1b4] sm:$0xf]
    %v1151 = vld [vmem:[%s3 + $0x1b8] sm:$0xf]
    %v1152 = vld [vmem:[%s3 + $0x1bc] sm:$0xf]
    %v1153 = vld [vmem:[%s3 + $0x1c0] sm:$0xf]
    %v1154 = vld [vmem:[%s3 + $0x1c4] sm:$0xf]
    %v1155 = vld [vmem:[%s3 + $0x1c8] sm:$0xf]
    %v1156 = vld [vmem:[%s3 + $0x1cc] sm:$0xf]
    %v1157 = vld [vmem:[%s3 + $0x1d0] sm:$0xf]
    %v1158 = vld [vmem:[%s3 + $0x1d4] sm:$0xf]
    %v1159 = vld [vmem:[%s3 + $0x1d8] sm:$0xf]
    %v1160 = vld [vmem:[%s3 + $0x1dc] sm:$0xf]
    %v1161 = vld [vmem:[%s3 + $0x1e0] sm:$0xf]
    %v1162 = vld [vmem:[%s3 + $0x1e4] sm:$0xf]
    %v1163 = vld [vmem:[%s3 + $0x1e8] sm:$0xf]
    %v1164 = vld [vmem:[%s3 + $0x1ec] sm:$0xf]
    %v1165 = vld [vmem:[%s3 + $0x1f0] sm:$0xf]
    %v1166 = vld [vmem:[%s3 + $0x1f4] sm:$0xf]
    %v1167 = vld [vmem:[%s3 + $0x1f8] sm:$0xf]
    %v1168 = vld [vmem:[%s3 + $0x1fc] sm:$0xf]
    %v1169 = vld [vmem:[%s4] sm:$0x1]
    %v1171 = vlaneseq
    %v1172 = vshrl.u32 %v1171, 7
    %v1173 = vsub.s32 0, %v1172
    %v1174 = vrot.slane %v1169, %v1173
    %v1304 = vunpack.c.l.b16 %v1041
    %v1305 = vunpack.c.l.b16 %v1042
    %v1306 = vunpack.c.l.b16 %v1043
    %v1307 = vunpack.c.l.b16 %v1044
    %v1308 = vunpack.c.l.b16 %v1045
    %v1309 = vunpack.c.l.b16 %v1046
    %v1310 = vunpack.c.l.b16 %v1047
    %v1311 = vunpack.c.l.b16 %v1048
    %v1312 = vunpack.c.l.b16 %v1049
    %v1313 = vunpack.c.l.b16 %v1050
    %v1314 = vunpack.c.l.b16 %v1051
    %v1315 = vunpack.c.l.b16 %v1052
    %v1316 = vunpack.c.l.b16 %v1053
    %v1317 = vunpack.c.l.b16 %v1054
    %v1318 = vunpack.c.l.b16 %v1055
    %v1319 = vunpack.c.l.b16 %v1056
    %v1320 = vunpack.c.l.b16 %v1057
    %v1321 = vunpack.c.l.b16 %v1058
    %v1322 = vunpack.c.l.b16 %v1059
    %v1323 = vunpack.c.l.b16 %v1060
    %v1324 = vunpack.c.l.b16 %v1061
    %v1325 = vunpack.c.l.b16 %v1062
    %v1326 = vunpack.c.l.b16 %v1063
    %v1327 = vunpack.c.l.b16 %v1064
    %v1328 = vunpack.c.l.b16 %v1065
    %v1329 = vunpack.c.l.b16 %v1066
    %v1330 = vunpack.c.l.b16 %v1067
    %v1331 = vunpack.c.l.b16 %v1068
    %v1332 = vunpack.c.l.b16 %v1069
    %v1333 = vunpack.c.l.b16 %v1070
    %v1334 = vunpack.c.l.b16 %v1071
    %v1335 = vunpack.c.l.b16 %v1072
    %v1336 = vunpack.c.l.b16 %v1073
    %v1337 = vunpack.c.l.b16 %v1074
    %v1338 = vunpack.c.l.b16 %v1075
    %v1339 = vunpack.c.l.b16 %v1076
    %v1340 = vunpack.c.l.b16 %v1077
    %v1341 = vunpack.c.l.b16 %v1078
    %v1342 = vunpack.c.l.b16 %v1079
    %v1343 = vunpack.c.l.b16 %v1080
    %v1344 = vunpack.c.l.b16 %v1081
    %v1345 = vunpack.c.l.b16 %v1082
    %v1346 = vunpack.c.l.b16 %v1083
    %v1347 = vunpack.c.l.b16 %v1084
    %v1348 = vunpack.c.l.b16 %v1085
    %v1349 = vunpack.c.l.b16 %v1086
    %v1350 = vunpack.c.l.b16 %v1087
    %v1351 = vunpack.c.l.b16 %v1088
    %v1352 = vunpack.c.l.b16 %v1089
    %v1353 = vunpack.c.l.b16 %v1090
    %v1354 = vunpack.c.l.b16 %v1091
    %v1355 = vunpack.c.l.b16 %v1092
    %v1356 = vunpack.c.l.b16 %v1093
    %v1357 = vunpack.c.l.b16 %v1094
    %v1358 = vunpack.c.l.b16 %v1095
    %v1359 = vunpack.c.l.b16 %v1096
    %v1360 = vunpack.c.l.b16 %v1097
    %v1361 = vunpack.c.l.b16 %v1098
    %v1362 = vunpack.c.l.b16 %v1099
    %v1363 = vunpack.c.l.b16 %v1100
    %v1364 = vunpack.c.l.b16 %v1101
    %v1365 = vunpack.c.l.b16 %v1102
    %v1366 = vunpack.c.l.b16 %v1103
    %v1367 = vunpack.c.l.b16 %v1104
    %v1368 = vunpack.c.l.b16 %v1105
    %v1369 = vunpack.c.l.b16 %v1106
    %v1370 = vunpack.c.l.b16 %v1107
    %v1371 = vunpack.c.l.b16 %v1108
    %v1372 = vunpack.c.l.b16 %v1109
    %v1373 = vunpack.c.l.b16 %v1110
    %v1374 = vunpack.c.l.b16 %v1111
    %v1375 = vunpack.c.l.b16 %v1112
    %v1376 = vunpack.c.l.b16 %v1113
    %v1377 = vunpack.c.l.b16 %v1114
    %v1378 = vunpack.c.l.b16 %v1115
    %v1379 = vunpack.c.l.b16 %v1116
    %v1380 = vunpack.c.l.b16 %v1117
    %v1381 = vunpack.c.l.b16 %v1118
    %v1382 = vunpack.c.l.b16 %v1119
    %v1383 = vunpack.c.l.b16 %v1120
    %v1384 = vunpack.c.l.b16 %v1121
    %v1385 = vunpack.c.l.b16 %v1122
    %v1386 = vunpack.c.l.b16 %v1123
    %v1387 = vunpack.c.l.b16 %v1124
    %v1388 = vunpack.c.l.b16 %v1125
    %v1389 = vunpack.c.l.b16 %v1126
    %v1390 = vunpack.c.l.b16 %v1127
    %v1391 = vunpack.c.l.b16 %v1128
    %v1392 = vunpack.c.l.b16 %v1129
    %v1393 = vunpack.c.l.b16 %v1130
    %v1394 = vunpack.c.l.b16 %v1131
    %v1395 = vunpack.c.l.b16 %v1132
    %v1396 = vunpack.c.l.b16 %v1133
    %v1397 = vunpack.c.l.b16 %v1134
    %v1398 = vunpack.c.l.b16 %v1135
    %v1399 = vunpack.c.l.b16 %v1136
    %v1400 = vunpack.c.l.b16 %v1137
    %v1401 = vunpack.c.l.b16 %v1138
    %v1402 = vunpack.c.l.b16 %v1139
    %v1403 = vunpack.c.l.b16 %v1140
    %v1404 = vunpack.c.l.b16 %v1141
    %v1405 = vunpack.c.l.b16 %v1142
    %v1406 = vunpack.c.l.b16 %v1143
    %v1407 = vunpack.c.l.b16 %v1144
    %v1408 = vunpack.c.l.b16 %v1145
    %v1409 = vunpack.c.l.b16 %v1146
    %v1410 = vunpack.c.l.b16 %v1147
    %v1411 = vunpack.c.l.b16 %v1148
    %v1412 = vunpack.c.l.b16 %v1149
    %v1413 = vunpack.c.l.b16 %v1150
    %v1414 = vunpack.c.l.b16 %v1151
    %v1415 = vunpack.c.l.b16 %v1152
    %v1416 = vunpack.c.l.b16 %v1153
    %v1417 = vunpack.c.l.b16 %v1154
    %v1418 = vunpack.c.l.b16 %v1155
    %v1419 = vunpack.c.l.b16 %v1156
    %v1420 = vunpack.c.l.b16 %v1157
    %v1421 = vunpack.c.l.b16 %v1158
    %v1422 = vunpack.c.l.b16 %v1159
    %v1423 = vunpack.c.l.b16 %v1160
    %v1424 = vunpack.c.l.b16 %v1161
    %v1425 = vunpack.c.l.b16 %v1162
    %v1426 = vunpack.c.l.b16 %v1163
    %v1427 = vunpack.c.l.b16 %v1164
    %v1428 = vunpack.c.l.b16 %v1165
    %v1429 = vunpack.c.l.b16 %v1166
    %v1430 = vunpack.c.l.b16 %v1167
    %v1431 = vunpack.c.l.b16 %v1168
    %v1432 = vpack.c.b16 %v1305, %v1304
    %v1433 = vpack.c.b16 %v1307, %v1306
    %v1434 = vpack.c.b16 %v1309, %v1308
    %v1435 = vpack.c.b16 %v1311, %v1310
    %v1436 = vpack.c.b16 %v1313, %v1312
    %v1437 = vpack.c.b16 %v1315, %v1314
    %v1438 = vpack.c.b16 %v1317, %v1316
    %v1439 = vpack.c.b16 %v1319, %v1318
    %v1440 = vpack.c.b16 %v1321, %v1320
    %v1441 = vpack.c.b16 %v1323, %v1322
    %v1442 = vpack.c.b16 %v1325, %v1324
    %v1443 = vpack.c.b16 %v1327, %v1326
    %v1444 = vpack.c.b16 %v1329, %v1328
    %v1445 = vpack.c.b16 %v1331, %v1330
    %v1446 = vpack.c.b16 %v1333, %v1332
    %v1447 = vpack.c.b16 %v1335, %v1334
    %v1448 = vpack.c.b16 %v1337, %v1336
    %v1449 = vpack.c.b16 %v1339, %v1338
    %v1450 = vpack.c.b16 %v1341, %v1340
    %v1451 = vpack.c.b16 %v1343, %v1342
    %v1452 = vpack.c.b16 %v1345, %v1344
    %v1453 = vpack.c.b16 %v1347, %v1346
    %v1454 = vpack.c.b16 %v1349, %v1348
    %v1455 = vpack.c.b16 %v1351, %v1350
    %v1456 = vpack.c.b16 %v1353, %v1352
    %v1457 = vpack.c.b16 %v1355, %v1354
    %v1458 = vpack.c.b16 %v1357, %v1356
    %v1459 = vpack.c.b16 %v1359, %v1358
    %v1460 = vpack.c.b16 %v1361, %v1360
    %v1461 = vpack.c.b16 %v1363, %v1362
    %v1462 = vpack.c.b16 %v1365, %v1364
    %v1463 = vpack.c.b16 %v1367, %v1366
    %v1464 = vpack.c.b16 %v1369, %v1368
    %v1465 = vpack.c.b16 %v1371, %v1370
    %v1466 = vpack.c.b16 %v1373, %v1372
    %v1467 = vpack.c.b16 %v1375, %v1374
    %v1468 = vpack.c.b16 %v1377, %v1376
    %v1469 = vpack.c.b16 %v1379, %v1378
    %v1470 = vpack.c.b16 %v1381, %v1380
    %v1471 = vpack.c.b16 %v1383, %v1382
    %v1472 = vpack.c.b16 %v1385, %v1384
    %v1473 = vpack.c.b16 %v1387, %v1386
    %v1474 = vpack.c.b16 %v1389, %v1388
    %v1475 = vpack.c.b16 %v1391, %v1390
    %v1476 = vpack.c.b16 %v1393, %v1392
    %v1477 = vpack.c.b16 %v1395, %v1394
    %v1478 = vpack.c.b16 %v1397, %v1396
    %v1479 = vpack.c.b16 %v1399, %v1398
    %v1480 = vpack.c.b16 %v1401, %v1400
    %v1481 = vpack.c.b16 %v1403, %v1402
    %v1482 = vpack.c.b16 %v1405, %v1404
    %v1483 = vpack.c.b16 %v1407, %v1406
    %v1484 = vpack.c.b16 %v1409, %v1408
    %v1485 = vpack.c.b16 %v1411, %v1410
    %v1486 = vpack.c.b16 %v1413, %v1412
    %v1487 = vpack.c.b16 %v1415, %v1414
    %v1488 = vpack.c.b16 %v1417, %v1416
    %v1489 = vpack.c.b16 %v1419, %v1418
    %v1490 = vpack.c.b16 %v1421, %v1420
    %v1491 = vpack.c.b16 %v1423, %v1422
    %v1492 = vpack.c.b16 %v1425, %v1424
    %v1493 = vpack.c.b16 %v1427, %v1426
    %v1494 = vpack.c.b16 %v1429, %v1428
    %v1495 = vpack.c.b16 %v1431, %v1430
    %1560 = vmatprep.subr.bf16.mxu0 0
    %1561 = vmatpush1.bf16.msra.mxu0 %v1432
    %1562 = vmatprep.subr.bf16.mxu0 0
    %1563 = vmatpush1.bf16.msra.mxu0 %v1433
    %1564 = vmatprep.subr.bf16.mxu0 0
    %1565 = vmatpush1.bf16.msra.mxu0 %v1434
    %1566 = vmatprep.subr.bf16.mxu0 0
    %1567 = vmatpush1.bf16.msra.mxu0 %v1435
    %1568 = vmatprep.subr.bf16.mxu0 0
    %1569 = vmatpush1.bf16.msra.mxu0 %v1436
    %1570 = vmatprep.subr.bf16.mxu0 0
    %1571 = vmatpush1.bf16.msra.mxu0 %v1437
    %1572 = vmatprep.subr.bf16.mxu0 0
    %1573 = vmatpush1.bf16.msra.mxu0 %v1438
    %1574 = vmatprep.subr.bf16.mxu0 0
    %1575 = vmatpush1.bf16.msra.mxu0 %v1439
    %1576 = vmatprep.subr.bf16.mxu0 0
    %1577 = vmatpush1.bf16.msra.mxu0 %v1440
    %1578 = vmatprep.subr.bf16.mxu0 0
    %1579 = vmatpush1.bf16.msra.mxu0 %v1441
    %1580 = vmatprep.subr.bf16.mxu0 0
    %1581 = vmatpush1.bf16.msra.mxu0 %v1442
    %1582 = vmatprep.subr.bf16.mxu0 0
    %1583 = vmatpush1.bf16.msra.mxu0 %v1443
    %1584 = vmatprep.subr.bf16.mxu0 0
    %1585 = vmatpush1.bf16.msra.mxu0 %v1444
    %1586 = vmatprep.subr.bf16.mxu0 0
    %1587 = vmatpush1.bf16.msra.mxu0 %v1445
    %1588 = vmatprep.subr.bf16.mxu0 0
    %1589 = vmatpush1.bf16.msra.mxu0 %v1446
    %1590 = vmatprep.subr.bf16.mxu0 0
    %1591 = vmatpush1.bf16.msra.mxu0 %v1447
    %1592 = vmatprep.mubr.bf16.mxu0 %v965
    %1593 = vmatmul.mubr.bf16.gmra.mrb[0].mxu0 %v953
    %v1594 = vpop.f32.mrb[0].mxu0
    %v1595 = vadd.f32 %v1174, %v1594
    %v1596 = vpop.f32.mrb[0].mxu0
    %v1597 = vpop.f32.mrb[0].mxu0
    %v1598 = vadd.f32 %v1174, %v1597
    %v1599 = vpop.f32.mrb[0].mxu0
    %1600 = vmatprep.mubr.bf16.mxu0 %v966
    %1601 = vmatmul.mubr.bf16.gmra.mrb[0].mxu0 %v954
    %v1602 = vpop.f32.mrb[0].mxu0
    %v1603 = vadd.f32 %v1174, %v1602
    %v1604 = vpop.f32.mrb[0].mxu0
    %v1605 = vpop.f32.mrb[0].mxu0
    %v1606 = vadd.f32 %v1174, %v1605
    %v1607 = vpop.f32.mrb[0].mxu0
    %1608 = vmatprep.mubr.bf16.mxu0 %v967
    %1609 = vmatmul.mubr.bf16.gmra.mrb[0].mxu0 %v955
    %v1610 = vpop.f32.mrb[0].mxu0
    %v1611 = vadd.f32 %v1174, %v1610
    %v1612 = vpop.f32.mrb[0].mxu0
    %v1613 = vpop.f32.mrb[0].mxu0
    %v1614 = vadd.f32 %v1174, %v1613
    %v1615 = vpop.f32.mrb[0].mxu0
    %1616 = vmatprep.mubr.bf16.mxu0 %v968
    %1617 = vmatmul.mubr.bf16.gmra.mrb[0].mxu0 %v956
    %v1618 = vpop.f32.mrb[0].mxu0
    %v1619 = vadd.f32 %v1174, %v1618
    %v1620 = vpop.f32.mrb[0].mxu0
    %v1621 = vpop.f32.mrb[0].mxu0
    %v1622 = vadd.f32 %v1174, %v1621
    %v1623 = vpop.f32.mrb[0].mxu0
    %1624 = vdwg.mxu0
    %1625 = vmatprep.subr.bf16.mxu0 0
    %1626 = vmatpush1.bf16.msra.mxu0 %v1448
    %1627 = vmatprep.subr.bf16.mxu0 0
    %1628 = vmatpush1.bf16.msra.mxu0 %v1449
    %1629 = vmatprep.subr.bf16.mxu0 0
    %1630 = vmatpush1.bf16.msra.mxu0 %v1450
    %1631 = vmatprep.subr.bf16.mxu0 0
    %1632 = vmatpush1.bf16.msra.mxu0 %v1451
    %1633 = vmatprep.subr.bf16.mxu0 0
    %1634 = vmatpush1.bf16.msra.mxu0 %v1452
    %1635 = vmatprep.subr.bf16.mxu0 0
    %1636 = vmatpush1.bf16.msra.mxu0 %v1453
    %1637 = vmatprep.subr.bf16.mxu0 0
    %1638 = vmatpush1.bf16.msra.mxu0 %v1454
    %1639 = vmatprep.subr.bf16.mxu0 0
    %1640 = vmatpush1.bf16.msra.mxu0 %v1455
    %1641 = vmatprep.subr.bf16.mxu0 0
    %1642 = vmatpush1.bf16.msra.mxu0 %v1456
    %1643 = vmatprep.subr.bf16.mxu0 0
    %1644 = vmatpush1.bf16.msra.mxu0 %v1457
    %1645 = vmatprep.subr.bf16.mxu0 0
    %1646 = vmatpush1.bf16.msra.mxu0 %v1458
    %1647 = vmatprep.subr.bf16.mxu0 0
    %1648 = vmatpush1.bf16.msra.mxu0 %v1459
    %1649 = vmatprep.subr.bf16.mxu0 0
    %1650 = vmatpush1.bf16.msra.mxu0 %v1460
    %1651 = vmatprep.subr.bf16.mxu0 0
    %1652 = vmatpush1.bf16.msra.mxu0 %v1461
    %1653 = vmatprep.subr.bf16.mxu0 0
    %1654 = vmatpush1.bf16.msra.mxu0 %v1462
    %1655 = vmatprep.subr.bf16.mxu0 0
    %1656 = vmatpush1.bf16.msra.mxu0 %v1463
    %1657 = vmatprep.mubr.bf16.mxu0 %v989
    %1658 = vmatmul.mubr.bf16.gmra.mrb[0].mxu0 %v977
    %v1659 = vpop.f32.mrb[0].mxu0
    %v1660 = vadd.f32 %v1595, %v1659
    %v1661 = vpop.f32.mrb[0].mxu0
    %v1662 = vpop.f32.mrb[0].mxu0
    %v1663 = vadd.f32 %v1598, %v1662
    %v1664 = vpop.f32.mrb[0].mxu0
    %1665 = vmatprep.mubr.bf16.mxu0 %v990
    %1666 = vmatmul.mubr.bf16.gmra.mrb[0].mxu0 %v978
    %v1667 = vpop.f32.mrb[0].mxu0
    %v1668 = vadd.f32 %v1603, %v1667
    %v1669 = vpop.f32.mrb[0].mxu0
    %v1670 = vpop.f32.mrb[0].mxu0
    %v1671 = vadd.f32 %v1606, %v1670
    %v1672 = vpop.f32.mrb[0].mxu0
    %1673 = vmatprep.mubr.bf16.mxu0 %v991
    %1674 = vmatmul.mubr.bf16.gmra.mrb[0].mxu0 %v979
    %v1675 = vpop.f32.mrb[0].mxu0
    %v1676 = vadd.f32 %v1611, %v1675
    %v1677 = vpop.f32.mrb[0].mxu0
    %v1678 = vpop.f32.mrb[0].mxu0
    %v1679 = vadd.f32 %v1614, %v1678
    %v1680 = vpop.f32.mrb[0].mxu0
    %1681 = vmatprep.mubr.bf16.mxu0 %v992
    %1682 = vmatmul.mubr.bf16.gmra.mrb[0].mxu0 %v980
    %v1683 = vpop.f32.mrb[0].mxu0
    %v1684 = vadd.f32 %v1619, %v1683
    %v1685 = vpop.f32.mrb[0].mxu0
    %v1686 = vpop.f32.mrb[0].mxu0
    %v1687 = vadd.f32 %v1622, %v1686
    %v1688 = vpop.f32.mrb[0].mxu0
    %1689 = vdwg.mxu0
    %1690 = vmatprep.subr.bf16.mxu0 0
    %1691 = vmatpush1.bf16.msra.mxu0 %v1464
    %1692 = vmatprep.subr.bf16.mxu0 0
    %1693 = vmatpush1.bf16.msra.mxu0 %v1465
    %1694 = vmatprep.subr.bf16.mxu0 0
    %1695 = vmatpush1.bf16.msra.mxu0 %v1466
    %1696 = vmatprep.subr.bf16.mxu0 0
    %1697 = vmatpush1.bf16.msra.mxu0 %v1467
    %1698 = vmatprep.subr.bf16.mxu0 0
    %1699 = vmatpush1.bf16.msra.mxu0 %v1468
    %1700 = vmatprep.subr.bf16.mxu0 0
    %1701 = vmatpush1.bf16.msra.mxu0 %v1469
    %1702 = vmatprep.subr.bf16.mxu0 0
    %1703 = vmatpush1.bf16.msra.mxu0 %v1470
    %1704 = vmatprep.subr.bf16.mxu0 0
    %1705 = vmatpush1.bf16.msra.mxu0 %v1471
    %1706 = vmatprep.subr.bf16.mxu0 0
    %1707 = vmatpush1.bf16.msra.mxu0 %v1472
    %1708 = vmatprep.subr.bf16.mxu0 0
    %1709 = vmatpush1.bf16.msra.mxu0 %v1473
    %1710 = vmatprep.subr.bf16.mxu0 0
    %1711 = vmatpush1.bf16.msra.mxu0 %v1474
    %1712 = vmatprep.subr.bf16.mxu0 0
    %1713 = vmatpush1.bf16.msra.mxu0 %v1475
    %1714 = vmatprep.subr.bf16.mxu0 0
    %1715 = vmatpush1.bf16.msra.mxu0 %v1476
    %1716 = vmatprep.subr.bf16.mxu0 0
    %1717 = vmatpush1.bf16.msra.mxu0 %v1477
    %1718 = vmatprep.subr.bf16.mxu0 0
    %1719 = vmatpush1.bf16.msra.mxu0 %v1478
    %1720 = vmatprep.subr.bf16.mxu0 0
    %1721 = vmatpush1.bf16.msra.mxu0 %v1479
    %1722 = vmatprep.mubr.bf16.mxu0 %v1013
    %1723 = vmatmul.mubr.bf16.gmra.mrb[0].mxu0 %v1001
    %v1724 = vpop.f32.mrb[0].mxu0
    %v1725 = vadd.f32 %v1660, %v1724
    %v1726 = vpop.f32.mrb[0].mxu0
    %v1727 = vpop.f32.mrb[0].mxu0
    %v1728 = vadd.f32 %v1663, %v1727
    %v1729 = vpop.f32.mrb[0].mxu0
    %1730 = vmatprep.mubr.bf16.mxu0 %v1014
    %1731 = vmatmul.mubr.bf16.gmra.mrb[0].mxu0 %v1002
    %v1732 = vpop.f32.mrb[0].mxu0
    %v1733 = vadd.f32 %v1668, %v1732
    %v1734 = vpop.f32.mrb[0].mxu0
    %v1735 = vpop.f32.mrb[0].mxu0
    %v1736 = vadd.f32 %v1671, %v1735
    %v1737 = vpop.f32.mrb[0].mxu0
    %1738 = vmatprep.mubr.bf16.mxu0 %v1015
    %1739 = vmatmul.mubr.bf16.gmra.mrb[0].mxu0 %v1003
    %v1740 = vpop.f32.mrb[0].mxu0
    %v1741 = vadd.f32 %v1676, %v1740
    %v1742 = vpop.f32.mrb[0].mxu0
    %v1743 = vpop.f32.mrb[0].mxu0
    %v1744 = vadd.f32 %v1679, %v1743
    %v1745 = vpop.f32.mrb[0].mxu0
    %1746 = vmatprep.mubr.bf16.mxu0 %v1016
    %1747 = vmatmul.mubr.bf16.gmra.mrb[0].mxu0 %v1004
    %v1748 = vpop.f32.mrb[0].mxu0
    %v1749 = vadd.f32 %v1684, %v1748
    %v1750 = vpop.f32.mrb[0].mxu0
    %v1751 = vpop.f32.mrb[0].mxu0
    %v1752 = vadd.f32 %v1687, %v1751
    %v1753 = vpop.f32.mrb[0].mxu0
    %1754 = vdwg.mxu0
    %1755 = vmatprep.subr.bf16.mxu0 0
    %1756 = vmatpush1.bf16.msra.mxu0 %v1480
    %1757 = vmatprep.subr.bf16.mxu0 0
    %1758 = vmatpush1.bf16.msra.mxu0 %v1481
    %1759 = vmatprep.subr.bf16.mxu0 0
    %1760 = vmatpush1.bf16.msra.mxu0 %v1482
    %1761 = vmatprep.subr.bf16.mxu0 0
    %1762 = vmatpush1.bf16.msra.mxu0 %v1483
    %1763 = vmatprep.subr.bf16.mxu0 0
    %1764 = vmatpush1.bf16.msra.mxu0 %v1484
    %1765 = vmatprep.subr.bf16.mxu0 0
    %1766 = vmatpush1.bf16.msra.mxu0 %v1485
    %1767 = vmatprep.subr.bf16.mxu0 0
    %1768 = vmatpush1.bf16.msra.mxu0 %v1486
    %1769 = vmatprep.subr.bf16.mxu0 0
    %1770 = vmatpush1.bf16.msra.mxu0 %v1487
    %1771 = vmatprep.subr.bf16.mxu0 0
    %1772 = vmatpush1.bf16.msra.mxu0 %v1488
    %1773 = vmatprep.subr.bf16.mxu0 0
    %1774 = vmatpush1.bf16.msra.mxu0 %v1489
    %1775 = vmatprep.subr.bf16.mxu0 0
    %1776 = vmatpush1.bf16.msra.mxu0 %v1490
    %1777 = vmatprep.subr.bf16.mxu0 0
    %1778 = vmatpush1.bf16.msra.mxu0 %v1491
    %1779 = vmatprep.subr.bf16.mxu0 0
    %1780 = vmatpush1.bf16.msra.mxu0 %v1492
    %1781 = vmatprep.subr.bf16.mxu0 0
    %1782 = vmatpush1.bf16.msra.mxu0 %v1493
    %1783 = vmatprep.subr.bf16.mxu0 0
    %1784 = vmatpush1.bf16.msra.mxu0 %v1494
    %1785 = vmatprep.subr.bf16.mxu0 0
    %1786 = vmatpush1.bf16.msra.mxu0 %v1495
    %1787 = vmatprep.mubr.bf16.mxu0 %v1037
    %1788 = vmatmul.mubr.bf16.gmra.mrb[0].mxu0 %v1025
    %v1789 = vpop.f32.mrb[0].mxu0
    %v1790 = vadd.f32 %v1725, %v1789
    %v1791 = vpop.f32.mrb[0].mxu0
    %v1792 = vpop.f32.mrb[0].mxu0
    %v1793 = vadd.f32 %v1728, %v1792
    %v1794 = vpop.f32.mrb[0].mxu0
    %1795 = vmatprep.mubr.bf16.mxu0 %v1038
    %1796 = vmatmul.mubr.bf16.gmra.mrb[0].mxu0 %v1026
    %v1797 = vpop.f32.mrb[0].mxu0
    %v1798 = vadd.f32 %v1733, %v1797
    %v1799 = vpop.f32.mrb[0].mxu0
    %v1800 = vpop.f32.mrb[0].mxu0
    %v1801 = vadd.f32 %v1736, %v1800
    %v1802 = vpop.f32.mrb[0].mxu0
    %1803 = vmatprep.mubr.bf16.mxu0 %v1039
    %1804 = vmatmul.mubr.bf16.gmra.mrb[0].mxu0 %v1027
    %v1805 = vpop.f32.mrb[0].mxu0
    %v1806 = vadd.f32 %v1741, %v1805
    %v1807 = vpop.f32.mrb[0].mxu0
    %v1808 = vpop.f32.mrb[0].mxu0
    %v1809 = vadd.f32 %v1744, %v1808
    %v1810 = vpop.f32.mrb[0].mxu0
    %1811 = vmatprep.mubr.bf16.mxu0 %v1040
    %1812 = vmatmul.mubr.bf16.gmra.mrb[0].mxu0 %v1028
    %v1813 = vpop.f32.mrb[0].mxu0
    %v1814 = vadd.f32 %v1749, %v1813
    %v1815 = vpop.f32.mrb[0].mxu0
    %v1816 = vpop.f32.mrb[0].mxu0
    %v1817 = vadd.f32 %v1752, %v1816
    %v1818 = vpop.f32.mrb[0].mxu0
    %1819 = vdwg.mxu0
    %v1820 = vmax.f32 %v1790, 0.0
    %v1821 = vmax.f32 %v1793, 0.0
    %v1822 = vmax.f32 %v1798, 0.0
    %v1823 = vmax.f32 %v1801, 0.0
    %v1824 = vmax.f32 %v1806, 0.0
    %v1825 = vmax.f32 %v1809, 0.0
    %v1826 = vmax.f32 %v1814, 0.0
    %v1827 = vmax.f32 %v1817, 0.0
    %v1828 = vsel %vm201, %v1820, 0.0
    %v1829 = vsel %vm201, %v1821, 0.0
    %v1830 = vadd.f32 %v1828, %v1829
    %v1831 = vsel %vm201, %v1822, 0.0
    %v1832 = vadd.f32 %v1830, %v1831
    %v1833 = vsel %vm201, %v1823, 0.0
    %v1834 = vadd.f32 %v1832, %v1833
    %v1835 = vsel %vm201, %v1824, 0.0
    %v1836 = vadd.f32 %v1834, %v1835
    %v1837 = vsel %vm201, %v1825, 0.0
    %v1838 = vadd.f32 %v1836, %v1837
    %v1839 = vsel %vm201, %v1826, 0.0
    %v1840 = vadd.f32 %v1838, %v1839
    %v1841 = vsel %vm201, %v1827, 0.0
    %v1842 = vadd.f32 %v1840, %v1841
    %v1843 = vrot.slane %v1842, 4
    %v1844 = vadd.f32 %v1842, %v1843
    %v1845 = vrot.slane %v1844, 2
    %v1846 = vadd.f32 %v1844, %v1845
    %v1847 = vrot.slane %v1846, 1
    %v1848 = vadd.f32 %v1846, %v1847
    %v1849 = vmul.f32 %v1820, %v1820
    %v1850 = vmul.f32 %v1821, %v1821
    %v1851 = vmul.f32 %v1822, %v1822
    %v1852 = vmul.f32 %v1823, %v1823
    %v1853 = vmul.f32 %v1824, %v1824
    %v1854 = vmul.f32 %v1825, %v1825
    %v1855 = vmul.f32 %v1826, %v1826
    %v1856 = vmul.f32 %v1827, %v1827
    %v1857 = vsel %vm201, %v1849, 0.0
    %v1858 = vsel %vm201, %v1850, 0.0
    %v1859 = vadd.f32 %v1857, %v1858
    %v1860 = vsel %vm201, %v1851, 0.0
    %v1861 = vadd.f32 %v1859, %v1860
    %v1862 = vsel %vm201, %v1852, 0.0
    %v1863 = vadd.f32 %v1861, %v1862
    %v1864 = vsel %vm201, %v1853, 0.0
    %v1865 = vadd.f32 %v1863, %v1864
    %v1866 = vsel %vm201, %v1854, 0.0
    %v1867 = vadd.f32 %v1865, %v1866
    %v1868 = vsel %vm201, %v1855, 0.0
    %v1869 = vadd.f32 %v1867, %v1868
    %v1870 = vsel %vm201, %v1856, 0.0
    %v1871 = vadd.f32 %v1869, %v1870
    %v1872 = vrot.slane %v1871, 4
    %v1873 = vadd.f32 %v1871, %v1872
    %v1874 = vrot.slane %v1873, 2
    %v1875 = vadd.f32 %v1873, %v1874
    %v1876 = vrot.slane %v1875, 1
    %v1877 = vadd.f32 %v1875, %v1876
    %v1878 = vmul.f32 %v1848, 0.015625
    %v1879 = vmul.f32 %v1877, 0.015625
    %v1880 = vmul.f32 %v1878, %v1878
    %v1881 = vsub.f32 %v1879, %v1880
    %v1882 = vsub.f32 %v1820, %v1878
    %v1883 = vsub.f32 %v1821, %v1878
    %v1884 = vsub.f32 %v1822, %v1878
    %v1885 = vsub.f32 %v1823, %v1878
    %v1886 = vsub.f32 %v1824, %v1878
    %v1887 = vsub.f32 %v1825, %v1878
    %v1888 = vsub.f32 %v1826, %v1878
    %v1889 = vsub.f32 %v1827, %v1878
    %v1890 = vadd.f32 %v1881, 1e-05
    %v1891 = vrsqrt.pop %v1890
    %v1892 = vmul.f32 %v1882, %v1891
    %v1893 = vmul.f32 %v1883, %v1891
    %v1894 = vmul.f32 %v1884, %v1891
    %v1895 = vmul.f32 %v1885, %v1891
    %v1896 = vmul.f32 %v1886, %v1891
    %v1897 = vmul.f32 %v1887, %v1891
    %v1898 = vmul.f32 %v1888, %v1891
    %v1899 = vmul.f32 %v1889, %v1891
    %v1900 = vld [vmem:[%s5] sm:$0x1]
    %v1902 = vlaneseq
    %v1903 = vshrl.u32 %v1902, 7
    %v1904 = vsub.s32 0, %v1903
    %v1905 = vrot.slane %v1900, %v1904
    %v1907 = vmul.f32 %v1892, %v1905
    %v1908 = vmul.f32 %v1893, %v1905
    %v1909 = vmul.f32 %v1894, %v1905
    %v1910 = vmul.f32 %v1895, %v1905
    %v1911 = vmul.f32 %v1896, %v1905
    %v1912 = vmul.f32 %v1897, %v1905
    %v1913 = vmul.f32 %v1898, %v1905
    %v1914 = vmul.f32 %v1899, %v1905
    %v1915 = vld [vmem:[%s6] sm:$0x1]
    %v1917 = vlaneseq
    %v1918 = vshrl.u32 %v1917, 7
    %v1919 = vsub.s32 0, %v1918
    %v1920 = vrot.slane %v1915, %v1919
    %v1922 = vadd.f32 %v1907, %v1920
    %v1923 = vadd.f32 %v1908, %v1920
    %v1924 = vadd.f32 %v1909, %v1920
    %v1925 = vadd.f32 %v1910, %v1920
    %v1926 = vadd.f32 %v1911, %v1920
    %v1927 = vadd.f32 %v1912, %v1920
    %v1928 = vadd.f32 %v1913, %v1920
    %v1929 = vadd.f32 %v1914, %v1920
    %v1932 = vrot.slane %v1924, 7
    %v1933 = vrot.slane %v1925, 7
    %v1934 = vsel %vm831, %v1932, %v1933
    %v1937 = vsel %vm831, %v1922, %v1932
    %v1938 = vmul.f32 %v1937, 0.25
    %v1939 = vmul.f32 %v1934, 0.25
    %v1940 = vmul.f32 %v1922, 0.75
    %v1941 = vmul.f32 %v1923, 0.75
    %v1942 = vadd.f32 %v1938, %v1940
    %v1943 = vadd.f32 %v1939, %v1941
    %v1944 = vmul.f32 %v1924, 0.25
    %v1945 = vmul.f32 %v1925, 0.25
    %v1946 = vadd.f32 %v1940, %v1944
    %v1947 = vadd.f32 %v1941, %v1945
    %v1950 = vrot.slane %v1922, 1
    %v1951 = vrot.slane %v1923, 1
    %v1952 = vsel %vm843, %v1950, %v1951
    %v1955 = vsel %vm843, %v1951, %v1925
    %v1956 = vmul.f32 %v1922, 0.25
    %v1957 = vmul.f32 %v1923, 0.25
    %v1958 = vmul.f32 %v1924, 0.75
    %v1959 = vmul.f32 %v1925, 0.75
    %v1960 = vadd.f32 %v1956, %v1958
    %v1961 = vadd.f32 %v1957, %v1959
    %v1962 = vmul.f32 %v1952, 0.25
    %v1963 = vmul.f32 %v1955, 0.25
    %v1964 = vadd.f32 %v1958, %v1962
    %v1965 = vadd.f32 %v1959, %v1963
    %1968 = vrot.lane.b32.xlu0 %v1946, 32
    %v1969 = vpop.permute.xlu0 %1968
    %1970 = vrot.lane.b32.xlu0 %v1947, 32
    %v1971 = vpop.permute.xlu0 %1970
    %1976 = vrot.lane.b32.xlu0 %v1960, 64
    %v1977 = vpop.permute.xlu0 %1976
    %1978 = vrot.lane.b32.xlu0 %v1961, 64
    %v1979 = vpop.permute.xlu0 %1978
    %1984 = vrot.lane.b32.xlu0 %v1964, 96
    %v1985 = vpop.permute.xlu0 %1984
    %1986 = vrot.lane.b32.xlu0 %v1965, 96
    %v1987 = vpop.permute.xlu0 %1986
    %v1990 = vsel %vm201, %v1942, %v1969
    %v1991 = vsel %vm201, %v1943, %v1971
    %v1992 = vsel %vm920, %v1990, %v1977
    %v1993 = vsel %vm920, %v1991, %v1979
    %vm1994 = vcmask 785408
    %v1995 = vsel %vm1994, %v1992, %v1985
    %v1996 = vsel %vm1994, %v1993, %v1987
    %v1999 = vrot.slane %v1928, 7
    %v2000 = vrot.slane %v1929, 7
    %v2001 = vsel %vm831, %v1999, %v2000
    %v2004 = vsel %vm831, %v1926, %v1999
    %v2005 = vmul.f32 %v2004, 0.25
    %v2006 = vmul.f32 %v2001, 0.25
    %v2007 = vmul.f32 %v1926, 0.75
    %v2008 = vmul.f32 %v1927, 0.75
    %v2009 = vadd.f32 %v2005, %v2007
    %v2010 = vadd.f32 %v2006, %v2008
    %v2011 = vmul.f32 %v1928, 0.25
    %v2012 = vmul.f32 %v1929, 0.25
    %v2013 = vadd.f32 %v2007, %v2011
    %v2014 = vadd.f32 %v2008, %v2012
    %v2017 = vrot.slane %v1926, 1
    %v2018 = vrot.slane %v1927, 1
    %v2019 = vsel %vm843, %v2017, %v2018
    %v2022 = vsel %vm843, %v2018, %v1929
    %v2023 = vmul.f32 %v1926, 0.25
    %v2024 = vmul.f32 %v1927, 0.25
    %v2025 = vmul.f32 %v1928, 0.75
    %v2026 = vmul.f32 %v1929, 0.75
    %v2027 = vadd.f32 %v2023, %v2025
    %v2028 = vadd.f32 %v2024, %v2026
    %v2029 = vmul.f32 %v2019, 0.25
    %v2030 = vmul.f32 %v2022, 0.25
    %v2031 = vadd.f32 %v2025, %v2029
    %v2032 = vadd.f32 %v2026, %v2030
    %2035 = vrot.lane.b32.xlu0 %v2013, 32
    %v2036 = vpop.permute.xlu0 %2035
    %2037 = vrot.lane.b32.xlu0 %v2014, 32
    %v2038 = vpop.permute.xlu0 %2037
    %2043 = vrot.lane.b32.xlu0 %v2027, 64
    %v2044 = vpop.permute.xlu0 %2043
    %2045 = vrot.lane.b32.xlu0 %v2028, 64
    %v2046 = vpop.permute.xlu0 %2045
    %2051 = vrot.lane.b32.xlu0 %v2031, 96
    %v2052 = vpop.permute.xlu0 %2051
    %2053 = vrot.lane.b32.xlu0 %v2032, 96
    %v2054 = vpop.permute.xlu0 %2053
    %v2057 = vsel %vm201, %v2009, %v2036
    %v2058 = vsel %vm201, %v2010, %v2038
    %v2059 = vsel %vm920, %v2057, %v2044
    %v2060 = vsel %vm920, %v2058, %v2046
    %v2061 = vsel %vm1994, %v2059, %v2052
    %v2062 = vsel %vm1994, %v2060, %v2054
    %2063 = vst [vmem:[#allocation2] sm:$0xff] 0.0
    %2064 = vst [vmem:[#allocation2 + $0x8] sm:$0xff] 0.0
    %2065 = vst [vmem:[#allocation2 + $0x10] sm:$0xff] 0.0
    %2066 = vst [vmem:[#allocation2 + $0x18] sm:$0xff] 0.0
    %2067 = vst [vmem:[#allocation2 + $0x20] sm:$0xff] 0.0
    %2068 = vst [vmem:[#allocation2 + $0x28] sm:$0xff] 0.0
    %2069 = vst [vmem:[#allocation2 + $0x30] sm:$0xff] 0.0
    %2070 = vst [vmem:[#allocation2 + $0x38] sm:$0xff] 0.0
    %2071 = vst [vmem:[#allocation2 + $0x40] sm:$0xff] 0.0
    %2072 = vst [vmem:[#allocation2 + $0x48] sm:$0xff] 0.0
    %2073 = vst [vmem:[#allocation2 + $0x50] sm:$0xff] 0.0
    %2074 = vst [vmem:[#allocation2 + $0x58] sm:$0xff] 0.0
    %2075 = vst [vmem:[#allocation2 + $0x60] sm:$0xff] 0.0
    %2076 = vst [vmem:[#allocation2 + $0x68] sm:$0xff] 0.0
    %2077 = vst [vmem:[#allocation2 + $0x70] sm:$0xff] 0.0
    %2078 = vst [vmem:[#allocation2 + $0x78] sm:$0xff] 0.0
    %2079 = vst [vmem:[#allocation2 + $0x80] sm:$0xff] 0.0
    %2080 = vst [vmem:[#allocation2 + $0x88] sm:$0xff] 0.0
    %2081 = vst [vmem:[#allocation2 + $0x90] sm:$0xff] 0.0
    %2082 = vst [vmem:[#allocation2 + $0x98] sm:$0xff] 0.0
    %2083 = vst [vmem:[#allocation2 + $0xa0] sm:$0xff] 0.0
    %2084 = vst [vmem:[#allocation2 + $0xa8] sm:$0xff] 0.0
    %2085 = vst [vmem:[#allocation2 + $0xb0] sm:$0xff] 0.0
    %2086 = vst [vmem:[#allocation2 + $0xb8] sm:$0xff] 0.0
    %2087 = vst [vmem:[#allocation2 + $0xc0] sm:$0xff] 0.0
    %2088 = vst [vmem:[#allocation2 + $0xc8] sm:$0xff] 0.0
    %2089 = vst [vmem:[#allocation2 + $0xd0] sm:$0xff] 0.0
    %2090 = vst [vmem:[#allocation2 + $0xd8] sm:$0xff] 0.0
    %2091 = vst [vmem:[#allocation2 + $0xe0] sm:$0xff] 0.0
    %2092 = vst [vmem:[#allocation2 + $0xe8] sm:$0xff] 0.0
    %2093 = vst [vmem:[#allocation2 + $0xf0] sm:$0xff] 0.0
    %2094 = vst [vmem:[#allocation2 + $0xf8] sm:$0xff] 0.0
    %2097 = vrot.lane.b32.xlu0 %v1995, 96
    %v2098 = vpop.permute.xlu0 %2097
    %2099 = vrot.lane.b32.xlu0 %v1996, 96
    %v2100 = vpop.permute.xlu0 %2099
    %2103 = vst.msk [vmem:[#allocation2 + $0x4] sm:$0xff] %vm1994, %v2098
    %2104 = vst.msk [vmem:[#allocation2 + $0xc] sm:$0xff] %vm1994, %v2100
    %vm2105 = vcmask 1048320
    %2106 = vst.msk [vmem:[#allocation2 + $0x3] sm:$0xff] %vm2105, %v2098
    %2107 = vst.msk [vmem:[#allocation2 + $0xb] sm:$0xff] %vm2105, %v2100
    %2108 = vrot.lane.b32.xlu0 %v1995, 64
    %v2109 = vpop.permute.xlu0 %2108
    %2110 = vrot.lane.b32.xlu0 %v1996, 64
    %v2111 = vpop.permute.xlu0 %2110
    %2114 = vst.msk [vmem:[%s926 + $0x4] sm:$0xff] %vm920, %v2109
    %2115 = vst.msk [vmem:[%s926 + $0xc] sm:$0xff] %vm920, %v2111
    %2116 = vst.msk [vmem:[%s926 + $0x3] sm:$0xff] %vm923, %v2109
    %2117 = vst.msk [vmem:[%s926 + $0xb] sm:$0xff] %vm923, %v2111
    %2118 = vrot.lane.b32.xlu0 %v1995, 32
    %v2119 = vpop.permute.xlu0 %2118
    %2120 = vrot.lane.b32.xlu0 %v1996, 32
    %v2121 = vpop.permute.xlu0 %2120
    %2124 = vst.msk [vmem:[%s937 + $0x4] sm:$0xff] %vm201, %v2119
    %2125 = vst.msk [vmem:[%s937 + $0xc] sm:$0xff] %vm201, %v2121
    %vm2126 = vcmask 1047808
    %2127 = vst.msk [vmem:[%s937 + $0x3] sm:$0xff] %vm2126, %v2119
    %2128 = vst.msk [vmem:[%s937 + $0xb] sm:$0xff] %vm2126, %v2121
    %2129 = vst [vmem:[%s942 + $0x3] sm:$0xff] %v1995
    %2130 = vst [vmem:[%s942 + $0xb] sm:$0xff] %v1996
    %2133 = vrot.lane.b32.xlu0 %v2061, 96
    %v2134 = vpop.permute.xlu0 %2133
    %2135 = vrot.lane.b32.xlu0 %v2062, 96
    %v2136 = vpop.permute.xlu0 %2135
    %s2139 = scalar_lea.vmem [#allocation2], 128
    %2140 = vst.msk [vmem:[%s2139 + $0x4] sm:$0xff] %vm1994, %v2134
    %2141 = vst.msk [vmem:[%s2139 + $0xc] sm:$0xff] %vm1994, %v2136
    %2142 = vst.msk [vmem:[%s2139 + $0x3] sm:$0xff] %vm2105, %v2134
    %2143 = vst.msk [vmem:[%s2139 + $0xb] sm:$0xff] %vm2105, %v2136
    %2144 = vrot.lane.b32.xlu0 %v2061, 64
    %v2145 = vpop.permute.xlu0 %2144
    %2146 = vrot.lane.b32.xlu0 %v2062, 64
    %v2147 = vpop.permute.xlu0 %2146
    %s2150 = scalar_lea.vmem [#allocation2], 160
    %2151 = vst.msk [vmem:[%s2150 + $0x4] sm:$0xff] %vm920, %v2145
    %2152 = vst.msk [vmem:[%s2150 + $0xc] sm:$0xff] %vm920, %v2147
    %2153 = vst.msk [vmem:[%s2150 + $0x3] sm:$0xff] %vm923, %v2145
    %2154 = vst.msk [vmem:[%s2150 + $0xb] sm:$0xff] %vm923, %v2147
    %2155 = vrot.lane.b32.xlu0 %v2061, 32
    %v2156 = vpop.permute.xlu0 %2155
    %2157 = vrot.lane.b32.xlu0 %v2062, 32
    %v2158 = vpop.permute.xlu0 %2157
    %s2161 = scalar_lea.vmem [#allocation2], 192
    %2162 = vst.msk [vmem:[%s2161 + $0x4] sm:$0xff] %vm201, %v2156
    %2163 = vst.msk [vmem:[%s2161 + $0xc] sm:$0xff] %vm201, %v2158
    %2164 = vst.msk [vmem:[%s2161 + $0x3] sm:$0xff] %vm2126, %v2156
    %2165 = vst.msk [vmem:[%s2161 + $0xb] sm:$0xff] %vm2126, %v2158
    %s2166 = scalar_lea.vmem [#allocation2], 224
    %2167 = vst [vmem:[%s2166 + $0x3] sm:$0xff] %v2061
    %2168 = vst [vmem:[%s2166 + $0xb] sm:$0xff] %v2062
    %v2169 = vld [vmem:[#allocation2] sm:$0xff]
    %v2170 = vld [vmem:[#allocation2 + $0x8] sm:$0xff]
    %v2171 = vld [vmem:[#allocation2 + $0x20] sm:$0xff]
    %v2172 = vld [vmem:[#allocation2 + $0x28] sm:$0xff]
    %v2173 = vld [vmem:[#allocation2 + $0x40] sm:$0xff]
    %v2174 = vld [vmem:[#allocation2 + $0x48] sm:$0xff]
    %v2175 = vld [vmem:[#allocation2 + $0x60] sm:$0xff]
    %v2176 = vld [vmem:[#allocation2 + $0x68] sm:$0xff]
    %v2177 = vld [vmem:[#allocation2 + $0x80] sm:$0xff]
    %v2178 = vld [vmem:[#allocation2 + $0x88] sm:$0xff]
    %v2179 = vld [vmem:[#allocation2 + $0xa0] sm:$0xff]
    %v2180 = vld [vmem:[#allocation2 + $0xa8] sm:$0xff]
    %v2181 = vld [vmem:[#allocation2 + $0xc0] sm:$0xff]
    %v2182 = vld [vmem:[#allocation2 + $0xc8] sm:$0xff]
    %v2183 = vld [vmem:[#allocation2 + $0xe0] sm:$0xff]
    %v2184 = vld [vmem:[#allocation2 + $0xe8] sm:$0xff]
    %v2185 = vpack.c.bf16 %v2170, %v2169
    %v2186 = vpack.c.bf16 %v2172, %v2171
    %v2187 = vpack.c.bf16 %v2174, %v2173
    %v2188 = vpack.c.bf16 %v2176, %v2175
    %v2189 = vpack.c.bf16 %v2178, %v2177
    %v2190 = vpack.c.bf16 %v2180, %v2179
    %v2191 = vpack.c.bf16 %v2182, %v2181
    %v2192 = vpack.c.bf16 %v2184, %v2183
    %v2193 = vld [vmem:[#allocation2 + $0x1] sm:$0xff]
    %v2194 = vld [vmem:[#allocation2 + $0x9] sm:$0xff]
    %v2195 = vld [vmem:[#allocation2 + $0x21] sm:$0xff]
    %v2196 = vld [vmem:[#allocation2 + $0x29] sm:$0xff]
    %v2197 = vld [vmem:[#allocation2 + $0x41] sm:$0xff]
    %v2198 = vld [vmem:[#allocation2 + $0x49] sm:$0xff]
    %v2199 = vld [vmem:[#allocation2 + $0x61] sm:$0xff]
    %v2200 = vld [vmem:[#allocation2 + $0x69] sm:$0xff]
    %v2201 = vld [vmem:[#allocation2 + $0x81] sm:$0xff]
    %v2202 = vld [vmem:[#allocation2 + $0x89] sm:$0xff]
    %v2203 = vld [vmem:[#allocation2 + $0xa1] sm:$0xff]
    %v2204 = vld [vmem:[#allocation2 + $0xa9] sm:$0xff]
    %v2205 = vld [vmem:[#allocation2 + $0xc1] sm:$0xff]
    %v2206 = vld [vmem:[#allocation2 + $0xc9] sm:$0xff]
    %v2207 = vld [vmem:[#allocation2 + $0xe1] sm:$0xff]
    %v2208 = vld [vmem:[#allocation2 + $0xe9] sm:$0xff]
    %v2209 = vpack.c.bf16 %v2194, %v2193
    %v2210 = vpack.c.bf16 %v2196, %v2195
    %v2211 = vpack.c.bf16 %v2198, %v2197
    %v2212 = vpack.c.bf16 %v2200, %v2199
    %v2213 = vpack.c.bf16 %v2202, %v2201
    %v2214 = vpack.c.bf16 %v2204, %v2203
    %v2215 = vpack.c.bf16 %v2206, %v2205
    %v2216 = vpack.c.bf16 %v2208, %v2207
    %v2217 = vld [vmem:[#allocation2 + $0x2] sm:$0xff]
    %v2218 = vld [vmem:[#allocation2 + $0xa] sm:$0xff]
    %v2219 = vld [vmem:[#allocation2 + $0x22] sm:$0xff]
    %v2220 = vld [vmem:[#allocation2 + $0x2a] sm:$0xff]
    %v2221 = vld [vmem:[#allocation2 + $0x42] sm:$0xff]
    %v2222 = vld [vmem:[#allocation2 + $0x4a] sm:$0xff]
    %v2223 = vld [vmem:[#allocation2 + $0x62] sm:$0xff]
    %v2224 = vld [vmem:[#allocation2 + $0x6a] sm:$0xff]
    %v2225 = vld [vmem:[#allocation2 + $0x82] sm:$0xff]
    %v2226 = vld [vmem:[#allocation2 + $0x8a] sm:$0xff]
    %v2227 = vld [vmem:[#allocation2 + $0xa2] sm:$0xff]
    %v2228 = vld [vmem:[#allocation2 + $0xaa] sm:$0xff]
    %v2229 = vld [vmem:[#allocation2 + $0xc2] sm:$0xff]
    %v2230 = vld [vmem:[#allocation2 + $0xca] sm:$0xff]
    %v2231 = vld [vmem:[#allocation2 + $0xe2] sm:$0xff]
    %v2232 = vld [vmem:[#allocation2 + $0xea] sm:$0xff]
    %v2233 = vpack.c.bf16 %v2218, %v2217
    %v2234 = vpack.c.bf16 %v2220, %v2219
    %v2235 = vpack.c.bf16 %v2222, %v2221
    %v2236 = vpack.c.bf16 %v2224, %v2223
    %v2237 = vpack.c.bf16 %v2226, %v2225
    %v2238 = vpack.c.bf16 %v2228, %v2227
    %v2239 = vpack.c.bf16 %v2230, %v2229
    %v2240 = vpack.c.bf16 %v2232, %v2231
    %v2241 = vld [vmem:[#allocation2 + $0x3] sm:$0xff]
    %v2242 = vld [vmem:[#allocation2 + $0xb] sm:$0xff]
    %v2243 = vld [vmem:[#allocation2 + $0x23] sm:$0xff]
    %v2244 = vld [vmem:[#allocation2 + $0x2b] sm:$0xff]
    %v2245 = vld [vmem:[#allocation2 + $0x43] sm:$0xff]
    %v2246 = vld [vmem:[#allocation2 + $0x4b] sm:$0xff]
    %v2247 = vld [vmem:[#allocation2 + $0x63] sm:$0xff]
    %v2248 = vld [vmem:[#allocation2 + $0x6b] sm:$0xff]
    %v2249 = vld [vmem:[#allocation2 + $0x83] sm:$0xff]
    %v2250 = vld [vmem:[#allocation2 + $0x8b] sm:$0xff]
    %v2251 = vld [vmem:[#allocation2 + $0xa3] sm:$0xff]
    %v2252 = vld [vmem:[#allocation2 + $0xab] sm:$0xff]
    %v2253 = vld [vmem:[#allocation2 + $0xc3] sm:$0xff]
    %v2254 = vld [vmem:[#allocation2 + $0xcb] sm:$0xff]
    %v2255 = vld [vmem:[#allocation2 + $0xe3] sm:$0xff]
    %v2256 = vld [vmem:[#allocation2 + $0xeb] sm:$0xff]
    %v2257 = vpack.c.bf16 %v2242, %v2241
    %v2258 = vpack.c.bf16 %v2244, %v2243
    %v2259 = vpack.c.bf16 %v2246, %v2245
    %v2260 = vpack.c.bf16 %v2248, %v2247
    %v2261 = vpack.c.bf16 %v2250, %v2249
    %v2262 = vpack.c.bf16 %v2252, %v2251
    %v2263 = vpack.c.bf16 %v2254, %v2253
    %v2264 = vpack.c.bf16 %v2256, %v2255
    %v2265 = vld [vmem:[#allocation2 + $0x4] sm:$0xff]
    %v2266 = vld [vmem:[#allocation2 + $0xc] sm:$0xff]
    %v2267 = vld [vmem:[#allocation2 + $0x24] sm:$0xff]
    %v2268 = vld [vmem:[#allocation2 + $0x2c] sm:$0xff]
    %v2269 = vld [vmem:[#allocation2 + $0x44] sm:$0xff]
    %v2270 = vld [vmem:[#allocation2 + $0x4c] sm:$0xff]
    %v2271 = vld [vmem:[#allocation2 + $0x64] sm:$0xff]
    %v2272 = vld [vmem:[#allocation2 + $0x6c] sm:$0xff]
    %v2273 = vld [vmem:[#allocation2 + $0x84] sm:$0xff]
    %v2274 = vld [vmem:[#allocation2 + $0x8c] sm:$0xff]
    %v2275 = vld [vmem:[#allocation2 + $0xa4] sm:$0xff]
    %v2276 = vld [vmem:[#allocation2 + $0xac] sm:$0xff]
    %v2277 = vld [vmem:[#allocation2 + $0xc4] sm:$0xff]
    %v2278 = vld [vmem:[#allocation2 + $0xcc] sm:$0xff]
    %v2279 = vld [vmem:[#allocation2 + $0xe4] sm:$0xff]
    %v2280 = vld [vmem:[#allocation2 + $0xec] sm:$0xff]
    %v2281 = vpack.c.bf16 %v2266, %v2265
    %v2282 = vpack.c.bf16 %v2268, %v2267
    %v2283 = vpack.c.bf16 %v2270, %v2269
    %v2284 = vpack.c.bf16 %v2272, %v2271
    %v2285 = vpack.c.bf16 %v2274, %v2273
    %v2286 = vpack.c.bf16 %v2276, %v2275
    %v2287 = vpack.c.bf16 %v2278, %v2277
    %v2288 = vpack.c.bf16 %v2280, %v2279
    %v2289 = vld [vmem:[#allocation2 + $0x5] sm:$0xff]
    %v2290 = vld [vmem:[#allocation2 + $0xd] sm:$0xff]
    %v2291 = vld [vmem:[#allocation2 + $0x25] sm:$0xff]
    %v2292 = vld [vmem:[#allocation2 + $0x2d] sm:$0xff]
    %v2293 = vld [vmem:[#allocation2 + $0x45] sm:$0xff]
    %v2294 = vld [vmem:[#allocation2 + $0x4d] sm:$0xff]
    %v2295 = vld [vmem:[#allocation2 + $0x65] sm:$0xff]
    %v2296 = vld [vmem:[#allocation2 + $0x6d] sm:$0xff]
    %v2297 = vld [vmem:[#allocation2 + $0x85] sm:$0xff]
    %v2298 = vld [vmem:[#allocation2 + $0x8d] sm:$0xff]
    %v2299 = vld [vmem:[#allocation2 + $0xa5] sm:$0xff]
    %v2300 = vld [vmem:[#allocation2 + $0xad] sm:$0xff]
    %v2301 = vld [vmem:[#allocation2 + $0xc5] sm:$0xff]
    %v2302 = vld [vmem:[#allocation2 + $0xcd] sm:$0xff]
    %v2303 = vld [vmem:[#allocation2 + $0xe5] sm:$0xff]
    %v2304 = vld [vmem:[#allocation2 + $0xed] sm:$0xff]
    %v2305 = vpack.c.bf16 %v2290, %v2289
    %v2306 = vpack.c.bf16 %v2292, %v2291
    %v2307 = vpack.c.bf16 %v2294, %v2293
    %v2308 = vpack.c.bf16 %v2296, %v2295
    %v2309 = vpack.c.bf16 %v2298, %v2297
    %v2310 = vpack.c.bf16 %v2300, %v2299
    %v2311 = vpack.c.bf16 %v2302, %v2301
    %v2312 = vpack.c.bf16 %v2304, %v2303
    %v2313 = vld [vmem:[#allocation2 + $0x6] sm:$0xff]
    %v2314 = vld [vmem:[#allocation2 + $0xe] sm:$0xff]
    %v2315 = vld [vmem:[#allocation2 + $0x26] sm:$0xff]
    %v2316 = vld [vmem:[#allocation2 + $0x2e] sm:$0xff]
    %v2317 = vld [vmem:[#allocation2 + $0x46] sm:$0xff]
    %v2318 = vld [vmem:[#allocation2 + $0x4e] sm:$0xff]
    %v2319 = vld [vmem:[#allocation2 + $0x66] sm:$0xff]
    %v2320 = vld [vmem:[#allocation2 + $0x6e] sm:$0xff]
    %v2321 = vld [vmem:[#allocation2 + $0x86] sm:$0xff]
    %v2322 = vld [vmem:[#allocation2 + $0x8e] sm:$0xff]
    %v2323 = vld [vmem:[#allocation2 + $0xa6] sm:$0xff]
    %v2324 = vld [vmem:[#allocation2 + $0xae] sm:$0xff]
    %v2325 = vld [vmem:[#allocation2 + $0xc6] sm:$0xff]
    %v2326 = vld [vmem:[#allocation2 + $0xce] sm:$0xff]
    %v2327 = vld [vmem:[#allocation2 + $0xe6] sm:$0xff]
    %v2328 = vld [vmem:[#allocation2 + $0xee] sm:$0xff]
    %v2329 = vpack.c.bf16 %v2314, %v2313
    %v2330 = vpack.c.bf16 %v2316, %v2315
    %v2331 = vpack.c.bf16 %v2318, %v2317
    %v2332 = vpack.c.bf16 %v2320, %v2319
    %v2333 = vpack.c.bf16 %v2322, %v2321
    %v2334 = vpack.c.bf16 %v2324, %v2323
    %v2335 = vpack.c.bf16 %v2326, %v2325
    %v2336 = vpack.c.bf16 %v2328, %v2327
    %v2337 = vld [vmem:[#allocation2 + $0x7] sm:$0xff]
    %v2338 = vld [vmem:[#allocation2 + $0xf] sm:$0xff]
    %v2339 = vld [vmem:[#allocation2 + $0x27] sm:$0xff]
    %v2340 = vld [vmem:[#allocation2 + $0x2f] sm:$0xff]
    %v2341 = vld [vmem:[#allocation2 + $0x47] sm:$0xff]
    %v2342 = vld [vmem:[#allocation2 + $0x4f] sm:$0xff]
    %v2343 = vld [vmem:[#allocation2 + $0x67] sm:$0xff]
    %v2344 = vld [vmem:[#allocation2 + $0x6f] sm:$0xff]
    %v2345 = vld [vmem:[#allocation2 + $0x87] sm:$0xff]
    %v2346 = vld [vmem:[#allocation2 + $0x8f] sm:$0xff]
    %v2347 = vld [vmem:[#allocation2 + $0xa7] sm:$0xff]
    %v2348 = vld [vmem:[#allocation2 + $0xaf] sm:$0xff]
    %v2349 = vld [vmem:[#allocation2 + $0xc7] sm:$0xff]
    %v2350 = vld [vmem:[#allocation2 + $0xcf] sm:$0xff]
    %v2351 = vld [vmem:[#allocation2 + $0xe7] sm:$0xff]
    %v2352 = vld [vmem:[#allocation2 + $0xef] sm:$0xff]
    %v2353 = vpack.c.bf16 %v2338, %v2337
    %v2354 = vpack.c.bf16 %v2340, %v2339
    %v2355 = vpack.c.bf16 %v2342, %v2341
    %v2356 = vpack.c.bf16 %v2344, %v2343
    %v2357 = vpack.c.bf16 %v2346, %v2345
    %v2358 = vpack.c.bf16 %v2348, %v2347
    %v2359 = vpack.c.bf16 %v2350, %v2349
    %v2360 = vpack.c.bf16 %v2352, %v2351
    %v2361 = vld [vmem:[%s7] sm:$0xf]
    %v2362 = vld [vmem:[%s7 + $0x4] sm:$0xf]
    %v2363 = vld [vmem:[%s7 + $0x8] sm:$0xf]
    %v2364 = vld [vmem:[%s7 + $0xc] sm:$0xf]
    %v2365 = vld [vmem:[%s7 + $0x10] sm:$0xf]
    %v2366 = vld [vmem:[%s7 + $0x14] sm:$0xf]
    %v2367 = vld [vmem:[%s7 + $0x18] sm:$0xf]
    %v2368 = vld [vmem:[%s7 + $0x1c] sm:$0xf]
    %v2369 = vld [vmem:[%s7 + $0x20] sm:$0xf]
    %v2370 = vld [vmem:[%s7 + $0x24] sm:$0xf]
    %v2371 = vld [vmem:[%s7 + $0x28] sm:$0xf]
    %v2372 = vld [vmem:[%s7 + $0x2c] sm:$0xf]
    %v2373 = vld [vmem:[%s7 + $0x30] sm:$0xf]
    %v2374 = vld [vmem:[%s7 + $0x34] sm:$0xf]
    %v2375 = vld [vmem:[%s7 + $0x38] sm:$0xf]
    %v2376 = vld [vmem:[%s7 + $0x3c] sm:$0xf]
    %v2377 = vld [vmem:[%s7 + $0x40] sm:$0xf]
    %v2378 = vld [vmem:[%s7 + $0x44] sm:$0xf]
    %v2379 = vld [vmem:[%s7 + $0x48] sm:$0xf]
    %v2380 = vld [vmem:[%s7 + $0x4c] sm:$0xf]
    %v2381 = vld [vmem:[%s7 + $0x50] sm:$0xf]
    %v2382 = vld [vmem:[%s7 + $0x54] sm:$0xf]
    %v2383 = vld [vmem:[%s7 + $0x58] sm:$0xf]
    %v2384 = vld [vmem:[%s7 + $0x5c] sm:$0xf]
    %v2385 = vld [vmem:[%s7 + $0x60] sm:$0xf]
    %v2386 = vld [vmem:[%s7 + $0x64] sm:$0xf]
    %v2387 = vld [vmem:[%s7 + $0x68] sm:$0xf]
    %v2388 = vld [vmem:[%s7 + $0x6c] sm:$0xf]
    %v2389 = vld [vmem:[%s7 + $0x70] sm:$0xf]
    %v2390 = vld [vmem:[%s7 + $0x74] sm:$0xf]
    %v2391 = vld [vmem:[%s7 + $0x78] sm:$0xf]
    %v2392 = vld [vmem:[%s7 + $0x7c] sm:$0xf]
    %v2393 = vld [vmem:[%s7 + $0x80] sm:$0xf]
    %v2394 = vld [vmem:[%s7 + $0x84] sm:$0xf]
    %v2395 = vld [vmem:[%s7 + $0x88] sm:$0xf]
    %v2396 = vld [vmem:[%s7 + $0x8c] sm:$0xf]
    %v2397 = vld [vmem:[%s7 + $0x90] sm:$0xf]
    %v2398 = vld [vmem:[%s7 + $0x94] sm:$0xf]
    %v2399 = vld [vmem:[%s7 + $0x98] sm:$0xf]
    %v2400 = vld [vmem:[%s7 + $0x9c] sm:$0xf]
    %v2401 = vld [vmem:[%s7 + $0xa0] sm:$0xf]
    %v2402 = vld [vmem:[%s7 + $0xa4] sm:$0xf]
    %v2403 = vld [vmem:[%s7 + $0xa8] sm:$0xf]
    %v2404 = vld [vmem:[%s7 + $0xac] sm:$0xf]
    %v2405 = vld [vmem:[%s7 + $0xb0] sm:$0xf]
    %v2406 = vld [vmem:[%s7 + $0xb4] sm:$0xf]
    %v2407 = vld [vmem:[%s7 + $0xb8] sm:$0xf]
    %v2408 = vld [vmem:[%s7 + $0xbc] sm:$0xf]
    %v2409 = vld [vmem:[%s7 + $0xc0] sm:$0xf]
    %v2410 = vld [vmem:[%s7 + $0xc4] sm:$0xf]
    %v2411 = vld [vmem:[%s7 + $0xc8] sm:$0xf]
    %v2412 = vld [vmem:[%s7 + $0xcc] sm:$0xf]
    %v2413 = vld [vmem:[%s7 + $0xd0] sm:$0xf]
    %v2414 = vld [vmem:[%s7 + $0xd4] sm:$0xf]
    %v2415 = vld [vmem:[%s7 + $0xd8] sm:$0xf]
    %v2416 = vld [vmem:[%s7 + $0xdc] sm:$0xf]
    %v2417 = vld [vmem:[%s7 + $0xe0] sm:$0xf]
    %v2418 = vld [vmem:[%s7 + $0xe4] sm:$0xf]
    %v2419 = vld [vmem:[%s7 + $0xe8] sm:$0xf]
    %v2420 = vld [vmem:[%s7 + $0xec] sm:$0xf]
    %v2421 = vld [vmem:[%s7 + $0xf0] sm:$0xf]
    %v2422 = vld [vmem:[%s7 + $0xf4] sm:$0xf]
    %v2423 = vld [vmem:[%s7 + $0xf8] sm:$0xf]
    %v2424 = vld [vmem:[%s7 + $0xfc] sm:$0xf]
    %v2425 = vld [vmem:[%s7 + $0x100] sm:$0xf]
    %v2426 = vld [vmem:[%s7 + $0x104] sm:$0xf]
    %v2427 = vld [vmem:[%s7 + $0x108] sm:$0xf]
    %v2428 = vld [vmem:[%s7 + $0x10c] sm:$0xf]
    %v2429 = vld [vmem:[%s7 + $0x110] sm:$0xf]
    %v2430 = vld [vmem:[%s7 + $0x114] sm:$0xf]
    %v2431 = vld [vmem:[%s7 + $0x118] sm:$0xf]
    %v2432 = vld [vmem:[%s7 + $0x11c] sm:$0xf]
    %v2433 = vld [vmem:[%s7 + $0x120] sm:$0xf]
    %v2434 = vld [vmem:[%s7 + $0x124] sm:$0xf]
    %v2435 = vld [vmem:[%s7 + $0x128] sm:$0xf]
    %v2436 = vld [vmem:[%s7 + $0x12c] sm:$0xf]
    %v2437 = vld [vmem:[%s7 + $0x130] sm:$0xf]
    %v2438 = vld [vmem:[%s7 + $0x134] sm:$0xf]
    %v2439 = vld [vmem:[%s7 + $0x138] sm:$0xf]
    %v2440 = vld [vmem:[%s7 + $0x13c] sm:$0xf]
    %v2441 = vld [vmem:[%s7 + $0x140] sm:$0xf]
    %v2442 = vld [vmem:[%s7 + $0x144] sm:$0xf]
    %v2443 = vld [vmem:[%s7 + $0x148] sm:$0xf]
    %v2444 = vld [vmem:[%s7 + $0x14c] sm:$0xf]
    %v2445 = vld [vmem:[%s7 + $0x150] sm:$0xf]
    %v2446 = vld [vmem:[%s7 + $0x154] sm:$0xf]
    %v2447 = vld [vmem:[%s7 + $0x158] sm:$0xf]
    %v2448 = vld [vmem:[%s7 + $0x15c] sm:$0xf]
    %v2449 = vld [vmem:[%s7 + $0x160] sm:$0xf]
    %v2450 = vld [vmem:[%s7 + $0x164] sm:$0xf]
    %v2451 = vld [vmem:[%s7 + $0x168] sm:$0xf]
    %v2452 = vld [vmem:[%s7 + $0x16c] sm:$0xf]
    %v2453 = vld [vmem:[%s7 + $0x170] sm:$0xf]
    %v2454 = vld [vmem:[%s7 + $0x174] sm:$0xf]
    %v2455 = vld [vmem:[%s7 + $0x178] sm:$0xf]
    %v2456 = vld [vmem:[%s7 + $0x17c] sm:$0xf]
    %v2457 = vld [vmem:[%s7 + $0x180] sm:$0xf]
    %v2458 = vld [vmem:[%s7 + $0x184] sm:$0xf]
    %v2459 = vld [vmem:[%s7 + $0x188] sm:$0xf]
    %v2460 = vld [vmem:[%s7 + $0x18c] sm:$0xf]
    %v2461 = vld [vmem:[%s7 + $0x190] sm:$0xf]
    %v2462 = vld [vmem:[%s7 + $0x194] sm:$0xf]
    %v2463 = vld [vmem:[%s7 + $0x198] sm:$0xf]
    %v2464 = vld [vmem:[%s7 + $0x19c] sm:$0xf]
    %v2465 = vld [vmem:[%s7 + $0x1a0] sm:$0xf]
    %v2466 = vld [vmem:[%s7 + $0x1a4] sm:$0xf]
    %v2467 = vld [vmem:[%s7 + $0x1a8] sm:$0xf]
    %v2468 = vld [vmem:[%s7 + $0x1ac] sm:$0xf]
    %v2469 = vld [vmem:[%s7 + $0x1b0] sm:$0xf]
    %v2470 = vld [vmem:[%s7 + $0x1b4] sm:$0xf]
    %v2471 = vld [vmem:[%s7 + $0x1b8] sm:$0xf]
    %v2472 = vld [vmem:[%s7 + $0x1bc] sm:$0xf]
    %v2473 = vld [vmem:[%s7 + $0x1c0] sm:$0xf]
    %v2474 = vld [vmem:[%s7 + $0x1c4] sm:$0xf]
    %v2475 = vld [vmem:[%s7 + $0x1c8] sm:$0xf]
    %v2476 = vld [vmem:[%s7 + $0x1cc] sm:$0xf]
    %v2477 = vld [vmem:[%s7 + $0x1d0] sm:$0xf]
    %v2478 = vld [vmem:[%s7 + $0x1d4] sm:$0xf]
    %v2479 = vld [vmem:[%s7 + $0x1d8] sm:$0xf]
    %v2480 = vld [vmem:[%s7 + $0x1dc] sm:$0xf]
    %v2481 = vld [vmem:[%s7 + $0x1e0] sm:$0xf]
    %v2482 = vld [vmem:[%s7 + $0x1e4] sm:$0xf]
    %v2483 = vld [vmem:[%s7 + $0x1e8] sm:$0xf]
    %v2484 = vld [vmem:[%s7 + $0x1ec] sm:$0xf]
    %v2485 = vld [vmem:[%s7 + $0x1f0] sm:$0xf]
    %v2486 = vld [vmem:[%s7 + $0x1f4] sm:$0xf]
    %v2487 = vld [vmem:[%s7 + $0x1f8] sm:$0xf]
    %v2488 = vld [vmem:[%s7 + $0x1fc] sm:$0xf]
    %v2489 = vld [vmem:[%s8] sm:$0x1]
    %v2491 = vlaneseq
    %v2492 = vshrl.u32 %v2491, 7
    %v2493 = vsub.s32 0, %v2492
    %v2494 = vrot.slane %v2489, %v2493
    %v2624 = vunpack.c.l.b16 %v2361
    %v2625 = vunpack.c.l.b16 %v2362
    %v2626 = vunpack.c.l.b16 %v2363
    %v2627 = vunpack.c.l.b16 %v2364
    %v2628 = vunpack.c.l.b16 %v2365
    %v2629 = vunpack.c.l.b16 %v2366
    %v2630 = vunpack.c.l.b16 %v2367
    %v2631 = vunpack.c.l.b16 %v2368
    %v2632 = vunpack.c.l.b16 %v2369
    %v2633 = vunpack.c.l.b16 %v2370
    %v2634 = vunpack.c.l.b16 %v2371
    %v2635 = vunpack.c.l.b16 %v2372
    %v2636 = vunpack.c.l.b16 %v2373
    %v2637 = vunpack.c.l.b16 %v2374
    %v2638 = vunpack.c.l.b16 %v2375
    %v2639 = vunpack.c.l.b16 %v2376
    %v2640 = vunpack.c.l.b16 %v2377
    %v2641 = vunpack.c.l.b16 %v2378
    %v2642 = vunpack.c.l.b16 %v2379
    %v2643 = vunpack.c.l.b16 %v2380
    %v2644 = vunpack.c.l.b16 %v2381
    %v2645 = vunpack.c.l.b16 %v2382
    %v2646 = vunpack.c.l.b16 %v2383
    %v2647 = vunpack.c.l.b16 %v2384
    %v2648 = vunpack.c.l.b16 %v2385
    %v2649 = vunpack.c.l.b16 %v2386
    %v2650 = vunpack.c.l.b16 %v2387
    %v2651 = vunpack.c.l.b16 %v2388
    %v2652 = vunpack.c.l.b16 %v2389
    %v2653 = vunpack.c.l.b16 %v2390
    %v2654 = vunpack.c.l.b16 %v2391
    %v2655 = vunpack.c.l.b16 %v2392
    %v2656 = vunpack.c.l.b16 %v2393
    %v2657 = vunpack.c.l.b16 %v2394
    %v2658 = vunpack.c.l.b16 %v2395
    %v2659 = vunpack.c.l.b16 %v2396
    %v2660 = vunpack.c.l.b16 %v2397
    %v2661 = vunpack.c.l.b16 %v2398
    %v2662 = vunpack.c.l.b16 %v2399
    %v2663 = vunpack.c.l.b16 %v2400
    %v2664 = vunpack.c.l.b16 %v2401
    %v2665 = vunpack.c.l.b16 %v2402
    %v2666 = vunpack.c.l.b16 %v2403
    %v2667 = vunpack.c.l.b16 %v2404
    %v2668 = vunpack.c.l.b16 %v2405
    %v2669 = vunpack.c.l.b16 %v2406
    %v2670 = vunpack.c.l.b16 %v2407
    %v2671 = vunpack.c.l.b16 %v2408
    %v2672 = vunpack.c.l.b16 %v2409
    %v2673 = vunpack.c.l.b16 %v2410
    %v2674 = vunpack.c.l.b16 %v2411
    %v2675 = vunpack.c.l.b16 %v2412
    %v2676 = vunpack.c.l.b16 %v2413
    %v2677 = vunpack.c.l.b16 %v2414
    %v2678 = vunpack.c.l.b16 %v2415
    %v2679 = vunpack.c.l.b16 %v2416
    %v2680 = vunpack.c.l.b16 %v2417
    %v2681 = vunpack.c.l.b16 %v2418
    %v2682 = vunpack.c.l.b16 %v2419
    %v2683 = vunpack.c.l.b16 %v2420
    %v2684 = vunpack.c.l.b16 %v2421
    %v2685 = vunpack.c.l.b16 %v2422
    %v2686 = vunpack.c.l.b16 %v2423
    %v2687 = vunpack.c.l.b16 %v2424
    %v2688 = vunpack.c.l.b16 %v2425
    %v2689 = vunpack.c.l.b16 %v2426
    %v2690 = vunpack.c.l.b16 %v2427
    %v2691 = vunpack.c.l.b16 %v2428
    %v2692 = vunpack.c.l.b16 %v2429
    %v2693 = vunpack.c.l.b16 %v2430
    %v2694 = vunpack.c.l.b16 %v2431
    %v2695 = vunpack.c.l.b16 %v2432
    %v2696 = vunpack.c.l.b16 %v2433
    %v2697 = vunpack.c.l.b16 %v2434
    %v2698 = vunpack.c.l.b16 %v2435
    %v2699 = vunpack.c.l.b16 %v2436
    %v2700 = vunpack.c.l.b16 %v2437
    %v2701 = vunpack.c.l.b16 %v2438
    %v2702 = vunpack.c.l.b16 %v2439
    %v2703 = vunpack.c.l.b16 %v2440
    %v2704 = vunpack.c.l.b16 %v2441
    %v2705 = vunpack.c.l.b16 %v2442
    %v2706 = vunpack.c.l.b16 %v2443
    %v2707 = vunpack.c.l.b16 %v2444
    %v2708 = vunpack.c.l.b16 %v2445
    %v2709 = vunpack.c.l.b16 %v2446
    %v2710 = vunpack.c.l.b16 %v2447
    %v2711 = vunpack.c.l.b16 %v2448
    %v2712 = vunpack.c.l.b16 %v2449
    %v2713 = vunpack.c.l.b16 %v2450
    %v2714 = vunpack.c.l.b16 %v2451
    %v2715 = vunpack.c.l.b16 %v2452
    %v2716 = vunpack.c.l.b16 %v2453
    %v2717 = vunpack.c.l.b16 %v2454
    %v2718 = vunpack.c.l.b16 %v2455
    %v2719 = vunpack.c.l.b16 %v2456
    %v2720 = vunpack.c.l.b16 %v2457
    %v2721 = vunpack.c.l.b16 %v2458
    %v2722 = vunpack.c.l.b16 %v2459
    %v2723 = vunpack.c.l.b16 %v2460
    %v2724 = vunpack.c.l.b16 %v2461
    %v2725 = vunpack.c.l.b16 %v2462
    %v2726 = vunpack.c.l.b16 %v2463
    %v2727 = vunpack.c.l.b16 %v2464
    %v2728 = vunpack.c.l.b16 %v2465
    %v2729 = vunpack.c.l.b16 %v2466
    %v2730 = vunpack.c.l.b16 %v2467
    %v2731 = vunpack.c.l.b16 %v2468
    %v2732 = vunpack.c.l.b16 %v2469
    %v2733 = vunpack.c.l.b16 %v2470
    %v2734 = vunpack.c.l.b16 %v2471
    %v2735 = vunpack.c.l.b16 %v2472
    %v2736 = vunpack.c.l.b16 %v2473
    %v2737 = vunpack.c.l.b16 %v2474
    %v2738 = vunpack.c.l.b16 %v2475
    %v2739 = vunpack.c.l.b16 %v2476
    %v2740 = vunpack.c.l.b16 %v2477
    %v2741 = vunpack.c.l.b16 %v2478
    %v2742 = vunpack.c.l.b16 %v2479
    %v2743 = vunpack.c.l.b16 %v2480
    %v2744 = vunpack.c.l.b16 %v2481
    %v2745 = vunpack.c.l.b16 %v2482
    %v2746 = vunpack.c.l.b16 %v2483
    %v2747 = vunpack.c.l.b16 %v2484
    %v2748 = vunpack.c.l.b16 %v2485
    %v2749 = vunpack.c.l.b16 %v2486
    %v2750 = vunpack.c.l.b16 %v2487
    %v2751 = vunpack.c.l.b16 %v2488
    %v2752 = vpack.c.b16 %v2625, %v2624
    %v2753 = vpack.c.b16 %v2627, %v2626
    %v2754 = vpack.c.b16 %v2629, %v2628
    %v2755 = vpack.c.b16 %v2631, %v2630
    %v2756 = vpack.c.b16 %v2633, %v2632
    %v2757 = vpack.c.b16 %v2635, %v2634
    %v2758 = vpack.c.b16 %v2637, %v2636
    %v2759 = vpack.c.b16 %v2639, %v2638
    %v2760 = vpack.c.b16 %v2641, %v2640
    %v2761 = vpack.c.b16 %v2643, %v2642
    %v2762 = vpack.c.b16 %v2645, %v2644
    %v2763 = vpack.c.b16 %v2647, %v2646
    %v2764 = vpack.c.b16 %v2649, %v2648
    %v2765 = vpack.c.b16 %v2651, %v2650
    %v2766 = vpack.c.b16 %v2653, %v2652
    %v2767 = vpack.c.b16 %v2655, %v2654
    %v2768 = vpack.c.b16 %v2657, %v2656
    %v2769 = vpack.c.b16 %v2659, %v2658
    %v2770 = vpack.c.b16 %v2661, %v2660
    %v2771 = vpack.c.b16 %v2663, %v2662
    %v2772 = vpack.c.b16 %v2665, %v2664
    %v2773 = vpack.c.b16 %v2667, %v2666
    %v2774 = vpack.c.b16 %v2669, %v2668
    %v2775 = vpack.c.b16 %v2671, %v2670
    %v2776 = vpack.c.b16 %v2673, %v2672
    %v2777 = vpack.c.b16 %v2675, %v2674
    %v2778 = vpack.c.b16 %v2677, %v2676
    %v2779 = vpack.c.b16 %v2679, %v2678
    %v2780 = vpack.c.b16 %v2681, %v2680
    %v2781 = vpack.c.b16 %v2683, %v2682
    %v2782 = vpack.c.b16 %v2685, %v2684
    %v2783 = vpack.c.b16 %v2687, %v2686
    %v2784 = vpack.c.b16 %v2689, %v2688
    %v2785 = vpack.c.b16 %v2691, %v2690
    %v2786 = vpack.c.b16 %v2693, %v2692
    %v2787 = vpack.c.b16 %v2695, %v2694
    %v2788 = vpack.c.b16 %v2697, %v2696
    %v2789 = vpack.c.b16 %v2699, %v2698
    %v2790 = vpack.c.b16 %v2701, %v2700
    %v2791 = vpack.c.b16 %v2703, %v2702
    %v2792 = vpack.c.b16 %v2705, %v2704
    %v2793 = vpack.c.b16 %v2707, %v2706
    %v2794 = vpack.c.b16 %v2709, %v2708
    %v2795 = vpack.c.b16 %v2711, %v2710
    %v2796 = vpack.c.b16 %v2713, %v2712
    %v2797 = vpack.c.b16 %v2715, %v2714
    %v2798 = vpack.c.b16 %v2717, %v2716
    %v2799 = vpack.c.b16 %v2719, %v2718
    %v2800 = vpack.c.b16 %v2721, %v2720
    %v2801 = vpack.c.b16 %v2723, %v2722
    %v2802 = vpack.c.b16 %v2725, %v2724
    %v2803 = vpack.c.b16 %v2727, %v2726
    %v2804 = vpack.c.b16 %v2729, %v2728
    %v2805 = vpack.c.b16 %v2731, %v2730
    %v2806 = vpack.c.b16 %v2733, %v2732
    %v2807 = vpack.c.b16 %v2735, %v2734
    %v2808 = vpack.c.b16 %v2737, %v2736
    %v2809 = vpack.c.b16 %v2739, %v2738
    %v2810 = vpack.c.b16 %v2741, %v2740
    %v2811 = vpack.c.b16 %v2743, %v2742
    %v2812 = vpack.c.b16 %v2745, %v2744
    %v2813 = vpack.c.b16 %v2747, %v2746
    %v2814 = vpack.c.b16 %v2749, %v2748
    %v2815 = vpack.c.b16 %v2751, %v2750
    %2880 = vmatprep.subr.bf16.mxu0 0
    %2881 = vmatpush1.bf16.msra.mxu0 %v2752
    %2882 = vmatprep.subr.bf16.mxu0 0
    %2883 = vmatpush1.bf16.msra.mxu0 %v2753
    %2884 = vmatprep.subr.bf16.mxu0 0
    %2885 = vmatpush1.bf16.msra.mxu0 %v2754
    %2886 = vmatprep.subr.bf16.mxu0 0
    %2887 = vmatpush1.bf16.msra.mxu0 %v2755
    %2888 = vmatprep.subr.bf16.mxu0 0
    %2889 = vmatpush1.bf16.msra.mxu0 %v2756
    %2890 = vmatprep.subr.bf16.mxu0 0
    %2891 = vmatpush1.bf16.msra.mxu0 %v2757
    %2892 = vmatprep.subr.bf16.mxu0 0
    %2893 = vmatpush1.bf16.msra.mxu0 %v2758
    %2894 = vmatprep.subr.bf16.mxu0 0
    %2895 = vmatpush1.bf16.msra.mxu0 %v2759
    %2896 = vmatprep.subr.bf16.mxu0 0
    %2897 = vmatpush1.bf16.msra.mxu0 %v2760
    %2898 = vmatprep.subr.bf16.mxu0 0
    %2899 = vmatpush1.bf16.msra.mxu0 %v2761
    %2900 = vmatprep.subr.bf16.mxu0 0
    %2901 = vmatpush1.bf16.msra.mxu0 %v2762
    %2902 = vmatprep.subr.bf16.mxu0 0
    %2903 = vmatpush1.bf16.msra.mxu0 %v2763
    %2904 = vmatprep.subr.bf16.mxu0 0
    %2905 = vmatpush1.bf16.msra.mxu0 %v2764
    %2906 = vmatprep.subr.bf16.mxu0 0
    %2907 = vmatpush1.bf16.msra.mxu0 %v2765
    %2908 = vmatprep.subr.bf16.mxu0 0
    %2909 = vmatpush1.bf16.msra.mxu0 %v2766
    %2910 = vmatprep.subr.bf16.mxu0 0
    %2911 = vmatpush1.bf16.msra.mxu0 %v2767
    %2912 = vmatprep.mubr.bf16.mxu0 %v2209
    %2913 = vmatmul.mubr.bf16.gmra.mrb[0].mxu0 %v2185
    %v2914 = vpop.f32.mrb[0].mxu0
    %v2915 = vadd.f32 %v2494, %v2914
    %v2916 = vpop.f32.mrb[0].mxu0
    %v2917 = vpop.f32.mrb[0].mxu0
    %v2918 = vadd.f32 %v2494, %v2917
    %v2919 = vpop.f32.mrb[0].mxu0
    %2920 = vmatprep.mubr.bf16.mxu0 %v2210
    %2921 = vmatmul.mubr.bf16.gmra.mrb[0].mxu0 %v2186
    %v2922 = vpop.f32.mrb[0].mxu0
    %v2923 = vadd.f32 %v2494, %v2922
    %v2924 = vpop.f32.mrb[0].mxu0
    %v2925 = vpop.f32.mrb[0].mxu0
    %v2926 = vadd.f32 %v2494, %v2925
    %v2927 = vpop.f32.mrb[0].mxu0
    %2928 = vmatprep.mubr.bf16.mxu0 %v2211
    %2929 = vmatmul.mubr.bf16.gmra.mrb[0].mxu0 %v2187
    %v2930 = vpop.f32.mrb[0].mxu0
    %v2931 = vadd.f32 %v2494, %v2930
    %v2932 = vpop.f32.mrb[0].mxu0
    %v2933 = vpop.f32.mrb[0].mxu0
    %v2934 = vadd.f32 %v2494, %v2933
    %v2935 = vpop.f32.mrb[0].mxu0
    %2936 = vmatprep.mubr.bf16.mxu0 %v2212
    %2937 = vmatmul.mubr.bf16.gmra.mrb[0].mxu0 %v2188
    %v2938 = vpop.f32.mrb[0].mxu0
    %v2939 = vadd.f32 %v2494, %v2938
    %v2940 = vpop.f32.mrb[0].mxu0
    %v2941 = vpop.f32.mrb[0].mxu0
    %v2942 = vadd.f32 %v2494, %v2941
    %v2943 = vpop.f32.mrb[0].mxu0
    %2944 = vmatprep.mubr.bf16.mxu0 %v2213
    %2945 = vmatmul.mubr.bf16.gmra.mrb[0].mxu0 %v2189
    %v2946 = vpop.f32.mrb[0].mxu0
    %v2947 = vadd.f32 %v2494, %v2946
    %v2948 = vpop.f32.mrb[0].mxu0
    %v2949 = vpop.f32.mrb[0].mxu0
    %v2950 = vadd.f32 %v2494, %v2949
    %v2951 = vpop.f32.mrb[0].mxu0
    %2952 = vmatprep.mubr.bf16.mxu0 %v2214
    %2953 = vmatmul.mubr.bf16.gmra.mrb[0].mxu0 %v2190
    %v2954 = vpop.f32.mrb[0].mxu0
    %v2955 = vadd.f32 %v2494, %v2954
    %v2956 = vpop.f32.mrb[0].mxu0
    %v2957 = vpop.f32.mrb[0].mxu0
    %v2958 = vadd.f32 %v2494, %v2957
    %v2959 = vpop.f32.mrb[0].mxu0
    %2960 = vmatprep.mubr.bf16.mxu0 %v2215
    %2961 = vmatmul.mubr.bf16.gmra.mrb[0].mxu0 %v2191
    %v2962 = vpop.f32.mrb[0].mxu0
    %v2963 = vadd.f32 %v2494, %v2962
    %v2964 = vpop.f32.mrb[0].mxu0
    %v2965 = vpop.f32.mrb[0].mxu0
    %v2966 = vadd.f32 %v2494, %v2965
    %v2967 = vpop.f32.mrb[0].mxu0
    %2968 = vmatprep.mubr.bf16.mxu0 %v2216
    %2969 = vmatmul.mubr.bf16.gmra.mrb[0].mxu0 %v2192
    %v2970 = vpop.f32.mrb[0].mxu0
    %v2971 = vadd.f32 %v2494, %v2970
    %v2972 = vpop.f32.mrb[0].mxu0
    %v2973 = vpop.f32.mrb[0].mxu0
    %v2974 = vadd.f32 %v2494, %v2973
    %v2975 = vpop.f32.mrb[0].mxu0
    %2976 = vdwg.mxu0
    %2977 = vmatprep.subr.bf16.mxu0 0
    %2978 = vmatpush1.bf16.msra.mxu0 %v2768
    %2979 = vmatprep.subr.bf16.mxu0 0
    %2980 = vmatpush1.bf16.msra.mxu0 %v2769
    %2981 = vmatprep.subr.bf16.mxu0 0
    %2982 = vmatpush1.bf16.msra.mxu0 %v2770
    %2983 = vmatprep.subr.bf16.mxu0 0
    %2984 = vmatpush1.bf16.msra.mxu0 %v2771
    %2985 = vmatprep.subr.bf16.mxu0 0
    %2986 = vmatpush1.bf16.msra.mxu0 %v2772
    %2987 = vmatprep.subr.bf16.mxu0 0
    %2988 = vmatpush1.bf16.msra.mxu0 %v2773
    %2989 = vmatprep.subr.bf16.mxu0 0
    %2990 = vmatpush1.bf16.msra.mxu0 %v2774
    %2991 = vmatprep.subr.bf16.mxu0 0
    %2992 = vmatpush1.bf16.msra.mxu0 %v2775
    %2993 = vmatprep.subr.bf16.mxu0 0
    %2994 = vmatpush1.bf16.msra.mxu0 %v2776
    %2995 = vmatprep.subr.bf16.mxu0 0
    %2996 = vmatpush1.bf16.msra.mxu0 %v2777
    %2997 = vmatprep.subr.bf16.mxu0 0
    %2998 = vmatpush1.bf16.msra.mxu0 %v2778
    %2999 = vmatprep.subr.bf16.mxu0 0
    %3000 = vmatpush1.bf16.msra.mxu0 %v2779
    %3001 = vmatprep.subr.bf16.mxu0 0
    %3002 = vmatpush1.bf16.msra.mxu0 %v2780
    %3003 = vmatprep.subr.bf16.mxu0 0
    %3004 = vmatpush1.bf16.msra.mxu0 %v2781
    %3005 = vmatprep.subr.bf16.mxu0 0
    %3006 = vmatpush1.bf16.msra.mxu0 %v2782
    %3007 = vmatprep.subr.bf16.mxu0 0
    %3008 = vmatpush1.bf16.msra.mxu0 %v2783
    %3009 = vmatprep.mubr.bf16.mxu0 %v2257
    %3010 = vmatmul.mubr.bf16.gmra.mrb[0].mxu0 %v2233
    %v3011 = vpop.f32.mrb[0].mxu0
    %v3012 = vadd.f32 %v2915, %v3011
    %v3013 = vpop.f32.mrb[0].mxu0
    %v3014 = vpop.f32.mrb[0].mxu0
    %v3015 = vadd.f32 %v2918, %v3014
    %v3016 = vpop.f32.mrb[0].mxu0
    %3017 = vmatprep.mubr.bf16.mxu0 %v2258
    %3018 = vmatmul.mubr.bf16.gmra.mrb[0].mxu0 %v2234
    %v3019 = vpop.f32.mrb[0].mxu0
    %v3020 = vadd.f32 %v2923, %v3019
    %v3021 = vpop.f32.mrb[0].mxu0
    %v3022 = vpop.f32.mrb[0].mxu0
    %v3023 = vadd.f32 %v2926, %v3022
    %v3024 = vpop.f32.mrb[0].mxu0
    %3025 = vmatprep.mubr.bf16.mxu0 %v2259
    %3026 = vmatmul.mubr.bf16.gmra.mrb[0].mxu0 %v2235
    %v3027 = vpop.f32.mrb[0].mxu0
    %v3028 = vadd.f32 %v2931, %v3027
    %v3029 = vpop.f32.mrb[0].mxu0
    %v3030 = vpop.f32.mrb[0].mxu0
    %v3031 = vadd.f32 %v2934, %v3030
    %v3032 = vpop.f32.mrb[0].mxu0
    %3033 = vmatprep.mubr.bf16.mxu0 %v2260
    %3034 = vmatmul.mubr.bf16.gmra.mrb[0].mxu0 %v2236
    %v3035 = vpop.f32.mrb[0].mxu0
    %v3036 = vadd.f32 %v2939, %v3035
    %v3037 = vpop.f32.mrb[0].mxu0
    %v3038 = vpop.f32.mrb[0].mxu0
    %v3039 = vadd.f32 %v2942, %v3038
    %v3040 = vpop.f32.mrb[0].mxu0
    %3041 = vmatprep.mubr.bf16.mxu0 %v2261
    %3042 = vmatmul.mubr.bf16.gmra.mrb[0].mxu0 %v2237
    %v3043 = vpop.f32.mrb[0].mxu0
    %v3044 = vadd.f32 %v2947, %v3043
    %v3045 = vpop.f32.mrb[0].mxu0
    %v3046 = vpop.f32.mrb[0].mxu0
    %v3047 = vadd.f32 %v2950, %v3046
    %v3048 = vpop.f32.mrb[0].mxu0
    %3049 = vmatprep.mubr.bf16.mxu0 %v2262
    %3050 = vmatmul.mubr.bf16.gmra.mrb[0].mxu0 %v2238
    %v3051 = vpop.f32.mrb[0].mxu0
    %v3052 = vadd.f32 %v2955, %v3051
    %v3053 = vpop.f32.mrb[0].mxu0
    %v3054 = vpop.f32.mrb[0].mxu0
    %v3055 = vadd.f32 %v2958, %v3054
    %v3056 = vpop.f32.mrb[0].mxu0
    %3057 = vmatprep.mubr.bf16.mxu0 %v2263
    %3058 = vmatmul.mubr.bf16.gmra.mrb[0].mxu0 %v2239
    %v3059 = vpop.f32.mrb[0].mxu0
    %v3060 = vadd.f32 %v2963, %v3059
    %v3061 = vpop.f32.mrb[0].mxu0
    %v3062 = vpop.f32.mrb[0].mxu0
    %v3063 = vadd.f32 %v2966, %v3062
    %v3064 = vpop.f32.mrb[0].mxu0
    %3065 = vmatprep.mubr.bf16.mxu0 %v2264
    %3066 = vmatmul.mubr.bf16.gmra.mrb[0].mxu0 %v2240
    %v3067 = vpop.f32.mrb[0].mxu0
    %v3068 = vadd.f32 %v2971, %v3067
    %v3069 = vpop.f32.mrb[0].mxu0
    %v3070 = vpop.f32.mrb[0].mxu0
    %v3071 = vadd.f32 %v2974, %v3070
    %v3072 = vpop.f32.mrb[0].mxu0
    %3073 = vdwg.mxu0
    %3074 = vmatprep.subr.bf16.mxu0 0
    %3075 = vmatpush1.bf16.msra.mxu0 %v2784
    %3076 = vmatprep.subr.bf16.mxu0 0
    %3077 = vmatpush1.bf16.msra.mxu0 %v2785
    %3078 = vmatprep.subr.bf16.mxu0 0
    %3079 = vmatpush1.bf16.msra.mxu0 %v2786
    %3080 = vmatprep.subr.bf16.mxu0 0
    %3081 = vmatpush1.bf16.msra.mxu0 %v2787
    %3082 = vmatprep.subr.bf16.mxu0 0
    %3083 = vmatpush1.bf16.msra.mxu0 %v2788
    %3084 = vmatprep.subr.bf16.mxu0 0
    %3085 = vmatpush1.bf16.msra.mxu0 %v2789
    %3086 = vmatprep.subr.bf16.mxu0 0
    %3087 = vmatpush1.bf16.msra.mxu0 %v2790
    %3088 = vmatprep.subr.bf16.mxu0 0
    %3089 = vmatpush1.bf16.msra.mxu0 %v2791
    %3090 = vmatprep.subr.bf16.mxu0 0
    %3091 = vmatpush1.bf16.msra.mxu0 %v2792
    %3092 = vmatprep.subr.bf16.mxu0 0
    %3093 = vmatpush1.bf16.msra.mxu0 %v2793
    %3094 = vmatprep.subr.bf16.mxu0 0
    %3095 = vmatpush1.bf16.msra.mxu0 %v2794
    %3096 = vmatprep.subr.bf16.mxu0 0
    %3097 = vmatpush1.bf16.msra.mxu0 %v2795
    %3098 = vmatprep.subr.bf16.mxu0 0
    %3099 = vmatpush1.bf16.msra.mxu0 %v2796
    %3100 = vmatprep.subr.bf16.mxu0 0
    %3101 = vmatpush1.bf16.msra.mxu0 %v2797
    %3102 = vmatprep.subr.bf16.mxu0 0
    %3103 = vmatpush1.bf16.msra.mxu0 %v2798
    %3104 = vmatprep.subr.bf16.mxu0 0
    %3105 = vmatpush1.bf16.msra.mxu0 %v2799
    %3106 = vmatprep.mubr.bf16.mxu0 %v2305
    %3107 = vmatmul.mubr.bf16.gmra.mrb[0].mxu0 %v2281
    %v3108 = vpop.f32.mrb[0].mxu0
    %v3109 = vadd.f32 %v3012, %v3108
    %v3110 = vpop.f32.mrb[0].mxu0
    %v3111 = vpop.f32.mrb[0].mxu0
    %v3112 = vadd.f32 %v3015, %v3111
    %v3113 = vpop.f32.mrb[0].mxu0
    %3114 = vmatprep.mubr.bf16.mxu0 %v2306
    %3115 = vmatmul.mubr.bf16.gmra.mrb[0].mxu0 %v2282
    %v3116 = vpop.f32.mrb[0].mxu0
    %v3117 = vadd.f32 %v3020, %v3116
    %v3118 = vpop.f32.mrb[0].mxu0
    %v3119 = vpop.f32.mrb[0].mxu0
    %v3120 = vadd.f32 %v3023, %v3119
    %v3121 = vpop.f32.mrb[0].mxu0
    %3122 = vmatprep.mubr.bf16.mxu0 %v2307
    %3123 = vmatmul.mubr.bf16.gmra.mrb[0].mxu0 %v2283
    %v3124 = vpop.f32.mrb[0].mxu0
    %v3125 = vadd.f32 %v3028, %v3124
    %v3126 = vpop.f32.mrb[0].mxu0
    %v3127 = vpop.f32.mrb[0].mxu0
    %v3128 = vadd.f32 %v3031, %v3127
    %v3129 = vpop.f32.mrb[0].mxu0
    %3130 = vmatprep.mubr.bf16.mxu0 %v2308
    %3131 = vmatmul.mubr.bf16.gmra.mrb[0].mxu0 %v2284
    %v3132 = vpop.f32.mrb[0].mxu0
    %v3133 = vadd.f32 %v3036, %v3132
    %v3134 = vpop.f32.mrb[0].mxu0
    %v3135 = vpop.f32.mrb[0].mxu0
    %v3136 = vadd.f32 %v3039, %v3135
    %v3137 = vpop.f32.mrb[0].mxu0
    %3138 = vmatprep.mubr.bf16.mxu0 %v2309
    %3139 = vmatmul.mubr.bf16.gmra.mrb[0].mxu0 %v2285
    %v3140 = vpop.f32.mrb[0].mxu0
    %v3141 = vadd.f32 %v3044, %v3140
    %v3142 = vpop.f32.mrb[0].mxu0
    %v3143 = vpop.f32.mrb[0].mxu0
    %v3144 = vadd.f32 %v3047, %v3143
    %v3145 = vpop.f32.mrb[0].mxu0
    %3146 = vmatprep.mubr.bf16.mxu0 %v2310
    %3147 = vmatmul.mubr.bf16.gmra.mrb[0].mxu0 %v2286
    %v3148 = vpop.f32.mrb[0].mxu0
    %v3149 = vadd.f32 %v3052, %v3148
    %v3150 = vpop.f32.mrb[0].mxu0
    %v3151 = vpop.f32.mrb[0].mxu0
    %v3152 = vadd.f32 %v3055, %v3151
    %v3153 = vpop.f32.mrb[0].mxu0
    %3154 = vmatprep.mubr.bf16.mxu0 %v2311
    %3155 = vmatmul.mubr.bf16.gmra.mrb[0].mxu0 %v2287
    %v3156 = vpop.f32.mrb[0].mxu0
    %v3157 = vadd.f32 %v3060, %v3156
    %v3158 = vpop.f32.mrb[0].mxu0
    %v3159 = vpop.f32.mrb[0].mxu0
    %v3160 = vadd.f32 %v3063, %v3159
    %v3161 = vpop.f32.mrb[0].mxu0
    %3162 = vmatprep.mubr.bf16.mxu0 %v2312
    %3163 = vmatmul.mubr.bf16.gmra.mrb[0].mxu0 %v2288
    %v3164 = vpop.f32.mrb[0].mxu0
    %v3165 = vadd.f32 %v3068, %v3164
    %v3166 = vpop.f32.mrb[0].mxu0
    %v3167 = vpop.f32.mrb[0].mxu0
    %v3168 = vadd.f32 %v3071, %v3167
    %v3169 = vpop.f32.mrb[0].mxu0
    %3170 = vdwg.mxu0
    %3171 = vmatprep.subr.bf16.mxu0 0
    %3172 = vmatpush1.bf16.msra.mxu0 %v2800
    %3173 = vmatprep.subr.bf16.mxu0 0
    %3174 = vmatpush1.bf16.msra.mxu0 %v2801
    %3175 = vmatprep.subr.bf16.mxu0 0
    %3176 = vmatpush1.bf16.msra.mxu0 %v2802
    %3177 = vmatprep.subr.bf16.mxu0 0
    %3178 = vmatpush1.bf16.msra.mxu0 %v2803
    %3179 = vmatprep.subr.bf16.mxu0 0
    %3180 = vmatpush1.bf16.msra.mxu0 %v2804
    %3181 = vmatprep.subr.bf16.mxu0 0
    %3182 = vmatpush1.bf16.msra.mxu0 %v2805
    %3183 = vmatprep.subr.bf16.mxu0 0
    %3184 = vmatpush1.bf16.msra.mxu0 %v2806
    %3185 = vmatprep.subr.bf16.mxu0 0
    %3186 = vmatpush1.bf16.msra.mxu0 %v2807
    %3187 = vmatprep.subr.bf16.mxu0 0
    %3188 = vmatpush1.bf16.msra.mxu0 %v2808
    %3189 = vmatprep.subr.bf16.mxu0 0
    %3190 = vmatpush1.bf16.msra.mxu0 %v2809
    %3191 = vmatprep.subr.bf16.mxu0 0
    %3192 = vmatpush1.bf16.msra.mxu0 %v2810
    %3193 = vmatprep.subr.bf16.mxu0 0
    %3194 = vmatpush1.bf16.msra.mxu0 %v2811
    %3195 = vmatprep.subr.bf16.mxu0 0
    %3196 = vmatpush1.bf16.msra.mxu0 %v2812
    %3197 = vmatprep.subr.bf16.mxu0 0
    %3198 = vmatpush1.bf16.msra.mxu0 %v2813
    %3199 = vmatprep.subr.bf16.mxu0 0
    %3200 = vmatpush1.bf16.msra.mxu0 %v2814
    %3201 = vmatprep.subr.bf16.mxu0 0
    %3202 = vmatpush1.bf16.msra.mxu0 %v2815
    %3203 = vmatprep.mubr.bf16.mxu0 %v2353
    %3204 = vmatmul.mubr.bf16.gmra.mrb[0].mxu0 %v2329
    %v3205 = vpop.f32.mrb[0].mxu0
    %v3206 = vadd.f32 %v3109, %v3205
    %v3207 = vpop.f32.mrb[0].mxu0
    %v3208 = vpop.f32.mrb[0].mxu0
    %v3209 = vadd.f32 %v3112, %v3208
    %v3210 = vpop.f32.mrb[0].mxu0
    %3211 = vmatprep.mubr.bf16.mxu0 %v2354
    %3212 = vmatmul.mubr.bf16.gmra.mrb[0].mxu0 %v2330
    %v3213 = vpop.f32.mrb[0].mxu0
    %v3214 = vadd.f32 %v3117, %v3213
    %v3215 = vpop.f32.mrb[0].mxu0
    %v3216 = vpop.f32.mrb[0].mxu0
    %v3217 = vadd.f32 %v3120, %v3216
    %v3218 = vpop.f32.mrb[0].mxu0
    %3219 = vmatprep.mubr.bf16.mxu0 %v2355
    %3220 = vmatmul.mubr.bf16.gmra.mrb[0].mxu0 %v2331
    %v3221 = vpop.f32.mrb[0].mxu0
    %v3222 = vadd.f32 %v3125, %v3221
    %v3223 = vpop.f32.mrb[0].mxu0
    %v3224 = vpop.f32.mrb[0].mxu0
    %v3225 = vadd.f32 %v3128, %v3224
    %v3226 = vpop.f32.mrb[0].mxu0
    %3227 = vmatprep.mubr.bf16.mxu0 %v2356
    %3228 = vmatmul.mubr.bf16.gmra.mrb[0].mxu0 %v2332
    %v3229 = vpop.f32.mrb[0].mxu0
    %v3230 = vadd.f32 %v3133, %v3229
    %v3231 = vpop.f32.mrb[0].mxu0
    %v3232 = vpop.f32.mrb[0].mxu0
    %v3233 = vadd.f32 %v3136, %v3232
    %v3234 = vpop.f32.mrb[0].mxu0
    %3235 = vmatprep.mubr.bf16.mxu0 %v2357
    %3236 = vmatmul.mubr.bf16.gmra.mrb[0].mxu0 %v2333
    %v3237 = vpop.f32.mrb[0].mxu0
    %v3238 = vadd.f32 %v3141, %v3237
    %v3239 = vpop.f32.mrb[0].mxu0
    %v3240 = vpop.f32.mrb[0].mxu0
    %v3241 = vadd.f32 %v3144, %v3240
    %v3242 = vpop.f32.mrb[0].mxu0
    %3243 = vmatprep.mubr.bf16.mxu0 %v2358
    %3244 = vmatmul.mubr.bf16.gmra.mrb[0].mxu0 %v2334
    %v3245 = vpop.f32.mrb[0].mxu0
    %v3246 = vadd.f32 %v3149, %v3245
    %v3247 = vpop.f32.mrb[0].mxu0
    %v3248 = vpop.f32.mrb[0].mxu0
    %v3249 = vadd.f32 %v3152, %v3248
    %v3250 = vpop.f32.mrb[0].mxu0
    %3251 = vmatprep.mubr.bf16.mxu0 %v2359
    %3252 = vmatmul.mubr.bf16.gmra.mrb[0].mxu0 %v2335
    %v3253 = vpop.f32.mrb[0].mxu0
    %v3254 = vadd.f32 %v3157, %v3253
    %v3255 = vpop.f32.mrb[0].mxu0
    %v3256 = vpop.f32.mrb[0].mxu0
    %v3257 = vadd.f32 %v3160, %v3256
    %v3258 = vpop.f32.mrb[0].mxu0
    %3259 = vmatprep.mubr.bf16.mxu0 %v2360
    %3260 = vmatmul.mubr.bf16.gmra.mrb[0].mxu0 %v2336
    %v3261 = vpop.f32.mrb[0].mxu0
    %v3262 = vadd.f32 %v3165, %v3261
    %v3263 = vpop.f32.mrb[0].mxu0
    %v3264 = vpop.f32.mrb[0].mxu0
    %v3265 = vadd.f32 %v3168, %v3264
    %v3266 = vpop.f32.mrb[0].mxu0
    %3267 = vdwg.mxu0
    %v3268 = vmax.f32 %v3206, 0.0
    %v3269 = vmax.f32 %v3209, 0.0
    %v3270 = vmax.f32 %v3214, 0.0
    %v3271 = vmax.f32 %v3217, 0.0
    %v3272 = vmax.f32 %v3222, 0.0
    %v3273 = vmax.f32 %v3225, 0.0
    %v3274 = vmax.f32 %v3230, 0.0
    %v3275 = vmax.f32 %v3233, 0.0
    %v3276 = vmax.f32 %v3238, 0.0
    %v3277 = vmax.f32 %v3241, 0.0
    %v3278 = vmax.f32 %v3246, 0.0
    %v3279 = vmax.f32 %v3249, 0.0
    %v3280 = vmax.f32 %v3254, 0.0
    %v3281 = vmax.f32 %v3257, 0.0
    %v3282 = vmax.f32 %v3262, 0.0
    %v3283 = vmax.f32 %v3265, 0.0
    %vm3284 = vcmask 130048
    %v3285 = vsel %vm3284, %v3268, 0.0
    %v3286 = vsel %vm3284, %v3269, 0.0
    %v3287 = vadd.f32 %v3285, %v3286
    %v3288 = vsel %vm3284, %v3270, 0.0
    %v3289 = vadd.f32 %v3287, %v3288
    %v3290 = vsel %vm3284, %v3271, 0.0
    %v3291 = vadd.f32 %v3289, %v3290
    %v3292 = vsel %vm3284, %v3272, 0.0
    %v3293 = vadd.f32 %v3291, %v3292
    %v3294 = vsel %vm3284, %v3273, 0.0
    %v3295 = vadd.f32 %v3293, %v3294
    %v3296 = vsel %vm3284, %v3274, 0.0
    %v3297 = vadd.f32 %v3295, %v3296
    %v3298 = vsel %vm3284, %v3275, 0.0
    %v3299 = vadd.f32 %v3297, %v3298
    %v3300 = vsel %vm3284, %v3276, 0.0
    %v3301 = vadd.f32 %v3299, %v3300
    %v3302 = vsel %vm3284, %v3277, 0.0
    %v3303 = vadd.f32 %v3301, %v3302
    %v3304 = vsel %vm3284, %v3278, 0.0
    %v3305 = vadd.f32 %v3303, %v3304
    %v3306 = vsel %vm3284, %v3279, 0.0
    %v3307 = vadd.f32 %v3305, %v3306
    %v3308 = vsel %vm3284, %v3280, 0.0
    %v3309 = vadd.f32 %v3307, %v3308
    %v3310 = vsel %vm3284, %v3281, 0.0
    %v3311 = vadd.f32 %v3309, %v3310
    %v3312 = vsel %vm3284, %v3282, 0.0
    %v3313 = vadd.f32 %v3311, %v3312
    %v3314 = vsel %vm3284, %v3283, 0.0
    %v3315 = vadd.f32 %v3313, %v3314
    %v3316 = vrot.slane %v3315, 4
    %v3317 = vadd.f32 %v3315, %v3316
    %v3318 = vrot.slane %v3317, 2
    %v3319 = vadd.f32 %v3317, %v3318
    %v3320 = vrot.slane %v3319, 1
    %v3321 = vadd.f32 %v3319, %v3320
    %v3322 = vmul.f32 %v3268, %v3268
    %v3323 = vmul.f32 %v3269, %v3269
    %v3324 = vmul.f32 %v3270, %v3270
    %v3325 = vmul.f32 %v3271, %v3271
    %v3326 = vmul.f32 %v3272, %v3272
    %v3327 = vmul.f32 %v3273, %v3273
    %v3328 = vmul.f32 %v3274, %v3274
    %v3329 = vmul.f32 %v3275, %v3275
    %v3330 = vmul.f32 %v3276, %v3276
    %v3331 = vmul.f32 %v3277, %v3277
    %v3332 = vmul.f32 %v3278, %v3278
    %v3333 = vmul.f32 %v3279, %v3279
    %v3334 = vmul.f32 %v3280, %v3280
    %v3335 = vmul.f32 %v3281, %v3281
    %v3336 = vmul.f32 %v3282, %v3282
    %v3337 = vmul.f32 %v3283, %v3283
    %v3338 = vsel %vm3284, %v3322, 0.0
    %v3339 = vsel %vm3284, %v3323, 0.0
    %v3340 = vadd.f32 %v3338, %v3339
    %v3341 = vsel %vm3284, %v3324, 0.0
    %v3342 = vadd.f32 %v3340, %v3341
    %v3343 = vsel %vm3284, %v3325, 0.0
    %v3344 = vadd.f32 %v3342, %v3343
    %v3345 = vsel %vm3284, %v3326, 0.0
    %v3346 = vadd.f32 %v3344, %v3345
    %v3347 = vsel %vm3284, %v3327, 0.0
    %v3348 = vadd.f32 %v3346, %v3347
    %v3349 = vsel %vm3284, %v3328, 0.0
    %v3350 = vadd.f32 %v3348, %v3349
    %v3351 = vsel %vm3284, %v3329, 0.0
    %v3352 = vadd.f32 %v3350, %v3351
    %v3353 = vsel %vm3284, %v3330, 0.0
    %v3354 = vadd.f32 %v3352, %v3353
    %v3355 = vsel %vm3284, %v3331, 0.0
    %v3356 = vadd.f32 %v3354, %v3355
    %v3357 = vsel %vm3284, %v3332, 0.0
    %v3358 = vadd.f32 %v3356, %v3357
    %v3359 = vsel %vm3284, %v3333, 0.0
    %v3360 = vadd.f32 %v3358, %v3359
    %v3361 = vsel %vm3284, %v3334, 0.0
    %v3362 = vadd.f32 %v3360, %v3361
    %v3363 = vsel %vm3284, %v3335, 0.0
    %v3364 = vadd.f32 %v3362, %v3363
    %v3365 = vsel %vm3284, %v3336, 0.0
    %v3366 = vadd.f32 %v3364, %v3365
    %v3367 = vsel %vm3284, %v3337, 0.0
    %v3368 = vadd.f32 %v3366, %v3367
    %v3369 = vrot.slane %v3368, 4
    %v3370 = vadd.f32 %v3368, %v3369
    %v3371 = vrot.slane %v3370, 2
    %v3372 = vadd.f32 %v3370, %v3371
    %v3373 = vrot.slane %v3372, 1
    %v3374 = vadd.f32 %v3372, %v3373
    %v3375 = vmul.f32 %v3321, 0.0078125
    %v3376 = vmul.f32 %v3374, 0.0078125
    %v3377 = vmul.f32 %v3375, %v3375
    %v3378 = vsub.f32 %v3376, %v3377
    %v3379 = vsub.f32 %v3268, %v3375
    %v3380 = vsub.f32 %v3269, %v3375
    %v3381 = vsub.f32 %v3270, %v3375
    %v3382 = vsub.f32 %v3271, %v3375
    %v3383 = vsub.f32 %v3272, %v3375
    %v3384 = vsub.f32 %v3273, %v3375
    %v3385 = vsub.f32 %v3274, %v3375
    %v3386 = vsub.f32 %v3275, %v3375
    %v3387 = vsub.f32 %v3276, %v3375
    %v3388 = vsub.f32 %v3277, %v3375
    %v3389 = vsub.f32 %v3278, %v3375
    %v3390 = vsub.f32 %v3279, %v3375
    %v3391 = vsub.f32 %v3280, %v3375
    %v3392 = vsub.f32 %v3281, %v3375
    %v3393 = vsub.f32 %v3282, %v3375
    %v3394 = vsub.f32 %v3283, %v3375
    %v3395 = vadd.f32 %v3378, 1e-05
    %v3396 = vrsqrt.pop %v3395
    %v3397 = vmul.f32 %v3379, %v3396
    %v3398 = vmul.f32 %v3380, %v3396
    %v3399 = vmul.f32 %v3381, %v3396
    %v3400 = vmul.f32 %v3382, %v3396
    %v3401 = vmul.f32 %v3383, %v3396
    %v3402 = vmul.f32 %v3384, %v3396
    %v3403 = vmul.f32 %v3385, %v3396
    %v3404 = vmul.f32 %v3386, %v3396
    %v3405 = vmul.f32 %v3387, %v3396
    %v3406 = vmul.f32 %v3388, %v3396
    %v3407 = vmul.f32 %v3389, %v3396
    %v3408 = vmul.f32 %v3390, %v3396
    %v3409 = vmul.f32 %v3391, %v3396
    %v3410 = vmul.f32 %v3392, %v3396
    %v3411 = vmul.f32 %v3393, %v3396
    %v3412 = vmul.f32 %v3394, %v3396
    %v3413 = vld [vmem:[%s9] sm:$0x1]
    %v3415 = vlaneseq
    %v3416 = vshrl.u32 %v3415, 7
    %v3417 = vsub.s32 0, %v3416
    %v3418 = vrot.slane %v3413, %v3417
    %v3420 = vmul.f32 %v3397, %v3418
    %v3421 = vmul.f32 %v3398, %v3418
    %v3422 = vmul.f32 %v3399, %v3418
    %v3423 = vmul.f32 %v3400, %v3418
    %v3424 = vmul.f32 %v3401, %v3418
    %v3425 = vmul.f32 %v3402, %v3418
    %v3426 = vmul.f32 %v3403, %v3418
    %v3427 = vmul.f32 %v3404, %v3418
    %v3428 = vmul.f32 %v3405, %v3418
    %v3429 = vmul.f32 %v3406, %v3418
    %v3430 = vmul.f32 %v3407, %v3418
    %v3431 = vmul.f32 %v3408, %v3418
    %v3432 = vmul.f32 %v3409, %v3418
    %v3433 = vmul.f32 %v3410, %v3418
    %v3434 = vmul.f32 %v3411, %v3418
    %v3435 = vmul.f32 %v3412, %v3418
    %v3436 = vld [vmem:[%s10] sm:$0x1]
    %v3438 = vlaneseq
    %v3439 = vshrl.u32 %v3438, 7
    %v3440 = vsub.s32 0, %v3439
    %v3441 = vrot.slane %v3436, %v3440
    %v3443 = vadd.f32 %v3420, %v3441
    %v3444 = vadd.f32 %v3421, %v3441
    %v3445 = vadd.f32 %v3422, %v3441
    %v3446 = vadd.f32 %v3423, %v3441
    %v3447 = vadd.f32 %v3424, %v3441
    %v3448 = vadd.f32 %v3425, %v3441
    %v3449 = vadd.f32 %v3426, %v3441
    %v3450 = vadd.f32 %v3427, %v3441
    %v3451 = vadd.f32 %v3428, %v3441
    %v3452 = vadd.f32 %v3429, %v3441
    %v3453 = vadd.f32 %v3430, %v3441
    %v3454 = vadd.f32 %v3431, %v3441
    %v3455 = vadd.f32 %v3432, %v3441
    %v3456 = vadd.f32 %v3433, %v3441
    %v3457 = vadd.f32 %v3434, %v3441
    %v3458 = vadd.f32 %v3435, %v3441
    %v3461 = vrot.slane %v3449, 7
    %v3462 = vrot.slane %v3450, 7
    %v3463 = vsel %vm831, %v3461, %v3462
    %v3466 = vsel %vm831, %v3443, %v3461
    %v3467 = vmul.f32 %v3466, 0.25
    %v3468 = vmul.f32 %v3463, 0.25
    %v3469 = vmul.f32 %v3443, 0.75
    %v3470 = vmul.f32 %v3444, 0.75
    %v3471 = vadd.f32 %v3467, %v3469
    %v3472 = vadd.f32 %v3468, %v3470
    %v3473 = vmul.f32 %v3445, 0.25
    %v3474 = vmul.f32 %v3446, 0.25
    %v3475 = vadd.f32 %v3469, %v3473
    %v3476 = vadd.f32 %v3470, %v3474
    %v3477 = vmul.f32 %v3443, 0.25
    %v3478 = vmul.f32 %v3444, 0.25
    %v3479 = vmul.f32 %v3445, 0.75
    %v3480 = vmul.f32 %v3446, 0.75
    %v3481 = vadd.f32 %v3477, %v3479
    %v3482 = vadd.f32 %v3478, %v3480
    %v3483 = vmul.f32 %v3447, 0.25
    %v3484 = vmul.f32 %v3448, 0.25
    %v3485 = vadd.f32 %v3479, %v3483
    %v3486 = vadd.f32 %v3480, %v3484
    %v3487 = vmul.f32 %v3447, 0.75
    %v3488 = vmul.f32 %v3448, 0.75
    %v3489 = vadd.f32 %v3473, %v3487
    %v3490 = vadd.f32 %v3474, %v3488
    %v3491 = vmul.f32 %v3449, 0.25
    %v3492 = vmul.f32 %v3450, 0.25
    %v3493 = vadd.f32 %v3487, %v3491
    %v3494 = vadd.f32 %v3488, %v3492
    %v3497 = vrot.slane %v3443, 1
    %v3498 = vrot.slane %v3444, 1
    %v3499 = vsel %vm843, %v3497, %v3498
    %v3502 = vsel %vm843, %v3498, %v3450
    %v3503 = vmul.f32 %v3449, 0.75
    %v3504 = vmul.f32 %v3450, 0.75
    %v3505 = vadd.f32 %v3483, %v3503
    %v3506 = vadd.f32 %v3484, %v3504
    %v3507 = vmul.f32 %v3499, 0.25
    %v3508 = vmul.f32 %v3502, 0.25
    %v3509 = vadd.f32 %v3503, %v3507
    %v3510 = vadd.f32 %v3504, %v3508
    %3513 = vrot.lane.b32.xlu0 %v3475, 16
    %v3514 = vpop.permute.xlu0 %3513
    %3515 = vrot.lane.b32.xlu0 %v3476, 16
    %v3516 = vpop.permute.xlu0 %3515
    %3521 = vrot.lane.b32.xlu0 %v3481, 32
    %v3522 = vpop.permute.xlu0 %3521
    %3523 = vrot.lane.b32.xlu0 %v3482, 32
    %v3524 = vpop.permute.xlu0 %3523
    %3529 = vrot.lane.b32.xlu0 %v3485, 48
    %v3530 = vpop.permute.xlu0 %3529
    %3531 = vrot.lane.b32.xlu0 %v3486, 48
    %v3532 = vpop.permute.xlu0 %3531
    %3537 = vrot.lane.b32.xlu0 %v3489, 64
    %v3538 = vpop.permute.xlu0 %3537
    %3539 = vrot.lane.b32.xlu0 %v3490, 64
    %v3540 = vpop.permute.xlu0 %3539
    %3545 = vrot.lane.b32.xlu0 %v3493, 80
    %v3546 = vpop.permute.xlu0 %3545
    %3547 = vrot.lane.b32.xlu0 %v3494, 80
    %v3548 = vpop.permute.xlu0 %3547
    %3553 = vrot.lane.b32.xlu0 %v3505, 96
    %v3554 = vpop.permute.xlu0 %3553
    %3555 = vrot.lane.b32.xlu0 %v3506, 96
    %v3556 = vpop.permute.xlu0 %3555
    %3561 = vrot.lane.b32.xlu0 %v3509, 112
    %v3562 = vpop.permute.xlu0 %3561
    %3563 = vrot.lane.b32.xlu0 %v3510, 112
    %v3564 = vpop.permute.xlu0 %3563
    %v3567 = vsel %vm3284, %v3471, %v3514
    %v3568 = vsel %vm3284, %v3472, %v3516
    %v3569 = vsel %vm201, %v3567, %v3522
    %v3570 = vsel %vm201, %v3568, %v3524
    %vm3571 = vcmask 392192
    %v3572 = vsel %vm3571, %v3569, %v3530
    %v3573 = vsel %vm3571, %v3570, %v3532
    %v3574 = vsel %vm920, %v3572, %v3538
    %v3575 = vsel %vm920, %v3573, %v3540
    %vm3576 = vcmask 654336
    %v3577 = vsel %vm3576, %v3574, %v3546
    %v3578 = vsel %vm3576, %v3575, %v3548
    %v3579 = vsel %vm1994, %v3577, %v3554
    %v3580 = vsel %vm1994, %v3578, %v3556
    %vm3581 = vcmask 916480
    %v3582 = vsel %vm3581, %v3579, %v3562
    %v3583 = vsel %vm3581, %v3580, %v3564
    %v3586 = vrot.slane %v3457, 7
    %v3587 = vrot.slane %v3458, 7
    %v3588 = vsel %vm831, %v3586, %v3587
    %v3591 = vsel %vm831, %v3451, %v3586
    %v3592 = vmul.f32 %v3591, 0.25
    %v3593 = vmul.f32 %v3588, 0.25
    %v3594 = vmul.f32 %v3451, 0.75
    %v3595 = vmul.f32 %v3452, 0.75
    %v3596 = vadd.f32 %v3592, %v3594
    %v3597 = vadd.f32 %v3593, %v3595
    %v3598 = vmul.f32 %v3453, 0.25
    %v3599 = vmul.f32 %v3454, 0.25
    %v3600 = vadd.f32 %v3594, %v3598
    %v3601 = vadd.f32 %v3595, %v3599
    %v3602 = vmul.f32 %v3451, 0.25
    %v3603 = vmul.f32 %v3452, 0.25
    %v3604 = vmul.f32 %v3453, 0.75
    %v3605 = vmul.f32 %v3454, 0.75
    %v3606 = vadd.f32 %v3602, %v3604
    %v3607 = vadd.f32 %v3603, %v3605
    %v3608 = vmul.f32 %v3455, 0.25
    %v3609 = vmul.f32 %v3456, 0.25
    %v3610 = vadd.f32 %v3604, %v3608
    %v3611 = vadd.f32 %v3605, %v3609
    %v3612 = vmul.f32 %v3455, 0.75
    %v3613 = vmul.f32 %v3456, 0.75
    %v3614 = vadd.f32 %v3598, %v3612
    %v3615 = vadd.f32 %v3599, %v3613
    %v3616 = vmul.f32 %v3457, 0.25
    %v3617 = vmul.f32 %v3458, 0.25
    %v3618 = vadd.f32 %v3612, %v3616
    %v3619 = vadd.f32 %v3613, %v3617
    %v3622 = vrot.slane %v3451, 1
    %v3623 = vrot.slane %v3452, 1
    %v3624 = vsel %vm843, %v3622, %v3623
    %v3627 = vsel %vm843, %v3623, %v3458
    %v3628 = vmul.f32 %v3457, 0.75
    %v3629 = vmul.f32 %v3458, 0.75
    %v3630 = vadd.f32 %v3608, %v3628
    %v3631 = vadd.f32 %v3609, %v3629
    %v3632 = vmul.f32 %v3624, 0.25
    %v3633 = vmul.f32 %v3627, 0.25
    %v3634 = vadd.f32 %v3628, %v3632
    %v3635 = vadd.f32 %v3629, %v3633
    %3638 = vrot.lane.b32.xlu0 %v3600, 16
    %v3639 = vpop.permute.xlu0 %3638
    %3640 = vrot.lane.b32.xlu0 %v3601, 16
    %v3641 = vpop.permute.xlu0 %3640
    %3646 = vrot.lane.b32.xlu0 %v3606, 32
    %v3647 = vpop.permute.xlu0 %3646
    %3648 = vrot.lane.b32.xlu0 %v3607, 32
    %v3649 = vpop.permute.xlu0 %3648
    %3654 = vrot.lane.b32.xlu0 %v3610, 48
    %v3655 = vpop.permute.xlu0 %3654
    %3656 = vrot.lane.b32.xlu0 %v3611, 48
    %v3657 = vpop.permute.xlu0 %3656
    %3662 = vrot.lane.b32.xlu0 %v3614, 64
    %v3663 = vpop.permute.xlu0 %3662
    %3664 = vrot.lane.b32.xlu0 %v3615, 64
    %v3665 = vpop.permute.xlu0 %3664
    %3670 = vrot.lane.b32.xlu0 %v3618, 80
    %v3671 = vpop.permute.xlu0 %3670
    %3672 = vrot.lane.b32.xlu0 %v3619, 80
    %v3673 = vpop.permute.xlu0 %3672
    %3678 = vrot.lane.b32.xlu0 %v3630, 96
    %v3679 = vpop.permute.xlu0 %3678
    %3680 = vrot.lane.b32.xlu0 %v3631, 96
    %v3681 = vpop.permute.xlu0 %3680
    %3686 = vrot.lane.b32.xlu0 %v3634, 112
    %v3687 = vpop.permute.xlu0 %3686
    %3688 = vrot.lane.b32.xlu0 %v3635, 112
    %v3689 = vpop.permute.xlu0 %3688
    %v3692 = vsel %vm3284, %v3596, %v3639
    %v3693 = vsel %vm3284, %v3597, %v3641
    %v3694 = vsel %vm201, %v3692, %v3647
    %v3695 = vsel %vm201, %v3693, %v3649
    %v3696 = vsel %vm3571, %v3694, %v3655
    %v3697 = vsel %vm3571, %v3695, %v3657
    %v3698 = vsel %vm920, %v3696, %v3663
    %v3699 = vsel %vm920, %v3697, %v3665
    %v3700 = vsel %vm3576, %v3698, %v3671
    %v3701 = vsel %vm3576, %v3699, %v3673
    %v3702 = vsel %vm1994, %v3700, %v3679
    %v3703 = vsel %vm1994, %v3701, %v3681
    %v3704 = vsel %vm3581, %v3702, %v3687
    %v3705 = vsel %vm3581, %v3703, %v3689
    %3706 = vst [vmem:[#allocation2] sm:$0xff] 0.0
    %3707 = vst [vmem:[#allocation2 + $0x8] sm:$0xff] 0.0
    %3708 = vst [vmem:[#allocation2 + $0x10] sm:$0xff] 0.0
    %3709 = vst [vmem:[#allocation2 + $0x18] sm:$0xff] 0.0
    %3710 = vst [vmem:[#allocation2 + $0x20] sm:$0xff] 0.0
    %3711 = vst [vmem:[#allocation2 + $0x28] sm:$0xff] 0.0
    %3712 = vst [vmem:[#allocation2 + $0x30] sm:$0xff] 0.0
    %3713 = vst [vmem:[#allocation2 + $0x38] sm:$0xff] 0.0
    %3714 = vst [vmem:[#allocation2 + $0x40] sm:$0xff] 0.0
    %3715 = vst [vmem:[#allocation2 + $0x48] sm:$0xff] 0.0
    %3716 = vst [vmem:[#allocation2 + $0x50] sm:$0xff] 0.0
    %3717 = vst [vmem:[#allocation2 + $0x58] sm:$0xff] 0.0
    %3718 = vst [vmem:[#allocation2 + $0x60] sm:$0xff] 0.0
    %3719 = vst [vmem:[#allocation2 + $0x68] sm:$0xff] 0.0
    %3720 = vst [vmem:[#allocation2 + $0x70] sm:$0xff] 0.0
    %3721 = vst [vmem:[#allocation2 + $0x78] sm:$0xff] 0.0
    %3722 = vst [vmem:[#allocation2 + $0x80] sm:$0xff] 0.0
    %3723 = vst [vmem:[#allocation2 + $0x88] sm:$0xff] 0.0
    %3724 = vst [vmem:[#allocation2 + $0x90] sm:$0xff] 0.0
    %3725 = vst [vmem:[#allocation2 + $0x98] sm:$0xff] 0.0
    %3726 = vst [vmem:[#allocation2 + $0xa0] sm:$0xff] 0.0
    %3727 = vst [vmem:[#allocation2 + $0xa8] sm:$0xff] 0.0
    %3728 = vst [vmem:[#allocation2 + $0xb0] sm:$0xff] 0.0
    %3729 = vst [vmem:[#allocation2 + $0xb8] sm:$0xff] 0.0
    %3730 = vst [vmem:[#allocation2 + $0xc0] sm:$0xff] 0.0
    %3731 = vst [vmem:[#allocation2 + $0xc8] sm:$0xff] 0.0
    %3732 = vst [vmem:[#allocation2 + $0xd0] sm:$0xff] 0.0
    %3733 = vst [vmem:[#allocation2 + $0xd8] sm:$0xff] 0.0
    %3734 = vst [vmem:[#allocation2 + $0xe0] sm:$0xff] 0.0
    %3735 = vst [vmem:[#allocation2 + $0xe8] sm:$0xff] 0.0
    %3736 = vst [vmem:[#allocation2 + $0xf0] sm:$0xff] 0.0
    %3737 = vst [vmem:[#allocation2 + $0xf8] sm:$0xff] 0.0
    %3738 = vst [vmem:[#allocation2 + $0x100] sm:$0xff] 0.0
    %3739 = vst [vmem:[#allocation2 + $0x108] sm:$0xff] 0.0
    %3740 = vst [vmem:[#allocation2 + $0x110] sm:$0xff] 0.0
    %3741 = vst [vmem:[#allocation2 + $0x118] sm:$0xff] 0.0
    %3742 = vst [vmem:[#allocation2 + $0x120] sm:$0xff] 0.0
    %3743 = vst [vmem:[#allocation2 + $0x128] sm:$0xff] 0.0
    %3744 = vst [vmem:[#allocation2 + $0x130] sm:$0xff] 0.0
    %3745 = vst [vmem:[#allocation2 + $0x138] sm:$0xff] 0.0
    %3746 = vst [vmem:[#allocation2 + $0x140] sm:$0xff] 0.0
    %3747 = vst [vmem:[#allocation2 + $0x148] sm:$0xff] 0.0
    %3748 = vst [vmem:[#allocation2 + $0x150] sm:$0xff] 0.0
    %3749 = vst [vmem:[#allocation2 + $0x158] sm:$0xff] 0.0
    %3750 = vst [vmem:[#allocation2 + $0x160] sm:$0xff] 0.0
    %3751 = vst [vmem:[#allocation2 + $0x168] sm:$0xff] 0.0
    %3752 = vst [vmem:[#allocation2 + $0x170] sm:$0xff] 0.0
    %3753 = vst [vmem:[#allocation2 + $0x178] sm:$0xff] 0.0
    %3754 = vst [vmem:[#allocation2 + $0x180] sm:$0xff] 0.0
    %3755 = vst [vmem:[#allocation2 + $0x188] sm:$0xff] 0.0
    %3756 = vst [vmem:[#allocation2 + $0x190] sm:$0xff] 0.0
    %3757 = vst [vmem:[#allocation2 + $0x198] sm:$0xff] 0.0
    %3758 = vst [vmem:[#allocation2 + $0x1a0] sm:$0xff] 0.0
    %3759 = vst [vmem:[#allocation2 + $0x1a8] sm:$0xff] 0.0
    %3760 = vst [vmem:[#allocation2 + $0x1b0] sm:$0xff] 0.0
    %3761 = vst [vmem:[#allocation2 + $0x1b8] sm:$0xff] 0.0
    %3762 = vst [vmem:[#allocation2 + $0x1c0] sm:$0xff] 0.0
    %3763 = vst [vmem:[#allocation2 + $0x1c8] sm:$0xff] 0.0
    %3764 = vst [vmem:[#allocation2 + $0x1d0] sm:$0xff] 0.0
    %3765 = vst [vmem:[#allocation2 + $0x1d8] sm:$0xff] 0.0
    %3766 = vst [vmem:[#allocation2 + $0x1e0] sm:$0xff] 0.0
    %3767 = vst [vmem:[#allocation2 + $0x1e8] sm:$0xff] 0.0
    %3768 = vst [vmem:[#allocation2 + $0x1f0] sm:$0xff] 0.0
    %3769 = vst [vmem:[#allocation2 + $0x1f8] sm:$0xff] 0.0
    %3772 = vrot.lane.b32.xlu0 %v3582, 112
    %v3773 = vpop.permute.xlu0 %3772
    %3774 = vrot.lane.b32.xlu0 %v3583, 112
    %v3775 = vpop.permute.xlu0 %3774
    %3778 = vst.msk [vmem:[#allocation2 + $0x4] sm:$0xff] %vm3581, %v3773
    %3779 = vst.msk [vmem:[#allocation2 + $0xc] sm:$0xff] %vm3581, %v3775
    %vm3780 = vcmask 1048448
    %3781 = vst.msk [vmem:[#allocation2 + $0x3] sm:$0xff] %vm3780, %v3773
    %3782 = vst.msk [vmem:[#allocation2 + $0xb] sm:$0xff] %vm3780, %v3775
    %3783 = vrot.lane.b32.xlu0 %v3582, 96
    %v3784 = vpop.permute.xlu0 %3783
    %3785 = vrot.lane.b32.xlu0 %v3583, 96
    %v3786 = vpop.permute.xlu0 %3785
    %3789 = vst.msk [vmem:[%s926 + $0x4] sm:$0xff] %vm1994, %v3784
    %3790 = vst.msk [vmem:[%s926 + $0xc] sm:$0xff] %vm1994, %v3786
    %3791 = vst.msk [vmem:[%s926 + $0x3] sm:$0xff] %vm2105, %v3784
    %3792 = vst.msk [vmem:[%s926 + $0xb] sm:$0xff] %vm2105, %v3786
    %3793 = vrot.lane.b32.xlu0 %v3582, 80
    %v3794 = vpop.permute.xlu0 %3793
    %3795 = vrot.lane.b32.xlu0 %v3583, 80
    %v3796 = vpop.permute.xlu0 %3795
    %3799 = vst.msk [vmem:[%s937 + $0x4] sm:$0xff] %vm3576, %v3794
    %3800 = vst.msk [vmem:[%s937 + $0xc] sm:$0xff] %vm3576, %v3796
    %vm3801 = vcmask 1048192
    %3802 = vst.msk [vmem:[%s937 + $0x3] sm:$0xff] %vm3801, %v3794
    %3803 = vst.msk [vmem:[%s937 + $0xb] sm:$0xff] %vm3801, %v3796
    %3804 = vrot.lane.b32.xlu0 %v3582, 64
    %v3805 = vpop.permute.xlu0 %3804
    %3806 = vrot.lane.b32.xlu0 %v3583, 64
    %v3807 = vpop.permute.xlu0 %3806
    %3810 = vst.msk [vmem:[%s942 + $0x4] sm:$0xff] %vm920, %v3805
    %3811 = vst.msk [vmem:[%s942 + $0xc] sm:$0xff] %vm920, %v3807
    %3812 = vst.msk [vmem:[%s942 + $0x3] sm:$0xff] %vm923, %v3805
    %3813 = vst.msk [vmem:[%s942 + $0xb] sm:$0xff] %vm923, %v3807
    %3814 = vrot.lane.b32.xlu0 %v3582, 48
    %v3815 = vpop.permute.xlu0 %3814
    %3816 = vrot.lane.b32.xlu0 %v3583, 48
    %v3817 = vpop.permute.xlu0 %3816
    %3820 = vst.msk [vmem:[%s2139 + $0x4] sm:$0xff] %vm3571, %v3815
    %3821 = vst.msk [vmem:[%s2139 + $0xc] sm:$0xff] %vm3571, %v3817
    %vm3822 = vcmask 1047936
    %3823 = vst.msk [vmem:[%s2139 + $0x3] sm:$0xff] %vm3822, %v3815
    %3824 = vst.msk [vmem:[%s2139 + $0xb] sm:$0xff] %vm3822, %v3817
    %3825 = vrot.lane.b32.xlu0 %v3582, 32
    %v3826 = vpop.permute.xlu0 %3825
    %3827 = vrot.lane.b32.xlu0 %v3583, 32
    %v3828 = vpop.permute.xlu0 %3827
    %3831 = vst.msk [vmem:[%s2150 + $0x4] sm:$0xff] %vm201, %v3826
    %3832 = vst.msk [vmem:[%s2150 + $0xc] sm:$0xff] %vm201, %v3828
    %3833 = vst.msk [vmem:[%s2150 + $0x3] sm:$0xff] %vm2126, %v3826
    %3834 = vst.msk [vmem:[%s2150 + $0xb] sm:$0xff] %vm2126, %v3828
    %3835 = vrot.lane.b32.xlu0 %v3582, 16
    %v3836 = vpop.permute.xlu0 %3835
    %3837 = vrot.lane.b32.xlu0 %v3583, 16
    %v3838 = vpop.permute.xlu0 %3837
    %3841 = vst.msk [vmem:[%s2161 + $0x4] sm:$0xff] %vm3284, %v3836
    %3842 = vst.msk [vmem:[%s2161 + $0xc] sm:$0xff] %vm3284, %v3838
    %vm3843 = vcmask 1047680
    %3844 = vst.msk [vmem:[%s2161 + $0x3] sm:$0xff] %vm3843, %v3836
    %3845 = vst.msk [vmem:[%s2161 + $0xb] sm:$0xff] %vm3843, %v3838
    %3846 = vst [vmem:[%s2166 + $0x3] sm:$0xff] %v3582
    %3847 = vst [vmem:[%s2166 + $0xb] sm:$0xff] %v3583
    %3850 = vrot.lane.b32.xlu0 %v3704, 112
    %v3851 = vpop.permute.xlu0 %3850
    %3852 = vrot.lane.b32.xlu0 %v3705, 112
    %v3853 = vpop.permute.xlu0 %3852
    %s3856 = scalar_lea.vmem [#allocation2], 256
    %3857 = vst.msk [vmem:[%s3856 + $0x4] sm:$0xff] %vm3581, %v3851
    %3858 = vst.msk [vmem:[%s3856 + $0xc] sm:$0xff] %vm3581, %v3853
    %3859 = vst.msk [vmem:[%s3856 + $0x3] sm:$0xff] %vm3780, %v3851
    %3860 = vst.msk [vmem:[%s3856 + $0xb] sm:$0xff] %vm3780, %v3853
    %3861 = vrot.lane.b32.xlu0 %v3704, 96
    %v3862 = vpop.permute.xlu0 %3861
    %3863 = vrot.lane.b32.xlu0 %v3705, 96
    %v3864 = vpop.permute.xlu0 %3863
    %s3867 = scalar_lea.vmem [#allocation2], 288
    %3868 = vst.msk [vmem:[%s3867 + $0x4] sm:$0xff] %vm1994, %v3862
    %3869 = vst.msk [vmem:[%s3867 + $0xc] sm:$0xff] %vm1994, %v3864
    %3870 = vst.msk [vmem:[%s3867 + $0x3] sm:$0xff] %vm2105, %v3862
    %3871 = vst.msk [vmem:[%s3867 + $0xb] sm:$0xff] %vm2105, %v3864
    %3872 = vrot.lane.b32.xlu0 %v3704, 80
    %v3873 = vpop.permute.xlu0 %3872
    %3874 = vrot.lane.b32.xlu0 %v3705, 80
    %v3875 = vpop.permute.xlu0 %3874
    %s3878 = scalar_lea.vmem [#allocation2], 320
    %3879 = vst.msk [vmem:[%s3878 + $0x4] sm:$0xff] %vm3576, %v3873
    %3880 = vst.msk [vmem:[%s3878 + $0xc] sm:$0xff] %vm3576, %v3875
    %3881 = vst.msk [vmem:[%s3878 + $0x3] sm:$0xff] %vm3801, %v3873
    %3882 = vst.msk [vmem:[%s3878 + $0xb] sm:$0xff] %vm3801, %v3875
    %3883 = vrot.lane.b32.xlu0 %v3704, 64
    %v3884 = vpop.permute.xlu0 %3883
    %3885 = vrot.lane.b32.xlu0 %v3705, 64
    %v3886 = vpop.permute.xlu0 %3885
    %s3889 = scalar_lea.vmem [#allocation2], 352
    %3890 = vst.msk [vmem:[%s3889 + $0x4] sm:$0xff] %vm920, %v3884
    %3891 = vst.msk [vmem:[%s3889 + $0xc] sm:$0xff] %vm920, %v3886
    %3892 = vst.msk [vmem:[%s3889 + $0x3] sm:$0xff] %vm923, %v3884
    %3893 = vst.msk [vmem:[%s3889 + $0xb] sm:$0xff] %vm923, %v3886
    %3894 = vrot.lane.b32.xlu0 %v3704, 48
    %v3895 = vpop.permute.xlu0 %3894
    %3896 = vrot.lane.b32.xlu0 %v3705, 48
    %v3897 = vpop.permute.xlu0 %3896
    %s3900 = scalar_lea.vmem [#allocation2], 384
    %3901 = vst.msk [vmem:[%s3900 + $0x4] sm:$0xff] %vm3571, %v3895
    %3902 = vst.msk [vmem:[%s3900 + $0xc] sm:$0xff] %vm3571, %v3897
    %3903 = vst.msk [vmem:[%s3900 + $0x3] sm:$0xff] %vm3822, %v3895
    %3904 = vst.msk [vmem:[%s3900 + $0xb] sm:$0xff] %vm3822, %v3897
    %3905 = vrot.lane.b32.xlu0 %v3704, 32
    %v3906 = vpop.permute.xlu0 %3905
    %3907 = vrot.lane.b32.xlu0 %v3705, 32
    %v3908 = vpop.permute.xlu0 %3907
    %s3911 = scalar_lea.vmem [#allocation2], 416
    %3912 = vst.msk [vmem:[%s3911 + $0x4] sm:$0xff] %vm201, %v3906
    %3913 = vst.msk [vmem:[%s3911 + $0xc] sm:$0xff] %vm201, %v3908
    %3914 = vst.msk [vmem:[%s3911 + $0x3] sm:$0xff] %vm2126, %v3906
    %3915 = vst.msk [vmem:[%s3911 + $0xb] sm:$0xff] %vm2126, %v3908
    %3916 = vrot.lane.b32.xlu0 %v3704, 16
    %v3917 = vpop.permute.xlu0 %3916
    %3918 = vrot.lane.b32.xlu0 %v3705, 16
    %v3919 = vpop.permute.xlu0 %3918
    %s3922 = scalar_lea.vmem [#allocation2], 448
    %3923 = vst.msk [vmem:[%s3922 + $0x4] sm:$0xff] %vm3284, %v3917
    %3924 = vst.msk [vmem:[%s3922 + $0xc] sm:$0xff] %vm3284, %v3919
    %3925 = vst.msk [vmem:[%s3922 + $0x3] sm:$0xff] %vm3843, %v3917
    %3926 = vst.msk [vmem:[%s3922 + $0xb] sm:$0xff] %vm3843, %v3919
    %s3927 = scalar_lea.vmem [#allocation2], 480
    %3928 = vst [vmem:[%s3927 + $0x3] sm:$0xff] %v3704
    %3929 = vst [vmem:[%s3927 + $0xb] sm:$0xff] %v3705
    %v3930 = vld [vmem:[#allocation2] sm:$0xff]
    %v3931 = vld [vmem:[#allocation2 + $0x8] sm:$0xff]
    %v3932 = vld [vmem:[#allocation2 + $0x20] sm:$0xff]
    %v3933 = vld [vmem:[#allocation2 + $0x28] sm:$0xff]
    %v3934 = vld [vmem:[#allocation2 + $0x40] sm:$0xff]
    %v3935 = vld [vmem:[#allocation2 + $0x48] sm:$0xff]
    %v3936 = vld [vmem:[#allocation2 + $0x60] sm:$0xff]
    %v3937 = vld [vmem:[#allocation2 + $0x68] sm:$0xff]
    %v3938 = vld [vmem:[#allocation2 + $0x80] sm:$0xff]
    %v3939 = vld [vmem:[#allocation2 + $0x88] sm:$0xff]
    %v3940 = vld [vmem:[#allocation2 + $0xa0] sm:$0xff]
    %v3941 = vld [vmem:[#allocation2 + $0xa8] sm:$0xff]
    %v3942 = vld [vmem:[#allocation2 + $0xc0] sm:$0xff]
    %v3943 = vld [vmem:[#allocation2 + $0xc8] sm:$0xff]
    %v3944 = vld [vmem:[#allocation2 + $0xe0] sm:$0xff]
    %v3945 = vld [vmem:[#allocation2 + $0xe8] sm:$0xff]
    %v3946 = vld [vmem:[#allocation2 + $0x100] sm:$0xff]
    %v3947 = vld [vmem:[#allocation2 + $0x108] sm:$0xff]
    %v3948 = vld [vmem:[#allocation2 + $0x120] sm:$0xff]
    %v3949 = vld [vmem:[#allocation2 + $0x128] sm:$0xff]
    %v3950 = vld [vmem:[#allocation2 + $0x140] sm:$0xff]
    %v3951 = vld [vmem:[#allocation2 + $0x148] sm:$0xff]
    %v3952 = vld [vmem:[#allocation2 + $0x160] sm:$0xff]
    %v3953 = vld [vmem:[#allocation2 + $0x168] sm:$0xff]
    %v3954 = vld [vmem:[#allocation2 + $0x180] sm:$0xff]
    %v3955 = vld [vmem:[#allocation2 + $0x188] sm:$0xff]
    %v3956 = vld [vmem:[#allocation2 + $0x1a0] sm:$0xff]
    %v3957 = vld [vmem:[#allocation2 + $0x1a8] sm:$0xff]
    %v3958 = vld [vmem:[#allocation2 + $0x1c0] sm:$0xff]
    %v3959 = vld [vmem:[#allocation2 + $0x1c8] sm:$0xff]
    %v3960 = vld [vmem:[#allocation2 + $0x1e0] sm:$0xff]
    %v3961 = vld [vmem:[#allocation2 + $0x1e8] sm:$0xff]
    %v3962 = vpack.c.bf16 %v3931, %v3930
    %v3963 = vpack.c.bf16 %v3933, %v3932
    %v3964 = vpack.c.bf16 %v3935, %v3934
    %v3965 = vpack.c.bf16 %v3937, %v3936
    %v3966 = vpack.c.bf16 %v3939, %v3938
    %v3967 = vpack.c.bf16 %v3941, %v3940
    %v3968 = vpack.c.bf16 %v3943, %v3942
    %v3969 = vpack.c.bf16 %v3945, %v3944
    %v3970 = vpack.c.bf16 %v3947, %v3946
    %v3971 = vpack.c.bf16 %v3949, %v3948
    %v3972 = vpack.c.bf16 %v3951, %v3950
    %v3973 = vpack.c.bf16 %v3953, %v3952
    %v3974 = vpack.c.bf16 %v3955, %v3954
    %v3975 = vpack.c.bf16 %v3957, %v3956
    %v3976 = vpack.c.bf16 %v3959, %v3958
    %v3977 = vpack.c.bf16 %v3961, %v3960
    %v3978 = vld [vmem:[#allocation2 + $0x1] sm:$0xff]
    %v3979 = vld [vmem:[#allocation2 + $0x9] sm:$0xff]
    %v3980 = vld [vmem:[#allocation2 + $0x21] sm:$0xff]
    %v3981 = vld [vmem:[#allocation2 + $0x29] sm:$0xff]
    %v3982 = vld [vmem:[#allocation2 + $0x41] sm:$0xff]
    %v3983 = vld [vmem:[#allocation2 + $0x49] sm:$0xff]
    %v3984 = vld [vmem:[#allocation2 + $0x61] sm:$0xff]
    %v3985 = vld [vmem:[#allocation2 + $0x69] sm:$0xff]
    %v3986 = vld [vmem:[#allocation2 + $0x81] sm:$0xff]
    %v3987 = vld [vmem:[#allocation2 + $0x89] sm:$0xff]
    %v3988 = vld [vmem:[#allocation2 + $0xa1] sm:$0xff]
    %v3989 = vld [vmem:[#allocation2 + $0xa9] sm:$0xff]
    %v3990 = vld [vmem:[#allocation2 + $0xc1] sm:$0xff]
    %v3991 = vld [vmem:[#allocation2 + $0xc9] sm:$0xff]
    %v3992 = vld [vmem:[#allocation2 + $0xe1] sm:$0xff]
    %v3993 = vld [vmem:[#allocation2 + $0xe9] sm:$0xff]
    %v3994 = vld [vmem:[#allocation2 + $0x101] sm:$0xff]
    %v3995 = vld [vmem:[#allocation2 + $0x109] sm:$0xff]
    %v3996 = vld [vmem:[#allocation2 + $0x121] sm:$0xff]
    %v3997 = vld [vmem:[#allocation2 + $0x129] sm:$0xff]
    %v3998 = vld [vmem:[#allocation2 + $0x141] sm:$0xff]
    %v3999 = vld [vmem:[#allocation2 + $0x149] sm:$0xff]
    %v4000 = vld [vmem:[#allocation2 + $0x161] sm:$0xff]
    %v4001 = vld [vmem:[#allocation2 + $0x169] sm:$0xff]
    %v4002 = vld [vmem:[#allocation2 + $0x181] sm:$0xff]
    %v4003 = vld [vmem:[#allocation2 + $0x189] sm:$0xff]
    %v4004 = vld [vmem:[#allocation2 + $0x1a1] sm:$0xff]
    %v4005 = vld [vmem:[#allocation2 + $0x1a9] sm:$0xff]
    %v4006 = vld [vmem:[#allocation2 + $0x1c1] sm:$0xff]
    %v4007 = vld [vmem:[#allocation2 + $0x1c9] sm:$0xff]
    %v4008 = vld [vmem:[#allocation2 + $0x1e1] sm:$0xff]
    %v4009 = vld [vmem:[#allocation2 + $0x1e9] sm:$0xff]
    %v4010 = vpack.c.bf16 %v3979, %v3978
    %v4011 = vpack.c.bf16 %v3981, %v3980
    %v4012 = vpack.c.bf16 %v3983, %v3982
    %v4013 = vpack.c.bf16 %v3985, %v3984
    %v4014 = vpack.c.bf16 %v3987, %v3986
    %v4015 = vpack.c.bf16 %v3989, %v3988
    %v4016 = vpack.c.bf16 %v3991, %v3990
    %v4017 = vpack.c.bf16 %v3993, %v3992
    %v4018 = vpack.c.bf16 %v3995, %v3994
    %v4019 = vpack.c.bf16 %v3997, %v3996
    %v4020 = vpack.c.bf16 %v3999, %v3998
    %v4021 = vpack.c.bf16 %v4001, %v4000
    %v4022 = vpack.c.bf16 %v4003, %v4002
    %v4023 = vpack.c.bf16 %v4005, %v4004
    %v4024 = vpack.c.bf16 %v4007, %v4006
    %v4025 = vpack.c.bf16 %v4009, %v4008
    %v4026 = vld [vmem:[#allocation2 + $0x2] sm:$0xff]
    %v4027 = vld [vmem:[#allocation2 + $0xa] sm:$0xff]
    %v4028 = vld [vmem:[#allocation2 + $0x22] sm:$0xff]
    %v4029 = vld [vmem:[#allocation2 + $0x2a] sm:$0xff]
    %v4030 = vld [vmem:[#allocation2 + $0x42] sm:$0xff]
    %v4031 = vld [vmem:[#allocation2 + $0x4a] sm:$0xff]
    %v4032 = vld [vmem:[#allocation2 + $0x62] sm:$0xff]
    %v4033 = vld [vmem:[#allocation2 + $0x6a] sm:$0xff]
    %v4034 = vld [vmem:[#allocation2 + $0x82] sm:$0xff]
    %v4035 = vld [vmem:[#allocation2 + $0x8a] sm:$0xff]
    %v4036 = vld [vmem:[#allocation2 + $0xa2] sm:$0xff]
    %v4037 = vld [vmem:[#allocation2 + $0xaa] sm:$0xff]
    %v4038 = vld [vmem:[#allocation2 + $0xc2] sm:$0xff]
    %v4039 = vld [vmem:[#allocation2 + $0xca] sm:$0xff]
    %v4040 = vld [vmem:[#allocation2 + $0xe2] sm:$0xff]
    %v4041 = vld [vmem:[#allocation2 + $0xea] sm:$0xff]
    %v4042 = vld [vmem:[#allocation2 + $0x102] sm:$0xff]
    %v4043 = vld [vmem:[#allocation2 + $0x10a] sm:$0xff]
    %v4044 = vld [vmem:[#allocation2 + $0x122] sm:$0xff]
    %v4045 = vld [vmem:[#allocation2 + $0x12a] sm:$0xff]
    %v4046 = vld [vmem:[#allocation2 + $0x142] sm:$0xff]
    %v4047 = vld [vmem:[#allocation2 + $0x14a] sm:$0xff]
    %v4048 = vld [vmem:[#allocation2 + $0x162] sm:$0xff]
    %v4049 = vld [vmem:[#allocation2 + $0x16a] sm:$0xff]
    %v4050 = vld [vmem:[#allocation2 + $0x182] sm:$0xff]
    %v4051 = vld [vmem:[#allocation2 + $0x18a] sm:$0xff]
    %v4052 = vld [vmem:[#allocation2 + $0x1a2] sm:$0xff]
    %v4053 = vld [vmem:[#allocation2 + $0x1aa] sm:$0xff]
    %v4054 = vld [vmem:[#allocation2 + $0x1c2] sm:$0xff]
    %v4055 = vld [vmem:[#allocation2 + $0x1ca] sm:$0xff]
    %v4056 = vld [vmem:[#allocation2 + $0x1e2] sm:$0xff]
    %v4057 = vld [vmem:[#allocation2 + $0x1ea] sm:$0xff]
    %v4058 = vpack.c.bf16 %v4027, %v4026
    %v4059 = vpack.c.bf16 %v4029, %v4028
    %v4060 = vpack.c.bf16 %v4031, %v4030
    %v4061 = vpack.c.bf16 %v4033, %v4032
    %v4062 = vpack.c.bf16 %v4035, %v4034
    %v4063 = vpack.c.bf16 %v4037, %v4036
    %v4064 = vpack.c.bf16 %v4039, %v4038
    %v4065 = vpack.c.bf16 %v4041, %v4040
    %v4066 = vpack.c.bf16 %v4043, %v4042
    %v4067 = vpack.c.bf16 %v4045, %v4044
    %v4068 = vpack.c.bf16 %v4047, %v4046
    %v4069 = vpack.c.bf16 %v4049, %v4048
    %v4070 = vpack.c.bf16 %v4051, %v4050
    %v4071 = vpack.c.bf16 %v4053, %v4052
    %v4072 = vpack.c.bf16 %v4055, %v4054
    %v4073 = vpack.c.bf16 %v4057, %v4056
    %v4074 = vld [vmem:[#allocation2 + $0x3] sm:$0xff]
    %v4075 = vld [vmem:[#allocation2 + $0xb] sm:$0xff]
    %v4076 = vld [vmem:[#allocation2 + $0x23] sm:$0xff]
    %v4077 = vld [vmem:[#allocation2 + $0x2b] sm:$0xff]
    %v4078 = vld [vmem:[#allocation2 + $0x43] sm:$0xff]
    %v4079 = vld [vmem:[#allocation2 + $0x4b] sm:$0xff]
    %v4080 = vld [vmem:[#allocation2 + $0x63] sm:$0xff]
    %v4081 = vld [vmem:[#allocation2 + $0x6b] sm:$0xff]
    %v4082 = vld [vmem:[#allocation2 + $0x83] sm:$0xff]
    %v4083 = vld [vmem:[#allocation2 + $0x8b] sm:$0xff]
    %v4084 = vld [vmem:[#allocation2 + $0xa3] sm:$0xff]
    %v4085 = vld [vmem:[#allocation2 + $0xab] sm:$0xff]
    %v4086 = vld [vmem:[#allocation2 + $0xc3] sm:$0xff]
    %v4087 = vld [vmem:[#allocation2 + $0xcb] sm:$0xff]
    %v4088 = vld [vmem:[#allocation2 + $0xe3] sm:$0xff]
    %v4089 = vld [vmem:[#allocation2 + $0xeb] sm:$0xff]
    %v4090 = vld [vmem:[#allocation2 + $0x103] sm:$0xff]
    %v4091 = vld [vmem:[#allocation2 + $0x10b] sm:$0xff]
    %v4092 = vld [vmem:[#allocation2 + $0x123] sm:$0xff]
    %v4093 = vld [vmem:[#allocation2 + $0x12b] sm:$0xff]
    %v4094 = vld [vmem:[#allocation2 + $0x143] sm:$0xff]
    %v4095 = vld [vmem:[#allocation2 + $0x14b] sm:$0xff]
    %v4096 = vld [vmem:[#allocation2 + $0x163] sm:$0xff]
    %v4097 = vld [vmem:[#allocation2 + $0x16b] sm:$0xff]
    %v4098 = vld [vmem:[#allocation2 + $0x183] sm:$0xff]
    %v4099 = vld [vmem:[#allocation2 + $0x18b] sm:$0xff]
    %v4100 = vld [vmem:[#allocation2 + $0x1a3] sm:$0xff]
    %v4101 = vld [vmem:[#allocation2 + $0x1ab] sm:$0xff]
    %v4102 = vld [vmem:[#allocation2 + $0x1c3] sm:$0xff]
    %v4103 = vld [vmem:[#allocation2 + $0x1cb] sm:$0xff]
    %v4104 = vld [vmem:[#allocation2 + $0x1e3] sm:$0xff]
    %v4105 = vld [vmem:[#allocation2 + $0x1eb] sm:$0xff]
    %v4106 = vpack.c.bf16 %v4075, %v4074
    %v4107 = vpack.c.bf16 %v4077, %v4076
    %v4108 = vpack.c.bf16 %v4079, %v4078
    %v4109 = vpack.c.bf16 %v4081, %v4080
    %v4110 = vpack.c.bf16 %v4083, %v4082
    %v4111 = vpack.c.bf16 %v4085, %v4084
    %v4112 = vpack.c.bf16 %v4087, %v4086
    %v4113 = vpack.c.bf16 %v4089, %v4088
    %v4114 = vpack.c.bf16 %v4091, %v4090
    %v4115 = vpack.c.bf16 %v4093, %v4092
    %v4116 = vpack.c.bf16 %v4095, %v4094
    %v4117 = vpack.c.bf16 %v4097, %v4096
    %v4118 = vpack.c.bf16 %v4099, %v4098
    %v4119 = vpack.c.bf16 %v4101, %v4100
    %v4120 = vpack.c.bf16 %v4103, %v4102
    %v4121 = vpack.c.bf16 %v4105, %v4104
    %v4122 = vld [vmem:[#allocation2 + $0x4] sm:$0xff]
    %v4123 = vld [vmem:[#allocation2 + $0xc] sm:$0xff]
    %v4124 = vld [vmem:[#allocation2 + $0x24] sm:$0xff]
    %v4125 = vld [vmem:[#allocation2 + $0x2c] sm:$0xff]
    %v4126 = vld [vmem:[#allocation2 + $0x44] sm:$0xff]
    %v4127 = vld [vmem:[#allocation2 + $0x4c] sm:$0xff]
    %v4128 = vld [vmem:[#allocation2 + $0x64] sm:$0xff]
    %v4129 = vld [vmem:[#allocation2 + $0x6c] sm:$0xff]
    %v4130 = vld [vmem:[#allocation2 + $0x84] sm:$0xff]
    %v4131 = vld [vmem:[#allocation2 + $0x8c] sm:$0xff]
    %v4132 = vld [vmem:[#allocation2 + $0xa4] sm:$0xff]
    %v4133 = vld [vmem:[#allocation2 + $0xac] sm:$0xff]
    %v4134 = vld [vmem:[#allocation2 + $0xc4] sm:$0xff]
    %v4135 = vld [vmem:[#allocation2 + $0xcc] sm:$0xff]
    %v4136 = vld [vmem:[#allocation2 + $0xe4] sm:$0xff]
    %v4137 = vld [vmem:[#allocation2 + $0xec] sm:$0xff]
    %v4138 = vld [vmem:[#allocation2 + $0x104] sm:$0xff]
    %v4139 = vld [vmem:[#allocation2 + $0x10c] sm:$0xff]
    %v4140 = vld [vmem:[#allocation2 + $0x124] sm:$0xff]
    %v4141 = vld [vmem:[#allocation2 + $0x12c] sm:$0xff]
    %v4142 = vld [vmem:[#allocation2 + $0x144] sm:$0xff]
    %v4143 = vld [vmem:[#allocation2 + $0x14c] sm:$0xff]
    %v4144 = vld [vmem:[#allocation2 + $0x164] sm:$0xff]
    %v4145 = vld [vmem:[#allocation2 + $0x16c] sm:$0xff]
    %v4146 = vld [vmem:[#allocation2 + $0x184] sm:$0xff]
    %v4147 = vld [vmem:[#allocation2 + $0x18c] sm:$0xff]
    %v4148 = vld [vmem:[#allocation2 + $0x1a4] sm:$0xff]
    %v4149 = vld [vmem:[#allocation2 + $0x1ac] sm:$0xff]
    %v4150 = vld [vmem:[#allocation2 + $0x1c4] sm:$0xff]
    %v4151 = vld [vmem:[#allocation2 + $0x1cc] sm:$0xff]
    %v4152 = vld [vmem:[#allocation2 + $0x1e4] sm:$0xff]
    %v4153 = vld [vmem:[#allocation2 + $0x1ec] sm:$0xff]
    %v4154 = vpack.c.bf16 %v4123, %v4122
    %v4155 = vpack.c.bf16 %v4125, %v4124
    %v4156 = vpack.c.bf16 %v4127, %v4126
    %v4157 = vpack.c.bf16 %v4129, %v4128
    %v4158 = vpack.c.bf16 %v4131, %v4130
    %v4159 = vpack.c.bf16 %v4133, %v4132
    %v4160 = vpack.c.bf16 %v4135, %v4134
    %v4161 = vpack.c.bf16 %v4137, %v4136
    %v4162 = vpack.c.bf16 %v4139, %v4138
    %v4163 = vpack.c.bf16 %v4141, %v4140
    %v4164 = vpack.c.bf16 %v4143, %v4142
    %v4165 = vpack.c.bf16 %v4145, %v4144
    %v4166 = vpack.c.bf16 %v4147, %v4146
    %v4167 = vpack.c.bf16 %v4149, %v4148
    %v4168 = vpack.c.bf16 %v4151, %v4150
    %v4169 = vpack.c.bf16 %v4153, %v4152
    %v4170 = vld [vmem:[#allocation2 + $0x5] sm:$0xff]
    %v4171 = vld [vmem:[#allocation2 + $0xd] sm:$0xff]
    %v4172 = vld [vmem:[#allocation2 + $0x25] sm:$0xff]
    %v4173 = vld [vmem:[#allocation2 + $0x2d] sm:$0xff]
    %v4174 = vld [vmem:[#allocation2 + $0x45] sm:$0xff]
    %v4175 = vld [vmem:[#allocation2 + $0x4d] sm:$0xff]
    %v4176 = vld [vmem:[#allocation2 + $0x65] sm:$0xff]
    %v4177 = vld [vmem:[#allocation2 + $0x6d] sm:$0xff]
    %v4178 = vld [vmem:[#allocation2 + $0x85] sm:$0xff]
    %v4179 = vld [vmem:[#allocation2 + $0x8d] sm:$0xff]
    %v4180 = vld [vmem:[#allocation2 + $0xa5] sm:$0xff]
    %v4181 = vld [vmem:[#allocation2 + $0xad] sm:$0xff]
    %v4182 = vld [vmem:[#allocation2 + $0xc5] sm:$0xff]
    %v4183 = vld [vmem:[#allocation2 + $0xcd] sm:$0xff]
    %v4184 = vld [vmem:[#allocation2 + $0xe5] sm:$0xff]
    %v4185 = vld [vmem:[#allocation2 + $0xed] sm:$0xff]
    %v4186 = vld [vmem:[#allocation2 + $0x105] sm:$0xff]
    %v4187 = vld [vmem:[#allocation2 + $0x10d] sm:$0xff]
    %v4188 = vld [vmem:[#allocation2 + $0x125] sm:$0xff]
    %v4189 = vld [vmem:[#allocation2 + $0x12d] sm:$0xff]
    %v4190 = vld [vmem:[#allocation2 + $0x145] sm:$0xff]
    %v4191 = vld [vmem:[#allocation2 + $0x14d] sm:$0xff]
    %v4192 = vld [vmem:[#allocation2 + $0x165] sm:$0xff]
    %v4193 = vld [vmem:[#allocation2 + $0x16d] sm:$0xff]
    %v4194 = vld [vmem:[#allocation2 + $0x185] sm:$0xff]
    %v4195 = vld [vmem:[#allocation2 + $0x18d] sm:$0xff]
    %v4196 = vld [vmem:[#allocation2 + $0x1a5] sm:$0xff]
    %v4197 = vld [vmem:[#allocation2 + $0x1ad] sm:$0xff]
    %v4198 = vld [vmem:[#allocation2 + $0x1c5] sm:$0xff]
    %v4199 = vld [vmem:[#allocation2 + $0x1cd] sm:$0xff]
    %v4200 = vld [vmem:[#allocation2 + $0x1e5] sm:$0xff]
    %v4201 = vld [vmem:[#allocation2 + $0x1ed] sm:$0xff]
    %v4202 = vpack.c.bf16 %v4171, %v4170
    %v4203 = vpack.c.bf16 %v4173, %v4172
    %v4204 = vpack.c.bf16 %v4175, %v4174
    %v4205 = vpack.c.bf16 %v4177, %v4176
    %v4206 = vpack.c.bf16 %v4179, %v4178
    %v4207 = vpack.c.bf16 %v4181, %v4180
    %v4208 = vpack.c.bf16 %v4183, %v4182
    %v4209 = vpack.c.bf16 %v4185, %v4184
    %v4210 = vpack.c.bf16 %v4187, %v4186
    %v4211 = vpack.c.bf16 %v4189, %v4188
    %v4212 = vpack.c.bf16 %v4191, %v4190
    %v4213 = vpack.c.bf16 %v4193, %v4192
    %v4214 = vpack.c.bf16 %v4195, %v4194
    %v4215 = vpack.c.bf16 %v4197, %v4196
    %v4216 = vpack.c.bf16 %v4199, %v4198
    %v4217 = vpack.c.bf16 %v4201, %v4200
    %v4218 = vld [vmem:[#allocation2 + $0x6] sm:$0xff]
    %v4219 = vld [vmem:[#allocation2 + $0xe] sm:$0xff]
    %v4220 = vld [vmem:[#allocation2 + $0x26] sm:$0xff]
    %v4221 = vld [vmem:[#allocation2 + $0x2e] sm:$0xff]
    %v4222 = vld [vmem:[#allocation2 + $0x46] sm:$0xff]
    %v4223 = vld [vmem:[#allocation2 + $0x4e] sm:$0xff]
    %v4224 = vld [vmem:[#allocation2 + $0x66] sm:$0xff]
    %v4225 = vld [vmem:[#allocation2 + $0x6e] sm:$0xff]
    %v4226 = vld [vmem:[#allocation2 + $0x86] sm:$0xff]
    %v4227 = vld [vmem:[#allocation2 + $0x8e] sm:$0xff]
    %v4228 = vld [vmem:[#allocation2 + $0xa6] sm:$0xff]
    %v4229 = vld [vmem:[#allocation2 + $0xae] sm:$0xff]
    %v4230 = vld [vmem:[#allocation2 + $0xc6] sm:$0xff]
    %v4231 = vld [vmem:[#allocation2 + $0xce] sm:$0xff]
    %v4232 = vld [vmem:[#allocation2 + $0xe6] sm:$0xff]
    %v4233 = vld [vmem:[#allocation2 + $0xee] sm:$0xff]
    %v4234 = vld [vmem:[#allocation2 + $0x106] sm:$0xff]
    %v4235 = vld [vmem:[#allocation2 + $0x10e] sm:$0xff]
    %v4236 = vld [vmem:[#allocation2 + $0x126] sm:$0xff]
    %v4237 = vld [vmem:[#allocation2 + $0x12e] sm:$0xff]
    %v4238 = vld [vmem:[#allocation2 + $0x146] sm:$0xff]
    %v4239 = vld [vmem:[#allocation2 + $0x14e] sm:$0xff]
    %v4240 = vld [vmem:[#allocation2 + $0x166] sm:$0xff]
    %v4241 = vld [vmem:[#allocation2 + $0x16e] sm:$0xff]
    %v4242 = vld [vmem:[#allocation2 + $0x186] sm:$0xff]
    %v4243 = vld [vmem:[#allocation2 + $0x18e] sm:$0xff]
    %v4244 = vld [vmem:[#allocation2 + $0x1a6] sm:$0xff]
    %v4245 = vld [vmem:[#allocation2 + $0x1ae] sm:$0xff]
    %v4246 = vld [vmem:[#allocation2 + $0x1c6] sm:$0xff]
    %v4247 = vld [vmem:[#allocation2 + $0x1ce] sm:$0xff]
    %v4248 = vld [vmem:[#allocation2 + $0x1e6] sm:$0xff]
    %v4249 = vld [vmem:[#allocation2 + $0x1ee] sm:$0xff]
    %v4250 = vpack.c.bf16 %v4219, %v4218
    %v4251 = vpack.c.bf16 %v4221, %v4220
    %v4252 = vpack.c.bf16 %v4223, %v4222
    %v4253 = vpack.c.bf16 %v4225, %v4224
    %v4254 = vpack.c.bf16 %v4227, %v4226
    %v4255 = vpack.c.bf16 %v4229, %v4228
    %v4256 = vpack.c.bf16 %v4231, %v4230
    %v4257 = vpack.c.bf16 %v4233, %v4232
    %v4258 = vpack.c.bf16 %v4235, %v4234
    %v4259 = vpack.c.bf16 %v4237, %v4236
    %v4260 = vpack.c.bf16 %v4239, %v4238
    %v4261 = vpack.c.bf16 %v4241, %v4240
    %v4262 = vpack.c.bf16 %v4243, %v4242
    %v4263 = vpack.c.bf16 %v4245, %v4244
    %v4264 = vpack.c.bf16 %v4247, %v4246
    %v4265 = vpack.c.bf16 %v4249, %v4248
    %v4266 = vld [vmem:[#allocation2 + $0x7] sm:$0xff]
    %v4267 = vld [vmem:[#allocation2 + $0xf] sm:$0xff]
    %v4268 = vld [vmem:[#allocation2 + $0x27] sm:$0xff]
    %v4269 = vld [vmem:[#allocation2 + $0x2f] sm:$0xff]
    %v4270 = vld [vmem:[#allocation2 + $0x47] sm:$0xff]
    %v4271 = vld [vmem:[#allocation2 + $0x4f] sm:$0xff]
    %v4272 = vld [vmem:[#allocation2 + $0x67] sm:$0xff]
    %v4273 = vld [vmem:[#allocation2 + $0x6f] sm:$0xff]
    %v4274 = vld [vmem:[#allocation2 + $0x87] sm:$0xff]
    %v4275 = vld [vmem:[#allocation2 + $0x8f] sm:$0xff]
    %v4276 = vld [vmem:[#allocation2 + $0xa7] sm:$0xff]
    %v4277 = vld [vmem:[#allocation2 + $0xaf] sm:$0xff]
    %v4278 = vld [vmem:[#allocation2 + $0xc7] sm:$0xff]
    %v4279 = vld [vmem:[#allocation2 + $0xcf] sm:$0xff]
    %v4280 = vld [vmem:[#allocation2 + $0xe7] sm:$0xff]
    %v4281 = vld [vmem:[#allocation2 + $0xef] sm:$0xff]
    %v4282 = vld [vmem:[#allocation2 + $0x107] sm:$0xff]
    %v4283 = vld [vmem:[#allocation2 + $0x10f] sm:$0xff]
    %v4284 = vld [vmem:[#allocation2 + $0x127] sm:$0xff]
    %v4285 = vld [vmem:[#allocation2 + $0x12f] sm:$0xff]
    %v4286 = vld [vmem:[#allocation2 + $0x147] sm:$0xff]
    %v4287 = vld [vmem:[#allocation2 + $0x14f] sm:$0xff]
    %v4288 = vld [vmem:[#allocation2 + $0x167] sm:$0xff]
    %v4289 = vld [vmem:[#allocation2 + $0x16f] sm:$0xff]
    %v4290 = vld [vmem:[#allocation2 + $0x187] sm:$0xff]
    %v4291 = vld [vmem:[#allocation2 + $0x18f] sm:$0xff]
    %v4292 = vld [vmem:[#allocation2 + $0x1a7] sm:$0xff]
    %v4293 = vld [vmem:[#allocation2 + $0x1af] sm:$0xff]
    %v4294 = vld [vmem:[#allocation2 + $0x1c7] sm:$0xff]
    %v4295 = vld [vmem:[#allocation2 + $0x1cf] sm:$0xff]
    %v4296 = vld [vmem:[#allocation2 + $0x1e7] sm:$0xff]
    %v4297 = vld [vmem:[#allocation2 + $0x1ef] sm:$0xff]
    %v4298 = vpack.c.bf16 %v4267, %v4266
    %v4299 = vpack.c.bf16 %v4269, %v4268
    %v4300 = vpack.c.bf16 %v4271, %v4270
    %v4301 = vpack.c.bf16 %v4273, %v4272
    %v4302 = vpack.c.bf16 %v4275, %v4274
    %v4303 = vpack.c.bf16 %v4277, %v4276
    %v4304 = vpack.c.bf16 %v4279, %v4278
    %v4305 = vpack.c.bf16 %v4281, %v4280
    %v4306 = vpack.c.bf16 %v4283, %v4282
    %v4307 = vpack.c.bf16 %v4285, %v4284
    %v4308 = vpack.c.bf16 %v4287, %v4286
    %v4309 = vpack.c.bf16 %v4289, %v4288
    %v4310 = vpack.c.bf16 %v4291, %v4290
    %v4311 = vpack.c.bf16 %v4293, %v4292
    %v4312 = vpack.c.bf16 %v4295, %v4294
    %v4313 = vpack.c.bf16 %v4297, %v4296
    %v4314 = vld [vmem:[%s11] sm:$0xf]
    %v4315 = vld [vmem:[%s11 + $0x4] sm:$0xf]
    %v4316 = vld [vmem:[%s11 + $0x8] sm:$0xf]
    %v4317 = vld [vmem:[%s11 + $0xc] sm:$0xf]
    %v4318 = vld [vmem:[%s11 + $0x10] sm:$0xf]
    %v4319 = vld [vmem:[%s11 + $0x14] sm:$0xf]
    %v4320 = vld [vmem:[%s11 + $0x18] sm:$0xf]
    %v4321 = vld [vmem:[%s11 + $0x1c] sm:$0xf]
    %v4322 = vld [vmem:[%s11 + $0x20] sm:$0xf]
    %v4323 = vld [vmem:[%s11 + $0x24] sm:$0xf]
    %v4324 = vld [vmem:[%s11 + $0x28] sm:$0xf]
    %v4325 = vld [vmem:[%s11 + $0x2c] sm:$0xf]
    %v4326 = vld [vmem:[%s11 + $0x30] sm:$0xf]
    %v4327 = vld [vmem:[%s11 + $0x34] sm:$0xf]
    %v4328 = vld [vmem:[%s11 + $0x38] sm:$0xf]
    %v4329 = vld [vmem:[%s11 + $0x3c] sm:$0xf]
    %v4330 = vld [vmem:[%s11 + $0x40] sm:$0xf]
    %v4331 = vld [vmem:[%s11 + $0x44] sm:$0xf]
    %v4332 = vld [vmem:[%s11 + $0x48] sm:$0xf]
    %v4333 = vld [vmem:[%s11 + $0x4c] sm:$0xf]
    %v4334 = vld [vmem:[%s11 + $0x50] sm:$0xf]
    %v4335 = vld [vmem:[%s11 + $0x54] sm:$0xf]
    %v4336 = vld [vmem:[%s11 + $0x58] sm:$0xf]
    %v4337 = vld [vmem:[%s11 + $0x5c] sm:$0xf]
    %v4338 = vld [vmem:[%s11 + $0x60] sm:$0xf]
    %v4339 = vld [vmem:[%s11 + $0x64] sm:$0xf]
    %v4340 = vld [vmem:[%s11 + $0x68] sm:$0xf]
    %v4341 = vld [vmem:[%s11 + $0x6c] sm:$0xf]
    %v4342 = vld [vmem:[%s11 + $0x70] sm:$0xf]
    %v4343 = vld [vmem:[%s11 + $0x74] sm:$0xf]
    %v4344 = vld [vmem:[%s11 + $0x78] sm:$0xf]
    %v4345 = vld [vmem:[%s11 + $0x7c] sm:$0xf]
    %v4346 = vld [vmem:[%s11 + $0x80] sm:$0xf]
    %v4347 = vld [vmem:[%s11 + $0x84] sm:$0xf]
    %v4348 = vld [vmem:[%s11 + $0x88] sm:$0xf]
    %v4349 = vld [vmem:[%s11 + $0x8c] sm:$0xf]
    %v4350 = vld [vmem:[%s11 + $0x90] sm:$0xf]
    %v4351 = vld [vmem:[%s11 + $0x94] sm:$0xf]
    %v4352 = vld [vmem:[%s11 + $0x98] sm:$0xf]
    %v4353 = vld [vmem:[%s11 + $0x9c] sm:$0xf]
    %v4354 = vld [vmem:[%s11 + $0xa0] sm:$0xf]
    %v4355 = vld [vmem:[%s11 + $0xa4] sm:$0xf]
    %v4356 = vld [vmem:[%s11 + $0xa8] sm:$0xf]
    %v4357 = vld [vmem:[%s11 + $0xac] sm:$0xf]
    %v4358 = vld [vmem:[%s11 + $0xb0] sm:$0xf]
    %v4359 = vld [vmem:[%s11 + $0xb4] sm:$0xf]
    %v4360 = vld [vmem:[%s11 + $0xb8] sm:$0xf]
    %v4361 = vld [vmem:[%s11 + $0xbc] sm:$0xf]
    %v4362 = vld [vmem:[%s11 + $0xc0] sm:$0xf]
    %v4363 = vld [vmem:[%s11 + $0xc4] sm:$0xf]
    %v4364 = vld [vmem:[%s11 + $0xc8] sm:$0xf]
    %v4365 = vld [vmem:[%s11 + $0xcc] sm:$0xf]
    %v4366 = vld [vmem:[%s11 + $0xd0] sm:$0xf]
    %v4367 = vld [vmem:[%s11 + $0xd4] sm:$0xf]
    %v4368 = vld [vmem:[%s11 + $0xd8] sm:$0xf]
    %v4369 = vld [vmem:[%s11 + $0xdc] sm:$0xf]
    %v4370 = vld [vmem:[%s11 + $0xe0] sm:$0xf]
    %v4371 = vld [vmem:[%s11 + $0xe4] sm:$0xf]
    %v4372 = vld [vmem:[%s11 + $0xe8] sm:$0xf]
    %v4373 = vld [vmem:[%s11 + $0xec] sm:$0xf]
    %v4374 = vld [vmem:[%s11 + $0xf0] sm:$0xf]
    %v4375 = vld [vmem:[%s11 + $0xf4] sm:$0xf]
    %v4376 = vld [vmem:[%s11 + $0xf8] sm:$0xf]
    %v4377 = vld [vmem:[%s11 + $0xfc] sm:$0xf]
    %v4378 = vld [vmem:[%s11 + $0x100] sm:$0xf]
    %v4379 = vld [vmem:[%s11 + $0x104] sm:$0xf]
    %v4380 = vld [vmem:[%s11 + $0x108] sm:$0xf]
    %v4381 = vld [vmem:[%s11 + $0x10c] sm:$0xf]
    %v4382 = vld [vmem:[%s11 + $0x110] sm:$0xf]
    %v4383 = vld [vmem:[%s11 + $0x114] sm:$0xf]
    %v4384 = vld [vmem:[%s11 + $0x118] sm:$0xf]
    %v4385 = vld [vmem:[%s11 + $0x11c] sm:$0xf]
    %v4386 = vld [vmem:[%s11 + $0x120] sm:$0xf]
    %v4387 = vld [vmem:[%s11 + $0x124] sm:$0xf]
    %v4388 = vld [vmem:[%s11 + $0x128] sm:$0xf]
    %v4389 = vld [vmem:[%s11 + $0x12c] sm:$0xf]
    %v4390 = vld [vmem:[%s11 + $0x130] sm:$0xf]
    %v4391 = vld [vmem:[%s11 + $0x134] sm:$0xf]
    %v4392 = vld [vmem:[%s11 + $0x138] sm:$0xf]
    %v4393 = vld [vmem:[%s11 + $0x13c] sm:$0xf]
    %v4394 = vld [vmem:[%s11 + $0x140] sm:$0xf]
    %v4395 = vld [vmem:[%s11 + $0x144] sm:$0xf]
    %v4396 = vld [vmem:[%s11 + $0x148] sm:$0xf]
    %v4397 = vld [vmem:[%s11 + $0x14c] sm:$0xf]
    %v4398 = vld [vmem:[%s11 + $0x150] sm:$0xf]
    %v4399 = vld [vmem:[%s11 + $0x154] sm:$0xf]
    %v4400 = vld [vmem:[%s11 + $0x158] sm:$0xf]
    %v4401 = vld [vmem:[%s11 + $0x15c] sm:$0xf]
    %v4402 = vld [vmem:[%s11 + $0x160] sm:$0xf]
    %v4403 = vld [vmem:[%s11 + $0x164] sm:$0xf]
    %v4404 = vld [vmem:[%s11 + $0x168] sm:$0xf]
    %v4405 = vld [vmem:[%s11 + $0x16c] sm:$0xf]
    %v4406 = vld [vmem:[%s11 + $0x170] sm:$0xf]
    %v4407 = vld [vmem:[%s11 + $0x174] sm:$0xf]
    %v4408 = vld [vmem:[%s11 + $0x178] sm:$0xf]
    %v4409 = vld [vmem:[%s11 + $0x17c] sm:$0xf]
    %v4410 = vld [vmem:[%s11 + $0x180] sm:$0xf]
    %v4411 = vld [vmem:[%s11 + $0x184] sm:$0xf]
    %v4412 = vld [vmem:[%s11 + $0x188] sm:$0xf]
    %v4413 = vld [vmem:[%s11 + $0x18c] sm:$0xf]
    %v4414 = vld [vmem:[%s11 + $0x190] sm:$0xf]
    %v4415 = vld [vmem:[%s11 + $0x194] sm:$0xf]
    %v4416 = vld [vmem:[%s11 + $0x198] sm:$0xf]
    %v4417 = vld [vmem:[%s11 + $0x19c] sm:$0xf]
    %v4418 = vld [vmem:[%s11 + $0x1a0] sm:$0xf]
    %v4419 = vld [vmem:[%s11 + $0x1a4] sm:$0xf]
    %v4420 = vld [vmem:[%s11 + $0x1a8] sm:$0xf]
    %v4421 = vld [vmem:[%s11 + $0x1ac] sm:$0xf]
    %v4422 = vld [vmem:[%s11 + $0x1b0] sm:$0xf]
    %v4423 = vld [vmem:[%s11 + $0x1b4] sm:$0xf]
    %v4424 = vld [vmem:[%s11 + $0x1b8] sm:$0xf]
    %v4425 = vld [vmem:[%s11 + $0x1bc] sm:$0xf]
    %v4426 = vld [vmem:[%s11 + $0x1c0] sm:$0xf]
    %v4427 = vld [vmem:[%s11 + $0x1c4] sm:$0xf]
    %v4428 = vld [vmem:[%s11 + $0x1c8] sm:$0xf]
    %v4429 = vld [vmem:[%s11 + $0x1cc] sm:$0xf]
    %v4430 = vld [vmem:[%s11 + $0x1d0] sm:$0xf]
    %v4431 = vld [vmem:[%s11 + $0x1d4] sm:$0xf]
    %v4432 = vld [vmem:[%s11 + $0x1d8] sm:$0xf]
    %v4433 = vld [vmem:[%s11 + $0x1dc] sm:$0xf]
    %v4434 = vld [vmem:[%s11 + $0x1e0] sm:$0xf]
    %v4435 = vld [vmem:[%s11 + $0x1e4] sm:$0xf]
    %v4436 = vld [vmem:[%s11 + $0x1e8] sm:$0xf]
    %v4437 = vld [vmem:[%s11 + $0x1ec] sm:$0xf]
    %v4438 = vld [vmem:[%s11 + $0x1f0] sm:$0xf]
    %v4439 = vld [vmem:[%s11 + $0x1f4] sm:$0xf]
    %v4440 = vld [vmem:[%s11 + $0x1f8] sm:$0xf]
    %v4441 = vld [vmem:[%s11 + $0x1fc] sm:$0xf]
    %v4442 = vld [vmem:[%s12] sm:$0x1]
    %v4444 = vlaneseq
    %v4445 = vshrl.u32 %v4444, 7
    %v4446 = vsub.s32 0, %v4445
    %v4447 = vrot.slane %v4442, %v4446
    %v4577 = vunpack.c.l.b16 %v4314
    %v4578 = vunpack.c.l.b16 %v4315
    %v4579 = vunpack.c.l.b16 %v4316
    %v4580 = vunpack.c.l.b16 %v4317
    %v4581 = vunpack.c.l.b16 %v4318
    %v4582 = vunpack.c.l.b16 %v4319
    %v4583 = vunpack.c.l.b16 %v4320
    %v4584 = vunpack.c.l.b16 %v4321
    %v4585 = vunpack.c.l.b16 %v4322
    %v4586 = vunpack.c.l.b16 %v4323
    %v4587 = vunpack.c.l.b16 %v4324
    %v4588 = vunpack.c.l.b16 %v4325
    %v4589 = vunpack.c.l.b16 %v4326
    %v4590 = vunpack.c.l.b16 %v4327
    %v4591 = vunpack.c.l.b16 %v4328
    %v4592 = vunpack.c.l.b16 %v4329
    %v4593 = vunpack.c.l.b16 %v4330
    %v4594 = vunpack.c.l.b16 %v4331
    %v4595 = vunpack.c.l.b16 %v4332
    %v4596 = vunpack.c.l.b16 %v4333
    %v4597 = vunpack.c.l.b16 %v4334
    %v4598 = vunpack.c.l.b16 %v4335
    %v4599 = vunpack.c.l.b16 %v4336
    %v4600 = vunpack.c.l.b16 %v4337
    %v4601 = vunpack.c.l.b16 %v4338
    %v4602 = vunpack.c.l.b16 %v4339
    %v4603 = vunpack.c.l.b16 %v4340
    %v4604 = vunpack.c.l.b16 %v4341
    %v4605 = vunpack.c.l.b16 %v4342
    %v4606 = vunpack.c.l.b16 %v4343
    %v4607 = vunpack.c.l.b16 %v4344
    %v4608 = vunpack.c.l.b16 %v4345
    %v4609 = vunpack.c.l.b16 %v4346
    %v4610 = vunpack.c.l.b16 %v4347
    %v4611 = vunpack.c.l.b16 %v4348
    %v4612 = vunpack.c.l.b16 %v4349
    %v4613 = vunpack.c.l.b16 %v4350
    %v4614 = vunpack.c.l.b16 %v4351
    %v4615 = vunpack.c.l.b16 %v4352
    %v4616 = vunpack.c.l.b16 %v4353
    %v4617 = vunpack.c.l.b16 %v4354
    %v4618 = vunpack.c.l.b16 %v4355
    %v4619 = vunpack.c.l.b16 %v4356
    %v4620 = vunpack.c.l.b16 %v4357
    %v4621 = vunpack.c.l.b16 %v4358
    %v4622 = vunpack.c.l.b16 %v4359
    %v4623 = vunpack.c.l.b16 %v4360
    %v4624 = vunpack.c.l.b16 %v4361
    %v4625 = vunpack.c.l.b16 %v4362
    %v4626 = vunpack.c.l.b16 %v4363
    %v4627 = vunpack.c.l.b16 %v4364
    %v4628 = vunpack.c.l.b16 %v4365
    %v4629 = vunpack.c.l.b16 %v4366
    %v4630 = vunpack.c.l.b16 %v4367
    %v4631 = vunpack.c.l.b16 %v4368
    %v4632 = vunpack.c.l.b16 %v4369
    %v4633 = vunpack.c.l.b16 %v4370
    %v4634 = vunpack.c.l.b16 %v4371
    %v4635 = vunpack.c.l.b16 %v4372
    %v4636 = vunpack.c.l.b16 %v4373
    %v4637 = vunpack.c.l.b16 %v4374
    %v4638 = vunpack.c.l.b16 %v4375
    %v4639 = vunpack.c.l.b16 %v4376
    %v4640 = vunpack.c.l.b16 %v4377
    %v4641 = vunpack.c.l.b16 %v4378
    %v4642 = vunpack.c.l.b16 %v4379
    %v4643 = vunpack.c.l.b16 %v4380
    %v4644 = vunpack.c.l.b16 %v4381
    %v4645 = vunpack.c.l.b16 %v4382
    %v4646 = vunpack.c.l.b16 %v4383
    %v4647 = vunpack.c.l.b16 %v4384
    %v4648 = vunpack.c.l.b16 %v4385
    %v4649 = vunpack.c.l.b16 %v4386
    %v4650 = vunpack.c.l.b16 %v4387
    %v4651 = vunpack.c.l.b16 %v4388
    %v4652 = vunpack.c.l.b16 %v4389
    %v4653 = vunpack.c.l.b16 %v4390
    %v4654 = vunpack.c.l.b16 %v4391
    %v4655 = vunpack.c.l.b16 %v4392
    %v4656 = vunpack.c.l.b16 %v4393
    %v4657 = vunpack.c.l.b16 %v4394
    %v4658 = vunpack.c.l.b16 %v4395
    %v4659 = vunpack.c.l.b16 %v4396
    %v4660 = vunpack.c.l.b16 %v4397
    %v4661 = vunpack.c.l.b16 %v4398
    %v4662 = vunpack.c.l.b16 %v4399
    %v4663 = vunpack.c.l.b16 %v4400
    %v4664 = vunpack.c.l.b16 %v4401
    %v4665 = vunpack.c.l.b16 %v4402
    %v4666 = vunpack.c.l.b16 %v4403
    %v4667 = vunpack.c.l.b16 %v4404
    %v4668 = vunpack.c.l.b16 %v4405
    %v4669 = vunpack.c.l.b16 %v4406
    %v4670 = vunpack.c.l.b16 %v4407
    %v4671 = vunpack.c.l.b16 %v4408
    %v4672 = vunpack.c.l.b16 %v4409
    %v4673 = vunpack.c.l.b16 %v4410
    %v4674 = vunpack.c.l.b16 %v4411
    %v4675 = vunpack.c.l.b16 %v4412
    %v4676 = vunpack.c.l.b16 %v4413
    %v4677 = vunpack.c.l.b16 %v4414
    %v4678 = vunpack.c.l.b16 %v4415
    %v4679 = vunpack.c.l.b16 %v4416
    %v4680 = vunpack.c.l.b16 %v4417
    %v4681 = vunpack.c.l.b16 %v4418
    %v4682 = vunpack.c.l.b16 %v4419
    %v4683 = vunpack.c.l.b16 %v4420
    %v4684 = vunpack.c.l.b16 %v4421
    %v4685 = vunpack.c.l.b16 %v4422
    %v4686 = vunpack.c.l.b16 %v4423
    %v4687 = vunpack.c.l.b16 %v4424
    %v4688 = vunpack.c.l.b16 %v4425
    %v4689 = vunpack.c.l.b16 %v4426
    %v4690 = vunpack.c.l.b16 %v4427
    %v4691 = vunpack.c.l.b16 %v4428
    %v4692 = vunpack.c.l.b16 %v4429
    %v4693 = vunpack.c.l.b16 %v4430
    %v4694 = vunpack.c.l.b16 %v4431
    %v4695 = vunpack.c.l.b16 %v4432
    %v4696 = vunpack.c.l.b16 %v4433
    %v4697 = vunpack.c.l.b16 %v4434
    %v4698 = vunpack.c.l.b16 %v4435
    %v4699 = vunpack.c.l.b16 %v4436
    %v4700 = vunpack.c.l.b16 %v4437
    %v4701 = vunpack.c.l.b16 %v4438
    %v4702 = vunpack.c.l.b16 %v4439
    %v4703 = vunpack.c.l.b16 %v4440
    %v4704 = vunpack.c.l.b16 %v4441
    %v4705 = vpack.c.b16 %v4578, %v4577
    %v4706 = vpack.c.b16 %v4580, %v4579
    %v4707 = vpack.c.b16 %v4582, %v4581
    %v4708 = vpack.c.b16 %v4584, %v4583
    %v4709 = vpack.c.b16 %v4586, %v4585
    %v4710 = vpack.c.b16 %v4588, %v4587
    %v4711 = vpack.c.b16 %v4590, %v4589
    %v4712 = vpack.c.b16 %v4592, %v4591
    %v4713 = vpack.c.b16 %v4594, %v4593
    %v4714 = vpack.c.b16 %v4596, %v4595
    %v4715 = vpack.c.b16 %v4598, %v4597
    %v4716 = vpack.c.b16 %v4600, %v4599
    %v4717 = vpack.c.b16 %v4602, %v4601
    %v4718 = vpack.c.b16 %v4604, %v4603
    %v4719 = vpack.c.b16 %v4606, %v4605
    %v4720 = vpack.c.b16 %v4608, %v4607
    %v4721 = vpack.c.b16 %v4610, %v4609
    %v4722 = vpack.c.b16 %v4612, %v4611
    %v4723 = vpack.c.b16 %v4614, %v4613
    %v4724 = vpack.c.b16 %v4616, %v4615
    %v4725 = vpack.c.b16 %v4618, %v4617
    %v4726 = vpack.c.b16 %v4620, %v4619
    %v4727 = vpack.c.b16 %v4622, %v4621
    %v4728 = vpack.c.b16 %v4624, %v4623
    %v4729 = vpack.c.b16 %v4626, %v4625
    %v4730 = vpack.c.b16 %v4628, %v4627
    %v4731 = vpack.c.b16 %v4630, %v4629
    %v4732 = vpack.c.b16 %v4632, %v4631
    %v4733 = vpack.c.b16 %v4634, %v4633
    %v4734 = vpack.c.b16 %v4636, %v4635
    %v4735 = vpack.c.b16 %v4638, %v4637
    %v4736 = vpack.c.b16 %v4640, %v4639
    %v4737 = vpack.c.b16 %v4642, %v4641
    %v4738 = vpack.c.b16 %v4644, %v4643
    %v4739 = vpack.c.b16 %v4646, %v4645
    %v4740 = vpack.c.b16 %v4648, %v4647
    %v4741 = vpack.c.b16 %v4650, %v4649
    %v4742 = vpack.c.b16 %v4652, %v4651
    %v4743 = vpack.c.b16 %v4654, %v4653
    %v4744 = vpack.c.b16 %v4656, %v4655
    %v4745 = vpack.c.b16 %v4658, %v4657
    %v4746 = vpack.c.b16 %v4660, %v4659
    %v4747 = vpack.c.b16 %v4662, %v4661
    %v4748 = vpack.c.b16 %v4664, %v4663
    %v4749 = vpack.c.b16 %v4666, %v4665
    %v4750 = vpack.c.b16 %v4668, %v4667
    %v4751 = vpack.c.b16 %v4670, %v4669
    %v4752 = vpack.c.b16 %v4672, %v4671
    %v4753 = vpack.c.b16 %v4674, %v4673
    %v4754 = vpack.c.b16 %v4676, %v4675
    %v4755 = vpack.c.b16 %v4678, %v4677
    %v4756 = vpack.c.b16 %v4680, %v4679
    %v4757 = vpack.c.b16 %v4682, %v4681
    %v4758 = vpack.c.b16 %v4684, %v4683
    %v4759 = vpack.c.b16 %v4686, %v4685
    %v4760 = vpack.c.b16 %v4688, %v4687
    %v4761 = vpack.c.b16 %v4690, %v4689
    %v4762 = vpack.c.b16 %v4692, %v4691
    %v4763 = vpack.c.b16 %v4694, %v4693
    %v4764 = vpack.c.b16 %v4696, %v4695
    %v4765 = vpack.c.b16 %v4698, %v4697
    %v4766 = vpack.c.b16 %v4700, %v4699
    %v4767 = vpack.c.b16 %v4702, %v4701
    %v4768 = vpack.c.b16 %v4704, %v4703
    %4833 = vmatprep.subr.bf16.mxu0 0
    %4834 = vmatpush1.bf16.msra.mxu0 %v4705
    %4835 = vmatprep.subr.bf16.mxu0 0
    %4836 = vmatpush1.bf16.msra.mxu0 %v4706
    %4837 = vmatprep.subr.bf16.mxu0 0
    %4838 = vmatpush1.bf16.msra.mxu0 %v4707
    %4839 = vmatprep.subr.bf16.mxu0 0
    %4840 = vmatpush1.bf16.msra.mxu0 %v4708
    %4841 = vmatprep.subr.bf16.mxu0 0
    %4842 = vmatpush1.bf16.msra.mxu0 %v4709
    %4843 = vmatprep.subr.bf16.mxu0 0
    %4844 = vmatpush1.bf16.msra.mxu0 %v4710
    %4845 = vmatprep.subr.bf16.mxu0 0
    %4846 = vmatpush1.bf16.msra.mxu0 %v4711
    %4847 = vmatprep.subr.bf16.mxu0 0
    %4848 = vmatpush1.bf16.msra.mxu0 %v4712
    %4849 = vmatprep.subr.bf16.mxu0 0
    %4850 = vmatpush1.bf16.msra.mxu0 %v4713
    %4851 = vmatprep.subr.bf16.mxu0 0
    %4852 = vmatpush1.bf16.msra.mxu0 %v4714
    %4853 = vmatprep.subr.bf16.mxu0 0
    %4854 = vmatpush1.bf16.msra.mxu0 %v4715
    %4855 = vmatprep.subr.bf16.mxu0 0
    %4856 = vmatpush1.bf16.msra.mxu0 %v4716
    %4857 = vmatprep.subr.bf16.mxu0 0
    %4858 = vmatpush1.bf16.msra.mxu0 %v4717
    %4859 = vmatprep.subr.bf16.mxu0 0
    %4860 = vmatpush1.bf16.msra.mxu0 %v4718
    %4861 = vmatprep.subr.bf16.mxu0 0
    %4862 = vmatpush1.bf16.msra.mxu0 %v4719
    %4863 = vmatprep.subr.bf16.mxu0 0
    %4864 = vmatpush1.bf16.msra.mxu0 %v4720
    %4865 = vmatprep.mubr.bf16.mxu0 %v4010
    %4866 = vmatmul.mubr.bf16.gmra.mrb[0].mxu0 %v3962
    %v4867 = vpop.f32.mrb[0].mxu0
    %v4868 = vadd.f32 %v4447, %v4867
    %v4869 = vpop.f32.mrb[0].mxu0
    %v4870 = vpop.f32.mrb[0].mxu0
    %v4871 = vadd.f32 %v4447, %v4870
    %v4872 = vpop.f32.mrb[0].mxu0
    %4873 = vmatprep.mubr.bf16.mxu0 %v4011
    %4874 = vmatmul.mubr.bf16.gmra.mrb[0].mxu0 %v3963
    %v4875 = vpop.f32.mrb[0].mxu0
    %v4876 = vadd.f32 %v4447, %v4875
    %v4877 = vpop.f32.mrb[0].mxu0
    %v4878 = vpop.f32.mrb[0].mxu0
    %v4879 = vadd.f32 %v4447, %v4878
    %v4880 = vpop.f32.mrb[0].mxu0
    %4881 = vmatprep.mubr.bf16.mxu0 %v4012
    %4882 = vmatmul.mubr.bf16.gmra.mrb[0].mxu0 %v3964
    %v4883 = vpop.f32.mrb[0].mxu0
    %v4884 = vadd.f32 %v4447, %v4883
    %v4885 = vpop.f32.mrb[0].mxu0
    %v4886 = vpop.f32.mrb[0].mxu0
    %v4887 = vadd.f32 %v4447, %v4886
    %v4888 = vpop.f32.mrb[0].mxu0
    %4889 = vmatprep.mubr.bf16.mxu0 %v4013
    %4890 = vmatmul.mubr.bf16.gmra.mrb[0].mxu0 %v3965
    %v4891 = vpop.f32.mrb[0].mxu0
    %v4892 = vadd.f32 %v4447, %v4891
    %v4893 = vpop.f32.mrb[0].mxu0
    %v4894 = vpop.f32.mrb[0].mxu0
    %v4895 = vadd.f32 %v4447, %v4894
    %v4896 = vpop.f32.mrb[0].mxu0
    %4897 = vmatprep.mubr.bf16.mxu0 %v4014
    %4898 = vmatmul.mubr.bf16.gmra.mrb[0].mxu0 %v3966
    %v4899 = vpop.f32.mrb[0].mxu0
    %v4900 = vadd.f32 %v4447, %v4899
    %v4901 = vpop.f32.mrb[0].mxu0
    %v4902 = vpop.f32.mrb[0].mxu0
    %v4903 = vadd.f32 %v4447, %v4902
    %v4904 = vpop.f32.mrb[0].mxu0
    %4905 = vmatprep.mubr.bf16.mxu0 %v4015
    %4906 = vmatmul.mubr.bf16.gmra.mrb[0].mxu0 %v3967
    %v4907 = vpop.f32.mrb[0].mxu0
    %v4908 = vadd.f32 %v4447, %v4907
    %v4909 = vpop.f32.mrb[0].mxu0
    %v4910 = vpop.f32.mrb[0].mxu0
    %v4911 = vadd.f32 %v4447, %v4910
    %v4912 = vpop.f32.mrb[0].mxu0
    %4913 = vmatprep.mubr.bf16.mxu0 %v4016
    %4914 = vmatmul.mubr.bf16.gmra.mrb[0].mxu0 %v3968
    %v4915 = vpop.f32.mrb[0].mxu0
    %v4916 = vadd.f32 %v4447, %v4915
    %v4917 = vpop.f32.mrb[0].mxu0
    %v4918 = vpop.f32.mrb[0].mxu0
    %v4919 = vadd.f32 %v4447, %v4918
    %v4920 = vpop.f32.mrb[0].mxu0
    %4921 = vmatprep.mubr.bf16.mxu0 %v4017
    %4922 = vmatmul.mubr.bf16.gmra.mrb[0].mxu0 %v3969
    %v4923 = vpop.f32.mrb[0].mxu0
    %v4924 = vadd.f32 %v4447, %v4923
    %v4925 = vpop.f32.mrb[0].mxu0
    %v4926 = vpop.f32.mrb[0].mxu0
    %v4927 = vadd.f32 %v4447, %v4926
    %v4928 = vpop.f32.mrb[0].mxu0
    %4929 = vmatprep.mubr.bf16.mxu0 %v4018
    %4930 = vmatmul.mubr.bf16.gmra.mrb[0].mxu0 %v3970
    %v4931 = vpop.f32.mrb[0].mxu0
    %v4932 = vadd.f32 %v4447, %v4931
    %v4933 = vpop.f32.mrb[0].mxu0
    %v4934 = vpop.f32.mrb[0].mxu0
    %v4935 = vadd.f32 %v4447, %v4934
    %v4936 = vpop.f32.mrb[0].mxu0
    %4937 = vmatprep.mubr.bf16.mxu0 %v4019
    %4938 = vmatmul.mubr.bf16.gmra.mrb[0].mxu0 %v3971
    %v4939 = vpop.f32.mrb[0].mxu0
    %v4940 = vadd.f32 %v4447, %v4939
    %v4941 = vpop.f32.mrb[0].mxu0
    %v4942 = vpop.f32.mrb[0].mxu0
    %v4943 = vadd.f32 %v4447, %v4942
    %v4944 = vpop.f32.mrb[0].mxu0
    %4945 = vmatprep.mubr.bf16.mxu0 %v4020
    %4946 = vmatmul.mubr.bf16.gmra.mrb[0].mxu0 %v3972
    %v4947 = vpop.f32.mrb[0].mxu0
    %v4948 = vadd.f32 %v4447, %v4947
    %v4949 = vpop.f32.mrb[0].mxu0
    %v4950 = vpop.f32.mrb[0].mxu0
    %v4951 = vadd.f32 %v4447, %v4950
    %v4952 = vpop.f32.mrb[0].mxu0
    %4953 = vmatprep.mubr.bf16.mxu0 %v4021
    %4954 = vmatmul.mubr.bf16.gmra.mrb[0].mxu0 %v3973
    %v4955 = vpop.f32.mrb[0].mxu0
    %v4956 = vadd.f32 %v4447, %v4955
    %v4957 = vpop.f32.mrb[0].mxu0
    %v4958 = vpop.f32.mrb[0].mxu0
    %v4959 = vadd.f32 %v4447, %v4958
    %v4960 = vpop.f32.mrb[0].mxu0
    %4961 = vmatprep.mubr.bf16.mxu0 %v4022
    %4962 = vmatmul.mubr.bf16.gmra.mrb[0].mxu0 %v3974
    %v4963 = vpop.f32.mrb[0].mxu0
    %v4964 = vadd.f32 %v4447, %v4963
    %v4965 = vpop.f32.mrb[0].mxu0
    %v4966 = vpop.f32.mrb[0].mxu0
    %v4967 = vadd.f32 %v4447, %v4966
    %v4968 = vpop.f32.mrb[0].mxu0
    %4969 = vmatprep.mubr.bf16.mxu0 %v4023
    %4970 = vmatmul.mubr.bf16.gmra.mrb[0].mxu0 %v3975
    %v4971 = vpop.f32.mrb[0].mxu0
    %v4972 = vadd.f32 %v4447, %v4971
    %v4973 = vpop.f32.mrb[0].mxu0
    %v4974 = vpop.f32.mrb[0].mxu0
    %v4975 = vadd.f32 %v4447, %v4974
    %v4976 = vpop.f32.mrb[0].mxu0
    %4977 = vmatprep.mubr.bf16.mxu0 %v4024
    %4978 = vmatmul.mubr.bf16.gmra.mrb[0].mxu0 %v3976
    %v4979 = vpop.f32.mrb[0].mxu0
    %v4980 = vadd.f32 %v4447, %v4979
    %v4981 = vpop.f32.mrb[0].mxu0
    %v4982 = vpop.f32.mrb[0].mxu0
    %v4983 = vadd.f32 %v4447, %v4982
    %v4984 = vpop.f32.mrb[0].mxu0
    %4985 = vmatprep.mubr.bf16.mxu0 %v4025
    %4986 = vmatmul.mubr.bf16.gmra.mrb[0].mxu0 %v3977
    %v4987 = vpop.f32.mrb[0].mxu0
    %v4988 = vadd.f32 %v4447, %v4987
    %v4989 = vpop.f32.mrb[0].mxu0
    %v4990 = vpop.f32.mrb[0].mxu0
    %v4991 = vadd.f32 %v4447, %v4990
    %v4992 = vpop.f32.mrb[0].mxu0
    %4993 = vdwg.mxu0
    %4994 = vmatprep.subr.bf16.mxu0 0
    %4995 = vmatpush1.bf16.msra.mxu0 %v4721
    %4996 = vmatprep.subr.bf16.mxu0 0
    %4997 = vmatpush1.bf16.msra.mxu0 %v4722
    %4998 = vmatprep.subr.bf16.mxu0 0
    %4999 = vmatpush1.bf16.msra.mxu0 %v4723
    %5000 = vmatprep.subr.bf16.mxu0 0
    %5001 = vmatpush1.bf16.msra.mxu0 %v4724
    %5002 = vmatprep.subr.bf16.mxu0 0
    %5003 = vmatpush1.bf16.msra.mxu0 %v4725
    %5004 = vmatprep.subr.bf16.mxu0 0
    %5005 = vmatpush1.bf16.msra.mxu0 %v4726
    %5006 = vmatprep.subr.bf16.mxu0 0
    %5007 = vmatpush1.bf16.msra.mxu0 %v4727
    %5008 = vmatprep.subr.bf16.mxu0 0
    %5009 = vmatpush1.bf16.msra.mxu0 %v4728
    %5010 = vmatprep.subr.bf16.mxu0 0
    %5011 = vmatpush1.bf16.msra.mxu0 %v4729
    %5012 = vmatprep.subr.bf16.mxu0 0
    %5013 = vmatpush1.bf16.msra.mxu0 %v4730
    %5014 = vmatprep.subr.bf16.mxu0 0
    %5015 = vmatpush1.bf16.msra.mxu0 %v4731
    %5016 = vmatprep.subr.bf16.mxu0 0
    %5017 = vmatpush1.bf16.msra.mxu0 %v4732
    %5018 = vmatprep.subr.bf16.mxu0 0
    %5019 = vmatpush1.bf16.msra.mxu0 %v4733
    %5020 = vmatprep.subr.bf16.mxu0 0
    %5021 = vmatpush1.bf16.msra.mxu0 %v4734
    %5022 = vmatprep.subr.bf16.mxu0 0
    %5023 = vmatpush1.bf16.msra.mxu0 %v4735
    %5024 = vmatprep.subr.bf16.mxu0 0
    %5025 = vmatpush1.bf16.msra.mxu0 %v4736
    %5026 = vmatprep.mubr.bf16.mxu0 %v4106
    %5027 = vmatmul.mubr.bf16.gmra.mrb[0].mxu0 %v4058
    %v5028 = vpop.f32.mrb[0].mxu0
    %v5029 = vadd.f32 %v4868, %v5028
    %v5030 = vpop.f32.mrb[0].mxu0
    %v5031 = vpop.f32.mrb[0].mxu0
    %v5032 = vadd.f32 %v4871, %v5031
    %v5033 = vpop.f32.mrb[0].mxu0
    %5034 = vmatprep.mubr.bf16.mxu0 %v4107
    %5035 = vmatmul.mubr.bf16.gmra.mrb[0].mxu0 %v4059
    %v5036 = vpop.f32.mrb[0].mxu0
    %v5037 = vadd.f32 %v4876, %v5036
    %v5038 = vpop.f32.mrb[0].mxu0
    %v5039 = vpop.f32.mrb[0].mxu0
    %v5040 = vadd.f32 %v4879, %v5039
    %v5041 = vpop.f32.mrb[0].mxu0
    %5042 = vmatprep.mubr.bf16.mxu0 %v4108
    %5043 = vmatmul.mubr.bf16.gmra.mrb[0].mxu0 %v4060
    %v5044 = vpop.f32.mrb[0].mxu0
    %v5045 = vadd.f32 %v4884, %v5044
    %v5046 = vpop.f32.mrb[0].mxu0
    %v5047 = vpop.f32.mrb[0].mxu0
    %v5048 = vadd.f32 %v4887, %v5047
    %v5049 = vpop.f32.mrb[0].mxu0
    %5050 = vmatprep.mubr.bf16.mxu0 %v4109
    %5051 = vmatmul.mubr.bf16.gmra.mrb[0].mxu0 %v4061
    %v5052 = vpop.f32.mrb[0].mxu0
    %v5053 = vadd.f32 %v4892, %v5052
    %v5054 = vpop.f32.mrb[0].mxu0
    %v5055 = vpop.f32.mrb[0].mxu0
    %v5056 = vadd.f32 %v4895, %v5055
    %v5057 = vpop.f32.mrb[0].mxu0
    %5058 = vmatprep.mubr.bf16.mxu0 %v4110
    %5059 = vmatmul.mubr.bf16.gmra.mrb[0].mxu0 %v4062
    %v5060 = vpop.f32.mrb[0].mxu0
    %v5061 = vadd.f32 %v4900, %v5060
    %v5062 = vpop.f32.mrb[0].mxu0
    %v5063 = vpop.f32.mrb[0].mxu0
    %v5064 = vadd.f32 %v4903, %v5063
    %v5065 = vpop.f32.mrb[0].mxu0
    %5066 = vmatprep.mubr.bf16.mxu0 %v4111
    %5067 = vmatmul.mubr.bf16.gmra.mrb[0].mxu0 %v4063
    %v5068 = vpop.f32.mrb[0].mxu0
    %v5069 = vadd.f32 %v4908, %v5068
    %v5070 = vpop.f32.mrb[0].mxu0
    %v5071 = vpop.f32.mrb[0].mxu0
    %v5072 = vadd.f32 %v4911, %v5071
    %v5073 = vpop.f32.mrb[0].mxu0
    %5074 = vmatprep.mubr.bf16.mxu0 %v4112
    %5075 = vmatmul.mubr.bf16.gmra.mrb[0].mxu0 %v4064
    %v5076 = vpop.f32.mrb[0].mxu0
    %v5077 = vadd.f32 %v4916, %v5076
    %v5078 = vpop.f32.mrb[0].mxu0
    %v5079 = vpop.f32.mrb[0].mxu0
    %v5080 = vadd.f32 %v4919, %v5079
    %v5081 = vpop.f32.mrb[0].mxu0
    %5082 = vmatprep.mubr.bf16.mxu0 %v4113
    %5083 = vmatmul.mubr.bf16.gmra.mrb[0].mxu0 %v4065
    %v5084 = vpop.f32.mrb[0].mxu0
    %v5085 = vadd.f32 %v4924, %v5084
    %v5086 = vpop.f32.mrb[0].mxu0
    %v5087 = vpop.f32.mrb[0].mxu0
    %v5088 = vadd.f32 %v4927, %v5087
    %v5089 = vpop.f32.mrb[0].mxu0
    %5090 = vmatprep.mubr.bf16.mxu0 %v4114
    %5091 = vmatmul.mubr.bf16.gmra.mrb[0].mxu0 %v4066
    %v5092 = vpop.f32.mrb[0].mxu0
    %v5093 = vadd.f32 %v4932, %v5092
    %v5094 = vpop.f32.mrb[0].mxu0
    %v5095 = vpop.f32.mrb[0].mxu0
    %v5096 = vadd.f32 %v4935, %v5095
    %v5097 = vpop.f32.mrb[0].mxu0
    %5098 = vmatprep.mubr.bf16.mxu0 %v4115
    %5099 = vmatmul.mubr.bf16.gmra.mrb[0].mxu0 %v4067
    %v5100 = vpop.f32.mrb[0].mxu0
    %v5101 = vadd.f32 %v4940, %v5100
    %v5102 = vpop.f32.mrb[0].mxu0
    %v5103 = vpop.f32.mrb[0].mxu0
    %v5104 = vadd.f32 %v4943, %v5103
    %v5105 = vpop.f32.mrb[0].mxu0
    %5106 = vmatprep.mubr.bf16.mxu0 %v4116
    %5107 = vmatmul.mubr.bf16.gmra.mrb[0].mxu0 %v4068
    %v5108 = vpop.f32.mrb[0].mxu0
    %v5109 = vadd.f32 %v4948, %v5108
    %v5110 = vpop.f32.mrb[0].mxu0
    %v5111 = vpop.f32.mrb[0].mxu0
    %v5112 = vadd.f32 %v4951, %v5111
    %v5113 = vpop.f32.mrb[0].mxu0
    %5114 = vmatprep.mubr.bf16.mxu0 %v4117
    %5115 = vmatmul.mubr.bf16.gmra.mrb[0].mxu0 %v4069
    %v5116 = vpop.f32.mrb[0].mxu0
    %v5117 = vadd.f32 %v4956, %v5116
    %v5118 = vpop.f32.mrb[0].mxu0
    %v5119 = vpop.f32.mrb[0].mxu0
    %v5120 = vadd.f32 %v4959, %v5119
    %v5121 = vpop.f32.mrb[0].mxu0
    %5122 = vmatprep.mubr.bf16.mxu0 %v4118
    %5123 = vmatmul.mubr.bf16.gmra.mrb[0].mxu0 %v4070
    %v5124 = vpop.f32.mrb[0].mxu0
    %v5125 = vadd.f32 %v4964, %v5124
    %v5126 = vpop.f32.mrb[0].mxu0
    %v5127 = vpop.f32.mrb[0].mxu0
    %v5128 = vadd.f32 %v4967, %v5127
    %v5129 = vpop.f32.mrb[0].mxu0
    %5130 = vmatprep.mubr.bf16.mxu0 %v4119
    %5131 = vmatmul.mubr.bf16.gmra.mrb[0].mxu0 %v4071
    %v5132 = vpop.f32.mrb[0].mxu0
    %v5133 = vadd.f32 %v4972, %v5132
    %v5134 = vpop.f32.mrb[0].mxu0
    %v5135 = vpop.f32.mrb[0].mxu0
    %v5136 = vadd.f32 %v4975, %v5135
    %v5137 = vpop.f32.mrb[0].mxu0
    %5138 = vmatprep.mubr.bf16.mxu0 %v4120
    %5139 = vmatmul.mubr.bf16.gmra.mrb[0].mxu0 %v4072
    %v5140 = vpop.f32.mrb[0].mxu0
    %v5141 = vadd.f32 %v4980, %v5140
    %v5142 = vpop.f32.mrb[0].mxu0
    %v5143 = vpop.f32.mrb[0].mxu0
    %v5144 = vadd.f32 %v4983, %v5143
    %v5145 = vpop.f32.mrb[0].mxu0
    %5146 = vmatprep.mubr.bf16.mxu0 %v4121
    %5147 = vmatmul.mubr.bf16.gmra.mrb[0].mxu0 %v4073
    %v5148 = vpop.f32.mrb[0].mxu0
    %v5149 = vadd.f32 %v4988, %v5148
    %v5150 = vpop.f32.mrb[0].mxu0
    %v5151 = vpop.f32.mrb[0].mxu0
    %v5152 = vadd.f32 %v4991, %v5151
    %v5153 = vpop.f32.mrb[0].mxu0
    %5154 = vdwg.mxu0
    %5155 = vmatprep.subr.bf16.mxu0 0
    %5156 = vmatpush1.bf16.msra.mxu0 %v4737
    %5157 = vmatprep.subr.bf16.mxu0 0
    %5158 = vmatpush1.bf16.msra.mxu0 %v4738
    %5159 = vmatprep.subr.bf16.mxu0 0
    %5160 = vmatpush1.bf16.msra.mxu0 %v4739
    %5161 = vmatprep.subr.bf16.mxu0 0
    %5162 = vmatpush1.bf16.msra.mxu0 %v4740
    %5163 = vmatprep.subr.bf16.mxu0 0
    %5164 = vmatpush1.bf16.msra.mxu0 %v4741
    %5165 = vmatprep.subr.bf16.mxu0 0
    %5166 = vmatpush1.bf16.msra.mxu0 %v4742
    %5167 = vmatprep.subr.bf16.mxu0 0
    %5168 = vmatpush1.bf16.msra.mxu0 %v4743
    %5169 = vmatprep.subr.bf16.mxu0 0
    %5170 = vmatpush1.bf16.msra.mxu0 %v4744
    %5171 = vmatprep.subr.bf16.mxu0 0
    %5172 = vmatpush1.bf16.msra.mxu0 %v4745
    %5173 = vmatprep.subr.bf16.mxu0 0
    %5174 = vmatpush1.bf16.msra.mxu0 %v4746
    %5175 = vmatprep.subr.bf16.mxu0 0
    %5176 = vmatpush1.bf16.msra.mxu0 %v4747
    %5177 = vmatprep.subr.bf16.mxu0 0
    %5178 = vmatpush1.bf16.msra.mxu0 %v4748
    %5179 = vmatprep.subr.bf16.mxu0 0
    %5180 = vmatpush1.bf16.msra.mxu0 %v4749
    %5181 = vmatprep.subr.bf16.mxu0 0
    %5182 = vmatpush1.bf16.msra.mxu0 %v4750
    %5183 = vmatprep.subr.bf16.mxu0 0
    %5184 = vmatpush1.bf16.msra.mxu0 %v4751
    %5185 = vmatprep.subr.bf16.mxu0 0
    %5186 = vmatpush1.bf16.msra.mxu0 %v4752
    %5187 = vmatprep.mubr.bf16.mxu0 %v4202
    %5188 = vmatmul.mubr.bf16.gmra.mrb[0].mxu0 %v4154
    %v5189 = vpop.f32.mrb[0].mxu0
    %v5190 = vadd.f32 %v5029, %v5189
    %v5191 = vpop.f32.mrb[0].mxu0
    %v5192 = vpop.f32.mrb[0].mxu0
    %v5193 = vadd.f32 %v5032, %v5192
    %v5194 = vpop.f32.mrb[0].mxu0
    %5195 = vmatprep.mubr.bf16.mxu0 %v4203
    %5196 = vmatmul.mubr.bf16.gmra.mrb[0].mxu0 %v4155
    %v5197 = vpop.f32.mrb[0].mxu0
    %v5198 = vadd.f32 %v5037, %v5197
    %v5199 = vpop.f32.mrb[0].mxu0
    %v5200 = vpop.f32.mrb[0].mxu0
    %v5201 = vadd.f32 %v5040, %v5200
    %v5202 = vpop.f32.mrb[0].mxu0
    %5203 = vmatprep.mubr.bf16.mxu0 %v4204
    %5204 = vmatmul.mubr.bf16.gmra.mrb[0].mxu0 %v4156
    %v5205 = vpop.f32.mrb[0].mxu0
    %v5206 = vadd.f32 %v5045, %v5205
    %v5207 = vpop.f32.mrb[0].mxu0
    %v5208 = vpop.f32.mrb[0].mxu0
    %v5209 = vadd.f32 %v5048, %v5208
    %v5210 = vpop.f32.mrb[0].mxu0
    %5211 = vmatprep.mubr.bf16.mxu0 %v4205
    %5212 = vmatmul.mubr.bf16.gmra.mrb[0].mxu0 %v4157
    %v5213 = vpop.f32.mrb[0].mxu0
    %v5214 = vadd.f32 %v5053, %v5213
    %v5215 = vpop.f32.mrb[0].mxu0
    %v5216 = vpop.f32.mrb[0].mxu0
    %v5217 = vadd.f32 %v5056, %v5216
    %v5218 = vpop.f32.mrb[0].mxu0
    %5219 = vmatprep.mubr.bf16.mxu0 %v4206
    %5220 = vmatmul.mubr.bf16.gmra.mrb[0].mxu0 %v4158
    %v5221 = vpop.f32.mrb[0].mxu0
    %v5222 = vadd.f32 %v5061, %v5221
    %v5223 = vpop.f32.mrb[0].mxu0
    %v5224 = vpop.f32.mrb[0].mxu0
    %v5225 = vadd.f32 %v5064, %v5224
    %v5226 = vpop.f32.mrb[0].mxu0
    %5227 = vmatprep.mubr.bf16.mxu0 %v4207
    %5228 = vmatmul.mubr.bf16.gmra.mrb[0].mxu0 %v4159
    %v5229 = vpop.f32.mrb[0].mxu0
    %v5230 = vadd.f32 %v5069, %v5229
    %v5231 = vpop.f32.mrb[0].mxu0
    %v5232 = vpop.f32.mrb[0].mxu0
    %v5233 = vadd.f32 %v5072, %v5232
    %v5234 = vpop.f32.mrb[0].mxu0
    %5235 = vmatprep.mubr.bf16.mxu0 %v4208
    %5236 = vmatmul.mubr.bf16.gmra.mrb[0].mxu0 %v4160
    %v5237 = vpop.f32.mrb[0].mxu0
    %v5238 = vadd.f32 %v5077, %v5237
    %v5239 = vpop.f32.mrb[0].mxu0
    %v5240 = vpop.f32.mrb[0].mxu0
    %v5241 = vadd.f32 %v5080, %v5240
    %v5242 = vpop.f32.mrb[0].mxu0
    %5243 = vmatprep.mubr.bf16.mxu0 %v4209
    %5244 = vmatmul.mubr.bf16.gmra.mrb[0].mxu0 %v4161
    %v5245 = vpop.f32.mrb[0].mxu0
    %v5246 = vadd.f32 %v5085, %v5245
    %v5247 = vpop.f32.mrb[0].mxu0
    %v5248 = vpop.f32.mrb[0].mxu0
    %v5249 = vadd.f32 %v5088, %v5248
    %v5250 = vpop.f32.mrb[0].mxu0
    %5251 = vmatprep.mubr.bf16.mxu0 %v4210
    %5252 = vmatmul.mubr.bf16.gmra.mrb[0].mxu0 %v4162
    %v5253 = vpop.f32.mrb[0].mxu0
    %v5254 = vadd.f32 %v5093, %v5253
    %v5255 = vpop.f32.mrb[0].mxu0
    %v5256 = vpop.f32.mrb[0].mxu0
    %v5257 = vadd.f32 %v5096, %v5256
    %v5258 = vpop.f32.mrb[0].mxu0
    %5259 = vmatprep.mubr.bf16.mxu0 %v4211
    %5260 = vmatmul.mubr.bf16.gmra.mrb[0].mxu0 %v4163
    %v5261 = vpop.f32.mrb[0].mxu0
    %v5262 = vadd.f32 %v5101, %v5261
    %v5263 = vpop.f32.mrb[0].mxu0
    %v5264 = vpop.f32.mrb[0].mxu0
    %v5265 = vadd.f32 %v5104, %v5264
    %v5266 = vpop.f32.mrb[0].mxu0
    %5267 = vmatprep.mubr.bf16.mxu0 %v4212
    %5268 = vmatmul.mubr.bf16.gmra.mrb[0].mxu0 %v4164
    %v5269 = vpop.f32.mrb[0].mxu0
    %v5270 = vadd.f32 %v5109, %v5269
    %v5271 = vpop.f32.mrb[0].mxu0
    %v5272 = vpop.f32.mrb[0].mxu0
    %v5273 = vadd.f32 %v5112, %v5272
    %v5274 = vpop.f32.mrb[0].mxu0
    %5275 = vmatprep.mubr.bf16.mxu0 %v4213
    %5276 = vmatmul.mubr.bf16.gmra.mrb[0].mxu0 %v4165
    %v5277 = vpop.f32.mrb[0].mxu0
    %v5278 = vadd.f32 %v5117, %v5277
    %v5279 = vpop.f32.mrb[0].mxu0
    %v5280 = vpop.f32.mrb[0].mxu0
    %v5281 = vadd.f32 %v5120, %v5280
    %v5282 = vpop.f32.mrb[0].mxu0
    %5283 = vmatprep.mubr.bf16.mxu0 %v4214
    %5284 = vmatmul.mubr.bf16.gmra.mrb[0].mxu0 %v4166
    %v5285 = vpop.f32.mrb[0].mxu0
    %v5286 = vadd.f32 %v5125, %v5285
    %v5287 = vpop.f32.mrb[0].mxu0
    %v5288 = vpop.f32.mrb[0].mxu0
    %v5289 = vadd.f32 %v5128, %v5288
    %v5290 = vpop.f32.mrb[0].mxu0
    %5291 = vmatprep.mubr.bf16.mxu0 %v4215
    %5292 = vmatmul.mubr.bf16.gmra.mrb[0].mxu0 %v4167
    %v5293 = vpop.f32.mrb[0].mxu0
    %v5294 = vadd.f32 %v5133, %v5293
    %v5295 = vpop.f32.mrb[0].mxu0
    %v5296 = vpop.f32.mrb[0].mxu0
    %v5297 = vadd.f32 %v5136, %v5296
    %v5298 = vpop.f32.mrb[0].mxu0
    %5299 = vmatprep.mubr.bf16.mxu0 %v4216
    %5300 = vmatmul.mubr.bf16.gmra.mrb[0].mxu0 %v4168
    %v5301 = vpop.f32.mrb[0].mxu0
    %v5302 = vadd.f32 %v5141, %v5301
    %v5303 = vpop.f32.mrb[0].mxu0
    %v5304 = vpop.f32.mrb[0].mxu0
    %v5305 = vadd.f32 %v5144, %v5304
    %v5306 = vpop.f32.mrb[0].mxu0
    %5307 = vmatprep.mubr.bf16.mxu0 %v4217
    %5308 = vmatmul.mubr.bf16.gmra.mrb[0].mxu0 %v4169
    %v5309 = vpop.f32.mrb[0].mxu0
    %v5310 = vadd.f32 %v5149, %v5309
    %v5311 = vpop.f32.mrb[0].mxu0
    %v5312 = vpop.f32.mrb[0].mxu0
    %v5313 = vadd.f32 %v5152, %v5312
    %v5314 = vpop.f32.mrb[0].mxu0
    %5315 = vdwg.mxu0
    %5316 = vmatprep.subr.bf16.mxu0 0
    %5317 = vmatpush1.bf16.msra.mxu0 %v4753
    %5318 = vmatprep.subr.bf16.mxu0 0
    %5319 = vmatpush1.bf16.msra.mxu0 %v4754
    %5320 = vmatprep.subr.bf16.mxu0 0
    %5321 = vmatpush1.bf16.msra.mxu0 %v4755
    %5322 = vmatprep.subr.bf16.mxu0 0
    %5323 = vmatpush1.bf16.msra.mxu0 %v4756
    %5324 = vmatprep.subr.bf16.mxu0 0
    %5325 = vmatpush1.bf16.msra.mxu0 %v4757
    %5326 = vmatprep.subr.bf16.mxu0 0
    %5327 = vmatpush1.bf16.msra.mxu0 %v4758
    %5328 = vmatprep.subr.bf16.mxu0 0
    %5329 = vmatpush1.bf16.msra.mxu0 %v4759
    %5330 = vmatprep.subr.bf16.mxu0 0
    %5331 = vmatpush1.bf16.msra.mxu0 %v4760
    %5332 = vmatprep.subr.bf16.mxu0 0
    %5333 = vmatpush1.bf16.msra.mxu0 %v4761
    %5334 = vmatprep.subr.bf16.mxu0 0
    %5335 = vmatpush1.bf16.msra.mxu0 %v4762
    %5336 = vmatprep.subr.bf16.mxu0 0
    %5337 = vmatpush1.bf16.msra.mxu0 %v4763
    %5338 = vmatprep.subr.bf16.mxu0 0
    %5339 = vmatpush1.bf16.msra.mxu0 %v4764
    %5340 = vmatprep.subr.bf16.mxu0 0
    %5341 = vmatpush1.bf16.msra.mxu0 %v4765
    %5342 = vmatprep.subr.bf16.mxu0 0
    %5343 = vmatpush1.bf16.msra.mxu0 %v4766
    %5344 = vmatprep.subr.bf16.mxu0 0
    %5345 = vmatpush1.bf16.msra.mxu0 %v4767
    %5346 = vmatprep.subr.bf16.mxu0 0
    %5347 = vmatpush1.bf16.msra.mxu0 %v4768
    %5348 = vmatprep.mubr.bf16.mxu0 %v4298
    %5349 = vmatmul.mubr.bf16.gmra.mrb[0].mxu0 %v4250
    %v5350 = vpop.f32.mrb[0].mxu0
    %v5351 = vadd.f32 %v5190, %v5350
    %v5352 = vpop.f32.mrb[0].mxu0
    %v5353 = vpop.f32.mrb[0].mxu0
    %v5354 = vadd.f32 %v5193, %v5353
    %v5355 = vpop.f32.mrb[0].mxu0
    %5356 = vmatprep.mubr.bf16.mxu0 %v4299
    %5357 = vmatmul.mubr.bf16.gmra.mrb[0].mxu0 %v4251
    %v5358 = vpop.f32.mrb[0].mxu0
    %v5359 = vadd.f32 %v5198, %v5358
    %v5360 = vpop.f32.mrb[0].mxu0
    %v5361 = vpop.f32.mrb[0].mxu0
    %v5362 = vadd.f32 %v5201, %v5361
    %v5363 = vpop.f32.mrb[0].mxu0
    %5364 = vmatprep.mubr.bf16.mxu0 %v4300
    %5365 = vmatmul.mubr.bf16.gmra.mrb[0].mxu0 %v4252
    %v5366 = vpop.f32.mrb[0].mxu0
    %v5367 = vadd.f32 %v5206, %v5366
    %v5368 = vpop.f32.mrb[0].mxu0
    %v5369 = vpop.f32.mrb[0].mxu0
    %v5370 = vadd.f32 %v5209, %v5369
    %v5371 = vpop.f32.mrb[0].mxu0
    %5372 = vmatprep.mubr.bf16.mxu0 %v4301
    %5373 = vmatmul.mubr.bf16.gmra.mrb[0].mxu0 %v4253
    %v5374 = vpop.f32.mrb[0].mxu0
    %v5375 = vadd.f32 %v5214, %v5374
    %v5376 = vpop.f32.mrb[0].mxu0
    %v5377 = vpop.f32.mrb[0].mxu0
    %v5378 = vadd.f32 %v5217, %v5377
    %v5379 = vpop.f32.mrb[0].mxu0
    %5380 = vmatprep.mubr.bf16.mxu0 %v4302
    %5381 = vmatmul.mubr.bf16.gmra.mrb[0].mxu0 %v4254
    %v5382 = vpop.f32.mrb[0].mxu0
    %v5383 = vadd.f32 %v5222, %v5382
    %v5384 = vpop.f32.mrb[0].mxu0
    %v5385 = vpop.f32.mrb[0].mxu0
    %v5386 = vadd.f32 %v5225, %v5385
    %v5387 = vpop.f32.mrb[0].mxu0
    %5388 = vmatprep.mubr.bf16.mxu0 %v4303
    %5389 = vmatmul.mubr.bf16.gmra.mrb[0].mxu0 %v4255
    %v5390 = vpop.f32.mrb[0].mxu0
    %v5391 = vadd.f32 %v5230, %v5390
    %v5392 = vpop.f32.mrb[0].mxu0
    %v5393 = vpop.f32.mrb[0].mxu0
    %v5394 = vadd.f32 %v5233, %v5393
    %v5395 = vpop.f32.mrb[0].mxu0
    %5396 = vmatprep.mubr.bf16.mxu0 %v4304
    %5397 = vmatmul.mubr.bf16.gmra.mrb[0].mxu0 %v4256
    %v5398 = vpop.f32.mrb[0].mxu0
    %v5399 = vadd.f32 %v5238, %v5398
    %v5400 = vpop.f32.mrb[0].mxu0
    %v5401 = vpop.f32.mrb[0].mxu0
    %v5402 = vadd.f32 %v5241, %v5401
    %v5403 = vpop.f32.mrb[0].mxu0
    %5404 = vmatprep.mubr.bf16.mxu0 %v4305
    %5405 = vmatmul.mubr.bf16.gmra.mrb[0].mxu0 %v4257
    %v5406 = vpop.f32.mrb[0].mxu0
    %v5407 = vadd.f32 %v5246, %v5406
    %v5408 = vpop.f32.mrb[0].mxu0
    %v5409 = vpop.f32.mrb[0].mxu0
    %v5410 = vadd.f32 %v5249, %v5409
    %v5411 = vpop.f32.mrb[0].mxu0
    %5412 = vmatprep.mubr.bf16.mxu0 %v4306
    %5413 = vmatmul.mubr.bf16.gmra.mrb[0].mxu0 %v4258
    %v5414 = vpop.f32.mrb[0].mxu0
    %v5415 = vadd.f32 %v5254, %v5414
    %v5416 = vpop.f32.mrb[0].mxu0
    %v5417 = vpop.f32.mrb[0].mxu0
    %v5418 = vadd.f32 %v5257, %v5417
    %v5419 = vpop.f32.mrb[0].mxu0
    %5420 = vmatprep.mubr.bf16.mxu0 %v4307
    %5421 = vmatmul.mubr.bf16.gmra.mrb[0].mxu0 %v4259
    %v5422 = vpop.f32.mrb[0].mxu0
    %v5423 = vadd.f32 %v5262, %v5422
    %v5424 = vpop.f32.mrb[0].mxu0
    %v5425 = vpop.f32.mrb[0].mxu0
    %v5426 = vadd.f32 %v5265, %v5425
    %v5427 = vpop.f32.mrb[0].mxu0
    %5428 = vmatprep.mubr.bf16.mxu0 %v4308
    %5429 = vmatmul.mubr.bf16.gmra.mrb[0].mxu0 %v4260
    %v5430 = vpop.f32.mrb[0].mxu0
    %v5431 = vadd.f32 %v5270, %v5430
    %v5432 = vpop.f32.mrb[0].mxu0
    %v5433 = vpop.f32.mrb[0].mxu0
    %v5434 = vadd.f32 %v5273, %v5433
    %v5435 = vpop.f32.mrb[0].mxu0
    %5436 = vmatprep.mubr.bf16.mxu0 %v4309
    %5437 = vmatmul.mubr.bf16.gmra.mrb[0].mxu0 %v4261
    %v5438 = vpop.f32.mrb[0].mxu0
    %v5439 = vadd.f32 %v5278, %v5438
    %v5440 = vpop.f32.mrb[0].mxu0
    %v5441 = vpop.f32.mrb[0].mxu0
    %v5442 = vadd.f32 %v5281, %v5441
    %v5443 = vpop.f32.mrb[0].mxu0
    %5444 = vmatprep.mubr.bf16.mxu0 %v4310
    %5445 = vmatmul.mubr.bf16.gmra.mrb[0].mxu0 %v4262
    %v5446 = vpop.f32.mrb[0].mxu0
    %v5447 = vadd.f32 %v5286, %v5446
    %v5448 = vpop.f32.mrb[0].mxu0
    %v5449 = vpop.f32.mrb[0].mxu0
    %v5450 = vadd.f32 %v5289, %v5449
    %v5451 = vpop.f32.mrb[0].mxu0
    %5452 = vmatprep.mubr.bf16.mxu0 %v4311
    %5453 = vmatmul.mubr.bf16.gmra.mrb[0].mxu0 %v4263
    %v5454 = vpop.f32.mrb[0].mxu0
    %v5455 = vadd.f32 %v5294, %v5454
    %v5456 = vpop.f32.mrb[0].mxu0
    %v5457 = vpop.f32.mrb[0].mxu0
    %v5458 = vadd.f32 %v5297, %v5457
    %v5459 = vpop.f32.mrb[0].mxu0
    %5460 = vmatprep.mubr.bf16.mxu0 %v4312
    %5461 = vmatmul.mubr.bf16.gmra.mrb[0].mxu0 %v4264
    %v5462 = vpop.f32.mrb[0].mxu0
    %v5463 = vadd.f32 %v5302, %v5462
    %v5464 = vpop.f32.mrb[0].mxu0
    %v5465 = vpop.f32.mrb[0].mxu0
    %v5466 = vadd.f32 %v5305, %v5465
    %v5467 = vpop.f32.mrb[0].mxu0
    %5468 = vmatprep.mubr.bf16.mxu0 %v4313
    %5469 = vmatmul.mubr.bf16.gmra.mrb[0].mxu0 %v4265
    %v5470 = vpop.f32.mrb[0].mxu0
    %v5471 = vadd.f32 %v5310, %v5470
    %v5472 = vpop.f32.mrb[0].mxu0
    %v5473 = vpop.f32.mrb[0].mxu0
    %v5474 = vadd.f32 %v5313, %v5473
    %v5475 = vpop.f32.mrb[0].mxu0
    %5476 = vdwg.mxu0
    %v5477 = vmax.f32 %v5351, 0.0
    %v5478 = vmax.f32 %v5354, 0.0
    %v5479 = vmax.f32 %v5359, 0.0
    %v5480 = vmax.f32 %v5362, 0.0
    %v5481 = vmax.f32 %v5367, 0.0
    %v5482 = vmax.f32 %v5370, 0.0
    %v5483 = vmax.f32 %v5375, 0.0
    %v5484 = vmax.f32 %v5378, 0.0
    %v5485 = vmax.f32 %v5383, 0.0
    %v5486 = vmax.f32 %v5386, 0.0
    %v5487 = vmax.f32 %v5391, 0.0
    %v5488 = vmax.f32 %v5394, 0.0
    %v5489 = vmax.f32 %v5399, 0.0
    %v5490 = vmax.f32 %v5402, 0.0
    %v5491 = vmax.f32 %v5407, 0.0
    %v5492 = vmax.f32 %v5410, 0.0
    %v5493 = vmax.f32 %v5415, 0.0
    %v5494 = vmax.f32 %v5418, 0.0
    %v5495 = vmax.f32 %v5423, 0.0
    %v5496 = vmax.f32 %v5426, 0.0
    %v5497 = vmax.f32 %v5431, 0.0
    %v5498 = vmax.f32 %v5434, 0.0
    %v5499 = vmax.f32 %v5439, 0.0
    %v5500 = vmax.f32 %v5442, 0.0
    %v5501 = vmax.f32 %v5447, 0.0
    %v5502 = vmax.f32 %v5450, 0.0
    %v5503 = vmax.f32 %v5455, 0.0
    %v5504 = vmax.f32 %v5458, 0.0
    %v5505 = vmax.f32 %v5463, 0.0
    %v5506 = vmax.f32 %v5466, 0.0
    %v5507 = vmax.f32 %v5471, 0.0
    %v5508 = vmax.f32 %v5474, 0.0
    %vm5509 = vcmask 31744
    %v5510 = vsel %vm5509, %v5477, 0.0
    %v5511 = vsel %vm5509, %v5478, 0.0
    %v5512 = vadd.f32 %v5510, %v5511
    %v5513 = vsel %vm5509, %v5479, 0.0
    %v5514 = vadd.f32 %v5512, %v5513
    %v5515 = vsel %vm5509, %v5480, 0.0
    %v5516 = vadd.f32 %v5514, %v5515
    %v5517 = vsel %vm5509, %v5481, 0.0
    %v5518 = vadd.f32 %v5516, %v5517
    %v5519 = vsel %vm5509, %v5482, 0.0
    %v5520 = vadd.f32 %v5518, %v5519
    %v5521 = vsel %vm5509, %v5483, 0.0
    %v5522 = vadd.f32 %v5520, %v5521
    %v5523 = vsel %vm5509, %v5484, 0.0
    %v5524 = vadd.f32 %v5522, %v5523
    %v5525 = vsel %vm5509, %v5485, 0.0
    %v5526 = vadd.f32 %v5524, %v5525
    %v5527 = vsel %vm5509, %v5486, 0.0
    %v5528 = vadd.f32 %v5526, %v5527
    %v5529 = vsel %vm5509, %v5487, 0.0
    %v5530 = vadd.f32 %v5528, %v5529
    %v5531 = vsel %vm5509, %v5488, 0.0
    %v5532 = vadd.f32 %v5530, %v5531
    %v5533 = vsel %vm5509, %v5489, 0.0
    %v5534 = vadd.f32 %v5532, %v5533
    %v5535 = vsel %vm5509, %v5490, 0.0
    %v5536 = vadd.f32 %v5534, %v5535
    %v5537 = vsel %vm5509, %v5491, 0.0
    %v5538 = vadd.f32 %v5536, %v5537
    %v5539 = vsel %vm5509, %v5492, 0.0
    %v5540 = vadd.f32 %v5538, %v5539
    %v5541 = vsel %vm5509, %v5493, 0.0
    %v5542 = vadd.f32 %v5540, %v5541
    %v5543 = vsel %vm5509, %v5494, 0.0
    %v5544 = vadd.f32 %v5542, %v5543
    %v5545 = vsel %vm5509, %v5495, 0.0
    %v5546 = vadd.f32 %v5544, %v5545
    %v5547 = vsel %vm5509, %v5496, 0.0
    %v5548 = vadd.f32 %v5546, %v5547
    %v5549 = vsel %vm5509, %v5497, 0.0
    %v5550 = vadd.f32 %v5548, %v5549
    %v5551 = vsel %vm5509, %v5498, 0.0
    %v5552 = vadd.f32 %v5550, %v5551
    %v5553 = vsel %vm5509, %v5499, 0.0
    %v5554 = vadd.f32 %v5552, %v5553
    %v5555 = vsel %vm5509, %v5500, 0.0
    %v5556 = vadd.f32 %v5554, %v5555
    %v5557 = vsel %vm5509, %v5501, 0.0
    %v5558 = vadd.f32 %v5556, %v5557
    %v5559 = vsel %vm5509, %v5502, 0.0
    %v5560 = vadd.f32 %v5558, %v5559
    %v5561 = vsel %vm5509, %v5503, 0.0
    %v5562 = vadd.f32 %v5560, %v5561
    %v5563 = vsel %vm5509, %v5504, 0.0
    %v5564 = vadd.f32 %v5562, %v5563
    %v5565 = vsel %vm5509, %v5505, 0.0
    %v5566 = vadd.f32 %v5564, %v5565
    %v5567 = vsel %vm5509, %v5506, 0.0
    %v5568 = vadd.f32 %v5566, %v5567
    %v5569 = vsel %vm5509, %v5507, 0.0
    %v5570 = vadd.f32 %v5568, %v5569
    %v5571 = vsel %vm5509, %v5508, 0.0
    %v5572 = vadd.f32 %v5570, %v5571
    %v5573 = vrot.slane %v5572, 4
    %v5574 = vadd.f32 %v5572, %v5573
    %v5575 = vrot.slane %v5574, 2
    %v5576 = vadd.f32 %v5574, %v5575
    %v5577 = vrot.slane %v5576, 1
    %v5578 = vadd.f32 %v5576, %v5577
    %v5579 = vmul.f32 %v5477, %v5477
    %v5580 = vmul.f32 %v5478, %v5478
    %v5581 = vmul.f32 %v5479, %v5479
    %v5582 = vmul.f32 %v5480, %v5480
    %v5583 = vmul.f32 %v5481, %v5481
    %v5584 = vmul.f32 %v5482, %v5482
    %v5585 = vmul.f32 %v5483, %v5483
    %v5586 = vmul.f32 %v5484, %v5484
    %v5587 = vmul.f32 %v5485, %v5485
    %v5588 = vmul.f32 %v5486, %v5486
    %v5589 = vmul.f32 %v5487, %v5487
    %v5590 = vmul.f32 %v5488, %v5488
    %v5591 = vmul.f32 %v5489, %v5489
    %v5592 = vmul.f32 %v5490, %v5490
    %v5593 = vmul.f32 %v5491, %v5491
    %v5594 = vmul.f32 %v5492, %v5492
    %v5595 = vmul.f32 %v5493, %v5493
    %v5596 = vmul.f32 %v5494, %v5494
    %v5597 = vmul.f32 %v5495, %v5495
    %v5598 = vmul.f32 %v5496, %v5496
    %v5599 = vmul.f32 %v5497, %v5497
    %v5600 = vmul.f32 %v5498, %v5498
    %v5601 = vmul.f32 %v5499, %v5499
    %v5602 = vmul.f32 %v5500, %v5500
    %v5603 = vmul.f32 %v5501, %v5501
    %v5604 = vmul.f32 %v5502, %v5502
    %v5605 = vmul.f32 %v5503, %v5503
    %v5606 = vmul.f32 %v5504, %v5504
    %v5607 = vmul.f32 %v5505, %v5505
    %v5608 = vmul.f32 %v5506, %v5506
    %v5609 = vmul.f32 %v5507, %v5507
    %v5610 = vmul.f32 %v5508, %v5508
    %v5611 = vsel %vm5509, %v5579, 0.0
    %v5612 = vsel %vm5509, %v5580, 0.0
    %v5613 = vadd.f32 %v5611, %v5612
    %v5614 = vsel %vm5509, %v5581, 0.0
    %v5615 = vadd.f32 %v5613, %v5614
    %v5616 = vsel %vm5509, %v5582, 0.0
    %v5617 = vadd.f32 %v5615, %v5616
    %v5618 = vsel %vm5509, %v5583, 0.0
    %v5619 = vadd.f32 %v5617, %v5618
    %v5620 = vsel %vm5509, %v5584, 0.0
    %v5621 = vadd.f32 %v5619, %v5620
    %v5622 = vsel %vm5509, %v5585, 0.0
    %v5623 = vadd.f32 %v5621, %v5622
    %v5624 = vsel %vm5509, %v5586, 0.0
    %v5625 = vadd.f32 %v5623, %v5624
    %v5626 = vsel %vm5509, %v5587, 0.0
    %v5627 = vadd.f32 %v5625, %v5626
    %v5628 = vsel %vm5509, %v5588, 0.0
    %v5629 = vadd.f32 %v5627, %v5628
    %v5630 = vsel %vm5509, %v5589, 0.0
    %v5631 = vadd.f32 %v5629, %v5630
    %v5632 = vsel %vm5509, %v5590, 0.0
    %v5633 = vadd.f32 %v5631, %v5632
    %v5634 = vsel %vm5509, %v5591, 0.0
    %v5635 = vadd.f32 %v5633, %v5634
    %v5636 = vsel %vm5509, %v5592, 0.0
    %v5637 = vadd.f32 %v5635, %v5636
    %v5638 = vsel %vm5509, %v5593, 0.0
    %v5639 = vadd.f32 %v5637, %v5638
    %v5640 = vsel %vm5509, %v5594, 0.0
    %v5641 = vadd.f32 %v5639, %v5640
    %v5642 = vsel %vm5509, %v5595, 0.0
    %v5643 = vadd.f32 %v5641, %v5642
    %v5644 = vsel %vm5509, %v5596, 0.0
    %v5645 = vadd.f32 %v5643, %v5644
    %v5646 = vsel %vm5509, %v5597, 0.0
    %v5647 = vadd.f32 %v5645, %v5646
    %v5648 = vsel %vm5509, %v5598, 0.0
    %v5649 = vadd.f32 %v5647, %v5648
    %v5650 = vsel %vm5509, %v5599, 0.0
    %v5651 = vadd.f32 %v5649, %v5650
    %v5652 = vsel %vm5509, %v5600, 0.0
    %v5653 = vadd.f32 %v5651, %v5652
    %v5654 = vsel %vm5509, %v5601, 0.0
    %v5655 = vadd.f32 %v5653, %v5654
    %v5656 = vsel %vm5509, %v5602, 0.0
    %v5657 = vadd.f32 %v5655, %v5656
    %v5658 = vsel %vm5509, %v5603, 0.0
    %v5659 = vadd.f32 %v5657, %v5658
    %v5660 = vsel %vm5509, %v5604, 0.0
    %v5661 = vadd.f32 %v5659, %v5660
    %v5662 = vsel %vm5509, %v5605, 0.0
    %v5663 = vadd.f32 %v5661, %v5662
    %v5664 = vsel %vm5509, %v5606, 0.0
    %v5665 = vadd.f32 %v5663, %v5664
    %v5666 = vsel %vm5509, %v5607, 0.0
    %v5667 = vadd.f32 %v5665, %v5666
    %v5668 = vsel %vm5509, %v5608, 0.0
    %v5669 = vadd.f32 %v5667, %v5668
    %v5670 = vsel %vm5509, %v5609, 0.0
    %v5671 = vadd.f32 %v5669, %v5670
    %v5672 = vsel %vm5509, %v5610, 0.0
    %v5673 = vadd.f32 %v5671, %v5672
    %v5674 = vrot.slane %v5673, 4
    %v5675 = vadd.f32 %v5673, %v5674
    %v5676 = vrot.slane %v5675, 2
    %v5677 = vadd.f32 %v5675, %v5676
    %v5678 = vrot.slane %v5677, 1
    %v5679 = vadd.f32 %v5677, %v5678
    %v5680 = vmul.f32 %v5578, 0.00390625
    %v5681 = vmul.f32 %v5679, 0.00390625
    %v5682 = vmul.f32 %v5680, %v5680
    %v5683 = vsub.f32 %v5681, %v5682
    %v5684 = vsub.f32 %v5477, %v5680
    %v5685 = vsub.f32 %v5478, %v5680
    %v5686 = vsub.f32 %v5479, %v5680
    %v5687 = vsub.f32 %v5480, %v5680
    %v5688 = vsub.f32 %v5481, %v5680
    %v5689 = vsub.f32 %v5482, %v5680
    %v5690 = vsub.f32 %v5483, %v5680
    %v5691 = vsub.f32 %v5484, %v5680
    %v5692 = vsub.f32 %v5485, %v5680
    %v5693 = vsub.f32 %v5486, %v5680
    %v5694 = vsub.f32 %v5487, %v5680
    %v5695 = vsub.f32 %v5488, %v5680
    %v5696 = vsub.f32 %v5489, %v5680
    %v5697 = vsub.f32 %v5490, %v5680
    %v5698 = vsub.f32 %v5491, %v5680
    %v5699 = vsub.f32 %v5492, %v5680
    %v5700 = vsub.f32 %v5493, %v5680
    %v5701 = vsub.f32 %v5494, %v5680
    %v5702 = vsub.f32 %v5495, %v5680
    %v5703 = vsub.f32 %v5496, %v5680
    %v5704 = vsub.f32 %v5497, %v5680
    %v5705 = vsub.f32 %v5498, %v5680
    %v5706 = vsub.f32 %v5499, %v5680
    %v5707 = vsub.f32 %v5500, %v5680
    %v5708 = vsub.f32 %v5501, %v5680
    %v5709 = vsub.f32 %v5502, %v5680
    %v5710 = vsub.f32 %v5503, %v5680
    %v5711 = vsub.f32 %v5504, %v5680
    %v5712 = vsub.f32 %v5505, %v5680
    %v5713 = vsub.f32 %v5506, %v5680
    %v5714 = vsub.f32 %v5507, %v5680
    %v5715 = vsub.f32 %v5508, %v5680
    %v5716 = vadd.f32 %v5683, 1e-05
    %v5717 = vrsqrt.pop %v5716
    %v5718 = vmul.f32 %v5684, %v5717
    %v5719 = vmul.f32 %v5685, %v5717
    %v5720 = vmul.f32 %v5686, %v5717
    %v5721 = vmul.f32 %v5687, %v5717
    %v5722 = vmul.f32 %v5688, %v5717
    %v5723 = vmul.f32 %v5689, %v5717
    %v5724 = vmul.f32 %v5690, %v5717
    %v5725 = vmul.f32 %v5691, %v5717
    %v5726 = vmul.f32 %v5692, %v5717
    %v5727 = vmul.f32 %v5693, %v5717
    %v5728 = vmul.f32 %v5694, %v5717
    %v5729 = vmul.f32 %v5695, %v5717
    %v5730 = vmul.f32 %v5696, %v5717
    %v5731 = vmul.f32 %v5697, %v5717
    %v5732 = vmul.f32 %v5698, %v5717
    %v5733 = vmul.f32 %v5699, %v5717
    %v5734 = vmul.f32 %v5700, %v5717
    %v5735 = vmul.f32 %v5701, %v5717
    %v5736 = vmul.f32 %v5702, %v5717
    %v5737 = vmul.f32 %v5703, %v5717
    %v5738 = vmul.f32 %v5704, %v5717
    %v5739 = vmul.f32 %v5705, %v5717
    %v5740 = vmul.f32 %v5706, %v5717
    %v5741 = vmul.f32 %v5707, %v5717
    %v5742 = vmul.f32 %v5708, %v5717
    %v5743 = vmul.f32 %v5709, %v5717
    %v5744 = vmul.f32 %v5710, %v5717
    %v5745 = vmul.f32 %v5711, %v5717
    %v5746 = vmul.f32 %v5712, %v5717
    %v5747 = vmul.f32 %v5713, %v5717
    %v5748 = vmul.f32 %v5714, %v5717
    %v5749 = vmul.f32 %v5715, %v5717
    %v5750 = vld [vmem:[%s13] sm:$0x1]
    %v5752 = vlaneseq
    %v5753 = vshrl.u32 %v5752, 7
    %v5754 = vsub.s32 0, %v5753
    %v5755 = vrot.slane %v5750, %v5754
    %v5757 = vmul.f32 %v5718, %v5755
    %v5758 = vmul.f32 %v5719, %v5755
    %v5759 = vmul.f32 %v5720, %v5755
    %v5760 = vmul.f32 %v5721, %v5755
    %v5761 = vmul.f32 %v5722, %v5755
    %v5762 = vmul.f32 %v5723, %v5755
    %v5763 = vmul.f32 %v5724, %v5755
    %v5764 = vmul.f32 %v5725, %v5755
    %v5765 = vmul.f32 %v5726, %v5755
    %v5766 = vmul.f32 %v5727, %v5755
    %v5767 = vmul.f32 %v5728, %v5755
    %v5768 = vmul.f32 %v5729, %v5755
    %v5769 = vmul.f32 %v5730, %v5755
    %v5770 = vmul.f32 %v5731, %v5755
    %v5771 = vmul.f32 %v5732, %v5755
    %v5772 = vmul.f32 %v5733, %v5755
    %v5773 = vmul.f32 %v5734, %v5755
    %v5774 = vmul.f32 %v5735, %v5755
    %v5775 = vmul.f32 %v5736, %v5755
    %v5776 = vmul.f32 %v5737, %v5755
    %v5777 = vmul.f32 %v5738, %v5755
    %v5778 = vmul.f32 %v5739, %v5755
    %v5779 = vmul.f32 %v5740, %v5755
    %v5780 = vmul.f32 %v5741, %v5755
    %v5781 = vmul.f32 %v5742, %v5755
    %v5782 = vmul.f32 %v5743, %v5755
    %v5783 = vmul.f32 %v5744, %v5755
    %v5784 = vmul.f32 %v5745, %v5755
    %v5785 = vmul.f32 %v5746, %v5755
    %v5786 = vmul.f32 %v5747, %v5755
    %v5787 = vmul.f32 %v5748, %v5755
    %v5788 = vmul.f32 %v5749, %v5755
    %v5789 = vld [vmem:[%s14] sm:$0x1]
    %v5791 = vlaneseq
    %v5792 = vshrl.u32 %v5791, 7
    %v5793 = vsub.s32 0, %v5792
    %v5794 = vrot.slane %v5789, %v5793
    %v5796 = vadd.f32 %v5757, %v5794
    %v5797 = vadd.f32 %v5758, %v5794
    %v5798 = vadd.f32 %v5759, %v5794
    %v5799 = vadd.f32 %v5760, %v5794
    %v5800 = vadd.f32 %v5761, %v5794
    %v5801 = vadd.f32 %v5762, %v5794
    %v5802 = vadd.f32 %v5763, %v5794
    %v5803 = vadd.f32 %v5764, %v5794
    %v5804 = vadd.f32 %v5765, %v5794
    %v5805 = vadd.f32 %v5766, %v5794
    %v5806 = vadd.f32 %v5767, %v5794
    %v5807 = vadd.f32 %v5768, %v5794
    %v5808 = vadd.f32 %v5769, %v5794
    %v5809 = vadd.f32 %v5770, %v5794
    %v5810 = vadd.f32 %v5771, %v5794
    %v5811 = vadd.f32 %v5772, %v5794
    %v5812 = vadd.f32 %v5773, %v5794
    %v5813 = vadd.f32 %v5774, %v5794
    %v5814 = vadd.f32 %v5775, %v5794
    %v5815 = vadd.f32 %v5776, %v5794
    %v5816 = vadd.f32 %v5777, %v5794
    %v5817 = vadd.f32 %v5778, %v5794
    %v5818 = vadd.f32 %v5779, %v5794
    %v5819 = vadd.f32 %v5780, %v5794
    %v5820 = vadd.f32 %v5781, %v5794
    %v5821 = vadd.f32 %v5782, %v5794
    %v5822 = vadd.f32 %v5783, %v5794
    %v5823 = vadd.f32 %v5784, %v5794
    %v5824 = vadd.f32 %v5785, %v5794
    %v5825 = vadd.f32 %v5786, %v5794
    %v5826 = vadd.f32 %v5787, %v5794
    %v5827 = vadd.f32 %v5788, %v5794
    %v5830 = vrot.slane %v5810, 7
    %v5831 = vrot.slane %v5811, 7
    %v5832 = vsel %vm831, %v5830, %v5831
    %v5835 = vsel %vm831, %v5796, %v5830
    %v5836 = vmul.f32 %v5835, 0.25
    %v5837 = vmul.f32 %v5832, 0.25
    %v5838 = vmul.f32 %v5796, 0.75
    %v5839 = vmul.f32 %v5797, 0.75
    %v5840 = vadd.f32 %v5836, %v5838
    %v5841 = vadd.f32 %v5837, %v5839
    %v5842 = vmul.f32 %v5798, 0.25
    %v5843 = vmul.f32 %v5799, 0.25
    %v5844 = vadd.f32 %v5838, %v5842
    %v5845 = vadd.f32 %v5839, %v5843
    %v5846 = vmul.f32 %v5796, 0.25
    %v5847 = vmul.f32 %v5797, 0.25
    %v5848 = vmul.f32 %v5798, 0.75
    %v5849 = vmul.f32 %v5799, 0.75
    %v5850 = vadd.f32 %v5846, %v5848
    %v5851 = vadd.f32 %v5847, %v5849
    %v5852 = vmul.f32 %v5800, 0.25
    %v5853 = vmul.f32 %v5801, 0.25
    %v5854 = vadd.f32 %v5848, %v5852
    %v5855 = vadd.f32 %v5849, %v5853
    %v5856 = vmul.f32 %v5800, 0.75
    %v5857 = vmul.f32 %v5801, 0.75
    %v5858 = vadd.f32 %v5842, %v5856
    %v5859 = vadd.f32 %v5843, %v5857
    %v5860 = vmul.f32 %v5802, 0.25
    %v5861 = vmul.f32 %v5803, 0.25
    %v5862 = vadd.f32 %v5856, %v5860
    %v5863 = vadd.f32 %v5857, %v5861
    %v5864 = vmul.f32 %v5802, 0.75
    %v5865 = vmul.f32 %v5803, 0.75
    %v5866 = vadd.f32 %v5852, %v5864
    %v5867 = vadd.f32 %v5853, %v5865
    %v5868 = vmul.f32 %v5804, 0.25
    %v5869 = vmul.f32 %v5805, 0.25
    %v5870 = vadd.f32 %v5864, %v5868
    %v5871 = vadd.f32 %v5865, %v5869
    %v5872 = vmul.f32 %v5804, 0.75
    %v5873 = vmul.f32 %v5805, 0.75
    %v5874 = vadd.f32 %v5860, %v5872
    %v5875 = vadd.f32 %v5861, %v5873
    %v5876 = vmul.f32 %v5806, 0.25
    %v5877 = vmul.f32 %v5807, 0.25
    %v5878 = vadd.f32 %v5872, %v5876
    %v5879 = vadd.f32 %v5873, %v5877
    %v5880 = vmul.f32 %v5806, 0.75
    %v5881 = vmul.f32 %v5807, 0.75
    %v5882 = vadd.f32 %v5868, %v5880
    %v5883 = vadd.f32 %v5869, %v5881
    %v5884 = vmul.f32 %v5808, 0.25
    %v5885 = vmul.f32 %v5809, 0.25
    %v5886 = vadd.f32 %v5880, %v5884
    %v5887 = vadd.f32 %v5881, %v5885
    %v5888 = vmul.f32 %v5808, 0.75
    %v5889 = vmul.f32 %v5809, 0.75
    %v5890 = vadd.f32 %v5876, %v5888
    %v5891 = vadd.f32 %v5877, %v5889
    %v5892 = vmul.f32 %v5810, 0.25
    %v5893 = vmul.f32 %v5811, 0.25
    %v5894 = vadd.f32 %v5888, %v5892
    %v5895 = vadd.f32 %v5889, %v5893
    %v5898 = vrot.slane %v5796, 1
    %v5899 = vrot.slane %v5797, 1
    %v5900 = vsel %vm843, %v5898, %v5899
    %v5903 = vsel %vm843, %v5899, %v5811
    %v5904 = vmul.f32 %v5810, 0.75
    %v5905 = vmul.f32 %v5811, 0.75
    %v5906 = vadd.f32 %v5884, %v5904
    %v5907 = vadd.f32 %v5885, %v5905
    %v5908 = vmul.f32 %v5900, 0.25
    %v5909 = vmul.f32 %v5903, 0.25
    %v5910 = vadd.f32 %v5904, %v5908
    %v5911 = vadd.f32 %v5905, %v5909
    %5914 = vrot.lane.b32.xlu0 %v5844, 4
    %v5915 = vpop.permute.xlu0 %5914
    %5916 = vrot.lane.b32.xlu0 %v5845, 4
    %v5917 = vpop.permute.xlu0 %5916
    %5922 = vrot.lane.b32.xlu0 %v5850, 8
    %v5923 = vpop.permute.xlu0 %5922
    %5924 = vrot.lane.b32.xlu0 %v5851, 8
    %v5925 = vpop.permute.xlu0 %5924
    %5930 = vrot.lane.b32.xlu0 %v5854, 12
    %v5931 = vpop.permute.xlu0 %5930
    %5932 = vrot.lane.b32.xlu0 %v5855, 12
    %v5933 = vpop.permute.xlu0 %5932
    %5938 = vrot.lane.b32.xlu0 %v5858, 16
    %v5939 = vpop.permute.xlu0 %5938
    %5940 = vrot.lane.b32.xlu0 %v5859, 16
    %v5941 = vpop.permute.xlu0 %5940
    %5946 = vrot.lane.b32.xlu0 %v5862, 20
    %v5947 = vpop.permute.xlu0 %5946
    %5948 = vrot.lane.b32.xlu0 %v5863, 20
    %v5949 = vpop.permute.xlu0 %5948
    %5954 = vrot.lane.b32.xlu0 %v5866, 24
    %v5955 = vpop.permute.xlu0 %5954
    %5956 = vrot.lane.b32.xlu0 %v5867, 24
    %v5957 = vpop.permute.xlu0 %5956
    %5962 = vrot.lane.b32.xlu0 %v5870, 28
    %v5963 = vpop.permute.xlu0 %5962
    %5964 = vrot.lane.b32.xlu0 %v5871, 28
    %v5965 = vpop.permute.xlu0 %5964
    %5970 = vrot.lane.b32.xlu0 %v5874, 32
    %v5971 = vpop.permute.xlu0 %5970
    %5972 = vrot.lane.b32.xlu0 %v5875, 32
    %v5973 = vpop.permute.xlu0 %5972
    %5978 = vrot.lane.b32.xlu0 %v5878, 36
    %v5979 = vpop.permute.xlu0 %5978
    %5980 = vrot.lane.b32.xlu0 %v5879, 36
    %v5981 = vpop.permute.xlu0 %5980
    %5986 = vrot.lane.b32.xlu0 %v5882, 40
    %v5987 = vpop.permute.xlu0 %5986
    %5988 = vrot.lane.b32.xlu0 %v5883, 40
    %v5989 = vpop.permute.xlu0 %5988
    %5994 = vrot.lane.b32.xlu0 %v5886, 44
    %v5995 = vpop.permute.xlu0 %5994
    %5996 = vrot.lane.b32.xlu0 %v5887, 44
    %v5997 = vpop.permute.xlu0 %5996
    %6002 = vrot.lane.b32.xlu0 %v5890, 48
    %v6003 = vpop.permute.xlu0 %6002
    %6004 = vrot.lane.b32.xlu0 %v5891, 48
    %v6005 = vpop.permute.xlu0 %6004
    %6010 = vrot.lane.b32.xlu0 %v5894, 52
    %v6011 = vpop.permute.xlu0 %6010
    %6012 = vrot.lane.b32.xlu0 %v5895, 52
    %v6013 = vpop.permute.xlu0 %6012
    %6018 = vrot.lane.b32.xlu0 %v5906, 56
    %v6019 = vpop.permute.xlu0 %6018
    %6020 = vrot.lane.b32.xlu0 %v5907, 56
    %v6021 = vpop.permute.xlu0 %6020
    %6026 = vrot.lane.b32.xlu0 %v5910, 60
    %v6027 = vpop.permute.xlu0 %6026
    %6028 = vrot.lane.b32.xlu0 %v5911, 60
    %v6029 = vpop.permute.xlu0 %6028
    %v6032 = vsel %vm5509, %v5840, %v5915
    %v6033 = vsel %vm5509, %v5841, %v5917
    %vm6034 = vcmask 64512
    %v6035 = vsel %vm6034, %v6032, %v5923
    %v6036 = vsel %vm6034, %v6033, %v5925
    %vm6037 = vcmask 97280
    %v6038 = vsel %vm6037, %v6035, %v5931
    %v6039 = vsel %vm6037, %v6036, %v5933
    %v6040 = vsel %vm3284, %v6038, %v5939
    %v6041 = vsel %vm3284, %v6039, %v5941
    %vm6042 = vcmask 162816
    %v6043 = vsel %vm6042, %v6040, %v5947
    %v6044 = vsel %vm6042, %v6041, %v5949
    %vm6045 = vcmask 195584
    %v6046 = vsel %vm6045, %v6043, %v5955
    %v6047 = vsel %vm6045, %v6044, %v5957
    %vm6048 = vcmask 228352
    %v6049 = vsel %vm6048, %v6046, %v5963
    %v6050 = vsel %vm6048, %v6047, %v5965
    %v6051 = vsel %vm201, %v6049, %v5971
    %v6052 = vsel %vm201, %v6050, %v5973
    %vm6053 = vcmask 293888
    %v6054 = vsel %vm6053, %v6051, %v5979
    %v6055 = vsel %vm6053, %v6052, %v5981
    %vm6056 = vcmask 326656
    %v6057 = vsel %vm6056, %v6054, %v5987
    %v6058 = vsel %vm6056, %v6055, %v5989
    %vm6059 = vcmask 359424
    %v6060 = vsel %vm6059, %v6057, %v5995
    %v6061 = vsel %vm6059, %v6058, %v5997
    %v6062 = vsel %vm3571, %v6060, %v6003
    %v6063 = vsel %vm3571, %v6061, %v6005
    %vm6064 = vcmask 424960
    %v6065 = vsel %vm6064, %v6062, %v6011
    %v6066 = vsel %vm6064, %v6063, %v6013
    %vm6067 = vcmask 457728
    %v6068 = vsel %vm6067, %v6065, %v6019
    %v6069 = vsel %vm6067, %v6066, %v6021
    %vm6070 = vcmask 490496
    %v6071 = vsel %vm6070, %v6068, %v6027
    %v6072 = vsel %vm6070, %v6069, %v6029
    %v6075 = vrot.slane %v5826, 7
    %v6076 = vrot.slane %v5827, 7
    %v6077 = vsel %vm831, %v6075, %v6076
    %v6080 = vsel %vm831, %v5812, %v6075
    %v6081 = vmul.f32 %v6080, 0.25
    %v6082 = vmul.f32 %v6077, 0.25
    %v6083 = vmul.f32 %v5812, 0.75
    %v6084 = vmul.f32 %v5813, 0.75
    %v6085 = vadd.f32 %v6081, %v6083
    %v6086 = vadd.f32 %v6082, %v6084
    %v6087 = vmul.f32 %v5814, 0.25
    %v6088 = vmul.f32 %v5815, 0.25
    %v6089 = vadd.f32 %v6083, %v6087
    %v6090 = vadd.f32 %v6084, %v6088
    %v6091 = vmul.f32 %v5812, 0.25
    %v6092 = vmul.f32 %v5813, 0.25
    %v6093 = vmul.f32 %v5814, 0.75
    %v6094 = vmul.f32 %v5815, 0.75
    %v6095 = vadd.f32 %v6091, %v6093
    %v6096 = vadd.f32 %v6092, %v6094
    %v6097 = vmul.f32 %v5816, 0.25
    %v6098 = vmul.f32 %v5817, 0.25
    %v6099 = vadd.f32 %v6093, %v6097
    %v6100 = vadd.f32 %v6094, %v6098
    %v6101 = vmul.f32 %v5816, 0.75
    %v6102 = vmul.f32 %v5817, 0.75
    %v6103 = vadd.f32 %v6087, %v6101
    %v6104 = vadd.f32 %v6088, %v6102
    %v6105 = vmul.f32 %v5818, 0.25
    %v6106 = vmul.f32 %v5819, 0.25
    %v6107 = vadd.f32 %v6101, %v6105
    %v6108 = vadd.f32 %v6102, %v6106
    %v6109 = vmul.f32 %v5818, 0.75
    %v6110 = vmul.f32 %v5819, 0.75
    %v6111 = vadd.f32 %v6097, %v6109
    %v6112 = vadd.f32 %v6098, %v6110
    %v6113 = vmul.f32 %v5820, 0.25
    %v6114 = vmul.f32 %v5821, 0.25
    %v6115 = vadd.f32 %v6109, %v6113
    %v6116 = vadd.f32 %v6110, %v6114
    %v6117 = vmul.f32 %v5820, 0.75
    %v6118 = vmul.f32 %v5821, 0.75
    %v6119 = vadd.f32 %v6105, %v6117
    %v6120 = vadd.f32 %v6106, %v6118
    %v6121 = vmul.f32 %v5822, 0.25
    %v6122 = vmul.f32 %v5823, 0.25
    %v6123 = vadd.f32 %v6117, %v6121
    %v6124 = vadd.f32 %v6118, %v6122
    %v6125 = vmul.f32 %v5822, 0.75
    %v6126 = vmul.f32 %v5823, 0.75
    %v6127 = vadd.f32 %v6113, %v6125
    %v6128 = vadd.f32 %v6114, %v6126
    %v6129 = vmul.f32 %v5824, 0.25
    %v6130 = vmul.f32 %v5825, 0.25
    %v6131 = vadd.f32 %v6125, %v6129
    %v6132 = vadd.f32 %v6126, %v6130
    %v6133 = vmul.f32 %v5824, 0.75
    %v6134 = vmul.f32 %v5825, 0.75
    %v6135 = vadd.f32 %v6121, %v6133
    %v6136 = vadd.f32 %v6122, %v6134
    %v6137 = vmul.f32 %v5826, 0.25
    %v6138 = vmul.f32 %v5827, 0.25
    %v6139 = vadd.f32 %v6133, %v6137
    %v6140 = vadd.f32 %v6134, %v6138
    %v6143 = vrot.slane %v5812, 1
    %v6144 = vrot.slane %v5813, 1
    %v6145 = vsel %vm843, %v6143, %v6144
    %v6148 = vsel %vm843, %v6144, %v5827
    %v6149 = vmul.f32 %v5826, 0.75
    %v6150 = vmul.f32 %v5827, 0.75
    %v6151 = vadd.f32 %v6129, %v6149
    %v6152 = vadd.f32 %v6130, %v6150
    %v6153 = vmul.f32 %v6145, 0.25
    %v6154 = vmul.f32 %v6148, 0.25
    %v6155 = vadd.f32 %v6149, %v6153
    %v6156 = vadd.f32 %v6150, %v6154
    %6159 = vrot.lane.b32.xlu0 %v6089, 4
    %v6160 = vpop.permute.xlu0 %6159
    %6161 = vrot.lane.b32.xlu0 %v6090, 4
    %v6162 = vpop.permute.xlu0 %6161
    %6167 = vrot.lane.b32.xlu0 %v6095, 8
    %v6168 = vpop.permute.xlu0 %6167
    %6169 = vrot.lane.b32.xlu0 %v6096, 8
    %v6170 = vpop.permute.xlu0 %6169
    %6175 = vrot.lane.b32.xlu0 %v6099, 12
    %v6176 = vpop.permute.xlu0 %6175
    %6177 = vrot.lane.b32.xlu0 %v6100, 12
    %v6178 = vpop.permute.xlu0 %6177
    %6183 = vrot.lane.b32.xlu0 %v6103, 16
    %v6184 = vpop.permute.xlu0 %6183
    %6185 = vrot.lane.b32.xlu0 %v6104, 16
    %v6186 = vpop.permute.xlu0 %6185
    %6191 = vrot.lane.b32.xlu0 %v6107, 20
    %v6192 = vpop.permute.xlu0 %6191
    %6193 = vrot.lane.b32.xlu0 %v6108, 20
    %v6194 = vpop.permute.xlu0 %6193
    %6199 = vrot.lane.b32.xlu0 %v6111, 24
    %v6200 = vpop.permute.xlu0 %6199
    %6201 = vrot.lane.b32.xlu0 %v6112, 24
    %v6202 = vpop.permute.xlu0 %6201
    %6207 = vrot.lane.b32.xlu0 %v6115, 28
    %v6208 = vpop.permute.xlu0 %6207
    %6209 = vrot.lane.b32.xlu0 %v6116, 28
    %v6210 = vpop.permute.xlu0 %6209
    %6215 = vrot.lane.b32.xlu0 %v6119, 32
    %v6216 = vpop.permute.xlu0 %6215
    %6217 = vrot.lane.b32.xlu0 %v6120, 32
    %v6218 = vpop.permute.xlu0 %6217
    %6223 = vrot.lane.b32.xlu0 %v6123, 36
    %v6224 = vpop.permute.xlu0 %6223
    %6225 = vrot.lane.b32.xlu0 %v6124, 36
    %v6226 = vpop.permute.xlu0 %6225
    %6231 = vrot.lane.b32.xlu0 %v6127, 40
    %v6232 = vpop.permute.xlu0 %6231
    %6233 = vrot.lane.b32.xlu0 %v6128, 40
    %v6234 = vpop.permute.xlu0 %6233
    %6239 = vrot.lane.b32.xlu0 %v6131, 44
    %v6240 = vpop.permute.xlu0 %6239
    %6241 = vrot.lane.b32.xlu0 %v6132, 44
    %v6242 = vpop.permute.xlu0 %6241
    %6247 = vrot.lane.b32.xlu0 %v6135, 48
    %v6248 = vpop.permute.xlu0 %6247
    %6249 = vrot.lane.b32.xlu0 %v6136, 48
    %v6250 = vpop.permute.xlu0 %6249
    %6255 = vrot.lane.b32.xlu0 %v6139, 52
    %v6256 = vpop.permute.xlu0 %6255
    %6257 = vrot.lane.b32.xlu0 %v6140, 52
    %v6258 = vpop.permute.xlu0 %6257
    %6263 = vrot.lane.b32.xlu0 %v6151, 56
    %v6264 = vpop.permute.xlu0 %6263
    %6265 = vrot.lane.b32.xlu0 %v6152, 56
    %v6266 = vpop.permute.xlu0 %6265
    %6271 = vrot.lane.b32.xlu0 %v6155, 60
    %v6272 = vpop.permute.xlu0 %6271
    %6273 = vrot.lane.b32.xlu0 %v6156, 60
    %v6274 = vpop.permute.xlu0 %6273
    %v6277 = vsel %vm5509, %v6085, %v6160
    %v6278 = vsel %vm5509, %v6086, %v6162
    %v6279 = vsel %vm6034, %v6277, %v6168
    %v6280 = vsel %vm6034, %v6278, %v6170
    %v6281 = vsel %vm6037, %v6279, %v6176
    %v6282 = vsel %vm6037, %v6280, %v6178
    %v6283 = vsel %vm3284, %v6281, %v6184
    %v6284 = vsel %vm3284, %v6282, %v6186
    %v6285 = vsel %vm6042, %v6283, %v6192
    %v6286 = vsel %vm6042, %v6284, %v6194
    %v6287 = vsel %vm6045, %v6285, %v6200
    %v6288 = vsel %vm6045, %v6286, %v6202
    %v6289 = vsel %vm6048, %v6287, %v6208
    %v6290 = vsel %vm6048, %v6288, %v6210
    %v6291 = vsel %vm201, %v6289, %v6216
    %v6292 = vsel %vm201, %v6290, %v6218
    %v6293 = vsel %vm6053, %v6291, %v6224
    %v6294 = vsel %vm6053, %v6292, %v6226
    %v6295 = vsel %vm6056, %v6293, %v6232
    %v6296 = vsel %vm6056, %v6294, %v6234
    %v6297 = vsel %vm6059, %v6295, %v6240
    %v6298 = vsel %vm6059, %v6296, %v6242
    %v6299 = vsel %vm3571, %v6297, %v6248
    %v6300 = vsel %vm3571, %v6298, %v6250
    %v6301 = vsel %vm6064, %v6299, %v6256
    %v6302 = vsel %vm6064, %v6300, %v6258
    %v6303 = vsel %vm6067, %v6301, %v6264
    %v6304 = vsel %vm6067, %v6302, %v6266
    %v6305 = vsel %vm6070, %v6303, %v6272
    %v6306 = vsel %vm6070, %v6304, %v6274
    %6307 = vst.msk [vmem:[#allocation3] sm:$0xff] %vm920, %v6071
    %6308 = vst.msk [vmem:[#allocation3 + $0x8] sm:$0xff] %vm920, %v6072
    %6309 = vst.msk [vmem:[#allocation3 + $0x10] sm:$0xff] %vm920, %v6305
    %6310 = vst.msk [vmem:[#allocation3 + $0x18] sm:$0xff] %vm920, %v6306
    // Predicated region
    $region62: #{tpu_custom_call.1} parent=1 // pred_check
      _
    $region63: #{tpu_custom_call.1} parent=1 // pred_check_branch
      %6312 = sbr.rel (0) target = $region65
    $region64: #{tpu_custom_call.1} parent=1 // pred_region
      %s6314 = ssub.s32 512, 512
      %6315 = vsyncadd [#allocation4], %s6314
      %s6316 = sshll.u32 [#allocation3], 4
      %s6317 = int_to_ptr.vmem [resolvable:$true] %s6316
      %6322 = dma.vmem_to_hbm [thread:$0]  %s6317, 512, %s15, [#allocation4], 128, 128, 8
    $region65: #{tpu_custom_call.1} parent=1 // pred_fallthru
      _
    // Predicated region
    $region66: #{tpu_custom_call.1} parent=1 // pred_check
      _
    $region67: #{tpu_custom_call.1} parent=1 // pred_check_branch
      %6324 = sbr.rel (0) target = $region69
    $region68: #{tpu_custom_call.1} parent=1 // pred_region
      %6325 = dma.done [#allocation4], 512
    $region69: #{tpu_custom_call.1} parent=1 // pred_fallthru
      _
    %6326 = vsyncpa [#allocation4], 1

</llo_original>
